<compile_context>
chip_gen: v5e
topology: v5e:2x2
jax: 0.10.0
libtpu: 0.0.40
codegen_flags: <defaults>
</compile_context>

<pallas_src>
import jax
import jax.numpy as jnp
from jax import lax
from jax.experimental import pallas as pl
from jax.experimental.pallas import tpu as pltpu

EPS = 1e-5                      # nn.BatchNorm1d default
OFF = 8                         # zero-gap rows before/between/after samples (>= kmax - 1)
MXU_INPUT_DTYPE = jnp.float32   # set to jnp.bfloat16 on v6e/v7x (loosen the test tolerance)

_VMEM = pl.BlockSpec(memory_space=pltpu.MemorySpace.VMEM)


def _round_up(x, m):
    return -(-x // m) * m


# --------------------------------------------------------------- in-kernel building blocks
def _conv_same(x, w_ref, w_off, ksz, cin, cout):
    """Batched Conv1d('same', stride=1) over the gap-padded slab: (R, cin) -> (R, cout).

    The >= OFF zero rows surrounding each sample provide the 'same' padding, so every tap
    is a circular pltpu.roll (exact: all wrapped rows are gap zeros) followed by ONE
    batched matmul (or a VPU broadcast-MAC when Cin == 1).  The conv bias is intentionally
    omitted: the training-mode BatchNorm that always follows cancels it exactly.
    """
    pad_l = (ksz - 1) // 2                       # PyTorch 'same': left = (K-1)//2, rest right
    r = x.shape[0]
    acc = None
    for k in range(ksz):
        shift = (pad_l - k) % r                  # rolled[i] = x[i + k - pad_l]
        xk = x if shift == 0 else pltpu.roll(x, shift, axis=0)
        if cin == 1:
            wk = w_ref[w_off + k:w_off + k + 1, 0:cout].astype(jnp.float32)
            term = xk * wk                       # (R,1)*(1,Cout) broadcast MAC on the VPU
        else:
            wk = w_ref[w_off + k * cin:w_off + (k + 1) * cin, 0:cout]
            term = jnp.dot(xk.astype(wk.dtype), wk, preferred_element_type=jnp.float32)
        acc = term if acc is None else acc + term
    return acc


def _batch_norm(y, mask, count, v_ref, bn_row, cout, relu):
    """Training-mode BatchNorm1d over the slab (masked, two-pass stats), optional ReLU.

    `mask` zeroes the gap rows so (a) conv tails in the gaps never enter the statistics and
    (b) the output keeps exact zeros in the gaps (they are the next conv's 'same' padding).
    """
    gamma = v_ref[bn_row:bn_row + 1, 0:cout]
    beta = v_ref[bn_row + 1:bn_row + 2, 0:cout]
    inv_count = 1.0 / float(count)
    mean = jnp.sum(y * mask, axis=0, keepdims=True) * inv_count
    d = (y - mean) * mask                                       # centered, gaps forced to 0
    var = jnp.sum(d * d, axis=0, keepdims=True) * inv_count     # biased (training) variance
    out = d * (lax.rsqrt(var + EPS) * gamma) + beta
    if relu:
        out = jnp.maximum(out, 0.0)
    return out * mask


def _make_kernel(n_b, l0, cin0, stride, blocks):
    """Whole-network fused kernel: every activation stays in vregs, 3 input DMAs total."""
    r_rows = n_b * stride + OFF
    extra = stride - OFF - l0                    # alignment filler when L0 % 8 != 0

    def kernel(x_ref, w_ref, v_ref, o_ref):
        # ---- assemble the gap-padded batch slab: [OFF zeros | sample 0 | ... | OFF zeros]
        zgap = jnp.zeros((OFF, cin0), jnp.float32)
        parts = []
        for n in range(n_b):
            parts.append(zgap)
            parts.append(x_ref[n].astype(jnp.float32))
            if extra > 0:
                parts.append(jnp.zeros((extra, cin0), jnp.float32))
        parts.append(zgap)
        x = jnp.concatenate(parts, axis=0)       # (R, Cin0), gaps exactly zero

        rows_iota = lax.broadcasted_iota(jnp.int32, (r_rows, 1), 0)

        def valid_mask(l_cur):
            m = None
            for n in range(n_b):
                lo = n * stride + OFF
                hit = jnp.logical_and(rows_iota >= lo, rows_iota < lo + l_cur)
                m = hit if m is None else jnp.logical_or(m, hit)
            return m.astype(jnp.float32)

        l_cur = l0
        mask = valid_mask(l_cur)

        for blk in blocks:
            count = n_b * l_cur
            # ---- shortcut branch: 1x1 conv + BN when channels change, else BN only
            sc = blk["shortcut"]
            if sc["w_off"] is not None:
                y_sc = _conv_same(x, w_ref, sc["w_off"], sc["k"], sc["cin"], sc["cout"])
            else:
                y_sc = x
            res = _batch_norm(y_sc, mask, count, v_ref, sc["bn_row"], sc["cout"], relu=False)
            # ---- main branch: cnn_per_res x (conv + BN [+ ReLU except last])
            inner = x
            n_cv = len(blk["convs"])
            for j, cv in enumerate(blk["convs"]):
                y = _conv_same(inner, w_ref, cv["w_off"], cv["k"], cv["cin"], cv["cout"])
                inner = _batch_norm(y, mask, count, v_ref, cv["bn_row"], cv["cout"],
                                    relu=(j < n_cv - 1))
            # ---- residual add + ReLU + AvgPool1d(kernel=2, stride=1)
            y = jnp.maximum(inner + res, 0.0)
            if blk["pool"]:
                y_next = pltpu.roll(y, r_rows - 1, axis=0)      # y_next[i] = y[i + 1]
                l_cur -= 1
                mask = valid_mask(l_cur)
                x = (0.5 * (y + y_next)) * mask                 # re-zero gaps for next conv
            else:
                x = y

        # ---- store per-sample valid rows; (N, L_out, C) with channels on lanes
        for n in range(n_b):
            a = n * stride + OFF
            o_ref[n] = x[a:a + l_cur, :]

    return kernel


# ------------------------------------------------------------------------- param handling
def init_params(key, in_channels=1, num_res_blocks=4, cnn_per_res=3,
                kernel_sizes=(8, 5, 5, 3), init_filters=32, max_filters=64):
    """Random parameters in PyTorch layout (Conv1d weight = (Cout, Cin, K))."""
    params = []
    in_c = in_channels
    nf = init_filters
    for _ in range(num_res_blocks):
        blk = {}
        if in_c != nf:
            key, k1, k2 = jax.random.split(key, 3)
            blk["shortcut_conv"] = (
                jax.random.normal(k1, (nf, in_c, 1), jnp.float32) * 0.1,
                jax.random.normal(k2, (nf,), jnp.float32) * 0.1,
            )
        else:
            blk["shortcut_conv"] = None
        key, k1, k2 = jax.random.split(key, 3)
        blk["shortcut_bn"] = (1.0 + 0.1 * jax.random.normal(k1, (nf,), jnp.float32),
                              0.1 * jax.random.normal(k2, (nf,), jnp.float32))
        convs = []
        for j in range(cnn_per_res):
            cin = in_c if j == 0 else nf
            ksz = kernel_sizes[j] if j < len(kernel_sizes) else kernel_sizes[-1]
            key, k1, k2, k3, k4 = jax.random.split(key, 5)
            convs.append(dict(
                w=jax.random.normal(k1, (nf, cin, ksz), jnp.float32) * 0.1,
                b=jax.random.normal(k2, (nf,), jnp.float32) * 0.1,
                gamma=1.0 + 0.1 * jax.random.normal(k3, (nf,), jnp.float32),
                beta=0.1 * jax.random.normal(k4, (nf,), jnp.float32),
            ))
        blk["convs"] = convs
        params.append(blk)
        in_c = nf
        nf = min(nf * 2, max_filters)
    return params


def pack_params(params):
    """Pack everything into two slabs (3 kernel inputs total):
       * weight slab (rows, 128): each conv weight flattened to (K*Cin, Cout) with
         w_slab[off + k*Cin + ci, co] == torch_w[co, ci, k]; rows padded to a multiple of 8,
         lanes zero-padded to 128.  Conv biases are NOT packed (BatchNorm cancels them).
       * vector slab (2*num_bn, 128): gamma row then beta row per BatchNorm.
    Returns (w_slab, v_slab, meta) with static row offsets for in-kernel slicing."""
    w_chunks, v_rows, blocks = [], [], []
    w_off = 0
    kmax = 1

    def add_w(w):
        nonlocal w_off, kmax
        cout, cin, k = (int(s) for s in w.shape)
        kmax = max(kmax, k)
        flat = jnp.transpose(w, (2, 1, 0)).reshape(k * cin, cout).astype(jnp.float32)
        rows_pad = _round_up(k * cin, 8)
        w_chunks.append(jnp.zeros((rows_pad, 128), jnp.float32).at[:k * cin, :cout].set(flat))
        off = w_off
        w_off += rows_pad
        return off, k, cin, cout

    def add_bn(gamma, beta):
        cout = int(gamma.shape[0])
        row = len(v_rows)
        v_rows.append(jnp.zeros((128,), jnp.float32).at[:cout].set(gamma.astype(jnp.float32)))
        v_rows.append(jnp.zeros((128,), jnp.float32).at[:cout].set(beta.astype(jnp.float32)))
        return row

    for i, blk in enumerate(params):
        g, bt = blk["shortcut_bn"]
        if blk["shortcut_conv"] is not None:
            w, _bias = blk["shortcut_conv"]                     # bias dropped (BN cancels it)
            off, k, cin, cout = add_w(w)
            sc = dict(w_off=off, k=k, cin=cin, cout=cout, bn_row=add_bn(g, bt))
        else:
            nf = int(g.shape[0])
            sc = dict(w_off=None, k=1, cin=nf, cout=nf, bn_row=add_bn(g, bt))
        convs = []
        for cv in blk["convs"]:
            off, k, cin, cout = add_w(cv["w"])                  # cv["b"] dropped (BN cancels it)
            convs.append(dict(w_off=off, k=k, cin=cin, cout=cout,
                              bn_row=add_bn(cv["gamma"], cv["beta"])))
        blocks.append(dict(shortcut=sc, convs=convs, pool=(i < 5)))

    w_slab = jnp.concatenate(w_chunks, axis=0).astype(MXU_INPUT_DTYPE)
    v_slab = jnp.stack(v_rows, axis=0)
    meta = dict(blocks=blocks, kmax=kmax, c_out=blocks[-1]["convs"][-1]["cout"])
    return w_slab, v_slab, meta


# --------------------------------------------------------------------------------- forward
def forward(x_ncl, w_slab, v_slab, meta):
    """x_ncl: PyTorch layout (N, C_in, L).  Returns (N, C_out, L_out) like the torch module."""
    n_b, cin0, l0 = (int(s) for s in x_ncl.shape)
    assert OFF >= meta["kmax"] - 1, "gap rows must cover the conv receptive field"
    if cin0 == 1:
        x_nlc = x_ncl.reshape(n_b, l0, 1).astype(jnp.float32)   # free relabel: C_in == 1
    else:
        x_nlc = jnp.transpose(x_ncl, (0, 2, 1)).astype(jnp.float32)

    stride = OFF + _round_up(l0, 8)
    blocks = meta["blocks"]
    l_out = l0 - sum(1 for b in blocks if b["pool"])
    c_out = meta["c_out"]

    # advisory cost estimate for the XLA scheduler
    flops, trans = 0, 0
    l_cur = l0
    for blk in blocks:
        layers = ([blk["shortcut"]] if blk["shortcut"]["w_off"] is not None else []) + blk["convs"]
        for cv in layers:
            flops += 2 * n_b * l_cur * cv["k"] * cv["cin"] * cv["cout"]
        trans += (len(blk["convs"]) + 1) * blk["convs"][0]["cout"]   # rsqrt per BN channel
        if blk["pool"]:
            l_cur -= 1
    bytes_accessed = (x_nlc.size * 4 + w_slab.size * w_slab.dtype.itemsize
                      + v_slab.size * 4 + n_b * l_out * c_out * 4)

    kernel = _make_kernel(n_b, l0, cin0, stride, blocks)
    out = pl.pallas_call(
        kernel,
        out_shape=jax.ShapeDtypeStruct((n_b, l_out, c_out), jnp.float32),
        in_specs=[_VMEM, _VMEM, _VMEM],
        out_specs=_VMEM,
        compiler_params=pltpu.CompilerParams(vmem_limit_bytes=32 * 1024 * 1024),
        cost_estimate=pl.CostEstimate(flops=flops, transcendentals=trans,
                                      bytes_accessed=bytes_accessed),
        # TODO(synk): on v7x, add a batch grid axis marked "parallel" plus a cross-core
        # partial-sum reduction for the BatchNorm statistics to engage the second TensorCore.
    )(x_nlc, w_slab, v_slab)
    # Kernel emits (N, L_out, C); the final transpose to PyTorch (N, C, L_out) stays in the
    # wrapper: both orientations are < 128 lanes at this size, and a ragged (12, 64)
    # in-kernel transpose would buy nothing while adding lowering risk.
    return jnp.transpose(out, (0, 2, 1))


# ------------------------------------------------------------ pure-JAX reference (self-check)
def reference_forward(x_ncl, params):
    def conv1d_same(x, w, b):
        k = w.shape[2]
        pad_l = (k - 1) // 2
        out = lax.conv_general_dilated(
            x, w, window_strides=(1,), padding=[(pad_l, k - 1 - pad_l)],
            dimension_numbers=("NCH", "OIH", "NCH"), precision=lax.Precision.HIGHEST)
        return out + b[None, :, None]

    def bn_train(x, g, bt):
        mean = jnp.mean(x, axis=(0, 2), keepdims=True)
        var = jnp.mean((x - mean) ** 2, axis=(0, 2), keepdims=True)
        return (x - mean) * lax.rsqrt(var + EPS) * g[None, :, None] + bt[None, :, None]

    x = x_ncl.astype(jnp.float32)
    for i, blk in enumerate(params):
        g, bt = blk["shortcut_bn"]
        if blk["shortcut_conv"] is not None:
            w, b = blk["shortcut_conv"]
            res = bn_train(conv1d_same(x, w, b), g, bt)
        else:
            res = bn_train(x, g, bt)
        inner = x
        ncv = len(blk["convs"])
        for j, conv in enumerate(blk["convs"]):
            inner = bn_train(conv1d_same(inner, conv["w"], conv["b"]),
                             conv["gamma"], conv["beta"])
            if j < ncv - 1:
                inner = jnp.maximum(inner, 0.0)
        y = jnp.maximum(inner + res, 0.0)
        if i < 5:
            y = 0.5 * (y[:, :, :-1] + y[:, :, 1:])
        x = y
    return x


if __name__ == "__main__":
    key = jax.random.PRNGKey(0)
    pkey, xkey = jax.random.split(key)
    params = init_params(pkey)
    w_slab, v_slab, meta = pack_params(params)

    # PyTorch NCW input: batch=2, in_channels=1, length=16
    x = jax.random.normal(xkey, (2, 1, 16), jnp.float32)
    out = jax.block_until_ready(forward(x, w_slab, v_slab, meta))

    assert out.shape == (2, 64, 12), out.shape      # 4 blocks; each AvgPool(2,1) shrinks L by 1
    assert bool(jnp.all(jnp.isfinite(out)))

    ref = reference_forward(x, params)
    max_err = float(jnp.max(jnp.abs(out - ref)))
    assert max_err < 1e-2, f"mismatch vs pure-JAX reference: {max_err}"
    print("KERNEL_OK")
</pallas_src>

<mosaic_0001>
module attributes {stable_mosaic.version = 11 : i64} {
  func.func @kernel(%arg0: memref<2x16x1xf32, #tpu.memory_space<vmem>>, %arg1: memref<3568x128xf32, #tpu.memory_space<vmem>>, %arg2: memref<32x128xf32, #tpu.memory_space<vmem>>, %arg3: memref<2x12x64xf32, #tpu.memory_space<vmem>>) attributes {dimension_semantics = [], scalar_prefetch = 0 : i64, scratch_operands = 0 : i64, tpu.core_type = #tpu.core_type<tc>} {
    %cst = arith.constant 0.000000e+00 : f32
    %0 = vector.broadcast %cst : f32 to vector<8x1xf32>
    %c0 = arith.constant 0 : index
    %c0_0 = arith.constant 0 : index
    %c0_1 = arith.constant 0 : index
    %1 = vector.load %arg0[%c0, %c0_0, %c0_1] : memref<2x16x1xf32, #tpu.memory_space<vmem>>, vector<1x16x1xf32>
    %2 = vector.shape_cast %1 : vector<1x16x1xf32> to vector<16x1xf32>
    %c1 = arith.constant 1 : index
    %c0_2 = arith.constant 0 : index
    %c0_3 = arith.constant 0 : index
    %3 = vector.load %arg0[%c1, %c0_2, %c0_3] : memref<2x16x1xf32, #tpu.memory_space<vmem>>, vector<1x16x1xf32>
    %4 = vector.shape_cast %3 : vector<1x16x1xf32> to vector<16x1xf32>
    %5 = tpu.concatenate %0, %2, %0, %4, %0 in 0 : vector<8x1xf32>, vector<16x1xf32>, vector<8x1xf32>, vector<16x1xf32>, vector<8x1xf32> -> vector<56x1xf32>
    %6 = tpu.iota {dimensions = array<i32: 0>} : vector<56x1xi32>
    %c8_i32 = arith.constant 8 : i32
    %7 = vector.broadcast %c8_i32 : i32 to vector<56x1xi32>
    %8 = arith.cmpi sge, %6, %7 : vector<56x1xi32>
    %c24_i32 = arith.constant 24 : i32
    %9 = vector.broadcast %c24_i32 : i32 to vector<56x1xi32>
    %10 = arith.cmpi slt, %6, %9 : vector<56x1xi32>
    %11 = arith.andi %8, %10 : vector<56x1xi1>
    %c32_i32 = arith.constant 32 : i32
    %12 = vector.broadcast %c32_i32 : i32 to vector<56x1xi32>
    %13 = arith.cmpi sge, %6, %12 : vector<56x1xi32>
    %c48_i32 = arith.constant 48 : i32
    %14 = vector.broadcast %c48_i32 : i32 to vector<56x1xi32>
    %15 = arith.cmpi slt, %6, %14 : vector<56x1xi32>
    %16 = arith.andi %13, %15 : vector<56x1xi1>
    %17 = arith.ori %11, %16 : vector<56x1xi1>
    %18 = arith.extui %17 : vector<56x1xi1> to vector<56x1xi32>
    %19 = arith.sitofp %18 : vector<56x1xi32> to vector<56x1xf32>
    %c0_4 = arith.constant 0 : index
    %c0_5 = arith.constant 0 : index
    %20 = vector.load %arg1[%c0_4, %c0_5] : memref<3568x128xf32, #tpu.memory_space<vmem>>, vector<1x32xf32>
    %21 = vector.broadcast %5 : vector<56x1xf32> to vector<56x32xf32>
    %22 = vector.broadcast %20 : vector<1x32xf32> to vector<56x32xf32>
    %23 = arith.mulf %21, %22 : vector<56x32xf32>
    %c0_6 = arith.constant 0 : index
    %c0_7 = arith.constant 0 : index
    %24 = vector.load %arg2[%c0_6, %c0_7] : memref<32x128xf32, #tpu.memory_space<vmem>>, vector<1x32xf32>
    %c1_8 = arith.constant 1 : index
    %c0_9 = arith.constant 0 : index
    %25 = vector.load %arg2[%c1_8, %c0_9] : memref<32x128xf32, #tpu.memory_space<vmem>>, vector<1x32xf32>
    %26 = vector.broadcast %19 : vector<56x1xf32> to vector<56x32xf32>
    %27 = arith.mulf %23, %26 : vector<56x32xf32>
    %cst_10 = arith.constant dense<0.000000e+00> : vector<32xf32>
    %28 = vector.multi_reduction <add>, %27, %cst_10 [0] : vector<56x32xf32> to vector<32xf32>
    %29 = vector.shape_cast %28 : vector<32xf32> to vector<1x32xf32>
    %cst_11 = arith.constant 3.125000e-02 : f32
    %30 = vector.broadcast %cst_11 : f32 to vector<1x32xf32>
    %31 = arith.mulf %29, %30 : vector<1x32xf32>
    %32 = vector.broadcast %31 : vector<1x32xf32> to vector<56x32xf32>
    %33 = arith.subf %23, %32 : vector<56x32xf32>
    %34 = vector.broadcast %19 : vector<56x1xf32> to vector<56x32xf32>
    %35 = arith.mulf %33, %34 : vector<56x32xf32>
    %36 = arith.mulf %35, %35 : vector<56x32xf32>
    %cst_12 = arith.constant dense<0.000000e+00> : vector<32xf32>
    %37 = vector.multi_reduction <add>, %36, %cst_12 [0] : vector<56x32xf32> to vector<32xf32>
    %38 = vector.shape_cast %37 : vector<32xf32> to vector<1x32xf32>
    %cst_13 = arith.constant 3.125000e-02 : f32
    %39 = vector.broadcast %cst_13 : f32 to vector<1x32xf32>
    %40 = arith.mulf %38, %39 : vector<1x32xf32>
    %cst_14 = arith.constant 9.99999974E-6 : f32
    %41 = vector.broadcast %cst_14 : f32 to vector<1x32xf32>
    %42 = arith.addf %40, %41 : vector<1x32xf32>
    %43 = math.rsqrt %42 : vector<1x32xf32>
    %44 = arith.mulf %43, %24 : vector<1x32xf32>
    %45 = vector.broadcast %44 : vector<1x32xf32> to vector<56x32xf32>
    %46 = arith.mulf %35, %45 : vector<56x32xf32>
    %47 = vector.broadcast %25 : vector<1x32xf32> to vector<56x32xf32>
    %48 = arith.addf %46, %47 : vector<56x32xf32>
    %49 = vector.broadcast %19 : vector<56x1xf32> to vector<56x32xf32>
    %50 = arith.mulf %48, %49 : vector<56x32xf32>
    %c3_i32 = arith.constant 3 : i32
    %51 = tpu.dynamic_rotate %5 by %c3_i32 dim 0 : vector<56x1xf32>, i32 -> vector<56x1xf32>
    %c8 = arith.constant 8 : index
    %c0_15 = arith.constant 0 : index
    %52 = vector.load %arg1[%c8, %c0_15] : memref<3568x128xf32, #tpu.memory_space<vmem>>, vector<1x32xf32>
    %53 = vector.broadcast %51 : vector<56x1xf32> to vector<56x32xf32>
    %54 = vector.broadcast %52 : vector<1x32xf32> to vector<56x32xf32>
    %55 = arith.mulf %53, %54 : vector<56x32xf32>
    %c2_i32 = arith.constant 2 : i32
    %56 = tpu.dynamic_rotate %5 by %c2_i32 dim 0 : vector<56x1xf32>, i32 -> vector<56x1xf32>
    %c9 = arith.constant 9 : index
    %c0_16 = arith.constant 0 : index
    %57 = vector.load %arg1[%c9, %c0_16] : memref<3568x128xf32, #tpu.memory_space<vmem>>, vector<1x32xf32>
    %58 = vector.broadcast %56 : vector<56x1xf32> to vector<56x32xf32>
    %59 = vector.broadcast %57 : vector<1x32xf32> to vector<56x32xf32>
    %60 = arith.mulf %58, %59 : vector<56x32xf32>
    %61 = arith.addf %55, %60 : vector<56x32xf32>
    %c1_i32 = arith.constant 1 : i32
    %62 = tpu.dynamic_rotate %5 by %c1_i32 dim 0 : vector<56x1xf32>, i32 -> vector<56x1xf32>
    %c10 = arith.constant 10 : index
    %c0_17 = arith.constant 0 : index
    %63 = vector.load %arg1[%c10, %c0_17] : memref<3568x128xf32, #tpu.memory_space<vmem>>, vector<1x32xf32>
    %64 = vector.broadcast %62 : vector<56x1xf32> to vector<56x32xf32>
    %65 = vector.broadcast %63 : vector<1x32xf32> to vector<56x32xf32>
    %66 = arith.mulf %64, %65 : vector<56x32xf32>
    %67 = arith.addf %61, %66 : vector<56x32xf32>
    %c11 = arith.constant 11 : index
    %c0_18 = arith.constant 0 : index
    %68 = vector.load %arg1[%c11, %c0_18] : memref<3568x128xf32, #tpu.memory_space<vmem>>, vector<1x32xf32>
    %69 = vector.broadcast %5 : vector<56x1xf32> to vector<56x32xf32>
    %70 = vector.broadcast %68 : vector<1x32xf32> to vector<56x32xf32>
    %71 = arith.mulf %69, %70 : vector<56x32xf32>
    %72 = arith.addf %67, %71 : vector<56x32xf32>
    %c55_i32 = arith.constant 55 : i32
    %73 = tpu.dynamic_rotate %5 by %c55_i32 dim 0 : vector<56x1xf32>, i32 -> vector<56x1xf32>
    %c12 = arith.constant 12 : index
    %c0_19 = arith.constant 0 : index
    %74 = vector.load %arg1[%c12, %c0_19] : memref<3568x128xf32, #tpu.memory_space<vmem>>, vector<1x32xf32>
    %75 = vector.broadcast %73 : vector<56x1xf32> to vector<56x32xf32>
    %76 = vector.broadcast %74 : vector<1x32xf32> to vector<56x32xf32>
    %77 = arith.mulf %75, %76 : vector<56x32xf32>
    %78 = arith.addf %72, %77 : vector<56x32xf32>
    %c54_i32 = arith.constant 54 : i32
    %79 = tpu.dynamic_rotate %5 by %c54_i32 dim 0 : vector<56x1xf32>, i32 -> vector<56x1xf32>
    %c13 = arith.constant 13 : index
    %c0_20 = arith.constant 0 : index
    %80 = vector.load %arg1[%c13, %c0_20] : memref<3568x128xf32, #tpu.memory_space<vmem>>, vector<1x32xf32>
    %81 = vector.broadcast %79 : vector<56x1xf32> to vector<56x32xf32>
    %82 = vector.broadcast %80 : vector<1x32xf32> to vector<56x32xf32>
    %83 = arith.mulf %81, %82 : vector<56x32xf32>
    %84 = arith.addf %78, %83 : vector<56x32xf32>
    %c53_i32 = arith.constant 53 : i32
    %85 = tpu.dynamic_rotate %5 by %c53_i32 dim 0 : vector<56x1xf32>, i32 -> vector<56x1xf32>
    %c14 = arith.constant 14 : index
    %c0_21 = arith.constant 0 : index
    %86 = vector.load %arg1[%c14, %c0_21] : memref<3568x128xf32, #tpu.memory_space<vmem>>, vector<1x32xf32>
    %87 = vector.broadcast %85 : vector<56x1xf32> to vector<56x32xf32>
    %88 = vector.broadcast %86 : vector<1x32xf32> to vector<56x32xf32>
    %89 = arith.mulf %87, %88 : vector<56x32xf32>
    %90 = arith.addf %84, %89 : vector<56x32xf32>
    %c52_i32 = arith.constant 52 : i32
    %91 = tpu.dynamic_rotate %5 by %c52_i32 dim 0 : vector<56x1xf32>, i32 -> vector<56x1xf32>
    %c15 = arith.constant 15 : index
    %c0_22 = arith.constant 0 : index
    %92 = vector.load %arg1[%c15, %c0_22] : memref<3568x128xf32, #tpu.memory_space<vmem>>, vector<1x32xf32>
    %93 = vector.broadcast %91 : vector<56x1xf32> to vector<56x32xf32>
    %94 = vector.broadcast %92 : vector<1x32xf32> to vector<56x32xf32>
    %95 = arith.mulf %93, %94 : vector<56x32xf32>
    %96 = arith.addf %90, %95 : vector<56x32xf32>
    %c2 = arith.constant 2 : index
    %c0_23 = arith.constant 0 : index
    %97 = vector.load %arg2[%c2, %c0_23] : memref<32x128xf32, #tpu.memory_space<vmem>>, vector<1x32xf32>
    %c3 = arith.constant 3 : index
    %c0_24 = arith.constant 0 : index
    %98 = vector.load %arg2[%c3, %c0_24] : memref<32x128xf32, #tpu.memory_space<vmem>>, vector<1x32xf32>
    %99 = vector.broadcast %19 : vector<56x1xf32> to vector<56x32xf32>
    %100 = arith.mulf %96, %99 : vector<56x32xf32>
    %cst_25 = arith.constant dense<0.000000e+00> : vector<32xf32>
    %101 = vector.multi_reduction <add>, %100, %cst_25 [0] : vector<56x32xf32> to vector<32xf32>
    %102 = vector.shape_cast %101 : vector<32xf32> to vector<1x32xf32>
    %cst_26 = arith.constant 3.125000e-02 : f32
    %103 = vector.broadcast %cst_26 : f32 to vector<1x32xf32>
    %104 = arith.mulf %102, %103 : vector<1x32xf32>
    %105 = vector.broadcast %104 : vector<1x32xf32> to vector<56x32xf32>
    %106 = arith.subf %96, %105 : vector<56x32xf32>
    %107 = vector.broadcast %19 : vector<56x1xf32> to vector<56x32xf32>
    %108 = arith.mulf %106, %107 : vector<56x32xf32>
    %109 = arith.mulf %108, %108 : vector<56x32xf32>
    %cst_27 = arith.constant dense<0.000000e+00> : vector<32xf32>
    %110 = vector.multi_reduction <add>, %109, %cst_27 [0] : vector<56x32xf32> to vector<32xf32>
    %111 = vector.shape_cast %110 : vector<32xf32> to vector<1x32xf32>
    %cst_28 = arith.constant 3.125000e-02 : f32
    %112 = vector.broadcast %cst_28 : f32 to vector<1x32xf32>
    %113 = arith.mulf %111, %112 : vector<1x32xf32>
    %cst_29 = arith.constant 9.99999974E-6 : f32
    %114 = vector.broadcast %cst_29 : f32 to vector<1x32xf32>
    %115 = arith.addf %113, %114 : vector<1x32xf32>
    %116 = math.rsqrt %115 : vector<1x32xf32>
    %117 = arith.mulf %116, %97 : vector<1x32xf32>
    %118 = vector.broadcast %117 : vector<1x32xf32> to vector<56x32xf32>
    %119 = arith.mulf %108, %118 : vector<56x32xf32>
    %120 = vector.broadcast %98 : vector<1x32xf32> to vector<56x32xf32>
    %121 = arith.addf %119, %120 : vector<56x32xf32>
    %cst_30 = arith.constant 0.000000e+00 : f32
    %122 = vector.broadcast %cst_30 : f32 to vector<56x32xf32>
    %123 = arith.maximumf %121, %122 : vector<56x32xf32>
    %124 = vector.broadcast %19 : vector<56x1xf32> to vector<56x32xf32>
    %125 = arith.mulf %123, %124 : vector<56x32xf32>
    %c2_i32_31 = arith.constant 2 : i32
    %126 = tpu.dynamic_rotate %125 by %c2_i32_31 dim 0 : vector<56x32xf32>, i32 -> vector<56x32xf32>
    %c16 = arith.constant 16 : index
    %c0_32 = arith.constant 0 : index
    %127 = vector.load %arg1[%c16, %c0_32] : memref<3568x128xf32, #tpu.memory_space<vmem>>, vector<32x32xf32>
    %cst_33 = arith.constant dense<0.000000e+00> : vector<56x32xf32>
    %128 = tpu.matmul %126, %127, %cst_33 {dimension_numbers = #tpu.dot_dimension_numbers<[1], [0], [0], [1], [0, 0, 1, 1], [], []>} : vector<56x32xf32>, vector<32x32xf32>, vector<56x32xf32> -> vector<56x32xf32>
    %c1_i32_34 = arith.constant 1 : i32
    %129 = tpu.dynamic_rotate %125 by %c1_i32_34 dim 0 : vector<56x32xf32>, i32 -> vector<56x32xf32>
    %c48 = arith.constant 48 : index
    %c0_35 = arith.constant 0 : index
    %130 = vector.load %arg1[%c48, %c0_35] : memref<3568x128xf32, #tpu.memory_space<vmem>>, vector<32x32xf32>
    %cst_36 = arith.constant dense<0.000000e+00> : vector<56x32xf32>
    %131 = tpu.matmul %129, %130, %cst_36 {dimension_numbers = #tpu.dot_dimension_numbers<[1], [0], [0], [1], [0, 0, 1, 1], [], []>} : vector<56x32xf32>, vector<32x32xf32>, vector<56x32xf32> -> vector<56x32xf32>
    %132 = arith.addf %128, %131 : vector<56x32xf32>
    %c80 = arith.constant 80 : index
    %c0_37 = arith.constant 0 : index
    %133 = vector.load %arg1[%c80, %c0_37] : memref<3568x128xf32, #tpu.memory_space<vmem>>, vector<32x32xf32>
    %cst_38 = arith.constant dense<0.000000e+00> : vector<56x32xf32>
    %134 = tpu.matmul %125, %133, %cst_38 {dimension_numbers = #tpu.dot_dimension_numbers<[1], [0], [0], [1], [0, 0, 1, 1], [], []>} : vector<56x32xf32>, vector<32x32xf32>, vector<56x32xf32> -> vector<56x32xf32>
    %135 = arith.addf %132, %134 : vector<56x32xf32>
    %c55_i32_39 = arith.constant 55 : i32
    %136 = tpu.dynamic_rotate %125 by %c55_i32_39 dim 0 : vector<56x32xf32>, i32 -> vector<56x32xf32>
    %c112 = arith.constant 112 : index
    %c0_40 = arith.constant 0 : index
    %137 = vector.load %arg1[%c112, %c0_40] : memref<3568x128xf32, #tpu.memory_space<vmem>>, vector<32x32xf32>
    %cst_41 = arith.constant dense<0.000000e+00> : vector<56x32xf32>
    %138 = tpu.matmul %136, %137, %cst_41 {dimension_numbers = #tpu.dot_dimension_numbers<[1], [0], [0], [1], [0, 0, 1, 1], [], []>} : vector<56x32xf32>, vector<32x32xf32>, vector<56x32xf32> -> vector<56x32xf32>
    %139 = arith.addf %135, %138 : vector<56x32xf32>
    %c54_i32_42 = arith.constant 54 : i32
    %140 = tpu.dynamic_rotate %125 by %c54_i32_42 dim 0 : vector<56x32xf32>, i32 -> vector<56x32xf32>
    %c144 = arith.constant 144 : index
    %c0_43 = arith.constant 0 : index
    %141 = vector.load %arg1[%c144, %c0_43] : memref<3568x128xf32, #tpu.memory_space<vmem>>, vector<32x32xf32>
    %cst_44 = arith.constant dense<0.000000e+00> : vector<56x32xf32>
    %142 = tpu.matmul %140, %141, %cst_44 {dimension_numbers = #tpu.dot_dimension_numbers<[1], [0], [0], [1], [0, 0, 1, 1], [], []>} : vector<56x32xf32>, vector<32x32xf32>, vector<56x32xf32> -> vector<56x32xf32>
    %143 = arith.addf %139, %142 : vector<56x32xf32>
    %c4 = arith.constant 4 : index
    %c0_45 = arith.constant 0 : index
    %144 = vector.load %arg2[%c4, %c0_45] : memref<32x128xf32, #tpu.memory_space<vmem>>, vector<1x32xf32>
    %c5 = arith.constant 5 : index
    %c0_46 = arith.constant 0 : index
    %145 = vector.load %arg2[%c5, %c0_46] : memref<32x128xf32, #tpu.memory_space<vmem>>, vector<1x32xf32>
    %146 = vector.broadcast %19 : vector<56x1xf32> to vector<56x32xf32>
    %147 = arith.mulf %143, %146 : vector<56x32xf32>
    %cst_47 = arith.constant dense<0.000000e+00> : vector<32xf32>
    %148 = vector.multi_reduction <add>, %147, %cst_47 [0] : vector<56x32xf32> to vector<32xf32>
    %149 = vector.shape_cast %148 : vector<32xf32> to vector<1x32xf32>
    %cst_48 = arith.constant 3.125000e-02 : f32
    %150 = vector.broadcast %cst_48 : f32 to vector<1x32xf32>
    %151 = arith.mulf %149, %150 : vector<1x32xf32>
    %152 = vector.broadcast %151 : vector<1x32xf32> to vector<56x32xf32>
    %153 = arith.subf %143, %152 : vector<56x32xf32>
    %154 = vector.broadcast %19 : vector<56x1xf32> to vector<56x32xf32>
    %155 = arith.mulf %153, %154 : vector<56x32xf32>
    %156 = arith.mulf %155, %155 : vector<56x32xf32>
    %cst_49 = arith.constant dense<0.000000e+00> : vector<32xf32>
    %157 = vector.multi_reduction <add>, %156, %cst_49 [0] : vector<56x32xf32> to vector<32xf32>
    %158 = vector.shape_cast %157 : vector<32xf32> to vector<1x32xf32>
    %cst_50 = arith.constant 3.125000e-02 : f32
    %159 = vector.broadcast %cst_50 : f32 to vector<1x32xf32>
    %160 = arith.mulf %158, %159 : vector<1x32xf32>
    %cst_51 = arith.constant 9.99999974E-6 : f32
    %161 = vector.broadcast %cst_51 : f32 to vector<1x32xf32>
    %162 = arith.addf %160, %161 : vector<1x32xf32>
    %163 = math.rsqrt %162 : vector<1x32xf32>
    %164 = arith.mulf %163, %144 : vector<1x32xf32>
    %165 = vector.broadcast %164 : vector<1x32xf32> to vector<56x32xf32>
    %166 = arith.mulf %155, %165 : vector<56x32xf32>
    %167 = vector.broadcast %145 : vector<1x32xf32> to vector<56x32xf32>
    %168 = arith.addf %166, %167 : vector<56x32xf32>
    %cst_52 = arith.constant 0.000000e+00 : f32
    %169 = vector.broadcast %cst_52 : f32 to vector<56x32xf32>
    %170 = arith.maximumf %168, %169 : vector<56x32xf32>
    %171 = vector.broadcast %19 : vector<56x1xf32> to vector<56x32xf32>
    %172 = arith.mulf %170, %171 : vector<56x32xf32>
    %c2_i32_53 = arith.constant 2 : i32
    %173 = tpu.dynamic_rotate %172 by %c2_i32_53 dim 0 : vector<56x32xf32>, i32 -> vector<56x32xf32>
    %c176 = arith.constant 176 : index
    %c0_54 = arith.constant 0 : index
    %174 = vector.load %arg1[%c176, %c0_54] : memref<3568x128xf32, #tpu.memory_space<vmem>>, vector<32x32xf32>
    %cst_55 = arith.constant dense<0.000000e+00> : vector<56x32xf32>
    %175 = tpu.matmul %173, %174, %cst_55 {dimension_numbers = #tpu.dot_dimension_numbers<[1], [0], [0], [1], [0, 0, 1, 1], [], []>} : vector<56x32xf32>, vector<32x32xf32>, vector<56x32xf32> -> vector<56x32xf32>
    %c1_i32_56 = arith.constant 1 : i32
    %176 = tpu.dynamic_rotate %172 by %c1_i32_56 dim 0 : vector<56x32xf32>, i32 -> vector<56x32xf32>
    %c208 = arith.constant 208 : index
    %c0_57 = arith.constant 0 : index
    %177 = vector.load %arg1[%c208, %c0_57] : memref<3568x128xf32, #tpu.memory_space<vmem>>, vector<32x32xf32>
    %cst_58 = arith.constant dense<0.000000e+00> : vector<56x32xf32>
    %178 = tpu.matmul %176, %177, %cst_58 {dimension_numbers = #tpu.dot_dimension_numbers<[1], [0], [0], [1], [0, 0, 1, 1], [], []>} : vector<56x32xf32>, vector<32x32xf32>, vector<56x32xf32> -> vector<56x32xf32>
    %179 = arith.addf %175, %178 : vector<56x32xf32>
    %c240 = arith.constant 240 : index
    %c0_59 = arith.constant 0 : index
    %180 = vector.load %arg1[%c240, %c0_59] : memref<3568x128xf32, #tpu.memory_space<vmem>>, vector<32x32xf32>
    %cst_60 = arith.constant dense<0.000000e+00> : vector<56x32xf32>
    %181 = tpu.matmul %172, %180, %cst_60 {dimension_numbers = #tpu.dot_dimension_numbers<[1], [0], [0], [1], [0, 0, 1, 1], [], []>} : vector<56x32xf32>, vector<32x32xf32>, vector<56x32xf32> -> vector<56x32xf32>
    %182 = arith.addf %179, %181 : vector<56x32xf32>
    %c55_i32_61 = arith.constant 55 : i32
    %183 = tpu.dynamic_rotate %172 by %c55_i32_61 dim 0 : vector<56x32xf32>, i32 -> vector<56x32xf32>
    %c272 = arith.constant 272 : index
    %c0_62 = arith.constant 0 : index
    %184 = vector.load %arg1[%c272, %c0_62] : memref<3568x128xf32, #tpu.memory_space<vmem>>, vector<32x32xf32>
    %cst_63 = arith.constant dense<0.000000e+00> : vector<56x32xf32>
    %185 = tpu.matmul %183, %184, %cst_63 {dimension_numbers = #tpu.dot_dimension_numbers<[1], [0], [0], [1], [0, 0, 1, 1], [], []>} : vector<56x32xf32>, vector<32x32xf32>, vector<56x32xf32> -> vector<56x32xf32>
    %186 = arith.addf %182, %185 : vector<56x32xf32>
    %c54_i32_64 = arith.constant 54 : i32
    %187 = tpu.dynamic_rotate %172 by %c54_i32_64 dim 0 : vector<56x32xf32>, i32 -> vector<56x32xf32>
    %c304 = arith.constant 304 : index
    %c0_65 = arith.constant 0 : index
    %188 = vector.load %arg1[%c304, %c0_65] : memref<3568x128xf32, #tpu.memory_space<vmem>>, vector<32x32xf32>
    %cst_66 = arith.constant dense<0.000000e+00> : vector<56x32xf32>
    %189 = tpu.matmul %187, %188, %cst_66 {dimension_numbers = #tpu.dot_dimension_numbers<[1], [0], [0], [1], [0, 0, 1, 1], [], []>} : vector<56x32xf32>, vector<32x32xf32>, vector<56x32xf32> -> vector<56x32xf32>
    %190 = arith.addf %186, %189 : vector<56x32xf32>
    %c6 = arith.constant 6 : index
    %c0_67 = arith.constant 0 : index
    %191 = vector.load %arg2[%c6, %c0_67] : memref<32x128xf32, #tpu.memory_space<vmem>>, vector<1x32xf32>
    %c7 = arith.constant 7 : index
    %c0_68 = arith.constant 0 : index
    %192 = vector.load %arg2[%c7, %c0_68] : memref<32x128xf32, #tpu.memory_space<vmem>>, vector<1x32xf32>
    %193 = vector.broadcast %19 : vector<56x1xf32> to vector<56x32xf32>
    %194 = arith.mulf %190, %193 : vector<56x32xf32>
    %cst_69 = arith.constant dense<0.000000e+00> : vector<32xf32>
    %195 = vector.multi_reduction <add>, %194, %cst_69 [0] : vector<56x32xf32> to vector<32xf32>
    %196 = vector.shape_cast %195 : vector<32xf32> to vector<1x32xf32>
    %cst_70 = arith.constant 3.125000e-02 : f32
    %197 = vector.broadcast %cst_70 : f32 to vector<1x32xf32>
    %198 = arith.mulf %196, %197 : vector<1x32xf32>
    %199 = vector.broadcast %198 : vector<1x32xf32> to vector<56x32xf32>
    %200 = arith.subf %190, %199 : vector<56x32xf32>
    %201 = vector.broadcast %19 : vector<56x1xf32> to vector<56x32xf32>
    %202 = arith.mulf %200, %201 : vector<56x32xf32>
    %203 = arith.mulf %202, %202 : vector<56x32xf32>
    %cst_71 = arith.constant dense<0.000000e+00> : vector<32xf32>
    %204 = vector.multi_reduction <add>, %203, %cst_71 [0] : vector<56x32xf32> to vector<32xf32>
    %205 = vector.shape_cast %204 : vector<32xf32> to vector<1x32xf32>
    %cst_72 = arith.constant 3.125000e-02 : f32
    %206 = vector.broadcast %cst_72 : f32 to vector<1x32xf32>
    %207 = arith.mulf %205, %206 : vector<1x32xf32>
    %cst_73 = arith.constant 9.99999974E-6 : f32
    %208 = vector.broadcast %cst_73 : f32 to vector<1x32xf32>
    %209 = arith.addf %207, %208 : vector<1x32xf32>
    %210 = math.rsqrt %209 : vector<1x32xf32>
    %211 = arith.mulf %210, %191 : vector<1x32xf32>
    %212 = vector.broadcast %211 : vector<1x32xf32> to vector<56x32xf32>
    %213 = arith.mulf %202, %212 : vector<56x32xf32>
    %214 = vector.broadcast %192 : vector<1x32xf32> to vector<56x32xf32>
    %215 = arith.addf %213, %214 : vector<56x32xf32>
    %216 = vector.broadcast %19 : vector<56x1xf32> to vector<56x32xf32>
    %217 = arith.mulf %215, %216 : vector<56x32xf32>
    %218 = arith.addf %217, %50 : vector<56x32xf32>
    %cst_74 = arith.constant 0.000000e+00 : f32
    %219 = vector.broadcast %cst_74 : f32 to vector<56x32xf32>
    %220 = arith.maximumf %218, %219 : vector<56x32xf32>
    %c55_i32_75 = arith.constant 55 : i32
    %221 = tpu.dynamic_rotate %220 by %c55_i32_75 dim 0 : vector<56x32xf32>, i32 -> vector<56x32xf32>
    %c8_i32_76 = arith.constant 8 : i32
    %222 = vector.broadcast %c8_i32_76 : i32 to vector<56x1xi32>
    %223 = arith.cmpi sge, %6, %222 : vector<56x1xi32>
    %c23_i32 = arith.constant 23 : i32
    %224 = vector.broadcast %c23_i32 : i32 to vector<56x1xi32>
    %225 = arith.cmpi slt, %6, %224 : vector<56x1xi32>
    %226 = arith.andi %223, %225 : vector<56x1xi1>
    %c32_i32_77 = arith.constant 32 : i32
    %227 = vector.broadcast %c32_i32_77 : i32 to vector<56x1xi32>
    %228 = arith.cmpi sge, %6, %227 : vector<56x1xi32>
    %c47_i32 = arith.constant 47 : i32
    %229 = vector.broadcast %c47_i32 : i32 to vector<56x1xi32>
    %230 = arith.cmpi slt, %6, %229 : vector<56x1xi32>
    %231 = arith.andi %228, %230 : vector<56x1xi1>
    %232 = arith.ori %226, %231 : vector<56x1xi1>
    %233 = arith.extui %232 : vector<56x1xi1> to vector<56x1xi32>
    %234 = arith.sitofp %233 : vector<56x1xi32> to vector<56x1xf32>
    %235 = arith.addf %220, %221 : vector<56x32xf32>
    %cst_78 = arith.constant 5.000000e-01 : f32
    %236 = vector.broadcast %cst_78 : f32 to vector<56x32xf32>
    %237 = arith.mulf %236, %235 : vector<56x32xf32>
    %238 = vector.broadcast %234 : vector<56x1xf32> to vector<56x32xf32>
    %239 = arith.mulf %237, %238 : vector<56x32xf32>
    %c336 = arith.constant 336 : index
    %c0_79 = arith.constant 0 : index
    %240 = vector.load %arg1[%c336, %c0_79] : memref<3568x128xf32, #tpu.memory_space<vmem>>, vector<32x64xf32>
    %cst_80 = arith.constant dense<0.000000e+00> : vector<56x64xf32>
    %241 = tpu.matmul %239, %240, %cst_80 {dimension_numbers = #tpu.dot_dimension_numbers<[1], [0], [0], [1], [0, 0, 1, 1], [], []>} : vector<56x32xf32>, vector<32x64xf32>, vector<56x64xf32> -> vector<56x64xf32>
    %c8_81 = arith.constant 8 : index
    %c0_82 = arith.constant 0 : index
    %242 = vector.load %arg2[%c8_81, %c0_82] : memref<32x128xf32, #tpu.memory_space<vmem>>, vector<1x64xf32>
    %c9_83 = arith.constant 9 : index
    %c0_84 = arith.constant 0 : index
    %243 = vector.load %arg2[%c9_83, %c0_84] : memref<32x128xf32, #tpu.memory_space<vmem>>, vector<1x64xf32>
    %244 = vector.broadcast %234 : vector<56x1xf32> to vector<56x64xf32>
    %245 = arith.mulf %241, %244 : vector<56x64xf32>
    %cst_85 = arith.constant dense<0.000000e+00> : vector<64xf32>
    %246 = vector.multi_reduction <add>, %245, %cst_85 [0] : vector<56x64xf32> to vector<64xf32>
    %247 = vector.shape_cast %246 : vector<64xf32> to vector<1x64xf32>
    %cst_86 = arith.constant 0.0333333351 : f32
    %248 = vector.broadcast %cst_86 : f32 to vector<1x64xf32>
    %249 = arith.mulf %247, %248 : vector<1x64xf32>
    %250 = vector.broadcast %249 : vector<1x64xf32> to vector<56x64xf32>
    %251 = arith.subf %241, %250 : vector<56x64xf32>
    %252 = vector.broadcast %234 : vector<56x1xf32> to vector<56x64xf32>
    %253 = arith.mulf %251, %252 : vector<56x64xf32>
    %254 = arith.mulf %253, %253 : vector<56x64xf32>
    %cst_87 = arith.constant dense<0.000000e+00> : vector<64xf32>
    %255 = vector.multi_reduction <add>, %254, %cst_87 [0] : vector<56x64xf32> to vector<64xf32>
    %256 = vector.shape_cast %255 : vector<64xf32> to vector<1x64xf32>
    %cst_88 = arith.constant 0.0333333351 : f32
    %257 = vector.broadcast %cst_88 : f32 to vector<1x64xf32>
    %258 = arith.mulf %256, %257 : vector<1x64xf32>
    %cst_89 = arith.constant 9.99999974E-6 : f32
    %259 = vector.broadcast %cst_89 : f32 to vector<1x64xf32>
    %260 = arith.addf %258, %259 : vector<1x64xf32>
    %261 = math.rsqrt %260 : vector<1x64xf32>
    %262 = arith.mulf %261, %242 : vector<1x64xf32>
    %263 = vector.broadcast %262 : vector<1x64xf32> to vector<56x64xf32>
    %264 = arith.mulf %253, %263 : vector<56x64xf32>
    %265 = vector.broadcast %243 : vector<1x64xf32> to vector<56x64xf32>
    %266 = arith.addf %264, %265 : vector<56x64xf32>
    %267 = vector.broadcast %234 : vector<56x1xf32> to vector<56x64xf32>
    %268 = arith.mulf %266, %267 : vector<56x64xf32>
    %c3_i32_90 = arith.constant 3 : i32
    %269 = tpu.dynamic_rotate %239 by %c3_i32_90 dim 0 : vector<56x32xf32>, i32 -> vector<56x32xf32>
    %c368 = arith.constant 368 : index
    %c0_91 = arith.constant 0 : index
    %270 = vector.load %arg1[%c368, %c0_91] : memref<3568x128xf32, #tpu.memory_space<vmem>>, vector<32x64xf32>
    %cst_92 = arith.constant dense<0.000000e+00> : vector<56x64xf32>
    %271 = tpu.matmul %269, %270, %cst_92 {dimension_numbers = #tpu.dot_dimension_numbers<[1], [0], [0], [1], [0, 0, 1, 1], [], []>} : vector<56x32xf32>, vector<32x64xf32>, vector<56x64xf32> -> vector<56x64xf32>
    %c2_i32_93 = arith.constant 2 : i32
    %272 = tpu.dynamic_rotate %239 by %c2_i32_93 dim 0 : vector<56x32xf32>, i32 -> vector<56x32xf32>
    %c400 = arith.constant 400 : index
    %c0_94 = arith.constant 0 : index
    %273 = vector.load %arg1[%c400, %c0_94] : memref<3568x128xf32, #tpu.memory_space<vmem>>, vector<32x64xf32>
    %cst_95 = arith.constant dense<0.000000e+00> : vector<56x64xf32>
    %274 = tpu.matmul %272, %273, %cst_95 {dimension_numbers = #tpu.dot_dimension_numbers<[1], [0], [0], [1], [0, 0, 1, 1], [], []>} : vector<56x32xf32>, vector<32x64xf32>, vector<56x64xf32> -> vector<56x64xf32>
    %275 = arith.addf %271, %274 : vector<56x64xf32>
    %c1_i32_96 = arith.constant 1 : i32
    %276 = tpu.dynamic_rotate %239 by %c1_i32_96 dim 0 : vector<56x32xf32>, i32 -> vector<56x32xf32>
    %c432 = arith.constant 432 : index
    %c0_97 = arith.constant 0 : index
    %277 = vector.load %arg1[%c432, %c0_97] : memref<3568x128xf32, #tpu.memory_space<vmem>>, vector<32x64xf32>
    %cst_98 = arith.constant dense<0.000000e+00> : vector<56x64xf32>
    %278 = tpu.matmul %276, %277, %cst_98 {dimension_numbers = #tpu.dot_dimension_numbers<[1], [0], [0], [1], [0, 0, 1, 1], [], []>} : vector<56x32xf32>, vector<32x64xf32>, vector<56x64xf32> -> vector<56x64xf32>
    %279 = arith.addf %275, %278 : vector<56x64xf32>
    %c464 = arith.constant 464 : index
    %c0_99 = arith.constant 0 : index
    %280 = vector.load %arg1[%c464, %c0_99] : memref<3568x128xf32, #tpu.memory_space<vmem>>, vector<32x64xf32>
    %cst_100 = arith.constant dense<0.000000e+00> : vector<56x64xf32>
    %281 = tpu.matmul %239, %280, %cst_100 {dimension_numbers = #tpu.dot_dimension_numbers<[1], [0], [0], [1], [0, 0, 1, 1], [], []>} : vector<56x32xf32>, vector<32x64xf32>, vector<56x64xf32> -> vector<56x64xf32>
    %282 = arith.addf %279, %281 : vector<56x64xf32>
    %c55_i32_101 = arith.constant 55 : i32
    %283 = tpu.dynamic_rotate %239 by %c55_i32_101 dim 0 : vector<56x32xf32>, i32 -> vector<56x32xf32>
    %c496 = arith.constant 496 : index
    %c0_102 = arith.constant 0 : index
    %284 = vector.load %arg1[%c496, %c0_102] : memref<3568x128xf32, #tpu.memory_space<vmem>>, vector<32x64xf32>
    %cst_103 = arith.constant dense<0.000000e+00> : vector<56x64xf32>
    %285 = tpu.matmul %283, %284, %cst_103 {dimension_numbers = #tpu.dot_dimension_numbers<[1], [0], [0], [1], [0, 0, 1, 1], [], []>} : vector<56x32xf32>, vector<32x64xf32>, vector<56x64xf32> -> vector<56x64xf32>
    %286 = arith.addf %282, %285 : vector<56x64xf32>
    %c54_i32_104 = arith.constant 54 : i32
    %287 = tpu.dynamic_rotate %239 by %c54_i32_104 dim 0 : vector<56x32xf32>, i32 -> vector<56x32xf32>
    %c528 = arith.constant 528 : index
    %c0_105 = arith.constant 0 : index
    %288 = vector.load %arg1[%c528, %c0_105] : memref<3568x128xf32, #tpu.memory_space<vmem>>, vector<32x64xf32>
    %cst_106 = arith.constant dense<0.000000e+00> : vector<56x64xf32>
    %289 = tpu.matmul %287, %288, %cst_106 {dimension_numbers = #tpu.dot_dimension_numbers<[1], [0], [0], [1], [0, 0, 1, 1], [], []>} : vector<56x32xf32>, vector<32x64xf32>, vector<56x64xf32> -> vector<56x64xf32>
    %290 = arith.addf %286, %289 : vector<56x64xf32>
    %c53_i32_107 = arith.constant 53 : i32
    %291 = tpu.dynamic_rotate %239 by %c53_i32_107 dim 0 : vector<56x32xf32>, i32 -> vector<56x32xf32>
    %c560 = arith.constant 560 : index
    %c0_108 = arith.constant 0 : index
    %292 = vector.load %arg1[%c560, %c0_108] : memref<3568x128xf32, #tpu.memory_space<vmem>>, vector<32x64xf32>
    %cst_109 = arith.constant dense<0.000000e+00> : vector<56x64xf32>
    %293 = tpu.matmul %291, %292, %cst_109 {dimension_numbers = #tpu.dot_dimension_numbers<[1], [0], [0], [1], [0, 0, 1, 1], [], []>} : vector<56x32xf32>, vector<32x64xf32>, vector<56x64xf32> -> vector<56x64xf32>
    %294 = arith.addf %290, %293 : vector<56x64xf32>
    %c52_i32_110 = arith.constant 52 : i32
    %295 = tpu.dynamic_rotate %239 by %c52_i32_110 dim 0 : vector<56x32xf32>, i32 -> vector<56x32xf32>
    %c592 = arith.constant 592 : index
    %c0_111 = arith.constant 0 : index
    %296 = vector.load %arg1[%c592, %c0_111] : memref<3568x128xf32, #tpu.memory_space<vmem>>, vector<32x64xf32>
    %cst_112 = arith.constant dense<0.000000e+00> : vector<56x64xf32>
    %297 = tpu.matmul %295, %296, %cst_112 {dimension_numbers = #tpu.dot_dimension_numbers<[1], [0], [0], [1], [0, 0, 1, 1], [], []>} : vector<56x32xf32>, vector<32x64xf32>, vector<56x64xf32> -> vector<56x64xf32>
    %298 = arith.addf %294, %297 : vector<56x64xf32>
    %c10_113 = arith.constant 10 : index
    %c0_114 = arith.constant 0 : index
    %299 = vector.load %arg2[%c10_113, %c0_114] : memref<32x128xf32, #tpu.memory_space<vmem>>, vector<1x64xf32>
    %c11_115 = arith.constant 11 : index
    %c0_116 = arith.constant 0 : index
    %300 = vector.load %arg2[%c11_115, %c0_116] : memref<32x128xf32, #tpu.memory_space<vmem>>, vector<1x64xf32>
    %301 = vector.broadcast %234 : vector<56x1xf32> to vector<56x64xf32>
    %302 = arith.mulf %298, %301 : vector<56x64xf32>
    %cst_117 = arith.constant dense<0.000000e+00> : vector<64xf32>
    %303 = vector.multi_reduction <add>, %302, %cst_117 [0] : vector<56x64xf32> to vector<64xf32>
    %304 = vector.shape_cast %303 : vector<64xf32> to vector<1x64xf32>
    %cst_118 = arith.constant 0.0333333351 : f32
    %305 = vector.broadcast %cst_118 : f32 to vector<1x64xf32>
    %306 = arith.mulf %304, %305 : vector<1x64xf32>
    %307 = vector.broadcast %306 : vector<1x64xf32> to vector<56x64xf32>
    %308 = arith.subf %298, %307 : vector<56x64xf32>
    %309 = vector.broadcast %234 : vector<56x1xf32> to vector<56x64xf32>
    %310 = arith.mulf %308, %309 : vector<56x64xf32>
    %311 = arith.mulf %310, %310 : vector<56x64xf32>
    %cst_119 = arith.constant dense<0.000000e+00> : vector<64xf32>
    %312 = vector.multi_reduction <add>, %311, %cst_119 [0] : vector<56x64xf32> to vector<64xf32>
    %313 = vector.shape_cast %312 : vector<64xf32> to vector<1x64xf32>
    %cst_120 = arith.constant 0.0333333351 : f32
    %314 = vector.broadcast %cst_120 : f32 to vector<1x64xf32>
    %315 = arith.mulf %313, %314 : vector<1x64xf32>
    %cst_121 = arith.constant 9.99999974E-6 : f32
    %316 = vector.broadcast %cst_121 : f32 to vector<1x64xf32>
    %317 = arith.addf %315, %316 : vector<1x64xf32>
    %318 = math.rsqrt %317 : vector<1x64xf32>
    %319 = arith.mulf %318, %299 : vector<1x64xf32>
    %320 = vector.broadcast %319 : vector<1x64xf32> to vector<56x64xf32>
    %321 = arith.mulf %310, %320 : vector<56x64xf32>
    %322 = vector.broadcast %300 : vector<1x64xf32> to vector<56x64xf32>
    %323 = arith.addf %321, %322 : vector<56x64xf32>
    %cst_122 = arith.constant 0.000000e+00 : f32
    %324 = vector.broadcast %cst_122 : f32 to vector<56x64xf32>
    %325 = arith.maximumf %323, %324 : vector<56x64xf32>
    %326 = vector.broadcast %234 : vector<56x1xf32> to vector<56x64xf32>
    %327 = arith.mulf %325, %326 : vector<56x64xf32>
    %c2_i32_123 = arith.constant 2 : i32
    %328 = tpu.dynamic_rotate %327 by %c2_i32_123 dim 0 : vector<56x64xf32>, i32 -> vector<56x64xf32>
    %c624 = arith.constant 624 : index
    %c0_124 = arith.constant 0 : index
    %329 = vector.load %arg1[%c624, %c0_124] : memref<3568x128xf32, #tpu.memory_space<vmem>>, vector<64x64xf32>
    %cst_125 = arith.constant dense<0.000000e+00> : vector<56x64xf32>
    %330 = tpu.matmul %328, %329, %cst_125 {dimension_numbers = #tpu.dot_dimension_numbers<[1], [0], [0], [1], [0, 0, 1, 1], [], []>} : vector<56x64xf32>, vector<64x64xf32>, vector<56x64xf32> -> vector<56x64xf32>
    %c1_i32_126 = arith.constant 1 : i32
    %331 = tpu.dynamic_rotate %327 by %c1_i32_126 dim 0 : vector<56x64xf32>, i32 -> vector<56x64xf32>
    %c688 = arith.constant 688 : index
    %c0_127 = arith.constant 0 : index
    %332 = vector.load %arg1[%c688, %c0_127] : memref<3568x128xf32, #tpu.memory_space<vmem>>, vector<64x64xf32>
    %cst_128 = arith.constant dense<0.000000e+00> : vector<56x64xf32>
    %333 = tpu.matmul %331, %332, %cst_128 {dimension_numbers = #tpu.dot_dimension_numbers<[1], [0], [0], [1], [0, 0, 1, 1], [], []>} : vector<56x64xf32>, vector<64x64xf32>, vector<56x64xf32> -> vector<56x64xf32>
    %334 = arith.addf %330, %333 : vector<56x64xf32>
    %c752 = arith.constant 752 : index
    %c0_129 = arith.constant 0 : index
    %335 = vector.load %arg1[%c752, %c0_129] : memref<3568x128xf32, #tpu.memory_space<vmem>>, vector<64x64xf32>
    %cst_130 = arith.constant dense<0.000000e+00> : vector<56x64xf32>
    %336 = tpu.matmul %327, %335, %cst_130 {dimension_numbers = #tpu.dot_dimension_numbers<[1], [0], [0], [1], [0, 0, 1, 1], [], []>} : vector<56x64xf32>, vector<64x64xf32>, vector<56x64xf32> -> vector<56x64xf32>
    %337 = arith.addf %334, %336 : vector<56x64xf32>
    %c55_i32_131 = arith.constant 55 : i32
    %338 = tpu.dynamic_rotate %327 by %c55_i32_131 dim 0 : vector<56x64xf32>, i32 -> vector<56x64xf32>
    %c816 = arith.constant 816 : index
    %c0_132 = arith.constant 0 : index
    %339 = vector.load %arg1[%c816, %c0_132] : memref<3568x128xf32, #tpu.memory_space<vmem>>, vector<64x64xf32>
    %cst_133 = arith.constant dense<0.000000e+00> : vector<56x64xf32>
    %340 = tpu.matmul %338, %339, %cst_133 {dimension_numbers = #tpu.dot_dimension_numbers<[1], [0], [0], [1], [0, 0, 1, 1], [], []>} : vector<56x64xf32>, vector<64x64xf32>, vector<56x64xf32> -> vector<56x64xf32>
    %341 = arith.addf %337, %340 : vector<56x64xf32>
    %c54_i32_134 = arith.constant 54 : i32
    %342 = tpu.dynamic_rotate %327 by %c54_i32_134 dim 0 : vector<56x64xf32>, i32 -> vector<56x64xf32>
    %c880 = arith.constant 880 : index
    %c0_135 = arith.constant 0 : index
    %343 = vector.load %arg1[%c880, %c0_135] : memref<3568x128xf32, #tpu.memory_space<vmem>>, vector<64x64xf32>
    %cst_136 = arith.constant dense<0.000000e+00> : vector<56x64xf32>
    %344 = tpu.matmul %342, %343, %cst_136 {dimension_numbers = #tpu.dot_dimension_numbers<[1], [0], [0], [1], [0, 0, 1, 1], [], []>} : vector<56x64xf32>, vector<64x64xf32>, vector<56x64xf32> -> vector<56x64xf32>
    %345 = arith.addf %341, %344 : vector<56x64xf32>
    %c12_137 = arith.constant 12 : index
    %c0_138 = arith.constant 0 : index
    %346 = vector.load %arg2[%c12_137, %c0_138] : memref<32x128xf32, #tpu.memory_space<vmem>>, vector<1x64xf32>
    %c13_139 = arith.constant 13 : index
    %c0_140 = arith.constant 0 : index
    %347 = vector.load %arg2[%c13_139, %c0_140] : memref<32x128xf32, #tpu.memory_space<vmem>>, vector<1x64xf32>
    %348 = vector.broadcast %234 : vector<56x1xf32> to vector<56x64xf32>
    %349 = arith.mulf %345, %348 : vector<56x64xf32>
    %cst_141 = arith.constant dense<0.000000e+00> : vector<64xf32>
    %350 = vector.multi_reduction <add>, %349, %cst_141 [0] : vector<56x64xf32> to vector<64xf32>
    %351 = vector.shape_cast %350 : vector<64xf32> to vector<1x64xf32>
    %cst_142 = arith.constant 0.0333333351 : f32
    %352 = vector.broadcast %cst_142 : f32 to vector<1x64xf32>
    %353 = arith.mulf %351, %352 : vector<1x64xf32>
    %354 = vector.broadcast %353 : vector<1x64xf32> to vector<56x64xf32>
    %355 = arith.subf %345, %354 : vector<56x64xf32>
    %356 = vector.broadcast %234 : vector<56x1xf32> to vector<56x64xf32>
    %357 = arith.mulf %355, %356 : vector<56x64xf32>
    %358 = arith.mulf %357, %357 : vector<56x64xf32>
    %cst_143 = arith.constant dense<0.000000e+00> : vector<64xf32>
    %359 = vector.multi_reduction <add>, %358, %cst_143 [0] : vector<56x64xf32> to vector<64xf32>
    %360 = vector.shape_cast %359 : vector<64xf32> to vector<1x64xf32>
    %cst_144 = arith.constant 0.0333333351 : f32
    %361 = vector.broadcast %cst_144 : f32 to vector<1x64xf32>
    %362 = arith.mulf %360, %361 : vector<1x64xf32>
    %cst_145 = arith.constant 9.99999974E-6 : f32
    %363 = vector.broadcast %cst_145 : f32 to vector<1x64xf32>
    %364 = arith.addf %362, %363 : vector<1x64xf32>
    %365 = math.rsqrt %364 : vector<1x64xf32>
    %366 = arith.mulf %365, %346 : vector<1x64xf32>
    %367 = vector.broadcast %366 : vector<1x64xf32> to vector<56x64xf32>
    %368 = arith.mulf %357, %367 : vector<56x64xf32>
    %369 = vector.broadcast %347 : vector<1x64xf32> to vector<56x64xf32>
    %370 = arith.addf %368, %369 : vector<56x64xf32>
    %cst_146 = arith.constant 0.000000e+00 : f32
    %371 = vector.broadcast %cst_146 : f32 to vector<56x64xf32>
    %372 = arith.maximumf %370, %371 : vector<56x64xf32>
    %373 = vector.broadcast %234 : vector<56x1xf32> to vector<56x64xf32>
    %374 = arith.mulf %372, %373 : vector<56x64xf32>
    %c2_i32_147 = arith.constant 2 : i32
    %375 = tpu.dynamic_rotate %374 by %c2_i32_147 dim 0 : vector<56x64xf32>, i32 -> vector<56x64xf32>
    %c944 = arith.constant 944 : index
    %c0_148 = arith.constant 0 : index
    %376 = vector.load %arg1[%c944, %c0_148] : memref<3568x128xf32, #tpu.memory_space<vmem>>, vector<64x64xf32>
    %cst_149 = arith.constant dense<0.000000e+00> : vector<56x64xf32>
    %377 = tpu.matmul %375, %376, %cst_149 {dimension_numbers = #tpu.dot_dimension_numbers<[1], [0], [0], [1], [0, 0, 1, 1], [], []>} : vector<56x64xf32>, vector<64x64xf32>, vector<56x64xf32> -> vector<56x64xf32>
    %c1_i32_150 = arith.constant 1 : i32
    %378 = tpu.dynamic_rotate %374 by %c1_i32_150 dim 0 : vector<56x64xf32>, i32 -> vector<56x64xf32>
    %c1008 = arith.constant 1008 : index
    %c0_151 = arith.constant 0 : index
    %379 = vector.load %arg1[%c1008, %c0_151] : memref<3568x128xf32, #tpu.memory_space<vmem>>, vector<64x64xf32>
    %cst_152 = arith.constant dense<0.000000e+00> : vector<56x64xf32>
    %380 = tpu.matmul %378, %379, %cst_152 {dimension_numbers = #tpu.dot_dimension_numbers<[1], [0], [0], [1], [0, 0, 1, 1], [], []>} : vector<56x64xf32>, vector<64x64xf32>, vector<56x64xf32> -> vector<56x64xf32>
    %381 = arith.addf %377, %380 : vector<56x64xf32>
    %c1072 = arith.constant 1072 : index
    %c0_153 = arith.constant 0 : index
    %382 = vector.load %arg1[%c1072, %c0_153] : memref<3568x128xf32, #tpu.memory_space<vmem>>, vector<64x64xf32>
    %cst_154 = arith.constant dense<0.000000e+00> : vector<56x64xf32>
    %383 = tpu.matmul %374, %382, %cst_154 {dimension_numbers = #tpu.dot_dimension_numbers<[1], [0], [0], [1], [0, 0, 1, 1], [], []>} : vector<56x64xf32>, vector<64x64xf32>, vector<56x64xf32> -> vector<56x64xf32>
    %384 = arith.addf %381, %383 : vector<56x64xf32>
    %c55_i32_155 = arith.constant 55 : i32
    %385 = tpu.dynamic_rotate %374 by %c55_i32_155 dim 0 : vector<56x64xf32>, i32 -> vector<56x64xf32>
    %c1136 = arith.constant 1136 : index
    %c0_156 = arith.constant 0 : index
    %386 = vector.load %arg1[%c1136, %c0_156] : memref<3568x128xf32, #tpu.memory_space<vmem>>, vector<64x64xf32>
    %cst_157 = arith.constant dense<0.000000e+00> : vector<56x64xf32>
    %387 = tpu.matmul %385, %386, %cst_157 {dimension_numbers = #tpu.dot_dimension_numbers<[1], [0], [0], [1], [0, 0, 1, 1], [], []>} : vector<56x64xf32>, vector<64x64xf32>, vector<56x64xf32> -> vector<56x64xf32>
    %388 = arith.addf %384, %387 : vector<56x64xf32>
    %c54_i32_158 = arith.constant 54 : i32
    %389 = tpu.dynamic_rotate %374 by %c54_i32_158 dim 0 : vector<56x64xf32>, i32 -> vector<56x64xf32>
    %c1200 = arith.constant 1200 : index
    %c0_159 = arith.constant 0 : index
    %390 = vector.load %arg1[%c1200, %c0_159] : memref<3568x128xf32, #tpu.memory_space<vmem>>, vector<64x64xf32>
    %cst_160 = arith.constant dense<0.000000e+00> : vector<56x64xf32>
    %391 = tpu.matmul %389, %390, %cst_160 {dimension_numbers = #tpu.dot_dimension_numbers<[1], [0], [0], [1], [0, 0, 1, 1], [], []>} : vector<56x64xf32>, vector<64x64xf32>, vector<56x64xf32> -> vector<56x64xf32>
    %392 = arith.addf %388, %391 : vector<56x64xf32>
    %c14_161 = arith.constant 14 : index
    %c0_162 = arith.constant 0 : index
    %393 = vector.load %arg2[%c14_161, %c0_162] : memref<32x128xf32, #tpu.memory_space<vmem>>, vector<1x64xf32>
    %c15_163 = arith.constant 15 : index
    %c0_164 = arith.constant 0 : index
    %394 = vector.load %arg2[%c15_163, %c0_164] : memref<32x128xf32, #tpu.memory_space<vmem>>, vector<1x64xf32>
    %395 = vector.broadcast %234 : vector<56x1xf32> to vector<56x64xf32>
    %396 = arith.mulf %392, %395 : vector<56x64xf32>
    %cst_165 = arith.constant dense<0.000000e+00> : vector<64xf32>
    %397 = vector.multi_reduction <add>, %396, %cst_165 [0] : vector<56x64xf32> to vector<64xf32>
    %398 = vector.shape_cast %397 : vector<64xf32> to vector<1x64xf32>
    %cst_166 = arith.constant 0.0333333351 : f32
    %399 = vector.broadcast %cst_166 : f32 to vector<1x64xf32>
    %400 = arith.mulf %398, %399 : vector<1x64xf32>
    %401 = vector.broadcast %400 : vector<1x64xf32> to vector<56x64xf32>
    %402 = arith.subf %392, %401 : vector<56x64xf32>
    %403 = vector.broadcast %234 : vector<56x1xf32> to vector<56x64xf32>
    %404 = arith.mulf %402, %403 : vector<56x64xf32>
    %405 = arith.mulf %404, %404 : vector<56x64xf32>
    %cst_167 = arith.constant dense<0.000000e+00> : vector<64xf32>
    %406 = vector.multi_reduction <add>, %405, %cst_167 [0] : vector<56x64xf32> to vector<64xf32>
    %407 = vector.shape_cast %406 : vector<64xf32> to vector<1x64xf32>
    %cst_168 = arith.constant 0.0333333351 : f32
    %408 = vector.broadcast %cst_168 : f32 to vector<1x64xf32>
    %409 = arith.mulf %407, %408 : vector<1x64xf32>
    %cst_169 = arith.constant 9.99999974E-6 : f32
    %410 = vector.broadcast %cst_169 : f32 to vector<1x64xf32>
    %411 = arith.addf %409, %410 : vector<1x64xf32>
    %412 = math.rsqrt %411 : vector<1x64xf32>
    %413 = arith.mulf %412, %393 : vector<1x64xf32>
    %414 = vector.broadcast %413 : vector<1x64xf32> to vector<56x64xf32>
    %415 = arith.mulf %404, %414 : vector<56x64xf32>
    %416 = vector.broadcast %394 : vector<1x64xf32> to vector<56x64xf32>
    %417 = arith.addf %415, %416 : vector<56x64xf32>
    %418 = vector.broadcast %234 : vector<56x1xf32> to vector<56x64xf32>
    %419 = arith.mulf %417, %418 : vector<56x64xf32>
    %420 = arith.addf %419, %268 : vector<56x64xf32>
    %cst_170 = arith.constant 0.000000e+00 : f32
    %421 = vector.broadcast %cst_170 : f32 to vector<56x64xf32>
    %422 = arith.maximumf %420, %421 : vector<56x64xf32>
    %c55_i32_171 = arith.constant 55 : i32
    %423 = tpu.dynamic_rotate %422 by %c55_i32_171 dim 0 : vector<56x64xf32>, i32 -> vector<56x64xf32>
    %c8_i32_172 = arith.constant 8 : i32
    %424 = vector.broadcast %c8_i32_172 : i32 to vector<56x1xi32>
    %425 = arith.cmpi sge, %6, %424 : vector<56x1xi32>
    %c22_i32 = arith.constant 22 : i32
    %426 = vector.broadcast %c22_i32 : i32 to vector<56x1xi32>
    %427 = arith.cmpi slt, %6, %426 : vector<56x1xi32>
    %428 = arith.andi %425, %427 : vector<56x1xi1>
    %c32_i32_173 = arith.constant 32 : i32
    %429 = vector.broadcast %c32_i32_173 : i32 to vector<56x1xi32>
    %430 = arith.cmpi sge, %6, %429 : vector<56x1xi32>
    %c46_i32 = arith.constant 46 : i32
    %431 = vector.broadcast %c46_i32 : i32 to vector<56x1xi32>
    %432 = arith.cmpi slt, %6, %431 : vector<56x1xi32>
    %433 = arith.andi %430, %432 : vector<56x1xi1>
    %434 = arith.ori %428, %433 : vector<56x1xi1>
    %435 = arith.extui %434 : vector<56x1xi1> to vector<56x1xi32>
    %436 = arith.sitofp %435 : vector<56x1xi32> to vector<56x1xf32>
    %437 = arith.addf %422, %423 : vector<56x64xf32>
    %cst_174 = arith.constant 5.000000e-01 : f32
    %438 = vector.broadcast %cst_174 : f32 to vector<56x64xf32>
    %439 = arith.mulf %438, %437 : vector<56x64xf32>
    %440 = vector.broadcast %436 : vector<56x1xf32> to vector<56x64xf32>
    %441 = arith.mulf %439, %440 : vector<56x64xf32>
    %c16_175 = arith.constant 16 : index
    %c0_176 = arith.constant 0 : index
    %442 = vector.load %arg2[%c16_175, %c0_176] : memref<32x128xf32, #tpu.memory_space<vmem>>, vector<1x64xf32>
    %c17 = arith.constant 17 : index
    %c0_177 = arith.constant 0 : index
    %443 = vector.load %arg2[%c17, %c0_177] : memref<32x128xf32, #tpu.memory_space<vmem>>, vector<1x64xf32>
    %444 = vector.broadcast %436 : vector<56x1xf32> to vector<56x64xf32>
    %445 = arith.mulf %441, %444 : vector<56x64xf32>
    %cst_178 = arith.constant dense<0.000000e+00> : vector<64xf32>
    %446 = vector.multi_reduction <add>, %445, %cst_178 [0] : vector<56x64xf32> to vector<64xf32>
    %447 = vector.shape_cast %446 : vector<64xf32> to vector<1x64xf32>
    %cst_179 = arith.constant 0.0357142873 : f32
    %448 = vector.broadcast %cst_179 : f32 to vector<1x64xf32>
    %449 = arith.mulf %447, %448 : vector<1x64xf32>
    %450 = vector.broadcast %449 : vector<1x64xf32> to vector<56x64xf32>
    %451 = arith.subf %441, %450 : vector<56x64xf32>
    %452 = vector.broadcast %436 : vector<56x1xf32> to vector<56x64xf32>
    %453 = arith.mulf %451, %452 : vector<56x64xf32>
    %454 = arith.mulf %453, %453 : vector<56x64xf32>
    %cst_180 = arith.constant dense<0.000000e+00> : vector<64xf32>
    %455 = vector.multi_reduction <add>, %454, %cst_180 [0] : vector<56x64xf32> to vector<64xf32>
    %456 = vector.shape_cast %455 : vector<64xf32> to vector<1x64xf32>
    %cst_181 = arith.constant 0.0357142873 : f32
    %457 = vector.broadcast %cst_181 : f32 to vector<1x64xf32>
    %458 = arith.mulf %456, %457 : vector<1x64xf32>
    %cst_182 = arith.constant 9.99999974E-6 : f32
    %459 = vector.broadcast %cst_182 : f32 to vector<1x64xf32>
    %460 = arith.addf %458, %459 : vector<1x64xf32>
    %461 = math.rsqrt %460 : vector<1x64xf32>
    %462 = arith.mulf %461, %442 : vector<1x64xf32>
    %463 = vector.broadcast %462 : vector<1x64xf32> to vector<56x64xf32>
    %464 = arith.mulf %453, %463 : vector<56x64xf32>
    %465 = vector.broadcast %443 : vector<1x64xf32> to vector<56x64xf32>
    %466 = arith.addf %464, %465 : vector<56x64xf32>
    %467 = vector.broadcast %436 : vector<56x1xf32> to vector<56x64xf32>
    %468 = arith.mulf %466, %467 : vector<56x64xf32>
    %c3_i32_183 = arith.constant 3 : i32
    %469 = tpu.dynamic_rotate %441 by %c3_i32_183 dim 0 : vector<56x64xf32>, i32 -> vector<56x64xf32>
    %c1264 = arith.constant 1264 : index
    %c0_184 = arith.constant 0 : index
    %470 = vector.load %arg1[%c1264, %c0_184] : memref<3568x128xf32, #tpu.memory_space<vmem>>, vector<64x64xf32>
    %cst_185 = arith.constant dense<0.000000e+00> : vector<56x64xf32>
    %471 = tpu.matmul %469, %470, %cst_185 {dimension_numbers = #tpu.dot_dimension_numbers<[1], [0], [0], [1], [0, 0, 1, 1], [], []>} : vector<56x64xf32>, vector<64x64xf32>, vector<56x64xf32> -> vector<56x64xf32>
    %c2_i32_186 = arith.constant 2 : i32
    %472 = tpu.dynamic_rotate %441 by %c2_i32_186 dim 0 : vector<56x64xf32>, i32 -> vector<56x64xf32>
    %c1328 = arith.constant 1328 : index
    %c0_187 = arith.constant 0 : index
    %473 = vector.load %arg1[%c1328, %c0_187] : memref<3568x128xf32, #tpu.memory_space<vmem>>, vector<64x64xf32>
    %cst_188 = arith.constant dense<0.000000e+00> : vector<56x64xf32>
    %474 = tpu.matmul %472, %473, %cst_188 {dimension_numbers = #tpu.dot_dimension_numbers<[1], [0], [0], [1], [0, 0, 1, 1], [], []>} : vector<56x64xf32>, vector<64x64xf32>, vector<56x64xf32> -> vector<56x64xf32>
    %475 = arith.addf %471, %474 : vector<56x64xf32>
    %c1_i32_189 = arith.constant 1 : i32
    %476 = tpu.dynamic_rotate %441 by %c1_i32_189 dim 0 : vector<56x64xf32>, i32 -> vector<56x64xf32>
    %c1392 = arith.constant 1392 : index
    %c0_190 = arith.constant 0 : index
    %477 = vector.load %arg1[%c1392, %c0_190] : memref<3568x128xf32, #tpu.memory_space<vmem>>, vector<64x64xf32>
    %cst_191 = arith.constant dense<0.000000e+00> : vector<56x64xf32>
    %478 = tpu.matmul %476, %477, %cst_191 {dimension_numbers = #tpu.dot_dimension_numbers<[1], [0], [0], [1], [0, 0, 1, 1], [], []>} : vector<56x64xf32>, vector<64x64xf32>, vector<56x64xf32> -> vector<56x64xf32>
    %479 = arith.addf %475, %478 : vector<56x64xf32>
    %c1456 = arith.constant 1456 : index
    %c0_192 = arith.constant 0 : index
    %480 = vector.load %arg1[%c1456, %c0_192] : memref<3568x128xf32, #tpu.memory_space<vmem>>, vector<64x64xf32>
    %cst_193 = arith.constant dense<0.000000e+00> : vector<56x64xf32>
    %481 = tpu.matmul %441, %480, %cst_193 {dimension_numbers = #tpu.dot_dimension_numbers<[1], [0], [0], [1], [0, 0, 1, 1], [], []>} : vector<56x64xf32>, vector<64x64xf32>, vector<56x64xf32> -> vector<56x64xf32>
    %482 = arith.addf %479, %481 : vector<56x64xf32>
    %c55_i32_194 = arith.constant 55 : i32
    %483 = tpu.dynamic_rotate %441 by %c55_i32_194 dim 0 : vector<56x64xf32>, i32 -> vector<56x64xf32>
    %c1520 = arith.constant 1520 : index
    %c0_195 = arith.constant 0 : index
    %484 = vector.load %arg1[%c1520, %c0_195] : memref<3568x128xf32, #tpu.memory_space<vmem>>, vector<64x64xf32>
    %cst_196 = arith.constant dense<0.000000e+00> : vector<56x64xf32>
    %485 = tpu.matmul %483, %484, %cst_196 {dimension_numbers = #tpu.dot_dimension_numbers<[1], [0], [0], [1], [0, 0, 1, 1], [], []>} : vector<56x64xf32>, vector<64x64xf32>, vector<56x64xf32> -> vector<56x64xf32>
    %486 = arith.addf %482, %485 : vector<56x64xf32>
    %c54_i32_197 = arith.constant 54 : i32
    %487 = tpu.dynamic_rotate %441 by %c54_i32_197 dim 0 : vector<56x64xf32>, i32 -> vector<56x64xf32>
    %c1584 = arith.constant 1584 : index
    %c0_198 = arith.constant 0 : index
    %488 = vector.load %arg1[%c1584, %c0_198] : memref<3568x128xf32, #tpu.memory_space<vmem>>, vector<64x64xf32>
    %cst_199 = arith.constant dense<0.000000e+00> : vector<56x64xf32>
    %489 = tpu.matmul %487, %488, %cst_199 {dimension_numbers = #tpu.dot_dimension_numbers<[1], [0], [0], [1], [0, 0, 1, 1], [], []>} : vector<56x64xf32>, vector<64x64xf32>, vector<56x64xf32> -> vector<56x64xf32>
    %490 = arith.addf %486, %489 : vector<56x64xf32>
    %c53_i32_200 = arith.constant 53 : i32
    %491 = tpu.dynamic_rotate %441 by %c53_i32_200 dim 0 : vector<56x64xf32>, i32 -> vector<56x64xf32>
    %c1648 = arith.constant 1648 : index
    %c0_201 = arith.constant 0 : index
    %492 = vector.load %arg1[%c1648, %c0_201] : memref<3568x128xf32, #tpu.memory_space<vmem>>, vector<64x64xf32>
    %cst_202 = arith.constant dense<0.000000e+00> : vector<56x64xf32>
    %493 = tpu.matmul %491, %492, %cst_202 {dimension_numbers = #tpu.dot_dimension_numbers<[1], [0], [0], [1], [0, 0, 1, 1], [], []>} : vector<56x64xf32>, vector<64x64xf32>, vector<56x64xf32> -> vector<56x64xf32>
    %494 = arith.addf %490, %493 : vector<56x64xf32>
    %c52_i32_203 = arith.constant 52 : i32
    %495 = tpu.dynamic_rotate %441 by %c52_i32_203 dim 0 : vector<56x64xf32>, i32 -> vector<56x64xf32>
    %c1712 = arith.constant 1712 : index
    %c0_204 = arith.constant 0 : index
    %496 = vector.load %arg1[%c1712, %c0_204] : memref<3568x128xf32, #tpu.memory_space<vmem>>, vector<64x64xf32>
    %cst_205 = arith.constant dense<0.000000e+00> : vector<56x64xf32>
    %497 = tpu.matmul %495, %496, %cst_205 {dimension_numbers = #tpu.dot_dimension_numbers<[1], [0], [0], [1], [0, 0, 1, 1], [], []>} : vector<56x64xf32>, vector<64x64xf32>, vector<56x64xf32> -> vector<56x64xf32>
    %498 = arith.addf %494, %497 : vector<56x64xf32>
    %c18 = arith.constant 18 : index
    %c0_206 = arith.constant 0 : index
    %499 = vector.load %arg2[%c18, %c0_206] : memref<32x128xf32, #tpu.memory_space<vmem>>, vector<1x64xf32>
    %c19 = arith.constant 19 : index
    %c0_207 = arith.constant 0 : index
    %500 = vector.load %arg2[%c19, %c0_207] : memref<32x128xf32, #tpu.memory_space<vmem>>, vector<1x64xf32>
    %501 = vector.broadcast %436 : vector<56x1xf32> to vector<56x64xf32>
    %502 = arith.mulf %498, %501 : vector<56x64xf32>
    %cst_208 = arith.constant dense<0.000000e+00> : vector<64xf32>
    %503 = vector.multi_reduction <add>, %502, %cst_208 [0] : vector<56x64xf32> to vector<64xf32>
    %504 = vector.shape_cast %503 : vector<64xf32> to vector<1x64xf32>
    %cst_209 = arith.constant 0.0357142873 : f32
    %505 = vector.broadcast %cst_209 : f32 to vector<1x64xf32>
    %506 = arith.mulf %504, %505 : vector<1x64xf32>
    %507 = vector.broadcast %506 : vector<1x64xf32> to vector<56x64xf32>
    %508 = arith.subf %498, %507 : vector<56x64xf32>
    %509 = vector.broadcast %436 : vector<56x1xf32> to vector<56x64xf32>
    %510 = arith.mulf %508, %509 : vector<56x64xf32>
    %511 = arith.mulf %510, %510 : vector<56x64xf32>
    %cst_210 = arith.constant dense<0.000000e+00> : vector<64xf32>
    %512 = vector.multi_reduction <add>, %511, %cst_210 [0] : vector<56x64xf32> to vector<64xf32>
    %513 = vector.shape_cast %512 : vector<64xf32> to vector<1x64xf32>
    %cst_211 = arith.constant 0.0357142873 : f32
    %514 = vector.broadcast %cst_211 : f32 to vector<1x64xf32>
    %515 = arith.mulf %513, %514 : vector<1x64xf32>
    %cst_212 = arith.constant 9.99999974E-6 : f32
    %516 = vector.broadcast %cst_212 : f32 to vector<1x64xf32>
    %517 = arith.addf %515, %516 : vector<1x64xf32>
    %518 = math.rsqrt %517 : vector<1x64xf32>
    %519 = arith.mulf %518, %499 : vector<1x64xf32>
    %520 = vector.broadcast %519 : vector<1x64xf32> to vector<56x64xf32>
    %521 = arith.mulf %510, %520 : vector<56x64xf32>
    %522 = vector.broadcast %500 : vector<1x64xf32> to vector<56x64xf32>
    %523 = arith.addf %521, %522 : vector<56x64xf32>
    %cst_213 = arith.constant 0.000000e+00 : f32
    %524 = vector.broadcast %cst_213 : f32 to vector<56x64xf32>
    %525 = arith.maximumf %523, %524 : vector<56x64xf32>
    %526 = vector.broadcast %436 : vector<56x1xf32> to vector<56x64xf32>
    %527 = arith.mulf %525, %526 : vector<56x64xf32>
    %c2_i32_214 = arith.constant 2 : i32
    %528 = tpu.dynamic_rotate %527 by %c2_i32_214 dim 0 : vector<56x64xf32>, i32 -> vector<56x64xf32>
    %c1776 = arith.constant 1776 : index
    %c0_215 = arith.constant 0 : index
    %529 = vector.load %arg1[%c1776, %c0_215] : memref<3568x128xf32, #tpu.memory_space<vmem>>, vector<64x64xf32>
    %cst_216 = arith.constant dense<0.000000e+00> : vector<56x64xf32>
    %530 = tpu.matmul %528, %529, %cst_216 {dimension_numbers = #tpu.dot_dimension_numbers<[1], [0], [0], [1], [0, 0, 1, 1], [], []>} : vector<56x64xf32>, vector<64x64xf32>, vector<56x64xf32> -> vector<56x64xf32>
    %c1_i32_217 = arith.constant 1 : i32
    %531 = tpu.dynamic_rotate %527 by %c1_i32_217 dim 0 : vector<56x64xf32>, i32 -> vector<56x64xf32>
    %c1840 = arith.constant 1840 : index
    %c0_218 = arith.constant 0 : index
    %532 = vector.load %arg1[%c1840, %c0_218] : memref<3568x128xf32, #tpu.memory_space<vmem>>, vector<64x64xf32>
    %cst_219 = arith.constant dense<0.000000e+00> : vector<56x64xf32>
    %533 = tpu.matmul %531, %532, %cst_219 {dimension_numbers = #tpu.dot_dimension_numbers<[1], [0], [0], [1], [0, 0, 1, 1], [], []>} : vector<56x64xf32>, vector<64x64xf32>, vector<56x64xf32> -> vector<56x64xf32>
    %534 = arith.addf %530, %533 : vector<56x64xf32>
    %c1904 = arith.constant 1904 : index
    %c0_220 = arith.constant 0 : index
    %535 = vector.load %arg1[%c1904, %c0_220] : memref<3568x128xf32, #tpu.memory_space<vmem>>, vector<64x64xf32>
    %cst_221 = arith.constant dense<0.000000e+00> : vector<56x64xf32>
    %536 = tpu.matmul %527, %535, %cst_221 {dimension_numbers = #tpu.dot_dimension_numbers<[1], [0], [0], [1], [0, 0, 1, 1], [], []>} : vector<56x64xf32>, vector<64x64xf32>, vector<56x64xf32> -> vector<56x64xf32>
    %537 = arith.addf %534, %536 : vector<56x64xf32>
    %c55_i32_222 = arith.constant 55 : i32
    %538 = tpu.dynamic_rotate %527 by %c55_i32_222 dim 0 : vector<56x64xf32>, i32 -> vector<56x64xf32>
    %c1968 = arith.constant 1968 : index
    %c0_223 = arith.constant 0 : index
    %539 = vector.load %arg1[%c1968, %c0_223] : memref<3568x128xf32, #tpu.memory_space<vmem>>, vector<64x64xf32>
    %cst_224 = arith.constant dense<0.000000e+00> : vector<56x64xf32>
    %540 = tpu.matmul %538, %539, %cst_224 {dimension_numbers = #tpu.dot_dimension_numbers<[1], [0], [0], [1], [0, 0, 1, 1], [], []>} : vector<56x64xf32>, vector<64x64xf32>, vector<56x64xf32> -> vector<56x64xf32>
    %541 = arith.addf %537, %540 : vector<56x64xf32>
    %c54_i32_225 = arith.constant 54 : i32
    %542 = tpu.dynamic_rotate %527 by %c54_i32_225 dim 0 : vector<56x64xf32>, i32 -> vector<56x64xf32>
    %c2032 = arith.constant 2032 : index
    %c0_226 = arith.constant 0 : index
    %543 = vector.load %arg1[%c2032, %c0_226] : memref<3568x128xf32, #tpu.memory_space<vmem>>, vector<64x64xf32>
    %cst_227 = arith.constant dense<0.000000e+00> : vector<56x64xf32>
    %544 = tpu.matmul %542, %543, %cst_227 {dimension_numbers = #tpu.dot_dimension_numbers<[1], [0], [0], [1], [0, 0, 1, 1], [], []>} : vector<56x64xf32>, vector<64x64xf32>, vector<56x64xf32> -> vector<56x64xf32>
    %545 = arith.addf %541, %544 : vector<56x64xf32>
    %c20 = arith.constant 20 : index
    %c0_228 = arith.constant 0 : index
    %546 = vector.load %arg2[%c20, %c0_228] : memref<32x128xf32, #tpu.memory_space<vmem>>, vector<1x64xf32>
    %c21 = arith.constant 21 : index
    %c0_229 = arith.constant 0 : index
    %547 = vector.load %arg2[%c21, %c0_229] : memref<32x128xf32, #tpu.memory_space<vmem>>, vector<1x64xf32>
    %548 = vector.broadcast %436 : vector<56x1xf32> to vector<56x64xf32>
    %549 = arith.mulf %545, %548 : vector<56x64xf32>
    %cst_230 = arith.constant dense<0.000000e+00> : vector<64xf32>
    %550 = vector.multi_reduction <add>, %549, %cst_230 [0] : vector<56x64xf32> to vector<64xf32>
    %551 = vector.shape_cast %550 : vector<64xf32> to vector<1x64xf32>
    %cst_231 = arith.constant 0.0357142873 : f32
    %552 = vector.broadcast %cst_231 : f32 to vector<1x64xf32>
    %553 = arith.mulf %551, %552 : vector<1x64xf32>
    %554 = vector.broadcast %553 : vector<1x64xf32> to vector<56x64xf32>
    %555 = arith.subf %545, %554 : vector<56x64xf32>
    %556 = vector.broadcast %436 : vector<56x1xf32> to vector<56x64xf32>
    %557 = arith.mulf %555, %556 : vector<56x64xf32>
    %558 = arith.mulf %557, %557 : vector<56x64xf32>
    %cst_232 = arith.constant dense<0.000000e+00> : vector<64xf32>
    %559 = vector.multi_reduction <add>, %558, %cst_232 [0] : vector<56x64xf32> to vector<64xf32>
    %560 = vector.shape_cast %559 : vector<64xf32> to vector<1x64xf32>
    %cst_233 = arith.constant 0.0357142873 : f32
    %561 = vector.broadcast %cst_233 : f32 to vector<1x64xf32>
    %562 = arith.mulf %560, %561 : vector<1x64xf32>
    %cst_234 = arith.constant 9.99999974E-6 : f32
    %563 = vector.broadcast %cst_234 : f32 to vector<1x64xf32>
    %564 = arith.addf %562, %563 : vector<1x64xf32>
    %565 = math.rsqrt %564 : vector<1x64xf32>
    %566 = arith.mulf %565, %546 : vector<1x64xf32>
    %567 = vector.broadcast %566 : vector<1x64xf32> to vector<56x64xf32>
    %568 = arith.mulf %557, %567 : vector<56x64xf32>
    %569 = vector.broadcast %547 : vector<1x64xf32> to vector<56x64xf32>
    %570 = arith.addf %568, %569 : vector<56x64xf32>
    %cst_235 = arith.constant 0.000000e+00 : f32
    %571 = vector.broadcast %cst_235 : f32 to vector<56x64xf32>
    %572 = arith.maximumf %570, %571 : vector<56x64xf32>
    %573 = vector.broadcast %436 : vector<56x1xf32> to vector<56x64xf32>
    %574 = arith.mulf %572, %573 : vector<56x64xf32>
    %c2_i32_236 = arith.constant 2 : i32
    %575 = tpu.dynamic_rotate %574 by %c2_i32_236 dim 0 : vector<56x64xf32>, i32 -> vector<56x64xf32>
    %c2096 = arith.constant 2096 : index
    %c0_237 = arith.constant 0 : index
    %576 = vector.load %arg1[%c2096, %c0_237] : memref<3568x128xf32, #tpu.memory_space<vmem>>, vector<64x64xf32>
    %cst_238 = arith.constant dense<0.000000e+00> : vector<56x64xf32>
    %577 = tpu.matmul %575, %576, %cst_238 {dimension_numbers = #tpu.dot_dimension_numbers<[1], [0], [0], [1], [0, 0, 1, 1], [], []>} : vector<56x64xf32>, vector<64x64xf32>, vector<56x64xf32> -> vector<56x64xf32>
    %c1_i32_239 = arith.constant 1 : i32
    %578 = tpu.dynamic_rotate %574 by %c1_i32_239 dim 0 : vector<56x64xf32>, i32 -> vector<56x64xf32>
    %c2160 = arith.constant 2160 : index
    %c0_240 = arith.constant 0 : index
    %579 = vector.load %arg1[%c2160, %c0_240] : memref<3568x128xf32, #tpu.memory_space<vmem>>, vector<64x64xf32>
    %cst_241 = arith.constant dense<0.000000e+00> : vector<56x64xf32>
    %580 = tpu.matmul %578, %579, %cst_241 {dimension_numbers = #tpu.dot_dimension_numbers<[1], [0], [0], [1], [0, 0, 1, 1], [], []>} : vector<56x64xf32>, vector<64x64xf32>, vector<56x64xf32> -> vector<56x64xf32>
    %581 = arith.addf %577, %580 : vector<56x64xf32>
    %c2224 = arith.constant 2224 : index
    %c0_242 = arith.constant 0 : index
    %582 = vector.load %arg1[%c2224, %c0_242] : memref<3568x128xf32, #tpu.memory_space<vmem>>, vector<64x64xf32>
    %cst_243 = arith.constant dense<0.000000e+00> : vector<56x64xf32>
    %583 = tpu.matmul %574, %582, %cst_243 {dimension_numbers = #tpu.dot_dimension_numbers<[1], [0], [0], [1], [0, 0, 1, 1], [], []>} : vector<56x64xf32>, vector<64x64xf32>, vector<56x64xf32> -> vector<56x64xf32>
    %584 = arith.addf %581, %583 : vector<56x64xf32>
    %c55_i32_244 = arith.constant 55 : i32
    %585 = tpu.dynamic_rotate %574 by %c55_i32_244 dim 0 : vector<56x64xf32>, i32 -> vector<56x64xf32>
    %c2288 = arith.constant 2288 : index
    %c0_245 = arith.constant 0 : index
    %586 = vector.load %arg1[%c2288, %c0_245] : memref<3568x128xf32, #tpu.memory_space<vmem>>, vector<64x64xf32>
    %cst_246 = arith.constant dense<0.000000e+00> : vector<56x64xf32>
    %587 = tpu.matmul %585, %586, %cst_246 {dimension_numbers = #tpu.dot_dimension_numbers<[1], [0], [0], [1], [0, 0, 1, 1], [], []>} : vector<56x64xf32>, vector<64x64xf32>, vector<56x64xf32> -> vector<56x64xf32>
    %588 = arith.addf %584, %587 : vector<56x64xf32>
    %c54_i32_247 = arith.constant 54 : i32
    %589 = tpu.dynamic_rotate %574 by %c54_i32_247 dim 0 : vector<56x64xf32>, i32 -> vector<56x64xf32>
    %c2352 = arith.constant 2352 : index
    %c0_248 = arith.constant 0 : index
    %590 = vector.load %arg1[%c2352, %c0_248] : memref<3568x128xf32, #tpu.memory_space<vmem>>, vector<64x64xf32>
    %cst_249 = arith.constant dense<0.000000e+00> : vector<56x64xf32>
    %591 = tpu.matmul %589, %590, %cst_249 {dimension_numbers = #tpu.dot_dimension_numbers<[1], [0], [0], [1], [0, 0, 1, 1], [], []>} : vector<56x64xf32>, vector<64x64xf32>, vector<56x64xf32> -> vector<56x64xf32>
    %592 = arith.addf %588, %591 : vector<56x64xf32>
    %c22 = arith.constant 22 : index
    %c0_250 = arith.constant 0 : index
    %593 = vector.load %arg2[%c22, %c0_250] : memref<32x128xf32, #tpu.memory_space<vmem>>, vector<1x64xf32>
    %c23 = arith.constant 23 : index
    %c0_251 = arith.constant 0 : index
    %594 = vector.load %arg2[%c23, %c0_251] : memref<32x128xf32, #tpu.memory_space<vmem>>, vector<1x64xf32>
    %595 = vector.broadcast %436 : vector<56x1xf32> to vector<56x64xf32>
    %596 = arith.mulf %592, %595 : vector<56x64xf32>
    %cst_252 = arith.constant dense<0.000000e+00> : vector<64xf32>
    %597 = vector.multi_reduction <add>, %596, %cst_252 [0] : vector<56x64xf32> to vector<64xf32>
    %598 = vector.shape_cast %597 : vector<64xf32> to vector<1x64xf32>
    %cst_253 = arith.constant 0.0357142873 : f32
    %599 = vector.broadcast %cst_253 : f32 to vector<1x64xf32>
    %600 = arith.mulf %598, %599 : vector<1x64xf32>
    %601 = vector.broadcast %600 : vector<1x64xf32> to vector<56x64xf32>
    %602 = arith.subf %592, %601 : vector<56x64xf32>
    %603 = vector.broadcast %436 : vector<56x1xf32> to vector<56x64xf32>
    %604 = arith.mulf %602, %603 : vector<56x64xf32>
    %605 = arith.mulf %604, %604 : vector<56x64xf32>
    %cst_254 = arith.constant dense<0.000000e+00> : vector<64xf32>
    %606 = vector.multi_reduction <add>, %605, %cst_254 [0] : vector<56x64xf32> to vector<64xf32>
    %607 = vector.shape_cast %606 : vector<64xf32> to vector<1x64xf32>
    %cst_255 = arith.constant 0.0357142873 : f32
    %608 = vector.broadcast %cst_255 : f32 to vector<1x64xf32>
    %609 = arith.mulf %607, %608 : vector<1x64xf32>
    %cst_256 = arith.constant 9.99999974E-6 : f32
    %610 = vector.broadcast %cst_256 : f32 to vector<1x64xf32>
    %611 = arith.addf %609, %610 : vector<1x64xf32>
    %612 = math.rsqrt %611 : vector<1x64xf32>
    %613 = arith.mulf %612, %593 : vector<1x64xf32>
    %614 = vector.broadcast %613 : vector<1x64xf32> to vector<56x64xf32>
    %615 = arith.mulf %604, %614 : vector<56x64xf32>
    %616 = vector.broadcast %594 : vector<1x64xf32> to vector<56x64xf32>
    %617 = arith.addf %615, %616 : vector<56x64xf32>
    %618 = vector.broadcast %436 : vector<56x1xf32> to vector<56x64xf32>
    %619 = arith.mulf %617, %618 : vector<56x64xf32>
    %620 = arith.addf %619, %468 : vector<56x64xf32>
    %cst_257 = arith.constant 0.000000e+00 : f32
    %621 = vector.broadcast %cst_257 : f32 to vector<56x64xf32>
    %622 = arith.maximumf %620, %621 : vector<56x64xf32>
    %c55_i32_258 = arith.constant 55 : i32
    %623 = tpu.dynamic_rotate %622 by %c55_i32_258 dim 0 : vector<56x64xf32>, i32 -> vector<56x64xf32>
    %c8_i32_259 = arith.constant 8 : i32
    %624 = vector.broadcast %c8_i32_259 : i32 to vector<56x1xi32>
    %625 = arith.cmpi sge, %6, %624 : vector<56x1xi32>
    %c21_i32 = arith.constant 21 : i32
    %626 = vector.broadcast %c21_i32 : i32 to vector<56x1xi32>
    %627 = arith.cmpi slt, %6, %626 : vector<56x1xi32>
    %628 = arith.andi %625, %627 : vector<56x1xi1>
    %c32_i32_260 = arith.constant 32 : i32
    %629 = vector.broadcast %c32_i32_260 : i32 to vector<56x1xi32>
    %630 = arith.cmpi sge, %6, %629 : vector<56x1xi32>
    %c45_i32 = arith.constant 45 : i32
    %631 = vector.broadcast %c45_i32 : i32 to vector<56x1xi32>
    %632 = arith.cmpi slt, %6, %631 : vector<56x1xi32>
    %633 = arith.andi %630, %632 : vector<56x1xi1>
    %634 = arith.ori %628, %633 : vector<56x1xi1>
    %635 = arith.extui %634 : vector<56x1xi1> to vector<56x1xi32>
    %636 = arith.sitofp %635 : vector<56x1xi32> to vector<56x1xf32>
    %637 = arith.addf %622, %623 : vector<56x64xf32>
    %cst_261 = arith.constant 5.000000e-01 : f32
    %638 = vector.broadcast %cst_261 : f32 to vector<56x64xf32>
    %639 = arith.mulf %638, %637 : vector<56x64xf32>
    %640 = vector.broadcast %636 : vector<56x1xf32> to vector<56x64xf32>
    %641 = arith.mulf %639, %640 : vector<56x64xf32>
    %c24 = arith.constant 24 : index
    %c0_262 = arith.constant 0 : index
    %642 = vector.load %arg2[%c24, %c0_262] : memref<32x128xf32, #tpu.memory_space<vmem>>, vector<1x64xf32>
    %c25 = arith.constant 25 : index
    %c0_263 = arith.constant 0 : index
    %643 = vector.load %arg2[%c25, %c0_263] : memref<32x128xf32, #tpu.memory_space<vmem>>, vector<1x64xf32>
    %644 = vector.broadcast %636 : vector<56x1xf32> to vector<56x64xf32>
    %645 = arith.mulf %641, %644 : vector<56x64xf32>
    %cst_264 = arith.constant dense<0.000000e+00> : vector<64xf32>
    %646 = vector.multi_reduction <add>, %645, %cst_264 [0] : vector<56x64xf32> to vector<64xf32>
    %647 = vector.shape_cast %646 : vector<64xf32> to vector<1x64xf32>
    %cst_265 = arith.constant 0.0384615399 : f32
    %648 = vector.broadcast %cst_265 : f32 to vector<1x64xf32>
    %649 = arith.mulf %647, %648 : vector<1x64xf32>
    %650 = vector.broadcast %649 : vector<1x64xf32> to vector<56x64xf32>
    %651 = arith.subf %641, %650 : vector<56x64xf32>
    %652 = vector.broadcast %636 : vector<56x1xf32> to vector<56x64xf32>
    %653 = arith.mulf %651, %652 : vector<56x64xf32>
    %654 = arith.mulf %653, %653 : vector<56x64xf32>
    %cst_266 = arith.constant dense<0.000000e+00> : vector<64xf32>
    %655 = vector.multi_reduction <add>, %654, %cst_266 [0] : vector<56x64xf32> to vector<64xf32>
    %656 = vector.shape_cast %655 : vector<64xf32> to vector<1x64xf32>
    %cst_267 = arith.constant 0.0384615399 : f32
    %657 = vector.broadcast %cst_267 : f32 to vector<1x64xf32>
    %658 = arith.mulf %656, %657 : vector<1x64xf32>
    %cst_268 = arith.constant 9.99999974E-6 : f32
    %659 = vector.broadcast %cst_268 : f32 to vector<1x64xf32>
    %660 = arith.addf %658, %659 : vector<1x64xf32>
    %661 = math.rsqrt %660 : vector<1x64xf32>
    %662 = arith.mulf %661, %642 : vector<1x64xf32>
    %663 = vector.broadcast %662 : vector<1x64xf32> to vector<56x64xf32>
    %664 = arith.mulf %653, %663 : vector<56x64xf32>
    %665 = vector.broadcast %643 : vector<1x64xf32> to vector<56x64xf32>
    %666 = arith.addf %664, %665 : vector<56x64xf32>
    %667 = vector.broadcast %636 : vector<56x1xf32> to vector<56x64xf32>
    %668 = arith.mulf %666, %667 : vector<56x64xf32>
    %c3_i32_269 = arith.constant 3 : i32
    %669 = tpu.dynamic_rotate %641 by %c3_i32_269 dim 0 : vector<56x64xf32>, i32 -> vector<56x64xf32>
    %c2416 = arith.constant 2416 : index
    %c0_270 = arith.constant 0 : index
    %670 = vector.load %arg1[%c2416, %c0_270] : memref<3568x128xf32, #tpu.memory_space<vmem>>, vector<64x64xf32>
    %cst_271 = arith.constant dense<0.000000e+00> : vector<56x64xf32>
    %671 = tpu.matmul %669, %670, %cst_271 {dimension_numbers = #tpu.dot_dimension_numbers<[1], [0], [0], [1], [0, 0, 1, 1], [], []>} : vector<56x64xf32>, vector<64x64xf32>, vector<56x64xf32> -> vector<56x64xf32>
    %c2_i32_272 = arith.constant 2 : i32
    %672 = tpu.dynamic_rotate %641 by %c2_i32_272 dim 0 : vector<56x64xf32>, i32 -> vector<56x64xf32>
    %c2480 = arith.constant 2480 : index
    %c0_273 = arith.constant 0 : index
    %673 = vector.load %arg1[%c2480, %c0_273] : memref<3568x128xf32, #tpu.memory_space<vmem>>, vector<64x64xf32>
    %cst_274 = arith.constant dense<0.000000e+00> : vector<56x64xf32>
    %674 = tpu.matmul %672, %673, %cst_274 {dimension_numbers = #tpu.dot_dimension_numbers<[1], [0], [0], [1], [0, 0, 1, 1], [], []>} : vector<56x64xf32>, vector<64x64xf32>, vector<56x64xf32> -> vector<56x64xf32>
    %675 = arith.addf %671, %674 : vector<56x64xf32>
    %c1_i32_275 = arith.constant 1 : i32
    %676 = tpu.dynamic_rotate %641 by %c1_i32_275 dim 0 : vector<56x64xf32>, i32 -> vector<56x64xf32>
    %c2544 = arith.constant 2544 : index
    %c0_276 = arith.constant 0 : index
    %677 = vector.load %arg1[%c2544, %c0_276] : memref<3568x128xf32, #tpu.memory_space<vmem>>, vector<64x64xf32>
    %cst_277 = arith.constant dense<0.000000e+00> : vector<56x64xf32>
    %678 = tpu.matmul %676, %677, %cst_277 {dimension_numbers = #tpu.dot_dimension_numbers<[1], [0], [0], [1], [0, 0, 1, 1], [], []>} : vector<56x64xf32>, vector<64x64xf32>, vector<56x64xf32> -> vector<56x64xf32>
    %679 = arith.addf %675, %678 : vector<56x64xf32>
    %c2608 = arith.constant 2608 : index
    %c0_278 = arith.constant 0 : index
    %680 = vector.load %arg1[%c2608, %c0_278] : memref<3568x128xf32, #tpu.memory_space<vmem>>, vector<64x64xf32>
    %cst_279 = arith.constant dense<0.000000e+00> : vector<56x64xf32>
    %681 = tpu.matmul %641, %680, %cst_279 {dimension_numbers = #tpu.dot_dimension_numbers<[1], [0], [0], [1], [0, 0, 1, 1], [], []>} : vector<56x64xf32>, vector<64x64xf32>, vector<56x64xf32> -> vector<56x64xf32>
    %682 = arith.addf %679, %681 : vector<56x64xf32>
    %c55_i32_280 = arith.constant 55 : i32
    %683 = tpu.dynamic_rotate %641 by %c55_i32_280 dim 0 : vector<56x64xf32>, i32 -> vector<56x64xf32>
    %c2672 = arith.constant 2672 : index
    %c0_281 = arith.constant 0 : index
    %684 = vector.load %arg1[%c2672, %c0_281] : memref<3568x128xf32, #tpu.memory_space<vmem>>, vector<64x64xf32>
    %cst_282 = arith.constant dense<0.000000e+00> : vector<56x64xf32>
    %685 = tpu.matmul %683, %684, %cst_282 {dimension_numbers = #tpu.dot_dimension_numbers<[1], [0], [0], [1], [0, 0, 1, 1], [], []>} : vector<56x64xf32>, vector<64x64xf32>, vector<56x64xf32> -> vector<56x64xf32>
    %686 = arith.addf %682, %685 : vector<56x64xf32>
    %c54_i32_283 = arith.constant 54 : i32
    %687 = tpu.dynamic_rotate %641 by %c54_i32_283 dim 0 : vector<56x64xf32>, i32 -> vector<56x64xf32>
    %c2736 = arith.constant 2736 : index
    %c0_284 = arith.constant 0 : index
    %688 = vector.load %arg1[%c2736, %c0_284] : memref<3568x128xf32, #tpu.memory_space<vmem>>, vector<64x64xf32>
    %cst_285 = arith.constant dense<0.000000e+00> : vector<56x64xf32>
    %689 = tpu.matmul %687, %688, %cst_285 {dimension_numbers = #tpu.dot_dimension_numbers<[1], [0], [0], [1], [0, 0, 1, 1], [], []>} : vector<56x64xf32>, vector<64x64xf32>, vector<56x64xf32> -> vector<56x64xf32>
    %690 = arith.addf %686, %689 : vector<56x64xf32>
    %c53_i32_286 = arith.constant 53 : i32
    %691 = tpu.dynamic_rotate %641 by %c53_i32_286 dim 0 : vector<56x64xf32>, i32 -> vector<56x64xf32>
    %c2800 = arith.constant 2800 : index
    %c0_287 = arith.constant 0 : index
    %692 = vector.load %arg1[%c2800, %c0_287] : memref<3568x128xf32, #tpu.memory_space<vmem>>, vector<64x64xf32>
    %cst_288 = arith.constant dense<0.000000e+00> : vector<56x64xf32>
    %693 = tpu.matmul %691, %692, %cst_288 {dimension_numbers = #tpu.dot_dimension_numbers<[1], [0], [0], [1], [0, 0, 1, 1], [], []>} : vector<56x64xf32>, vector<64x64xf32>, vector<56x64xf32> -> vector<56x64xf32>
    %694 = arith.addf %690, %693 : vector<56x64xf32>
    %c52_i32_289 = arith.constant 52 : i32
    %695 = tpu.dynamic_rotate %641 by %c52_i32_289 dim 0 : vector<56x64xf32>, i32 -> vector<56x64xf32>
    %c2864 = arith.constant 2864 : index
    %c0_290 = arith.constant 0 : index
    %696 = vector.load %arg1[%c2864, %c0_290] : memref<3568x128xf32, #tpu.memory_space<vmem>>, vector<64x64xf32>
    %cst_291 = arith.constant dense<0.000000e+00> : vector<56x64xf32>
    %697 = tpu.matmul %695, %696, %cst_291 {dimension_numbers = #tpu.dot_dimension_numbers<[1], [0], [0], [1], [0, 0, 1, 1], [], []>} : vector<56x64xf32>, vector<64x64xf32>, vector<56x64xf32> -> vector<56x64xf32>
    %698 = arith.addf %694, %697 : vector<56x64xf32>
    %c26 = arith.constant 26 : index
    %c0_292 = arith.constant 0 : index
    %699 = vector.load %arg2[%c26, %c0_292] : memref<32x128xf32, #tpu.memory_space<vmem>>, vector<1x64xf32>
    %c27 = arith.constant 27 : index
    %c0_293 = arith.constant 0 : index
    %700 = vector.load %arg2[%c27, %c0_293] : memref<32x128xf32, #tpu.memory_space<vmem>>, vector<1x64xf32>
    %701 = vector.broadcast %636 : vector<56x1xf32> to vector<56x64xf32>
    %702 = arith.mulf %698, %701 : vector<56x64xf32>
    %cst_294 = arith.constant dense<0.000000e+00> : vector<64xf32>
    %703 = vector.multi_reduction <add>, %702, %cst_294 [0] : vector<56x64xf32> to vector<64xf32>
    %704 = vector.shape_cast %703 : vector<64xf32> to vector<1x64xf32>
    %cst_295 = arith.constant 0.0384615399 : f32
    %705 = vector.broadcast %cst_295 : f32 to vector<1x64xf32>
    %706 = arith.mulf %704, %705 : vector<1x64xf32>
    %707 = vector.broadcast %706 : vector<1x64xf32> to vector<56x64xf32>
    %708 = arith.subf %698, %707 : vector<56x64xf32>
    %709 = vector.broadcast %636 : vector<56x1xf32> to vector<56x64xf32>
    %710 = arith.mulf %708, %709 : vector<56x64xf32>
    %711 = arith.mulf %710, %710 : vector<56x64xf32>
    %cst_296 = arith.constant dense<0.000000e+00> : vector<64xf32>
    %712 = vector.multi_reduction <add>, %711, %cst_296 [0] : vector<56x64xf32> to vector<64xf32>
    %713 = vector.shape_cast %712 : vector<64xf32> to vector<1x64xf32>
    %cst_297 = arith.constant 0.0384615399 : f32
    %714 = vector.broadcast %cst_297 : f32 to vector<1x64xf32>
    %715 = arith.mulf %713, %714 : vector<1x64xf32>
    %cst_298 = arith.constant 9.99999974E-6 : f32
    %716 = vector.broadcast %cst_298 : f32 to vector<1x64xf32>
    %717 = arith.addf %715, %716 : vector<1x64xf32>
    %718 = math.rsqrt %717 : vector<1x64xf32>
    %719 = arith.mulf %718, %699 : vector<1x64xf32>
    %720 = vector.broadcast %719 : vector<1x64xf32> to vector<56x64xf32>
    %721 = arith.mulf %710, %720 : vector<56x64xf32>
    %722 = vector.broadcast %700 : vector<1x64xf32> to vector<56x64xf32>
    %723 = arith.addf %721, %722 : vector<56x64xf32>
    %cst_299 = arith.constant 0.000000e+00 : f32
    %724 = vector.broadcast %cst_299 : f32 to vector<56x64xf32>
    %725 = arith.maximumf %723, %724 : vector<56x64xf32>
    %726 = vector.broadcast %636 : vector<56x1xf32> to vector<56x64xf32>
    %727 = arith.mulf %725, %726 : vector<56x64xf32>
    %c2_i32_300 = arith.constant 2 : i32
    %728 = tpu.dynamic_rotate %727 by %c2_i32_300 dim 0 : vector<56x64xf32>, i32 -> vector<56x64xf32>
    %c2928 = arith.constant 2928 : index
    %c0_301 = arith.constant 0 : index
    %729 = vector.load %arg1[%c2928, %c0_301] : memref<3568x128xf32, #tpu.memory_space<vmem>>, vector<64x64xf32>
    %cst_302 = arith.constant dense<0.000000e+00> : vector<56x64xf32>
    %730 = tpu.matmul %728, %729, %cst_302 {dimension_numbers = #tpu.dot_dimension_numbers<[1], [0], [0], [1], [0, 0, 1, 1], [], []>} : vector<56x64xf32>, vector<64x64xf32>, vector<56x64xf32> -> vector<56x64xf32>
    %c1_i32_303 = arith.constant 1 : i32
    %731 = tpu.dynamic_rotate %727 by %c1_i32_303 dim 0 : vector<56x64xf32>, i32 -> vector<56x64xf32>
    %c2992 = arith.constant 2992 : index
    %c0_304 = arith.constant 0 : index
    %732 = vector.load %arg1[%c2992, %c0_304] : memref<3568x128xf32, #tpu.memory_space<vmem>>, vector<64x64xf32>
    %cst_305 = arith.constant dense<0.000000e+00> : vector<56x64xf32>
    %733 = tpu.matmul %731, %732, %cst_305 {dimension_numbers = #tpu.dot_dimension_numbers<[1], [0], [0], [1], [0, 0, 1, 1], [], []>} : vector<56x64xf32>, vector<64x64xf32>, vector<56x64xf32> -> vector<56x64xf32>
    %734 = arith.addf %730, %733 : vector<56x64xf32>
    %c3056 = arith.constant 3056 : index
    %c0_306 = arith.constant 0 : index
    %735 = vector.load %arg1[%c3056, %c0_306] : memref<3568x128xf32, #tpu.memory_space<vmem>>, vector<64x64xf32>
    %cst_307 = arith.constant dense<0.000000e+00> : vector<56x64xf32>
    %736 = tpu.matmul %727, %735, %cst_307 {dimension_numbers = #tpu.dot_dimension_numbers<[1], [0], [0], [1], [0, 0, 1, 1], [], []>} : vector<56x64xf32>, vector<64x64xf32>, vector<56x64xf32> -> vector<56x64xf32>
    %737 = arith.addf %734, %736 : vector<56x64xf32>
    %c55_i32_308 = arith.constant 55 : i32
    %738 = tpu.dynamic_rotate %727 by %c55_i32_308 dim 0 : vector<56x64xf32>, i32 -> vector<56x64xf32>
    %c3120 = arith.constant 3120 : index
    %c0_309 = arith.constant 0 : index
    %739 = vector.load %arg1[%c3120, %c0_309] : memref<3568x128xf32, #tpu.memory_space<vmem>>, vector<64x64xf32>
    %cst_310 = arith.constant dense<0.000000e+00> : vector<56x64xf32>
    %740 = tpu.matmul %738, %739, %cst_310 {dimension_numbers = #tpu.dot_dimension_numbers<[1], [0], [0], [1], [0, 0, 1, 1], [], []>} : vector<56x64xf32>, vector<64x64xf32>, vector<56x64xf32> -> vector<56x64xf32>
    %741 = arith.addf %737, %740 : vector<56x64xf32>
    %c54_i32_311 = arith.constant 54 : i32
    %742 = tpu.dynamic_rotate %727 by %c54_i32_311 dim 0 : vector<56x64xf32>, i32 -> vector<56x64xf32>
    %c3184 = arith.constant 3184 : index
    %c0_312 = arith.constant 0 : index
    %743 = vector.load %arg1[%c3184, %c0_312] : memref<3568x128xf32, #tpu.memory_space<vmem>>, vector<64x64xf32>
    %cst_313 = arith.constant dense<0.000000e+00> : vector<56x64xf32>
    %744 = tpu.matmul %742, %743, %cst_313 {dimension_numbers = #tpu.dot_dimension_numbers<[1], [0], [0], [1], [0, 0, 1, 1], [], []>} : vector<56x64xf32>, vector<64x64xf32>, vector<56x64xf32> -> vector<56x64xf32>
    %745 = arith.addf %741, %744 : vector<56x64xf32>
    %c28 = arith.constant 28 : index
    %c0_314 = arith.constant 0 : index
    %746 = vector.load %arg2[%c28, %c0_314] : memref<32x128xf32, #tpu.memory_space<vmem>>, vector<1x64xf32>
    %c29 = arith.constant 29 : index
    %c0_315 = arith.constant 0 : index
    %747 = vector.load %arg2[%c29, %c0_315] : memref<32x128xf32, #tpu.memory_space<vmem>>, vector<1x64xf32>
    %748 = vector.broadcast %636 : vector<56x1xf32> to vector<56x64xf32>
    %749 = arith.mulf %745, %748 : vector<56x64xf32>
    %cst_316 = arith.constant dense<0.000000e+00> : vector<64xf32>
    %750 = vector.multi_reduction <add>, %749, %cst_316 [0] : vector<56x64xf32> to vector<64xf32>
    %751 = vector.shape_cast %750 : vector<64xf32> to vector<1x64xf32>
    %cst_317 = arith.constant 0.0384615399 : f32
    %752 = vector.broadcast %cst_317 : f32 to vector<1x64xf32>
    %753 = arith.mulf %751, %752 : vector<1x64xf32>
    %754 = vector.broadcast %753 : vector<1x64xf32> to vector<56x64xf32>
    %755 = arith.subf %745, %754 : vector<56x64xf32>
    %756 = vector.broadcast %636 : vector<56x1xf32> to vector<56x64xf32>
    %757 = arith.mulf %755, %756 : vector<56x64xf32>
    %758 = arith.mulf %757, %757 : vector<56x64xf32>
    %cst_318 = arith.constant dense<0.000000e+00> : vector<64xf32>
    %759 = vector.multi_reduction <add>, %758, %cst_318 [0] : vector<56x64xf32> to vector<64xf32>
    %760 = vector.shape_cast %759 : vector<64xf32> to vector<1x64xf32>
    %cst_319 = arith.constant 0.0384615399 : f32
    %761 = vector.broadcast %cst_319 : f32 to vector<1x64xf32>
    %762 = arith.mulf %760, %761 : vector<1x64xf32>
    %cst_320 = arith.constant 9.99999974E-6 : f32
    %763 = vector.broadcast %cst_320 : f32 to vector<1x64xf32>
    %764 = arith.addf %762, %763 : vector<1x64xf32>
    %765 = math.rsqrt %764 : vector<1x64xf32>
    %766 = arith.mulf %765, %746 : vector<1x64xf32>
    %767 = vector.broadcast %766 : vector<1x64xf32> to vector<56x64xf32>
    %768 = arith.mulf %757, %767 : vector<56x64xf32>
    %769 = vector.broadcast %747 : vector<1x64xf32> to vector<56x64xf32>
    %770 = arith.addf %768, %769 : vector<56x64xf32>
    %cst_321 = arith.constant 0.000000e+00 : f32
    %771 = vector.broadcast %cst_321 : f32 to vector<56x64xf32>
    %772 = arith.maximumf %770, %771 : vector<56x64xf32>
    %773 = vector.broadcast %636 : vector<56x1xf32> to vector<56x64xf32>
    %774 = arith.mulf %772, %773 : vector<56x64xf32>
    %c2_i32_322 = arith.constant 2 : i32
    %775 = tpu.dynamic_rotate %774 by %c2_i32_322 dim 0 : vector<56x64xf32>, i32 -> vector<56x64xf32>
    %c3248 = arith.constant 3248 : index
    %c0_323 = arith.constant 0 : index
    %776 = vector.load %arg1[%c3248, %c0_323] : memref<3568x128xf32, #tpu.memory_space<vmem>>, vector<64x64xf32>
    %cst_324 = arith.constant dense<0.000000e+00> : vector<56x64xf32>
    %777 = tpu.matmul %775, %776, %cst_324 {dimension_numbers = #tpu.dot_dimension_numbers<[1], [0], [0], [1], [0, 0, 1, 1], [], []>} : vector<56x64xf32>, vector<64x64xf32>, vector<56x64xf32> -> vector<56x64xf32>
    %c1_i32_325 = arith.constant 1 : i32
    %778 = tpu.dynamic_rotate %774 by %c1_i32_325 dim 0 : vector<56x64xf32>, i32 -> vector<56x64xf32>
    %c3312 = arith.constant 3312 : index
    %c0_326 = arith.constant 0 : index
    %779 = vector.load %arg1[%c3312, %c0_326] : memref<3568x128xf32, #tpu.memory_space<vmem>>, vector<64x64xf32>
    %cst_327 = arith.constant dense<0.000000e+00> : vector<56x64xf32>
    %780 = tpu.matmul %778, %779, %cst_327 {dimension_numbers = #tpu.dot_dimension_numbers<[1], [0], [0], [1], [0, 0, 1, 1], [], []>} : vector<56x64xf32>, vector<64x64xf32>, vector<56x64xf32> -> vector<56x64xf32>
    %781 = arith.addf %777, %780 : vector<56x64xf32>
    %c3376 = arith.constant 3376 : index
    %c0_328 = arith.constant 0 : index
    %782 = vector.load %arg1[%c3376, %c0_328] : memref<3568x128xf32, #tpu.memory_space<vmem>>, vector<64x64xf32>
    %cst_329 = arith.constant dense<0.000000e+00> : vector<56x64xf32>
    %783 = tpu.matmul %774, %782, %cst_329 {dimension_numbers = #tpu.dot_dimension_numbers<[1], [0], [0], [1], [0, 0, 1, 1], [], []>} : vector<56x64xf32>, vector<64x64xf32>, vector<56x64xf32> -> vector<56x64xf32>
    %784 = arith.addf %781, %783 : vector<56x64xf32>
    %c55_i32_330 = arith.constant 55 : i32
    %785 = tpu.dynamic_rotate %774 by %c55_i32_330 dim 0 : vector<56x64xf32>, i32 -> vector<56x64xf32>
    %c3440 = arith.constant 3440 : index
    %c0_331 = arith.constant 0 : index
    %786 = vector.load %arg1[%c3440, %c0_331] : memref<3568x128xf32, #tpu.memory_space<vmem>>, vector<64x64xf32>
    %cst_332 = arith.constant dense<0.000000e+00> : vector<56x64xf32>
    %787 = tpu.matmul %785, %786, %cst_332 {dimension_numbers = #tpu.dot_dimension_numbers<[1], [0], [0], [1], [0, 0, 1, 1], [], []>} : vector<56x64xf32>, vector<64x64xf32>, vector<56x64xf32> -> vector<56x64xf32>
    %788 = arith.addf %784, %787 : vector<56x64xf32>
    %c54_i32_333 = arith.constant 54 : i32
    %789 = tpu.dynamic_rotate %774 by %c54_i32_333 dim 0 : vector<56x64xf32>, i32 -> vector<56x64xf32>
    %c3504 = arith.constant 3504 : index
    %c0_334 = arith.constant 0 : index
    %790 = vector.load %arg1[%c3504, %c0_334] : memref<3568x128xf32, #tpu.memory_space<vmem>>, vector<64x64xf32>
    %cst_335 = arith.constant dense<0.000000e+00> : vector<56x64xf32>
    %791 = tpu.matmul %789, %790, %cst_335 {dimension_numbers = #tpu.dot_dimension_numbers<[1], [0], [0], [1], [0, 0, 1, 1], [], []>} : vector<56x64xf32>, vector<64x64xf32>, vector<56x64xf32> -> vector<56x64xf32>
    %792 = arith.addf %788, %791 : vector<56x64xf32>
    %c30 = arith.constant 30 : index
    %c0_336 = arith.constant 0 : index
    %793 = vector.load %arg2[%c30, %c0_336] : memref<32x128xf32, #tpu.memory_space<vmem>>, vector<1x64xf32>
    %c31 = arith.constant 31 : index
    %c0_337 = arith.constant 0 : index
    %794 = vector.load %arg2[%c31, %c0_337] : memref<32x128xf32, #tpu.memory_space<vmem>>, vector<1x64xf32>
    %795 = vector.broadcast %636 : vector<56x1xf32> to vector<56x64xf32>
    %796 = arith.mulf %792, %795 : vector<56x64xf32>
    %cst_338 = arith.constant dense<0.000000e+00> : vector<64xf32>
    %797 = vector.multi_reduction <add>, %796, %cst_338 [0] : vector<56x64xf32> to vector<64xf32>
    %798 = vector.shape_cast %797 : vector<64xf32> to vector<1x64xf32>
    %cst_339 = arith.constant 0.0384615399 : f32
    %799 = vector.broadcast %cst_339 : f32 to vector<1x64xf32>
    %800 = arith.mulf %798, %799 : vector<1x64xf32>
    %801 = vector.broadcast %800 : vector<1x64xf32> to vector<56x64xf32>
    %802 = arith.subf %792, %801 : vector<56x64xf32>
    %803 = vector.broadcast %636 : vector<56x1xf32> to vector<56x64xf32>
    %804 = arith.mulf %802, %803 : vector<56x64xf32>
    %805 = arith.mulf %804, %804 : vector<56x64xf32>
    %cst_340 = arith.constant dense<0.000000e+00> : vector<64xf32>
    %806 = vector.multi_reduction <add>, %805, %cst_340 [0] : vector<56x64xf32> to vector<64xf32>
    %807 = vector.shape_cast %806 : vector<64xf32> to vector<1x64xf32>
    %cst_341 = arith.constant 0.0384615399 : f32
    %808 = vector.broadcast %cst_341 : f32 to vector<1x64xf32>
    %809 = arith.mulf %807, %808 : vector<1x64xf32>
    %cst_342 = arith.constant 9.99999974E-6 : f32
    %810 = vector.broadcast %cst_342 : f32 to vector<1x64xf32>
    %811 = arith.addf %809, %810 : vector<1x64xf32>
    %812 = math.rsqrt %811 : vector<1x64xf32>
    %813 = arith.mulf %812, %793 : vector<1x64xf32>
    %814 = vector.broadcast %813 : vector<1x64xf32> to vector<56x64xf32>
    %815 = arith.mulf %804, %814 : vector<56x64xf32>
    %816 = vector.broadcast %794 : vector<1x64xf32> to vector<56x64xf32>
    %817 = arith.addf %815, %816 : vector<56x64xf32>
    %818 = vector.broadcast %636 : vector<56x1xf32> to vector<56x64xf32>
    %819 = arith.mulf %817, %818 : vector<56x64xf32>
    %820 = arith.addf %819, %668 : vector<56x64xf32>
    %cst_343 = arith.constant 0.000000e+00 : f32
    %821 = vector.broadcast %cst_343 : f32 to vector<56x64xf32>
    %822 = arith.maximumf %820, %821 : vector<56x64xf32>
    %c55_i32_344 = arith.constant 55 : i32
    %823 = tpu.dynamic_rotate %822 by %c55_i32_344 dim 0 : vector<56x64xf32>, i32 -> vector<56x64xf32>
    %c8_i32_345 = arith.constant 8 : i32
    %824 = vector.broadcast %c8_i32_345 : i32 to vector<56x1xi32>
    %825 = arith.cmpi sge, %6, %824 : vector<56x1xi32>
    %c20_i32 = arith.constant 20 : i32
    %826 = vector.broadcast %c20_i32 : i32 to vector<56x1xi32>
    %827 = arith.cmpi slt, %6, %826 : vector<56x1xi32>
    %828 = arith.andi %825, %827 : vector<56x1xi1>
    %c32_i32_346 = arith.constant 32 : i32
    %829 = vector.broadcast %c32_i32_346 : i32 to vector<56x1xi32>
    %830 = arith.cmpi sge, %6, %829 : vector<56x1xi32>
    %c44_i32 = arith.constant 44 : i32
    %831 = vector.broadcast %c44_i32 : i32 to vector<56x1xi32>
    %832 = arith.cmpi slt, %6, %831 : vector<56x1xi32>
    %833 = arith.andi %830, %832 : vector<56x1xi1>
    %834 = arith.ori %828, %833 : vector<56x1xi1>
    %835 = arith.extui %834 : vector<56x1xi1> to vector<56x1xi32>
    %836 = arith.sitofp %835 : vector<56x1xi32> to vector<56x1xf32>
    %837 = arith.addf %822, %823 : vector<56x64xf32>
    %cst_347 = arith.constant 5.000000e-01 : f32
    %838 = vector.broadcast %cst_347 : f32 to vector<56x64xf32>
    %839 = arith.mulf %838, %837 : vector<56x64xf32>
    %840 = vector.broadcast %836 : vector<56x1xf32> to vector<56x64xf32>
    %841 = arith.mulf %839, %840 : vector<56x64xf32>
    %842 = vector.extract_strided_slice %841 {offsets = [8, 0], sizes = [12, 64], strides = [1, 1]} : vector<56x64xf32> to vector<12x64xf32>
    %c0_348 = arith.constant 0 : index
    %c0_349 = arith.constant 0 : index
    %c0_350 = arith.constant 0 : index
    %843 = vector.load %arg3[%c0_348, %c0_349, %c0_350] : memref<2x12x64xf32, #tpu.memory_space<vmem>>, vector<1x12x64xf32>
    %844 = vector.shape_cast %843 : vector<1x12x64xf32> to vector<12x64xf32>
    %845 = vector.shape_cast %842 : vector<12x64xf32> to vector<1x12x64xf32>
    tpu.vector_store %arg3[%c0_348, %c0_349, %c0_350], %845 {strides = array<i32>} : memref<2x12x64xf32, #tpu.memory_space<vmem>>, vector<1x12x64xf32>,
    %846 = vector.extract_strided_slice %841 {offsets = [32, 0], sizes = [12, 64], strides = [1, 1]} : vector<56x64xf32> to vector<12x64xf32>
    %c1_351 = arith.constant 1 : index
    %c0_352 = arith.constant 0 : index
    %c0_353 = arith.constant 0 : index
    %847 = vector.load %arg3[%c1_351, %c0_352, %c0_353] : memref<2x12x64xf32, #tpu.memory_space<vmem>>, vector<1x12x64xf32>
    %848 = vector.shape_cast %847 : vector<1x12x64xf32> to vector<12x64xf32>
    %849 = vector.shape_cast %846 : vector<12x64xf32> to vector<1x12x64xf32>
    tpu.vector_store %arg3[%c1_351, %c0_352, %c0_353], %849 {strides = array<i32>} : memref<2x12x64xf32, #tpu.memory_space<vmem>>, vector<1x12x64xf32>,
    return
  }
}

</mosaic_0001>

<llo_original>
// kernel: tpu_custom_call.1
$region0: #{tpu_custom_call.1}
  #allocation0 [shape = 'u32[]', space=smem, size = 0x4, offset = 0x4, fixed_abs, tag = 'smem constant byte address 0x4 - core index']
  #allocation1 [shape = 'u32[72,128]{1,0:T(1,128)}', space=vmem, size = 0x9000, scoped, tag = 'internal scratch']
  %s0 = inlined_call_operand.vmem [shape: f32[2,16,1], index: 0, kind: input, shape index: {}]
  %s1 = inlined_call_operand.hbm [shape: f32[3568,128], index: 1, kind: input, shape index: {}]
  %s2 = inlined_call_operand.hbm [shape: f32[32,128], index: 2, kind: input, shape index: {}]
  %s3 = inlined_call_operand.vmem [shape: f32[2,12,64], index: 3, kind: output, shape index: {}]
  %s4 = sld [smem:[#allocation0]]
  $region30: #{tpu_custom_call.1} parent=0
    _
  %s6 = ssub.s32 1, %s4
  %s7 = scalar_select 0, %s6, %s4
  $region1: #{tpu_custom_call.1} parent=0
    #allocation2 [shape = 'u8[1826816]{0}', space=vmem, size = 0x1be000, scoped, tag = 'input window, operand 1, single buffered']
    #allocation3 [shape = 's32[1]{0}', space=sflag, size = 0x4, scoped, tag = 'scoped memory for tpu_custom_call.1']
    #allocation4 [shape = 'u8[16384]{0}', space=vmem, size = 0x4000, scoped, tag = 'input window, operand 2, single buffered']
    #allocation5 [shape = 's32[1]{0}', space=sflag, size = 0x4, scoped, tag = 'scoped memory for tpu_custom_call.1']
    %8 = vsyncpa [#allocation3], 0
    %9 = vsyncpa [#allocation5], 0
    // Predicated region
    $region2: #{tpu_custom_call.1} parent=1 // pred_check
      _
    $region3: #{tpu_custom_call.1} parent=1 // pred_check_branch
      %11 = sbr.rel (0) target = $region5
    $region4: #{tpu_custom_call.1} parent=1 // pred_region
      _
    $region5: #{tpu_custom_call.1} parent=1 // pred_fallthru
      _
    // Predicated region
    $region6: #{tpu_custom_call.1} parent=1 // pred_check
      _
    $region7: #{tpu_custom_call.1} parent=1 // pred_check_branch
      %13 = sbr.rel (0) target = $region9
    $region8: #{tpu_custom_call.1} parent=1 // pred_region
      %15 = vsyncadd [#allocation3], 0
      %s16 = sshll.u32 %s1, 4
      %s17 = int_to_ptr.hbm [resolvable:$true] %s16
      %s18 = sshll.u32 [#allocation2], 4
      %s19 = int_to_ptr.vmem [resolvable:$true] %s18
      %24 = dma.hbm_to_vmem [thread:$0]  %s17, 57088, %s19, [#allocation3], 128, 128, 8
    $region9: #{tpu_custom_call.1} parent=1 // pred_fallthru
      _
    // Predicated region
    $region10: #{tpu_custom_call.1} parent=1 // pred_check
      _
    $region11: #{tpu_custom_call.1} parent=1 // pred_check_branch
      %26 = sbr.rel (0) target = $region13
    $region12: #{tpu_custom_call.1} parent=1 // pred_region
      %28 = vsyncadd [#allocation5], 0
      %s29 = sshll.u32 %s2, 4
      %s30 = int_to_ptr.hbm [resolvable:$true] %s29
      %s31 = sshll.u32 [#allocation4], 4
      %s32 = int_to_ptr.vmem [resolvable:$true] %s31
      %37 = dma.hbm_to_vmem [thread:$0]  %s30, 512, %s32, [#allocation5], 128, 128, 8
    $region13: #{tpu_custom_call.1} parent=1 // pred_fallthru
      _
    // Predicated region
    $region14: #{tpu_custom_call.1} parent=1 // pred_check
      _
    $region15: #{tpu_custom_call.1} parent=1 // pred_check_branch
      %39 = sbr.rel (0) target = $region17
    $region16: #{tpu_custom_call.1} parent=1 // pred_region
      %41 = dma.done [#allocation3], 57088
    $region17: #{tpu_custom_call.1} parent=1 // pred_fallthru
      _
    // Predicated region
    $region18: #{tpu_custom_call.1} parent=1 // pred_check
      _
    $region19: #{tpu_custom_call.1} parent=1 // pred_check_branch
      %43 = sbr.rel (0) target = $region21
    $region20: #{tpu_custom_call.1} parent=1 // pred_region
      %45 = dma.done [#allocation5], 512
    $region21: #{tpu_custom_call.1} parent=1 // pred_fallthru
      _
    %v46 = vld [vmem:[%s0] sm:$0xff]
    %v47 = vld [vmem:[%s0 + $0x8] sm:$0xff]
    %s48 = scalar_lea.vmem %s0, 16
    %v49 = vld [vmem:[%s48] sm:$0xff]
    %v50 = vld [vmem:[%s48 + $0x8] sm:$0xff]
    %v51 = vlaneseq
    %v52 = vshrl.u32 %v51, 7
    %v53 = vadd.s32 %v52, 8
    %v54 = vadd.s32 %v52, 16
    %v55 = vadd.s32 %v52, 24
    %v56 = vadd.s32 %v52, 32
    %v57 = vadd.s32 %v52, 40
    %v58 = vadd.s32 %v52, 48
    %vm59 = vcmp.ge.s32.totalorder %v52, 8
    %vm60 = vcmp.ge.s32.totalorder %v53, 8
    %vm61 = vcmp.ge.s32.totalorder %v54, 8
    %vm62 = vcmp.ge.s32.totalorder %v55, 8
    %vm63 = vcmp.ge.s32.totalorder %v56, 8
    %vm64 = vcmp.ge.s32.totalorder %v57, 8
    %vm65 = vcmp.ge.s32.totalorder %v58, 8
    %vm66 = vcmp.lt.s32.totalorder %v52, 24
    %vm67 = vcmp.lt.s32.totalorder %v53, 24
    %vm68 = vcmp.lt.s32.totalorder %v54, 24
    %vm69 = vcmp.lt.s32.totalorder %v55, 24
    %vm70 = vcmp.lt.s32.totalorder %v56, 24
    %vm71 = vcmp.lt.s32.totalorder %v57, 24
    %vm72 = vcmp.lt.s32.totalorder %v58, 24
    %vm73 = vmand %vm59, %vm66
    %vm74 = vmand %vm60, %vm67
    %vm75 = vmand %vm61, %vm68
    %vm76 = vmand %vm62, %vm69
    %vm77 = vmand %vm63, %vm70
    %vm78 = vmand %vm64, %vm71
    %vm79 = vmand %vm65, %vm72
    %vm80 = vcmp.ge.s32.totalorder %v52, 32
    %vm81 = vcmp.ge.s32.totalorder %v53, 32
    %vm82 = vcmp.ge.s32.totalorder %v54, 32
    %vm83 = vcmp.ge.s32.totalorder %v55, 32
    %vm84 = vcmp.ge.s32.totalorder %v56, 32
    %vm85 = vcmp.ge.s32.totalorder %v57, 32
    %vm86 = vcmp.ge.s32.totalorder %v58, 32
    %vm87 = vcmp.lt.s32.totalorder %v52, 48
    %vm88 = vcmp.lt.s32.totalorder %v53, 48
    %vm89 = vcmp.lt.s32.totalorder %v54, 48
    %vm90 = vcmp.lt.s32.totalorder %v55, 48
    %vm91 = vcmp.lt.s32.totalorder %v56, 48
    %vm92 = vcmp.lt.s32.totalorder %v57, 48
    %vm93 = vcmp.lt.s32.totalorder %v58, 48
    %vm94 = vmand %vm80, %vm87
    %vm95 = vmand %vm81, %vm88
    %vm96 = vmand %vm82, %vm89
    %vm97 = vmand %vm83, %vm90
    %vm98 = vmand %vm84, %vm91
    %vm99 = vmand %vm85, %vm92
    %vm100 = vmand %vm86, %vm93
    %vm101 = vmor %vm73, %vm94
    %vm102 = vmor %vm74, %vm95
    %vm103 = vmor %vm75, %vm96
    %vm104 = vmor %vm76, %vm97
    %vm105 = vmor %vm77, %vm98
    %vm106 = vmor %vm78, %vm99
    %vm107 = vmor %vm79, %vm100
    %v108 = vsel %vm101, 1, 0
    %v109 = vsel %vm102, 1, 0
    %v110 = vsel %vm103, 1, 0
    %v111 = vsel %vm104, 1, 0
    %v112 = vsel %vm105, 1, 0
    %v113 = vsel %vm106, 1, 0
    %v114 = vsel %vm107, 1, 0
    %v115 = vcvt.s32.f32 %v108
    %v116 = vcvt.s32.f32 %v109
    %v117 = vcvt.s32.f32 %v110
    %v118 = vcvt.s32.f32 %v111
    %v119 = vcvt.s32.f32 %v112
    %v120 = vcvt.s32.f32 %v113
    %v121 = vcvt.s32.f32 %v114
    %v122 = vld [vmem:[#allocation2] sm:$0x1]
    %124 = vset.pattern.permute.xlu0 0
    %125 = vperm.xlu0 %124, 0.0
    %v126 = vpop.permute.xlu0 %125
    %129 = vset.pattern.permute.xlu0 0
    %130 = vperm.xlu0 %129, %v46
    %v131 = vpop.permute.xlu0 %130
    %134 = vset.pattern.permute.xlu0 0
    %135 = vperm.xlu0 %134, %v47
    %v136 = vpop.permute.xlu0 %135
    %139 = vset.pattern.permute.xlu0 0
    %140 = vperm.xlu0 %139, %v49
    %v141 = vpop.permute.xlu0 %140
    %144 = vset.pattern.permute.xlu0 0
    %145 = vperm.xlu0 %144, %v50
    %v146 = vpop.permute.xlu0 %145
    %v148 = vperm.slane %v122, 0
    %v149 = vmul.f32 %v126, %v148
    %v150 = vmul.f32 %v131, %v148
    %v151 = vmul.f32 %v136, %v148
    %v152 = vmul.f32 %v141, %v148
    %v153 = vmul.f32 %v146, %v148
    %v154 = vld [vmem:[#allocation4] sm:$0x1]
    %v155 = vld [vmem:[#allocation4 + $0x1] sm:$0x1]
    %v156 = vmul.f32 %v149, %v115
    %v157 = vmul.f32 %v150, %v116
    %v158 = vmul.f32 %v151, %v117
    %v159 = vmul.f32 %v149, %v118
    %v160 = vmul.f32 %v152, %v119
    %v161 = vmul.f32 %v153, %v120
    %v162 = vmul.f32 %v149, %v121
    %vm163 = vcmask 261120
    %v164 = vsel %vm163, %v156, 0.0
    %v165 = vsel %vm163, %v157, 0.0
    %v166 = vadd.f32 %v164, %v165
    %v167 = vsel %vm163, %v158, 0.0
    %v168 = vadd.f32 %v166, %v167
    %v169 = vsel %vm163, %v159, 0.0
    %v170 = vadd.f32 %v168, %v169
    %v171 = vsel %vm163, %v160, 0.0
    %v172 = vadd.f32 %v170, %v171
    %v173 = vsel %vm163, %v161, 0.0
    %v174 = vadd.f32 %v172, %v173
    %v175 = vsel %vm163, %v162, 0.0
    %v176 = vadd.f32 %v174, %v175
    %v177 = vrot.slane %v176, 4
    %v178 = vadd.f32 %v176, %v177
    %v179 = vrot.slane %v178, 2
    %v180 = vadd.f32 %v178, %v179
    %v181 = vrot.slane %v180, 1
    %v182 = vadd.f32 %v180, %v181
    %v183 = vmul.f32 %v182, 0.03125
    %v184 = vsub.f32 %v149, %v183
    %v185 = vsub.f32 %v150, %v183
    %v186 = vsub.f32 %v151, %v183
    %v187 = vsub.f32 %v152, %v183
    %v188 = vsub.f32 %v153, %v183
    %v189 = vmul.f32 %v184, %v115
    %v190 = vmul.f32 %v185, %v116
    %v191 = vmul.f32 %v186, %v117
    %v192 = vmul.f32 %v184, %v118
    %v193 = vmul.f32 %v187, %v119
    %v194 = vmul.f32 %v188, %v120
    %v195 = vmul.f32 %v184, %v121
    %v196 = vmul.f32 %v189, %v189
    %v197 = vmul.f32 %v190, %v190
    %v198 = vmul.f32 %v191, %v191
    %v199 = vmul.f32 %v192, %v192
    %v200 = vmul.f32 %v193, %v193
    %v201 = vmul.f32 %v194, %v194
    %v202 = vmul.f32 %v195, %v195
    %v203 = vsel %vm163, %v196, 0.0
    %v204 = vsel %vm163, %v197, 0.0
    %v205 = vadd.f32 %v203, %v204
    %v206 = vsel %vm163, %v198, 0.0
    %v207 = vadd.f32 %v205, %v206
    %v208 = vsel %vm163, %v199, 0.0
    %v209 = vadd.f32 %v207, %v208
    %v210 = vsel %vm163, %v200, 0.0
    %v211 = vadd.f32 %v209, %v210
    %v212 = vsel %vm163, %v201, 0.0
    %v213 = vadd.f32 %v211, %v212
    %v214 = vsel %vm163, %v202, 0.0
    %v215 = vadd.f32 %v213, %v214
    %v216 = vrot.slane %v215, 4
    %v217 = vadd.f32 %v215, %v216
    %v218 = vrot.slane %v217, 2
    %v219 = vadd.f32 %v217, %v218
    %v220 = vrot.slane %v219, 1
    %v221 = vadd.f32 %v219, %v220
    %v222 = vmul.f32 %v221, 0.03125
    %v223 = vadd.f32 %v222, 1e-05
    %v224 = vrsqrt.pop %v223
    %v225 = vmul.f32 %v224, %v223
    %v226 = vmul.f32 %v225, %v224
    %v227 = vmul.f32 0.5, %v226
    %v228 = vsub.f32 1.5, %v227
    %v229 = vmul.f32 %v224, %v228
    %vm230 = vweird.f32 %v223
    %vm231 = vweird.f32 %v224
    %vm232 = vmor %vm230, %vm231
    %v233 = vsel %vm232, %v224, %v229
    %v234 = vmul.f32 %v233, %v154
    %v235 = vperm.slane %v234, 0
    %v236 = vmul.f32 %v189, %v235
    %v237 = vmul.f32 %v190, %v235
    %v238 = vmul.f32 %v191, %v235
    %v239 = vmul.f32 %v192, %v235
    %v240 = vmul.f32 %v193, %v235
    %v241 = vmul.f32 %v194, %v235
    %v242 = vmul.f32 %v195, %v235
    %v243 = vperm.slane %v155, 0
    %v244 = vadd.f32 %v236, %v243
    %v245 = vadd.f32 %v237, %v243
    %v246 = vadd.f32 %v238, %v243
    %v247 = vadd.f32 %v239, %v243
    %v248 = vadd.f32 %v240, %v243
    %v249 = vadd.f32 %v241, %v243
    %v250 = vadd.f32 %v242, %v243
    %v251 = vmul.f32 %v244, %v115
    %v252 = vmul.f32 %v245, %v116
    %v253 = vmul.f32 %v246, %v117
    %v254 = vmul.f32 %v247, %v118
    %v255 = vmul.f32 %v248, %v119
    %v256 = vmul.f32 %v249, %v120
    %v257 = vmul.f32 %v250, %v121
    %v258 = vrot.slane %v46, 5
    %v259 = vrot.slane %v47, 5
    %v260 = vrot.slane %v49, 5
    %v261 = vrot.slane %v50, 5
    %vm262 = vcmp.lt.s32.totalorder %v52, 3
    %v263 = vsel %vm262, %v261, 0.0
    %v264 = vsel %vm262, %v260, %v261
    %v265 = vsel %vm262, 0.0, %v260
    %v266 = vsel %vm262, %v259, 0.0
    %v267 = vsel %vm262, %v258, %v259
    %v268 = vsel %vm262, 0.0, %v258
    %v269 = vld [vmem:[#allocation2 + $0x8] sm:$0x1]
    %271 = vset.pattern.permute.xlu0 0
    %272 = vperm.xlu0 %271, 0.0
    %v273 = vpop.permute.xlu0 %272
    %276 = vset.pattern.permute.xlu0 0
    %277 = vperm.xlu0 %276, %v268
    %v278 = vpop.permute.xlu0 %277
    %281 = vset.pattern.permute.xlu0 0
    %282 = vperm.xlu0 %281, %v267
    %v283 = vpop.permute.xlu0 %282
    %286 = vset.pattern.permute.xlu0 0
    %287 = vperm.xlu0 %286, %v266
    %v288 = vpop.permute.xlu0 %287
    %291 = vset.pattern.permute.xlu0 0
    %292 = vperm.xlu0 %291, %v265
    %v293 = vpop.permute.xlu0 %292
    %296 = vset.pattern.permute.xlu0 0
    %297 = vperm.xlu0 %296, %v264
    %v298 = vpop.permute.xlu0 %297
    %301 = vset.pattern.permute.xlu0 0
    %302 = vperm.xlu0 %301, %v263
    %v303 = vpop.permute.xlu0 %302
    %v305 = vperm.slane %v269, 0
    %v306 = vmul.f32 %v273, %v305
    %v307 = vmul.f32 %v278, %v305
    %v308 = vmul.f32 %v283, %v305
    %v309 = vmul.f32 %v288, %v305
    %v310 = vmul.f32 %v293, %v305
    %v311 = vmul.f32 %v298, %v305
    %v312 = vmul.f32 %v303, %v305
    %v313 = vrot.slane %v46, 6
    %v314 = vrot.slane %v47, 6
    %v315 = vrot.slane %v49, 6
    %v316 = vrot.slane %v50, 6
    %vm317 = vcmp.lt.s32.totalorder %v52, 2
    %v318 = vsel %vm317, %v316, 0.0
    %v319 = vsel %vm317, %v315, %v316
    %v320 = vsel %vm317, 0.0, %v315
    %v321 = vsel %vm317, %v314, 0.0
    %v322 = vsel %vm317, %v313, %v314
    %v323 = vsel %vm317, 0.0, %v313
    %v324 = vld [vmem:[#allocation2 + $0x9] sm:$0x1]
    %326 = vset.pattern.permute.xlu0 0
    %327 = vperm.xlu0 %326, 0.0
    %v328 = vpop.permute.xlu0 %327
    %331 = vset.pattern.permute.xlu0 0
    %332 = vperm.xlu0 %331, %v323
    %v333 = vpop.permute.xlu0 %332
    %336 = vset.pattern.permute.xlu0 0
    %337 = vperm.xlu0 %336, %v322
    %v338 = vpop.permute.xlu0 %337
    %341 = vset.pattern.permute.xlu0 0
    %342 = vperm.xlu0 %341, %v321
    %v343 = vpop.permute.xlu0 %342
    %346 = vset.pattern.permute.xlu0 0
    %347 = vperm.xlu0 %346, %v320
    %v348 = vpop.permute.xlu0 %347
    %351 = vset.pattern.permute.xlu0 0
    %352 = vperm.xlu0 %351, %v319
    %v353 = vpop.permute.xlu0 %352
    %356 = vset.pattern.permute.xlu0 0
    %357 = vperm.xlu0 %356, %v318
    %v358 = vpop.permute.xlu0 %357
    %v360 = vperm.slane %v324, 0
    %v361 = vmul.f32 %v328, %v360
    %v362 = vmul.f32 %v333, %v360
    %v363 = vmul.f32 %v338, %v360
    %v364 = vmul.f32 %v343, %v360
    %v365 = vmul.f32 %v348, %v360
    %v366 = vmul.f32 %v353, %v360
    %v367 = vmul.f32 %v358, %v360
    %v368 = vadd.f32 %v306, %v361
    %v369 = vadd.f32 %v307, %v362
    %v370 = vadd.f32 %v308, %v363
    %v371 = vadd.f32 %v309, %v364
    %v372 = vadd.f32 %v310, %v365
    %v373 = vadd.f32 %v311, %v366
    %v374 = vadd.f32 %v312, %v367
    %v375 = vrot.slane %v46, 7
    %v376 = vrot.slane %v47, 7
    %v377 = vrot.slane %v49, 7
    %v378 = vrot.slane %v50, 7
    %vm379 = vcmp.lt.s32.totalorder %v52, 1
    %v380 = vsel %vm379, %v378, 0.0
    %v381 = vsel %vm379, %v377, %v378
    %v382 = vsel %vm379, 0.0, %v377
    %v383 = vsel %vm379, %v376, 0.0
    %v384 = vsel %vm379, %v375, %v376
    %v385 = vsel %vm379, 0.0, %v375
    %v386 = vld [vmem:[#allocation2 + $0xa] sm:$0x1]
    %388 = vset.pattern.permute.xlu0 0
    %389 = vperm.xlu0 %388, 0.0
    %v390 = vpop.permute.xlu0 %389
    %393 = vset.pattern.permute.xlu0 0
    %394 = vperm.xlu0 %393, %v385
    %v395 = vpop.permute.xlu0 %394
    %398 = vset.pattern.permute.xlu0 0
    %399 = vperm.xlu0 %398, %v384
    %v400 = vpop.permute.xlu0 %399
    %403 = vset.pattern.permute.xlu0 0
    %404 = vperm.xlu0 %403, %v383
    %v405 = vpop.permute.xlu0 %404
    %408 = vset.pattern.permute.xlu0 0
    %409 = vperm.xlu0 %408, %v382
    %v410 = vpop.permute.xlu0 %409
    %413 = vset.pattern.permute.xlu0 0
    %414 = vperm.xlu0 %413, %v381
    %v415 = vpop.permute.xlu0 %414
    %418 = vset.pattern.permute.xlu0 0
    %419 = vperm.xlu0 %418, %v380
    %v420 = vpop.permute.xlu0 %419
    %v422 = vperm.slane %v386, 0
    %v423 = vmul.f32 %v390, %v422
    %v424 = vmul.f32 %v395, %v422
    %v425 = vmul.f32 %v400, %v422
    %v426 = vmul.f32 %v405, %v422
    %v427 = vmul.f32 %v410, %v422
    %v428 = vmul.f32 %v415, %v422
    %v429 = vmul.f32 %v420, %v422
    %v430 = vadd.f32 %v368, %v423
    %v431 = vadd.f32 %v369, %v424
    %v432 = vadd.f32 %v370, %v425
    %v433 = vadd.f32 %v371, %v426
    %v434 = vadd.f32 %v372, %v427
    %v435 = vadd.f32 %v373, %v428
    %v436 = vadd.f32 %v374, %v429
    %v437 = vld [vmem:[#allocation2 + $0xb] sm:$0x1]
    %v438 = vperm.slane %v437, 0
    %v439 = vmul.f32 %v126, %v438
    %v440 = vmul.f32 %v131, %v438
    %v441 = vmul.f32 %v136, %v438
    %v442 = vmul.f32 %v141, %v438
    %v443 = vmul.f32 %v146, %v438
    %v444 = vadd.f32 %v430, %v439
    %v445 = vadd.f32 %v431, %v440
    %v446 = vadd.f32 %v432, %v441
    %v447 = vadd.f32 %v433, %v439
    %v448 = vadd.f32 %v434, %v442
    %v449 = vadd.f32 %v435, %v443
    %v450 = vadd.f32 %v436, %v439
    %v451 = vrot.slane %v46, 1
    %v452 = vrot.slane %v47, 1
    %v453 = vrot.slane %v49, 1
    %v454 = vrot.slane %v50, 1
    %vm455 = vcmp.lt.s32.totalorder %v52, 7
    %v456 = vsel %vm455, %v454, 0.0
    %v457 = vsel %vm455, %v453, %v454
    %v458 = vsel %vm455, 0.0, %v453
    %v459 = vsel %vm455, %v452, 0.0
    %v460 = vsel %vm455, %v451, %v452
    %v461 = vsel %vm455, 0.0, %v451
    %v462 = vld [vmem:[#allocation2 + $0xc] sm:$0x1]
    %464 = vset.pattern.permute.xlu0 0
    %465 = vperm.xlu0 %464, %v461
    %v466 = vpop.permute.xlu0 %465
    %469 = vset.pattern.permute.xlu0 0
    %470 = vperm.xlu0 %469, %v460
    %v471 = vpop.permute.xlu0 %470
    %474 = vset.pattern.permute.xlu0 0
    %475 = vperm.xlu0 %474, %v459
    %v476 = vpop.permute.xlu0 %475
    %479 = vset.pattern.permute.xlu0 0
    %480 = vperm.xlu0 %479, %v458
    %v481 = vpop.permute.xlu0 %480
    %484 = vset.pattern.permute.xlu0 0
    %485 = vperm.xlu0 %484, %v457
    %v486 = vpop.permute.xlu0 %485
    %489 = vset.pattern.permute.xlu0 0
    %490 = vperm.xlu0 %489, %v456
    %v491 = vpop.permute.xlu0 %490
    %494 = vset.pattern.permute.xlu0 0
    %495 = vperm.xlu0 %494, 0.0
    %v496 = vpop.permute.xlu0 %495
    %v498 = vperm.slane %v462, 0
    %v499 = vmul.f32 %v466, %v498
    %v500 = vmul.f32 %v471, %v498
    %v501 = vmul.f32 %v476, %v498
    %v502 = vmul.f32 %v481, %v498
    %v503 = vmul.f32 %v486, %v498
    %v504 = vmul.f32 %v491, %v498
    %v505 = vmul.f32 %v496, %v498
    %v506 = vadd.f32 %v444, %v499
    %v507 = vadd.f32 %v445, %v500
    %v508 = vadd.f32 %v446, %v501
    %v509 = vadd.f32 %v447, %v502
    %v510 = vadd.f32 %v448, %v503
    %v511 = vadd.f32 %v449, %v504
    %v512 = vadd.f32 %v450, %v505
    %v513 = vrot.slane %v46, 2
    %v514 = vrot.slane %v47, 2
    %v515 = vrot.slane %v49, 2
    %v516 = vrot.slane %v50, 2
    %vm517 = vcmp.lt.s32.totalorder %v52, 6
    %v518 = vsel %vm517, %v516, 0.0
    %v519 = vsel %vm517, %v515, %v516
    %v520 = vsel %vm517, 0.0, %v515
    %v521 = vsel %vm517, %v514, 0.0
    %v522 = vsel %vm517, %v513, %v514
    %v523 = vsel %vm517, 0.0, %v513
    %v524 = vld [vmem:[#allocation2 + $0xd] sm:$0x1]
    %526 = vset.pattern.permute.xlu0 0
    %527 = vperm.xlu0 %526, %v523
    %v528 = vpop.permute.xlu0 %527
    %531 = vset.pattern.permute.xlu0 0
    %532 = vperm.xlu0 %531, %v522
    %v533 = vpop.permute.xlu0 %532
    %536 = vset.pattern.permute.xlu0 0
    %537 = vperm.xlu0 %536, %v521
    %v538 = vpop.permute.xlu0 %537
    %541 = vset.pattern.permute.xlu0 0
    %542 = vperm.xlu0 %541, %v520
    %v543 = vpop.permute.xlu0 %542
    %546 = vset.pattern.permute.xlu0 0
    %547 = vperm.xlu0 %546, %v519
    %v548 = vpop.permute.xlu0 %547
    %551 = vset.pattern.permute.xlu0 0
    %552 = vperm.xlu0 %551, %v518
    %v553 = vpop.permute.xlu0 %552
    %556 = vset.pattern.permute.xlu0 0
    %557 = vperm.xlu0 %556, 0.0
    %v558 = vpop.permute.xlu0 %557
    %v560 = vperm.slane %v524, 0
    %v561 = vmul.f32 %v528, %v560
    %v562 = vmul.f32 %v533, %v560
    %v563 = vmul.f32 %v538, %v560
    %v564 = vmul.f32 %v543, %v560
    %v565 = vmul.f32 %v548, %v560
    %v566 = vmul.f32 %v553, %v560
    %v567 = vmul.f32 %v558, %v560
    %v568 = vadd.f32 %v506, %v561
    %v569 = vadd.f32 %v507, %v562
    %v570 = vadd.f32 %v508, %v563
    %v571 = vadd.f32 %v509, %v564
    %v572 = vadd.f32 %v510, %v565
    %v573 = vadd.f32 %v511, %v566
    %v574 = vadd.f32 %v512, %v567
    %v575 = vrot.slane %v46, 3
    %v576 = vrot.slane %v47, 3
    %v577 = vrot.slane %v49, 3
    %v578 = vrot.slane %v50, 3
    %vm579 = vcmp.lt.s32.totalorder %v52, 5
    %v580 = vsel %vm579, %v578, 0.0
    %v581 = vsel %vm579, %v577, %v578
    %v582 = vsel %vm579, 0.0, %v577
    %v583 = vsel %vm579, %v576, 0.0
    %v584 = vsel %vm579, %v575, %v576
    %v585 = vsel %vm579, 0.0, %v575
    %v586 = vld [vmem:[#allocation2 + $0xe] sm:$0x1]
    %588 = vset.pattern.permute.xlu0 0
    %589 = vperm.xlu0 %588, %v585
    %v590 = vpop.permute.xlu0 %589
    %593 = vset.pattern.permute.xlu0 0
    %594 = vperm.xlu0 %593, %v584
    %v595 = vpop.permute.xlu0 %594
    %598 = vset.pattern.permute.xlu0 0
    %599 = vperm.xlu0 %598, %v583
    %v600 = vpop.permute.xlu0 %599
    %603 = vset.pattern.permute.xlu0 0
    %604 = vperm.xlu0 %603, %v582
    %v605 = vpop.permute.xlu0 %604
    %608 = vset.pattern.permute.xlu0 0
    %609 = vperm.xlu0 %608, %v581
    %v610 = vpop.permute.xlu0 %609
    %613 = vset.pattern.permute.xlu0 0
    %614 = vperm.xlu0 %613, %v580
    %v615 = vpop.permute.xlu0 %614
    %618 = vset.pattern.permute.xlu0 0
    %619 = vperm.xlu0 %618, 0.0
    %v620 = vpop.permute.xlu0 %619
    %v622 = vperm.slane %v586, 0
    %v623 = vmul.f32 %v590, %v622
    %v624 = vmul.f32 %v595, %v622
    %v625 = vmul.f32 %v600, %v622
    %v626 = vmul.f32 %v605, %v622
    %v627 = vmul.f32 %v610, %v622
    %v628 = vmul.f32 %v615, %v622
    %v629 = vmul.f32 %v620, %v622
    %v630 = vadd.f32 %v568, %v623
    %v631 = vadd.f32 %v569, %v624
    %v632 = vadd.f32 %v570, %v625
    %v633 = vadd.f32 %v571, %v626
    %v634 = vadd.f32 %v572, %v627
    %v635 = vadd.f32 %v573, %v628
    %v636 = vadd.f32 %v574, %v629
    %v637 = vrot.slane %v46, 4
    %v638 = vrot.slane %v47, 4
    %v639 = vrot.slane %v49, 4
    %v640 = vrot.slane %v50, 4
    %vm641 = vcmp.lt.s32.totalorder %v52, 4
    %v642 = vsel %vm641, %v640, 0.0
    %v643 = vsel %vm641, %v639, %v640
    %v644 = vsel %vm641, 0.0, %v639
    %v645 = vsel %vm641, %v638, 0.0
    %v646 = vsel %vm641, %v637, %v638
    %v647 = vsel %vm641, 0.0, %v637
    %v648 = vld [vmem:[#allocation2 + $0xf] sm:$0x1]
    %650 = vset.pattern.permute.xlu0 0
    %651 = vperm.xlu0 %650, %v647
    %v652 = vpop.permute.xlu0 %651
    %655 = vset.pattern.permute.xlu0 0
    %656 = vperm.xlu0 %655, %v646
    %v657 = vpop.permute.xlu0 %656
    %660 = vset.pattern.permute.xlu0 0
    %661 = vperm.xlu0 %660, %v645
    %v662 = vpop.permute.xlu0 %661
    %665 = vset.pattern.permute.xlu0 0
    %666 = vperm.xlu0 %665, %v644
    %v667 = vpop.permute.xlu0 %666
    %670 = vset.pattern.permute.xlu0 0
    %671 = vperm.xlu0 %670, %v643
    %v672 = vpop.permute.xlu0 %671
    %675 = vset.pattern.permute.xlu0 0
    %676 = vperm.xlu0 %675, %v642
    %v677 = vpop.permute.xlu0 %676
    %680 = vset.pattern.permute.xlu0 0
    %681 = vperm.xlu0 %680, 0.0
    %v682 = vpop.permute.xlu0 %681
    %v684 = vperm.slane %v648, 0
    %v685 = vmul.f32 %v652, %v684
    %v686 = vmul.f32 %v657, %v684
    %v687 = vmul.f32 %v662, %v684
    %v688 = vmul.f32 %v667, %v684
    %v689 = vmul.f32 %v672, %v684
    %v690 = vmul.f32 %v677, %v684
    %v691 = vmul.f32 %v682, %v684
    %v692 = vadd.f32 %v630, %v685
    %v693 = vadd.f32 %v631, %v686
    %v694 = vadd.f32 %v632, %v687
    %v695 = vadd.f32 %v633, %v688
    %v696 = vadd.f32 %v634, %v689
    %v697 = vadd.f32 %v635, %v690
    %v698 = vadd.f32 %v636, %v691
    %v699 = vld [vmem:[#allocation4 + $0x2] sm:$0x1]
    %v700 = vld [vmem:[#allocation4 + $0x3] sm:$0x1]
    %v701 = vmul.f32 %v692, %v115
    %v702 = vmul.f32 %v693, %v116
    %v703 = vmul.f32 %v694, %v117
    %v704 = vmul.f32 %v695, %v118
    %v705 = vmul.f32 %v696, %v119
    %v706 = vmul.f32 %v697, %v120
    %v707 = vmul.f32 %v698, %v121
    %v708 = vsel %vm163, %v701, 0.0
    %v709 = vsel %vm163, %v702, 0.0
    %v710 = vadd.f32 %v708, %v709
    %v711 = vsel %vm163, %v703, 0.0
    %v712 = vadd.f32 %v710, %v711
    %v713 = vsel %vm163, %v704, 0.0
    %v714 = vadd.f32 %v712, %v713
    %v715 = vsel %vm163, %v705, 0.0
    %v716 = vadd.f32 %v714, %v715
    %v717 = vsel %vm163, %v706, 0.0
    %v718 = vadd.f32 %v716, %v717
    %v719 = vsel %vm163, %v707, 0.0
    %v720 = vadd.f32 %v718, %v719
    %v721 = vrot.slane %v720, 4
    %v722 = vadd.f32 %v720, %v721
    %v723 = vrot.slane %v722, 2
    %v724 = vadd.f32 %v722, %v723
    %v725 = vrot.slane %v724, 1
    %v726 = vadd.f32 %v724, %v725
    %v727 = vmul.f32 %v726, 0.03125
    %v728 = vsub.f32 %v692, %v727
    %v729 = vsub.f32 %v693, %v727
    %v730 = vsub.f32 %v694, %v727
    %v731 = vsub.f32 %v695, %v727
    %v732 = vsub.f32 %v696, %v727
    %v733 = vsub.f32 %v697, %v727
    %v734 = vsub.f32 %v698, %v727
    %v735 = vmul.f32 %v728, %v115
    %v736 = vmul.f32 %v729, %v116
    %v737 = vmul.f32 %v730, %v117
    %v738 = vmul.f32 %v731, %v118
    %v739 = vmul.f32 %v732, %v119
    %v740 = vmul.f32 %v733, %v120
    %v741 = vmul.f32 %v734, %v121
    %v742 = vmul.f32 %v735, %v735
    %v743 = vmul.f32 %v736, %v736
    %v744 = vmul.f32 %v737, %v737
    %v745 = vmul.f32 %v738, %v738
    %v746 = vmul.f32 %v739, %v739
    %v747 = vmul.f32 %v740, %v740
    %v748 = vmul.f32 %v741, %v741
    %v749 = vsel %vm163, %v742, 0.0
    %v750 = vsel %vm163, %v743, 0.0
    %v751 = vadd.f32 %v749, %v750
    %v752 = vsel %vm163, %v744, 0.0
    %v753 = vadd.f32 %v751, %v752
    %v754 = vsel %vm163, %v745, 0.0
    %v755 = vadd.f32 %v753, %v754
    %v756 = vsel %vm163, %v746, 0.0
    %v757 = vadd.f32 %v755, %v756
    %v758 = vsel %vm163, %v747, 0.0
    %v759 = vadd.f32 %v757, %v758
    %v760 = vsel %vm163, %v748, 0.0
    %v761 = vadd.f32 %v759, %v760
    %v762 = vrot.slane %v761, 4
    %v763 = vadd.f32 %v761, %v762
    %v764 = vrot.slane %v763, 2
    %v765 = vadd.f32 %v763, %v764
    %v766 = vrot.slane %v765, 1
    %v767 = vadd.f32 %v765, %v766
    %v768 = vmul.f32 %v767, 0.03125
    %v769 = vadd.f32 %v768, 1e-05
    %v770 = vrsqrt.pop %v769
    %v771 = vmul.f32 %v770, %v769
    %v772 = vmul.f32 %v771, %v770
    %v773 = vmul.f32 0.5, %v772
    %v774 = vsub.f32 1.5, %v773
    %v775 = vmul.f32 %v770, %v774
    %vm776 = vweird.f32 %v769
    %vm777 = vweird.f32 %v770
    %vm778 = vmor %vm776, %vm777
    %v779 = vsel %vm778, %v770, %v775
    %v780 = vmul.f32 %v779, %v699
    %v781 = vperm.slane %v780, 0
    %v782 = vmul.f32 %v735, %v781
    %v783 = vmul.f32 %v736, %v781
    %v784 = vmul.f32 %v737, %v781
    %v785 = vmul.f32 %v738, %v781
    %v786 = vmul.f32 %v739, %v781
    %v787 = vmul.f32 %v740, %v781
    %v788 = vmul.f32 %v741, %v781
    %v789 = vperm.slane %v700, 0
    %v790 = vadd.f32 %v782, %v789
    %v791 = vadd.f32 %v783, %v789
    %v792 = vadd.f32 %v784, %v789
    %v793 = vadd.f32 %v785, %v789
    %v794 = vadd.f32 %v786, %v789
    %v795 = vadd.f32 %v787, %v789
    %v796 = vadd.f32 %v788, %v789
    %v797 = vmax.f32 %v790, 0.0
    %v798 = vmax.f32 %v791, 0.0
    %v799 = vmax.f32 %v792, 0.0
    %v800 = vmax.f32 %v793, 0.0
    %v801 = vmax.f32 %v794, 0.0
    %v802 = vmax.f32 %v795, 0.0
    %v803 = vmax.f32 %v796, 0.0
    %v804 = vmul.f32 %v797, %v115
    %v805 = vmul.f32 %v798, %v116
    %v806 = vmul.f32 %v799, %v117
    %v807 = vmul.f32 %v800, %v118
    %v808 = vmul.f32 %v801, %v119
    %v809 = vmul.f32 %v802, %v120
    %v810 = vmul.f32 %v803, %v121
    %v811 = vrot.slane %v804, 6
    %v812 = vrot.slane %v805, 6
    %v813 = vrot.slane %v806, 6
    %v814 = vrot.slane %v807, 6
    %v815 = vrot.slane %v808, 6
    %v816 = vrot.slane %v809, 6
    %v817 = vrot.slane %v810, 6
    %v818 = vsel %vm317, %v816, %v817
    %v819 = vsel %vm317, %v815, %v816
    %v820 = vsel %vm317, %v814, %v815
    %v821 = vsel %vm317, %v813, %v814
    %v822 = vsel %vm317, %v812, %v813
    %v823 = vsel %vm317, %v811, %v812
    %v824 = vsel %vm317, %v817, %v811
    %v825 = vld [vmem:[#allocation2 + $0x10] sm:$0xff]
    %v826 = vld [vmem:[#allocation2 + $0x18] sm:$0xff]
    %v827 = vld [vmem:[#allocation2 + $0x20] sm:$0xff]
    %v828 = vld [vmem:[#allocation2 + $0x28] sm:$0xff]
    %v829 = vrot.slane %v804, 7
    %v830 = vrot.slane %v805, 7
    %v831 = vrot.slane %v806, 7
    %v832 = vrot.slane %v807, 7
    %v833 = vrot.slane %v808, 7
    %v834 = vrot.slane %v809, 7
    %v835 = vrot.slane %v810, 7
    %v836 = vsel %vm379, %v834, %v835
    %v837 = vsel %vm379, %v833, %v834
    %v838 = vsel %vm379, %v832, %v833
    %v839 = vsel %vm379, %v831, %v832
    %v840 = vsel %vm379, %v830, %v831
    %v841 = vsel %vm379, %v829, %v830
    %v842 = vsel %vm379, %v835, %v829
    %v843 = vld [vmem:[#allocation2 + $0x30] sm:$0xff]
    %v844 = vld [vmem:[#allocation2 + $0x38] sm:$0xff]
    %v845 = vld [vmem:[#allocation2 + $0x40] sm:$0xff]
    %v846 = vld [vmem:[#allocation2 + $0x48] sm:$0xff]
    %v848 = vsel %vm163, %v842, 0
    %v851 = vsel %vm163, %v841, 0
    %v854 = vsel %vm163, %v840, 0
    %v857 = vsel %vm163, %v839, 0
    %v860 = vsel %vm163, %v838, 0
    %v863 = vsel %vm163, %v837, 0
    %v866 = vsel %vm163, %v836, 0
    %868 = vmatpush.msra.mxu0 0.0
    %869 = vmatpush.msra.mxu0 0.0
    %870 = vmatpush.msra.mxu0 0.0
    %871 = vmatpush.msra.mxu0 0.0
    %872 = vmatpush.msra.mxu0 0.0
    %873 = vmatpush.msra.mxu0 0.0
    %874 = vmatpush.msra.mxu0 0.0
    %875 = vmatpush.msra.mxu0 0.0
    %876 = vmatpush.msra.mxu0 0.0
    %877 = vmatpush.msra.mxu0 0.0
    %878 = vmatpush.msra.mxu0 0.0
    %879 = vmatpush.msra.mxu0 0.0
    %880 = vmatpush.msra.mxu0 %v846
    %881 = vmatpush.msra.mxu0 %v845
    %882 = vmatpush.msra.mxu0 %v844
    %883 = vmatpush.msra.mxu0 %v843
    %884 = vmatmul.f32.gmra.mxu0 %v848
    %v885 = vpop.f32.mrf.mxu0
    %v886 = vadd.f32 0.0, %v885
    %887 = vmatmul.f32.gmra.mxu0 %v851
    %v888 = vpop.f32.mrf.mxu0
    %v889 = vadd.f32 0.0, %v888
    %890 = vmatmul.f32.gmra.mxu0 %v854
    %v891 = vpop.f32.mrf.mxu0
    %v892 = vadd.f32 0.0, %v891
    %893 = vmatmul.f32.gmra.mxu0 %v857
    %v894 = vpop.f32.mrf.mxu0
    %v895 = vadd.f32 0.0, %v894
    %896 = vmatmul.f32.gmra.mxu0 %v860
    %v897 = vpop.f32.mrf.mxu0
    %v898 = vadd.f32 0.0, %v897
    %899 = vmatmul.f32.gmra.mxu0 %v863
    %v900 = vpop.f32.mrf.mxu0
    %v901 = vadd.f32 0.0, %v900
    %902 = vmatmul.f32.gmra.mxu0 %v866
    %v903 = vpop.f32.mrf.mxu0
    %v904 = vadd.f32 0.0, %v903
    %905 = vdwg.mxu0
    %v907 = vsel %vm163, %v824, 0
    %v910 = vsel %vm163, %v823, 0
    %v913 = vsel %vm163, %v822, 0
    %v916 = vsel %vm163, %v821, 0
    %v919 = vsel %vm163, %v820, 0
    %v922 = vsel %vm163, %v819, 0
    %v925 = vsel %vm163, %v818, 0
    %927 = vmatpush.msra.mxu0 0.0
    %928 = vmatpush.msra.mxu0 0.0
    %929 = vmatpush.msra.mxu0 0.0
    %930 = vmatpush.msra.mxu0 0.0
    %931 = vmatpush.msra.mxu0 0.0
    %932 = vmatpush.msra.mxu0 0.0
    %933 = vmatpush.msra.mxu0 0.0
    %934 = vmatpush.msra.mxu0 0.0
    %935 = vmatpush.msra.mxu0 0.0
    %936 = vmatpush.msra.mxu0 0.0
    %937 = vmatpush.msra.mxu0 0.0
    %938 = vmatpush.msra.mxu0 0.0
    %939 = vmatpush.msra.mxu0 %v828
    %940 = vmatpush.msra.mxu0 %v827
    %941 = vmatpush.msra.mxu0 %v826
    %942 = vmatpush.msra.mxu0 %v825
    %943 = vmatmul.f32.gmra.mxu0 %v907
    %v944 = vpop.f32.mrf.mxu0
    %v945 = vadd.f32 %v886, %v944
    %946 = vmatmul.f32.gmra.mxu0 %v910
    %v947 = vpop.f32.mrf.mxu0
    %v948 = vadd.f32 %v889, %v947
    %949 = vmatmul.f32.gmra.mxu0 %v913
    %v950 = vpop.f32.mrf.mxu0
    %v951 = vadd.f32 %v892, %v950
    %952 = vmatmul.f32.gmra.mxu0 %v916
    %v953 = vpop.f32.mrf.mxu0
    %v954 = vadd.f32 %v895, %v953
    %955 = vmatmul.f32.gmra.mxu0 %v919
    %v956 = vpop.f32.mrf.mxu0
    %v957 = vadd.f32 %v898, %v956
    %958 = vmatmul.f32.gmra.mxu0 %v922
    %v959 = vpop.f32.mrf.mxu0
    %v960 = vadd.f32 %v901, %v959
    %961 = vmatmul.f32.gmra.mxu0 %v925
    %v962 = vpop.f32.mrf.mxu0
    %v963 = vadd.f32 %v904, %v962
    %964 = vdwg.mxu0
    %v965 = vld [vmem:[#allocation2 + $0x50] sm:$0xff]
    %v966 = vld [vmem:[#allocation2 + $0x58] sm:$0xff]
    %v967 = vld [vmem:[#allocation2 + $0x60] sm:$0xff]
    %v968 = vld [vmem:[#allocation2 + $0x68] sm:$0xff]
    %v970 = vsel %vm163, %v804, 0
    %v973 = vsel %vm163, %v805, 0
    %v976 = vsel %vm163, %v806, 0
    %v979 = vsel %vm163, %v807, 0
    %v982 = vsel %vm163, %v808, 0
    %v985 = vsel %vm163, %v809, 0
    %v988 = vsel %vm163, %v810, 0
    %990 = vmatpush.msra.mxu0 0.0
    %991 = vmatpush.msra.mxu0 0.0
    %992 = vmatpush.msra.mxu0 0.0
    %993 = vmatpush.msra.mxu0 0.0
    %994 = vmatpush.msra.mxu0 0.0
    %995 = vmatpush.msra.mxu0 0.0
    %996 = vmatpush.msra.mxu0 0.0
    %997 = vmatpush.msra.mxu0 0.0
    %998 = vmatpush.msra.mxu0 0.0
    %999 = vmatpush.msra.mxu0 0.0
    %1000 = vmatpush.msra.mxu0 0.0
    %1001 = vmatpush.msra.mxu0 0.0
    %1002 = vmatpush.msra.mxu0 %v968
    %1003 = vmatpush.msra.mxu0 %v967
    %1004 = vmatpush.msra.mxu0 %v966
    %1005 = vmatpush.msra.mxu0 %v965
    %1006 = vmatmul.f32.gmra.mxu0 %v970
    %v1007 = vpop.f32.mrf.mxu0
    %v1008 = vadd.f32 0.0, %v1007
    %1009 = vmatmul.f32.gmra.mxu0 %v973
    %v1010 = vpop.f32.mrf.mxu0
    %v1011 = vadd.f32 0.0, %v1010
    %1012 = vmatmul.f32.gmra.mxu0 %v976
    %v1013 = vpop.f32.mrf.mxu0
    %v1014 = vadd.f32 0.0, %v1013
    %1015 = vmatmul.f32.gmra.mxu0 %v979
    %v1016 = vpop.f32.mrf.mxu0
    %v1017 = vadd.f32 0.0, %v1016
    %1018 = vmatmul.f32.gmra.mxu0 %v982
    %v1019 = vpop.f32.mrf.mxu0
    %v1020 = vadd.f32 0.0, %v1019
    %1021 = vmatmul.f32.gmra.mxu0 %v985
    %v1022 = vpop.f32.mrf.mxu0
    %v1023 = vadd.f32 0.0, %v1022
    %1024 = vmatmul.f32.gmra.mxu0 %v988
    %v1025 = vpop.f32.mrf.mxu0
    %v1026 = vadd.f32 0.0, %v1025
    %1027 = vdwg.mxu0
    %v1028 = vadd.f32 %v945, %v1008
    %v1029 = vadd.f32 %v948, %v1011
    %v1030 = vadd.f32 %v951, %v1014
    %v1031 = vadd.f32 %v954, %v1017
    %v1032 = vadd.f32 %v957, %v1020
    %v1033 = vadd.f32 %v960, %v1023
    %v1034 = vadd.f32 %v963, %v1026
    %v1035 = vrot.slane %v804, 1
    %v1036 = vrot.slane %v805, 1
    %v1037 = vrot.slane %v806, 1
    %v1038 = vrot.slane %v807, 1
    %v1039 = vrot.slane %v808, 1
    %v1040 = vrot.slane %v809, 1
    %v1041 = vrot.slane %v810, 1
    %v1042 = vsel %vm455, %v1040, %v1041
    %v1043 = vsel %vm455, %v1039, %v1040
    %v1044 = vsel %vm455, %v1038, %v1039
    %v1045 = vsel %vm455, %v1037, %v1038
    %v1046 = vsel %vm455, %v1036, %v1037
    %v1047 = vsel %vm455, %v1035, %v1036
    %v1048 = vsel %vm455, %v1041, %v1035
    %v1049 = vld [vmem:[#allocation2 + $0x70] sm:$0xff]
    %v1050 = vld [vmem:[#allocation2 + $0x78] sm:$0xff]
    %v1051 = vld [vmem:[#allocation2 + $0x80] sm:$0xff]
    %v1052 = vld [vmem:[#allocation2 + $0x88] sm:$0xff]
    %v1054 = vsel %vm163, %v1047, 0
    %v1057 = vsel %vm163, %v1046, 0
    %v1060 = vsel %vm163, %v1045, 0
    %v1063 = vsel %vm163, %v1044, 0
    %v1066 = vsel %vm163, %v1043, 0
    %v1069 = vsel %vm163, %v1042, 0
    %v1072 = vsel %vm163, %v1048, 0
    %1074 = vmatpush.msra.mxu0 0.0
    %1075 = vmatpush.msra.mxu0 0.0
    %1076 = vmatpush.msra.mxu0 0.0
    %1077 = vmatpush.msra.mxu0 0.0
    %1078 = vmatpush.msra.mxu0 0.0
    %1079 = vmatpush.msra.mxu0 0.0
    %1080 = vmatpush.msra.mxu0 0.0
    %1081 = vmatpush.msra.mxu0 0.0
    %1082 = vmatpush.msra.mxu0 0.0
    %1083 = vmatpush.msra.mxu0 0.0
    %1084 = vmatpush.msra.mxu0 0.0
    %1085 = vmatpush.msra.mxu0 0.0
    %1086 = vmatpush.msra.mxu0 %v1052
    %1087 = vmatpush.msra.mxu0 %v1051
    %1088 = vmatpush.msra.mxu0 %v1050
    %1089 = vmatpush.msra.mxu0 %v1049
    %1090 = vmatmul.f32.gmra.mxu0 %v1054
    %v1091 = vpop.f32.mrf.mxu0
    %v1092 = vadd.f32 0.0, %v1091
    %1093 = vmatmul.f32.gmra.mxu0 %v1057
    %v1094 = vpop.f32.mrf.mxu0
    %v1095 = vadd.f32 0.0, %v1094
    %1096 = vmatmul.f32.gmra.mxu0 %v1060
    %v1097 = vpop.f32.mrf.mxu0
    %v1098 = vadd.f32 0.0, %v1097
    %1099 = vmatmul.f32.gmra.mxu0 %v1063
    %v1100 = vpop.f32.mrf.mxu0
    %v1101 = vadd.f32 0.0, %v1100
    %1102 = vmatmul.f32.gmra.mxu0 %v1066
    %v1103 = vpop.f32.mrf.mxu0
    %v1104 = vadd.f32 0.0, %v1103
    %1105 = vmatmul.f32.gmra.mxu0 %v1069
    %v1106 = vpop.f32.mrf.mxu0
    %v1107 = vadd.f32 0.0, %v1106
    %1108 = vmatmul.f32.gmra.mxu0 %v1072
    %v1109 = vpop.f32.mrf.mxu0
    %v1110 = vadd.f32 0.0, %v1109
    %1111 = vdwg.mxu0
    %v1112 = vadd.f32 %v1028, %v1092
    %v1113 = vadd.f32 %v1029, %v1095
    %v1114 = vadd.f32 %v1030, %v1098
    %v1115 = vadd.f32 %v1031, %v1101
    %v1116 = vadd.f32 %v1032, %v1104
    %v1117 = vadd.f32 %v1033, %v1107
    %v1118 = vadd.f32 %v1034, %v1110
    %v1119 = vrot.slane %v804, 2
    %v1120 = vrot.slane %v805, 2
    %v1121 = vrot.slane %v806, 2
    %v1122 = vrot.slane %v807, 2
    %v1123 = vrot.slane %v808, 2
    %v1124 = vrot.slane %v809, 2
    %v1125 = vrot.slane %v810, 2
    %v1126 = vsel %vm517, %v1124, %v1125
    %v1127 = vsel %vm517, %v1123, %v1124
    %v1128 = vsel %vm517, %v1122, %v1123
    %v1129 = vsel %vm517, %v1121, %v1122
    %v1130 = vsel %vm517, %v1120, %v1121
    %v1131 = vsel %vm517, %v1119, %v1120
    %v1132 = vsel %vm517, %v1125, %v1119
    %v1133 = vld [vmem:[#allocation2 + $0x90] sm:$0xff]
    %v1134 = vld [vmem:[#allocation2 + $0x98] sm:$0xff]
    %v1135 = vld [vmem:[#allocation2 + $0xa0] sm:$0xff]
    %v1136 = vld [vmem:[#allocation2 + $0xa8] sm:$0xff]
    %v1138 = vsel %vm163, %v1131, 0
    %v1141 = vsel %vm163, %v1130, 0
    %v1144 = vsel %vm163, %v1129, 0
    %v1147 = vsel %vm163, %v1128, 0
    %v1150 = vsel %vm163, %v1127, 0
    %v1153 = vsel %vm163, %v1126, 0
    %v1156 = vsel %vm163, %v1132, 0
    %1158 = vmatpush.msra.mxu0 0.0
    %1159 = vmatpush.msra.mxu0 0.0
    %1160 = vmatpush.msra.mxu0 0.0
    %1161 = vmatpush.msra.mxu0 0.0
    %1162 = vmatpush.msra.mxu0 0.0
    %1163 = vmatpush.msra.mxu0 0.0
    %1164 = vmatpush.msra.mxu0 0.0
    %1165 = vmatpush.msra.mxu0 0.0
    %1166 = vmatpush.msra.mxu0 0.0
    %1167 = vmatpush.msra.mxu0 0.0
    %1168 = vmatpush.msra.mxu0 0.0
    %1169 = vmatpush.msra.mxu0 0.0
    %1170 = vmatpush.msra.mxu0 %v1136
    %1171 = vmatpush.msra.mxu0 %v1135
    %1172 = vmatpush.msra.mxu0 %v1134
    %1173 = vmatpush.msra.mxu0 %v1133
    %1174 = vmatmul.f32.gmra.mxu0 %v1138
    %v1175 = vpop.f32.mrf.mxu0
    %v1176 = vadd.f32 0.0, %v1175
    %1177 = vmatmul.f32.gmra.mxu0 %v1141
    %v1178 = vpop.f32.mrf.mxu0
    %v1179 = vadd.f32 0.0, %v1178
    %1180 = vmatmul.f32.gmra.mxu0 %v1144
    %v1181 = vpop.f32.mrf.mxu0
    %v1182 = vadd.f32 0.0, %v1181
    %1183 = vmatmul.f32.gmra.mxu0 %v1147
    %v1184 = vpop.f32.mrf.mxu0
    %v1185 = vadd.f32 0.0, %v1184
    %1186 = vmatmul.f32.gmra.mxu0 %v1150
    %v1187 = vpop.f32.mrf.mxu0
    %v1188 = vadd.f32 0.0, %v1187
    %1189 = vmatmul.f32.gmra.mxu0 %v1153
    %v1190 = vpop.f32.mrf.mxu0
    %v1191 = vadd.f32 0.0, %v1190
    %1192 = vmatmul.f32.gmra.mxu0 %v1156
    %v1193 = vpop.f32.mrf.mxu0
    %v1194 = vadd.f32 0.0, %v1193
    %1195 = vdwg.mxu0
    %v1196 = vadd.f32 %v1112, %v1176
    %v1197 = vadd.f32 %v1113, %v1179
    %v1198 = vadd.f32 %v1114, %v1182
    %v1199 = vadd.f32 %v1115, %v1185
    %v1200 = vadd.f32 %v1116, %v1188
    %v1201 = vadd.f32 %v1117, %v1191
    %v1202 = vadd.f32 %v1118, %v1194
    %v1203 = vld [vmem:[#allocation4 + $0x4] sm:$0x1]
    %v1204 = vld [vmem:[#allocation4 + $0x5] sm:$0x1]
    %v1205 = vmul.f32 %v1196, %v115
    %v1206 = vmul.f32 %v1197, %v116
    %v1207 = vmul.f32 %v1198, %v117
    %v1208 = vmul.f32 %v1199, %v118
    %v1209 = vmul.f32 %v1200, %v119
    %v1210 = vmul.f32 %v1201, %v120
    %v1211 = vmul.f32 %v1202, %v121
    %v1212 = vsel %vm163, %v1205, 0.0
    %v1213 = vsel %vm163, %v1206, 0.0
    %v1214 = vadd.f32 %v1212, %v1213
    %v1215 = vsel %vm163, %v1207, 0.0
    %v1216 = vadd.f32 %v1214, %v1215
    %v1217 = vsel %vm163, %v1208, 0.0
    %v1218 = vadd.f32 %v1216, %v1217
    %v1219 = vsel %vm163, %v1209, 0.0
    %v1220 = vadd.f32 %v1218, %v1219
    %v1221 = vsel %vm163, %v1210, 0.0
    %v1222 = vadd.f32 %v1220, %v1221
    %v1223 = vsel %vm163, %v1211, 0.0
    %v1224 = vadd.f32 %v1222, %v1223
    %v1225 = vrot.slane %v1224, 4
    %v1226 = vadd.f32 %v1224, %v1225
    %v1227 = vrot.slane %v1226, 2
    %v1228 = vadd.f32 %v1226, %v1227
    %v1229 = vrot.slane %v1228, 1
    %v1230 = vadd.f32 %v1228, %v1229
    %v1231 = vmul.f32 %v1230, 0.03125
    %v1232 = vsub.f32 %v1196, %v1231
    %v1233 = vsub.f32 %v1197, %v1231
    %v1234 = vsub.f32 %v1198, %v1231
    %v1235 = vsub.f32 %v1199, %v1231
    %v1236 = vsub.f32 %v1200, %v1231
    %v1237 = vsub.f32 %v1201, %v1231
    %v1238 = vsub.f32 %v1202, %v1231
    %v1239 = vmul.f32 %v1232, %v115
    %v1240 = vmul.f32 %v1233, %v116
    %v1241 = vmul.f32 %v1234, %v117
    %v1242 = vmul.f32 %v1235, %v118
    %v1243 = vmul.f32 %v1236, %v119
    %v1244 = vmul.f32 %v1237, %v120
    %v1245 = vmul.f32 %v1238, %v121
    %v1246 = vmul.f32 %v1239, %v1239
    %v1247 = vmul.f32 %v1240, %v1240
    %v1248 = vmul.f32 %v1241, %v1241
    %v1249 = vmul.f32 %v1242, %v1242
    %v1250 = vmul.f32 %v1243, %v1243
    %v1251 = vmul.f32 %v1244, %v1244
    %v1252 = vmul.f32 %v1245, %v1245
    %v1253 = vsel %vm163, %v1246, 0.0
    %v1254 = vsel %vm163, %v1247, 0.0
    %v1255 = vadd.f32 %v1253, %v1254
    %v1256 = vsel %vm163, %v1248, 0.0
    %v1257 = vadd.f32 %v1255, %v1256
    %v1258 = vsel %vm163, %v1249, 0.0
    %v1259 = vadd.f32 %v1257, %v1258
    %v1260 = vsel %vm163, %v1250, 0.0
    %v1261 = vadd.f32 %v1259, %v1260
    %v1262 = vsel %vm163, %v1251, 0.0
    %v1263 = vadd.f32 %v1261, %v1262
    %v1264 = vsel %vm163, %v1252, 0.0
    %v1265 = vadd.f32 %v1263, %v1264
    %v1266 = vrot.slane %v1265, 4
    %v1267 = vadd.f32 %v1265, %v1266
    %v1268 = vrot.slane %v1267, 2
    %v1269 = vadd.f32 %v1267, %v1268
    %v1270 = vrot.slane %v1269, 1
    %v1271 = vadd.f32 %v1269, %v1270
    %v1272 = vmul.f32 %v1271, 0.03125
    %v1273 = vadd.f32 %v1272, 1e-05
    %v1274 = vrsqrt.pop %v1273
    %v1275 = vmul.f32 %v1274, %v1273
    %v1276 = vmul.f32 %v1275, %v1274
    %v1277 = vmul.f32 0.5, %v1276
    %v1278 = vsub.f32 1.5, %v1277
    %v1279 = vmul.f32 %v1274, %v1278
    %vm1280 = vweird.f32 %v1273
    %vm1281 = vweird.f32 %v1274
    %vm1282 = vmor %vm1280, %vm1281
    %v1283 = vsel %vm1282, %v1274, %v1279
    %v1284 = vmul.f32 %v1283, %v1203
    %v1285 = vperm.slane %v1284, 0
    %v1286 = vmul.f32 %v1239, %v1285
    %v1287 = vmul.f32 %v1240, %v1285
    %v1288 = vmul.f32 %v1241, %v1285
    %v1289 = vmul.f32 %v1242, %v1285
    %v1290 = vmul.f32 %v1243, %v1285
    %v1291 = vmul.f32 %v1244, %v1285
    %v1292 = vmul.f32 %v1245, %v1285
    %v1293 = vperm.slane %v1204, 0
    %v1294 = vadd.f32 %v1286, %v1293
    %v1295 = vadd.f32 %v1287, %v1293
    %v1296 = vadd.f32 %v1288, %v1293
    %v1297 = vadd.f32 %v1289, %v1293
    %v1298 = vadd.f32 %v1290, %v1293
    %v1299 = vadd.f32 %v1291, %v1293
    %v1300 = vadd.f32 %v1292, %v1293
    %v1301 = vmax.f32 %v1294, 0.0
    %v1302 = vmax.f32 %v1295, 0.0
    %v1303 = vmax.f32 %v1296, 0.0
    %v1304 = vmax.f32 %v1297, 0.0
    %v1305 = vmax.f32 %v1298, 0.0
    %v1306 = vmax.f32 %v1299, 0.0
    %v1307 = vmax.f32 %v1300, 0.0
    %v1308 = vmul.f32 %v1301, %v115
    %v1309 = vmul.f32 %v1302, %v116
    %v1310 = vmul.f32 %v1303, %v117
    %v1311 = vmul.f32 %v1304, %v118
    %v1312 = vmul.f32 %v1305, %v119
    %v1313 = vmul.f32 %v1306, %v120
    %v1314 = vmul.f32 %v1307, %v121
    %v1315 = vrot.slane %v1308, 6
    %v1316 = vrot.slane %v1309, 6
    %v1317 = vrot.slane %v1310, 6
    %v1318 = vrot.slane %v1311, 6
    %v1319 = vrot.slane %v1312, 6
    %v1320 = vrot.slane %v1313, 6
    %v1321 = vrot.slane %v1314, 6
    %v1322 = vsel %vm317, %v1320, %v1321
    %v1323 = vsel %vm317, %v1319, %v1320
    %v1324 = vsel %vm317, %v1318, %v1319
    %v1325 = vsel %vm317, %v1317, %v1318
    %v1326 = vsel %vm317, %v1316, %v1317
    %v1327 = vsel %vm317, %v1315, %v1316
    %v1328 = vsel %vm317, %v1321, %v1315
    %v1329 = vld [vmem:[#allocation2 + $0xb0] sm:$0xff]
    %v1330 = vld [vmem:[#allocation2 + $0xb8] sm:$0xff]
    %v1331 = vld [vmem:[#allocation2 + $0xc0] sm:$0xff]
    %v1332 = vld [vmem:[#allocation2 + $0xc8] sm:$0xff]
    %v1333 = vrot.slane %v1308, 7
    %v1334 = vrot.slane %v1309, 7
    %v1335 = vrot.slane %v1310, 7
    %v1336 = vrot.slane %v1311, 7
    %v1337 = vrot.slane %v1312, 7
    %v1338 = vrot.slane %v1313, 7
    %v1339 = vrot.slane %v1314, 7
    %v1340 = vsel %vm379, %v1338, %v1339
    %v1341 = vsel %vm379, %v1337, %v1338
    %v1342 = vsel %vm379, %v1336, %v1337
    %v1343 = vsel %vm379, %v1335, %v1336
    %v1344 = vsel %vm379, %v1334, %v1335
    %v1345 = vsel %vm379, %v1333, %v1334
    %v1346 = vsel %vm379, %v1339, %v1333
    %v1347 = vld [vmem:[#allocation2 + $0xd0] sm:$0xff]
    %v1348 = vld [vmem:[#allocation2 + $0xd8] sm:$0xff]
    %v1349 = vld [vmem:[#allocation2 + $0xe0] sm:$0xff]
    %v1350 = vld [vmem:[#allocation2 + $0xe8] sm:$0xff]
    %v1352 = vsel %vm163, %v1346, 0
    %v1355 = vsel %vm163, %v1345, 0
    %v1358 = vsel %vm163, %v1344, 0
    %v1361 = vsel %vm163, %v1343, 0
    %v1364 = vsel %vm163, %v1342, 0
    %v1367 = vsel %vm163, %v1341, 0
    %v1370 = vsel %vm163, %v1340, 0
    %1372 = vmatpush.msra.mxu0 0.0
    %1373 = vmatpush.msra.mxu0 0.0
    %1374 = vmatpush.msra.mxu0 0.0
    %1375 = vmatpush.msra.mxu0 0.0
    %1376 = vmatpush.msra.mxu0 0.0
    %1377 = vmatpush.msra.mxu0 0.0
    %1378 = vmatpush.msra.mxu0 0.0
    %1379 = vmatpush.msra.mxu0 0.0
    %1380 = vmatpush.msra.mxu0 0.0
    %1381 = vmatpush.msra.mxu0 0.0
    %1382 = vmatpush.msra.mxu0 0.0
    %1383 = vmatpush.msra.mxu0 0.0
    %1384 = vmatpush.msra.mxu0 %v1350
    %1385 = vmatpush.msra.mxu0 %v1349
    %1386 = vmatpush.msra.mxu0 %v1348
    %1387 = vmatpush.msra.mxu0 %v1347
    %1388 = vmatmul.f32.gmra.mxu0 %v1352
    %v1389 = vpop.f32.mrf.mxu0
    %v1390 = vadd.f32 0.0, %v1389
    %1391 = vmatmul.f32.gmra.mxu0 %v1355
    %v1392 = vpop.f32.mrf.mxu0
    %v1393 = vadd.f32 0.0, %v1392
    %1394 = vmatmul.f32.gmra.mxu0 %v1358
    %v1395 = vpop.f32.mrf.mxu0
    %v1396 = vadd.f32 0.0, %v1395
    %1397 = vmatmul.f32.gmra.mxu0 %v1361
    %v1398 = vpop.f32.mrf.mxu0
    %v1399 = vadd.f32 0.0, %v1398
    %1400 = vmatmul.f32.gmra.mxu0 %v1364
    %v1401 = vpop.f32.mrf.mxu0
    %v1402 = vadd.f32 0.0, %v1401
    %1403 = vmatmul.f32.gmra.mxu0 %v1367
    %v1404 = vpop.f32.mrf.mxu0
    %v1405 = vadd.f32 0.0, %v1404
    %1406 = vmatmul.f32.gmra.mxu0 %v1370
    %v1407 = vpop.f32.mrf.mxu0
    %v1408 = vadd.f32 0.0, %v1407
    %1409 = vdwg.mxu0
    %v1411 = vsel %vm163, %v1328, 0
    %v1414 = vsel %vm163, %v1327, 0
    %v1417 = vsel %vm163, %v1326, 0
    %v1420 = vsel %vm163, %v1325, 0
    %v1423 = vsel %vm163, %v1324, 0
    %v1426 = vsel %vm163, %v1323, 0
    %v1429 = vsel %vm163, %v1322, 0
    %1431 = vmatpush.msra.mxu0 0.0
    %1432 = vmatpush.msra.mxu0 0.0
    %1433 = vmatpush.msra.mxu0 0.0
    %1434 = vmatpush.msra.mxu0 0.0
    %1435 = vmatpush.msra.mxu0 0.0
    %1436 = vmatpush.msra.mxu0 0.0
    %1437 = vmatpush.msra.mxu0 0.0
    %1438 = vmatpush.msra.mxu0 0.0
    %1439 = vmatpush.msra.mxu0 0.0
    %1440 = vmatpush.msra.mxu0 0.0
    %1441 = vmatpush.msra.mxu0 0.0
    %1442 = vmatpush.msra.mxu0 0.0
    %1443 = vmatpush.msra.mxu0 %v1332
    %1444 = vmatpush.msra.mxu0 %v1331
    %1445 = vmatpush.msra.mxu0 %v1330
    %1446 = vmatpush.msra.mxu0 %v1329
    %1447 = vmatmul.f32.gmra.mxu0 %v1411
    %v1448 = vpop.f32.mrf.mxu0
    %v1449 = vadd.f32 %v1390, %v1448
    %1450 = vmatmul.f32.gmra.mxu0 %v1414
    %v1451 = vpop.f32.mrf.mxu0
    %v1452 = vadd.f32 %v1393, %v1451
    %1453 = vmatmul.f32.gmra.mxu0 %v1417
    %v1454 = vpop.f32.mrf.mxu0
    %v1455 = vadd.f32 %v1396, %v1454
    %1456 = vmatmul.f32.gmra.mxu0 %v1420
    %v1457 = vpop.f32.mrf.mxu0
    %v1458 = vadd.f32 %v1399, %v1457
    %1459 = vmatmul.f32.gmra.mxu0 %v1423
    %v1460 = vpop.f32.mrf.mxu0
    %v1461 = vadd.f32 %v1402, %v1460
    %1462 = vmatmul.f32.gmra.mxu0 %v1426
    %v1463 = vpop.f32.mrf.mxu0
    %v1464 = vadd.f32 %v1405, %v1463
    %1465 = vmatmul.f32.gmra.mxu0 %v1429
    %v1466 = vpop.f32.mrf.mxu0
    %v1467 = vadd.f32 %v1408, %v1466
    %1468 = vdwg.mxu0
    %v1469 = vld [vmem:[#allocation2 + $0xf0] sm:$0xff]
    %v1470 = vld [vmem:[#allocation2 + $0xf8] sm:$0xff]
    %v1471 = vld [vmem:[#allocation2 + $0x100] sm:$0xff]
    %v1472 = vld [vmem:[#allocation2 + $0x108] sm:$0xff]
    %v1474 = vsel %vm163, %v1308, 0
    %v1477 = vsel %vm163, %v1309, 0
    %v1480 = vsel %vm163, %v1310, 0
    %v1483 = vsel %vm163, %v1311, 0
    %v1486 = vsel %vm163, %v1312, 0
    %v1489 = vsel %vm163, %v1313, 0
    %v1492 = vsel %vm163, %v1314, 0
    %1494 = vmatpush.msra.mxu0 0.0
    %1495 = vmatpush.msra.mxu0 0.0
    %1496 = vmatpush.msra.mxu0 0.0
    %1497 = vmatpush.msra.mxu0 0.0
    %1498 = vmatpush.msra.mxu0 0.0
    %1499 = vmatpush.msra.mxu0 0.0
    %1500 = vmatpush.msra.mxu0 0.0
    %1501 = vmatpush.msra.mxu0 0.0
    %1502 = vmatpush.msra.mxu0 0.0
    %1503 = vmatpush.msra.mxu0 0.0
    %1504 = vmatpush.msra.mxu0 0.0
    %1505 = vmatpush.msra.mxu0 0.0
    %1506 = vmatpush.msra.mxu0 %v1472
    %1507 = vmatpush.msra.mxu0 %v1471
    %1508 = vmatpush.msra.mxu0 %v1470
    %1509 = vmatpush.msra.mxu0 %v1469
    %1510 = vmatmul.f32.gmra.mxu0 %v1474
    %v1511 = vpop.f32.mrf.mxu0
    %v1512 = vadd.f32 0.0, %v1511
    %1513 = vmatmul.f32.gmra.mxu0 %v1477
    %v1514 = vpop.f32.mrf.mxu0
    %v1515 = vadd.f32 0.0, %v1514
    %1516 = vmatmul.f32.gmra.mxu0 %v1480
    %v1517 = vpop.f32.mrf.mxu0
    %v1518 = vadd.f32 0.0, %v1517
    %1519 = vmatmul.f32.gmra.mxu0 %v1483
    %v1520 = vpop.f32.mrf.mxu0
    %v1521 = vadd.f32 0.0, %v1520
    %1522 = vmatmul.f32.gmra.mxu0 %v1486
    %v1523 = vpop.f32.mrf.mxu0
    %v1524 = vadd.f32 0.0, %v1523
    %1525 = vmatmul.f32.gmra.mxu0 %v1489
    %v1526 = vpop.f32.mrf.mxu0
    %v1527 = vadd.f32 0.0, %v1526
    %1528 = vmatmul.f32.gmra.mxu0 %v1492
    %v1529 = vpop.f32.mrf.mxu0
    %v1530 = vadd.f32 0.0, %v1529
    %1531 = vdwg.mxu0
    %v1532 = vadd.f32 %v1449, %v1512
    %v1533 = vadd.f32 %v1452, %v1515
    %v1534 = vadd.f32 %v1455, %v1518
    %v1535 = vadd.f32 %v1458, %v1521
    %v1536 = vadd.f32 %v1461, %v1524
    %v1537 = vadd.f32 %v1464, %v1527
    %v1538 = vadd.f32 %v1467, %v1530
    %v1539 = vrot.slane %v1308, 1
    %v1540 = vrot.slane %v1309, 1
    %v1541 = vrot.slane %v1310, 1
    %v1542 = vrot.slane %v1311, 1
    %v1543 = vrot.slane %v1312, 1
    %v1544 = vrot.slane %v1313, 1
    %v1545 = vrot.slane %v1314, 1
    %v1546 = vsel %vm455, %v1544, %v1545
    %v1547 = vsel %vm455, %v1543, %v1544
    %v1548 = vsel %vm455, %v1542, %v1543
    %v1549 = vsel %vm455, %v1541, %v1542
    %v1550 = vsel %vm455, %v1540, %v1541
    %v1551 = vsel %vm455, %v1539, %v1540
    %v1552 = vsel %vm455, %v1545, %v1539
    %v1553 = vld [vmem:[#allocation2 + $0x110] sm:$0xff]
    %v1554 = vld [vmem:[#allocation2 + $0x118] sm:$0xff]
    %v1555 = vld [vmem:[#allocation2 + $0x120] sm:$0xff]
    %v1556 = vld [vmem:[#allocation2 + $0x128] sm:$0xff]
    %v1558 = vsel %vm163, %v1551, 0
    %v1561 = vsel %vm163, %v1550, 0
    %v1564 = vsel %vm163, %v1549, 0
    %v1567 = vsel %vm163, %v1548, 0
    %v1570 = vsel %vm163, %v1547, 0
    %v1573 = vsel %vm163, %v1546, 0
    %v1576 = vsel %vm163, %v1552, 0
    %1578 = vmatpush.msra.mxu0 0.0
    %1579 = vmatpush.msra.mxu0 0.0
    %1580 = vmatpush.msra.mxu0 0.0
    %1581 = vmatpush.msra.mxu0 0.0
    %1582 = vmatpush.msra.mxu0 0.0
    %1583 = vmatpush.msra.mxu0 0.0
    %1584 = vmatpush.msra.mxu0 0.0
    %1585 = vmatpush.msra.mxu0 0.0
    %1586 = vmatpush.msra.mxu0 0.0
    %1587 = vmatpush.msra.mxu0 0.0
    %1588 = vmatpush.msra.mxu0 0.0
    %1589 = vmatpush.msra.mxu0 0.0
    %1590 = vmatpush.msra.mxu0 %v1556
    %1591 = vmatpush.msra.mxu0 %v1555
    %1592 = vmatpush.msra.mxu0 %v1554
    %1593 = vmatpush.msra.mxu0 %v1553
    %1594 = vmatmul.f32.gmra.mxu0 %v1558
    %v1595 = vpop.f32.mrf.mxu0
    %v1596 = vadd.f32 0.0, %v1595
    %1597 = vmatmul.f32.gmra.mxu0 %v1561
    %v1598 = vpop.f32.mrf.mxu0
    %v1599 = vadd.f32 0.0, %v1598
    %1600 = vmatmul.f32.gmra.mxu0 %v1564
    %v1601 = vpop.f32.mrf.mxu0
    %v1602 = vadd.f32 0.0, %v1601
    %1603 = vmatmul.f32.gmra.mxu0 %v1567
    %v1604 = vpop.f32.mrf.mxu0
    %v1605 = vadd.f32 0.0, %v1604
    %1606 = vmatmul.f32.gmra.mxu0 %v1570
    %v1607 = vpop.f32.mrf.mxu0
    %v1608 = vadd.f32 0.0, %v1607
    %1609 = vmatmul.f32.gmra.mxu0 %v1573
    %v1610 = vpop.f32.mrf.mxu0
    %v1611 = vadd.f32 0.0, %v1610
    %1612 = vmatmul.f32.gmra.mxu0 %v1576
    %v1613 = vpop.f32.mrf.mxu0
    %v1614 = vadd.f32 0.0, %v1613
    %1615 = vdwg.mxu0
    %v1616 = vadd.f32 %v1532, %v1596
    %v1617 = vadd.f32 %v1533, %v1599
    %v1618 = vadd.f32 %v1534, %v1602
    %v1619 = vadd.f32 %v1535, %v1605
    %v1620 = vadd.f32 %v1536, %v1608
    %v1621 = vadd.f32 %v1537, %v1611
    %v1622 = vadd.f32 %v1538, %v1614
    %v1623 = vrot.slane %v1308, 2
    %v1624 = vrot.slane %v1309, 2
    %v1625 = vrot.slane %v1310, 2
    %v1626 = vrot.slane %v1311, 2
    %v1627 = vrot.slane %v1312, 2
    %v1628 = vrot.slane %v1313, 2
    %v1629 = vrot.slane %v1314, 2
    %v1630 = vsel %vm517, %v1628, %v1629
    %v1631 = vsel %vm517, %v1627, %v1628
    %v1632 = vsel %vm517, %v1626, %v1627
    %v1633 = vsel %vm517, %v1625, %v1626
    %v1634 = vsel %vm517, %v1624, %v1625
    %v1635 = vsel %vm517, %v1623, %v1624
    %v1636 = vsel %vm517, %v1629, %v1623
    %v1637 = vld [vmem:[#allocation2 + $0x130] sm:$0xff]
    %v1638 = vld [vmem:[#allocation2 + $0x138] sm:$0xff]
    %v1639 = vld [vmem:[#allocation2 + $0x140] sm:$0xff]
    %v1640 = vld [vmem:[#allocation2 + $0x148] sm:$0xff]
    %v1642 = vsel %vm163, %v1635, 0
    %v1645 = vsel %vm163, %v1634, 0
    %v1648 = vsel %vm163, %v1633, 0
    %v1651 = vsel %vm163, %v1632, 0
    %v1654 = vsel %vm163, %v1631, 0
    %v1657 = vsel %vm163, %v1630, 0
    %v1660 = vsel %vm163, %v1636, 0
    %1662 = vmatpush.msra.mxu0 0.0
    %1663 = vmatpush.msra.mxu0 0.0
    %1664 = vmatpush.msra.mxu0 0.0
    %1665 = vmatpush.msra.mxu0 0.0
    %1666 = vmatpush.msra.mxu0 0.0
    %1667 = vmatpush.msra.mxu0 0.0
    %1668 = vmatpush.msra.mxu0 0.0
    %1669 = vmatpush.msra.mxu0 0.0
    %1670 = vmatpush.msra.mxu0 0.0
    %1671 = vmatpush.msra.mxu0 0.0
    %1672 = vmatpush.msra.mxu0 0.0
    %1673 = vmatpush.msra.mxu0 0.0
    %1674 = vmatpush.msra.mxu0 %v1640
    %1675 = vmatpush.msra.mxu0 %v1639
    %1676 = vmatpush.msra.mxu0 %v1638
    %1677 = vmatpush.msra.mxu0 %v1637
    %1678 = vmatmul.f32.gmra.mxu0 %v1642
    %v1679 = vpop.f32.mrf.mxu0
    %v1680 = vadd.f32 0.0, %v1679
    %1681 = vmatmul.f32.gmra.mxu0 %v1645
    %v1682 = vpop.f32.mrf.mxu0
    %v1683 = vadd.f32 0.0, %v1682
    %1684 = vmatmul.f32.gmra.mxu0 %v1648
    %v1685 = vpop.f32.mrf.mxu0
    %v1686 = vadd.f32 0.0, %v1685
    %1687 = vmatmul.f32.gmra.mxu0 %v1651
    %v1688 = vpop.f32.mrf.mxu0
    %v1689 = vadd.f32 0.0, %v1688
    %1690 = vmatmul.f32.gmra.mxu0 %v1654
    %v1691 = vpop.f32.mrf.mxu0
    %v1692 = vadd.f32 0.0, %v1691
    %1693 = vmatmul.f32.gmra.mxu0 %v1657
    %v1694 = vpop.f32.mrf.mxu0
    %v1695 = vadd.f32 0.0, %v1694
    %1696 = vmatmul.f32.gmra.mxu0 %v1660
    %v1697 = vpop.f32.mrf.mxu0
    %v1698 = vadd.f32 0.0, %v1697
    %1699 = vdwg.mxu0
    %v1700 = vadd.f32 %v1616, %v1680
    %v1701 = vadd.f32 %v1617, %v1683
    %v1702 = vadd.f32 %v1618, %v1686
    %v1703 = vadd.f32 %v1619, %v1689
    %v1704 = vadd.f32 %v1620, %v1692
    %v1705 = vadd.f32 %v1621, %v1695
    %v1706 = vadd.f32 %v1622, %v1698
    %v1707 = vld [vmem:[#allocation4 + $0x6] sm:$0x1]
    %v1708 = vld [vmem:[#allocation4 + $0x7] sm:$0x1]
    %v1709 = vmul.f32 %v1700, %v115
    %v1710 = vmul.f32 %v1701, %v116
    %v1711 = vmul.f32 %v1702, %v117
    %v1712 = vmul.f32 %v1703, %v118
    %v1713 = vmul.f32 %v1704, %v119
    %v1714 = vmul.f32 %v1705, %v120
    %v1715 = vmul.f32 %v1706, %v121
    %v1716 = vsel %vm163, %v1709, 0.0
    %v1717 = vsel %vm163, %v1710, 0.0
    %v1718 = vadd.f32 %v1716, %v1717
    %v1719 = vsel %vm163, %v1711, 0.0
    %v1720 = vadd.f32 %v1718, %v1719
    %v1721 = vsel %vm163, %v1712, 0.0
    %v1722 = vadd.f32 %v1720, %v1721
    %v1723 = vsel %vm163, %v1713, 0.0
    %v1724 = vadd.f32 %v1722, %v1723
    %v1725 = vsel %vm163, %v1714, 0.0
    %v1726 = vadd.f32 %v1724, %v1725
    %v1727 = vsel %vm163, %v1715, 0.0
    %v1728 = vadd.f32 %v1726, %v1727
    %v1729 = vrot.slane %v1728, 4
    %v1730 = vadd.f32 %v1728, %v1729
    %v1731 = vrot.slane %v1730, 2
    %v1732 = vadd.f32 %v1730, %v1731
    %v1733 = vrot.slane %v1732, 1
    %v1734 = vadd.f32 %v1732, %v1733
    %v1735 = vmul.f32 %v1734, 0.03125
    %v1736 = vsub.f32 %v1700, %v1735
    %v1737 = vsub.f32 %v1701, %v1735
    %v1738 = vsub.f32 %v1702, %v1735
    %v1739 = vsub.f32 %v1703, %v1735
    %v1740 = vsub.f32 %v1704, %v1735
    %v1741 = vsub.f32 %v1705, %v1735
    %v1742 = vsub.f32 %v1706, %v1735
    %v1743 = vmul.f32 %v1736, %v115
    %v1744 = vmul.f32 %v1737, %v116
    %v1745 = vmul.f32 %v1738, %v117
    %v1746 = vmul.f32 %v1739, %v118
    %v1747 = vmul.f32 %v1740, %v119
    %v1748 = vmul.f32 %v1741, %v120
    %v1749 = vmul.f32 %v1742, %v121
    %v1750 = vmul.f32 %v1743, %v1743
    %v1751 = vmul.f32 %v1744, %v1744
    %v1752 = vmul.f32 %v1745, %v1745
    %v1753 = vmul.f32 %v1746, %v1746
    %v1754 = vmul.f32 %v1747, %v1747
    %v1755 = vmul.f32 %v1748, %v1748
    %v1756 = vmul.f32 %v1749, %v1749
    %v1757 = vsel %vm163, %v1750, 0.0
    %v1758 = vsel %vm163, %v1751, 0.0
    %v1759 = vadd.f32 %v1757, %v1758
    %v1760 = vsel %vm163, %v1752, 0.0
    %v1761 = vadd.f32 %v1759, %v1760
    %v1762 = vsel %vm163, %v1753, 0.0
    %v1763 = vadd.f32 %v1761, %v1762
    %v1764 = vsel %vm163, %v1754, 0.0
    %v1765 = vadd.f32 %v1763, %v1764
    %v1766 = vsel %vm163, %v1755, 0.0
    %v1767 = vadd.f32 %v1765, %v1766
    %v1768 = vsel %vm163, %v1756, 0.0
    %v1769 = vadd.f32 %v1767, %v1768
    %v1770 = vrot.slane %v1769, 4
    %v1771 = vadd.f32 %v1769, %v1770
    %v1772 = vrot.slane %v1771, 2
    %v1773 = vadd.f32 %v1771, %v1772
    %v1774 = vrot.slane %v1773, 1
    %v1775 = vadd.f32 %v1773, %v1774
    %v1776 = vmul.f32 %v1775, 0.03125
    %v1777 = vadd.f32 %v1776, 1e-05
    %v1778 = vrsqrt.pop %v1777
    %v1779 = vmul.f32 %v1778, %v1777
    %v1780 = vmul.f32 %v1779, %v1778
    %v1781 = vmul.f32 0.5, %v1780
    %v1782 = vsub.f32 1.5, %v1781
    %v1783 = vmul.f32 %v1778, %v1782
    %vm1784 = vweird.f32 %v1777
    %vm1785 = vweird.f32 %v1778
    %vm1786 = vmor %vm1784, %vm1785
    %v1787 = vsel %vm1786, %v1778, %v1783
    %v1788 = vmul.f32 %v1787, %v1707
    %v1789 = vperm.slane %v1788, 0
    %v1790 = vmul.f32 %v1743, %v1789
    %v1791 = vmul.f32 %v1744, %v1789
    %v1792 = vmul.f32 %v1745, %v1789
    %v1793 = vmul.f32 %v1746, %v1789
    %v1794 = vmul.f32 %v1747, %v1789
    %v1795 = vmul.f32 %v1748, %v1789
    %v1796 = vmul.f32 %v1749, %v1789
    %v1797 = vperm.slane %v1708, 0
    %v1798 = vadd.f32 %v1790, %v1797
    %v1799 = vadd.f32 %v1791, %v1797
    %v1800 = vadd.f32 %v1792, %v1797
    %v1801 = vadd.f32 %v1793, %v1797
    %v1802 = vadd.f32 %v1794, %v1797
    %v1803 = vadd.f32 %v1795, %v1797
    %v1804 = vadd.f32 %v1796, %v1797
    %v1805 = vmul.f32 %v1798, %v115
    %v1806 = vmul.f32 %v1799, %v116
    %v1807 = vmul.f32 %v1800, %v117
    %v1808 = vmul.f32 %v1801, %v118
    %v1809 = vmul.f32 %v1802, %v119
    %v1810 = vmul.f32 %v1803, %v120
    %v1811 = vmul.f32 %v1804, %v121
    %v1812 = vadd.f32 %v1805, %v251
    %v1813 = vadd.f32 %v1806, %v252
    %v1814 = vadd.f32 %v1807, %v253
    %v1815 = vadd.f32 %v1808, %v254
    %v1816 = vadd.f32 %v1809, %v255
    %v1817 = vadd.f32 %v1810, %v256
    %v1818 = vadd.f32 %v1811, %v257
    %v1819 = vmax.f32 %v1812, 0.0
    %v1820 = vmax.f32 %v1813, 0.0
    %v1821 = vmax.f32 %v1814, 0.0
    %v1822 = vmax.f32 %v1815, 0.0
    %v1823 = vmax.f32 %v1816, 0.0
    %v1824 = vmax.f32 %v1817, 0.0
    %v1825 = vmax.f32 %v1818, 0.0
    %v1826 = vrot.slane %v1819, 1
    %v1827 = vrot.slane %v1820, 1
    %v1828 = vrot.slane %v1821, 1
    %v1829 = vrot.slane %v1822, 1
    %v1830 = vrot.slane %v1823, 1
    %v1831 = vrot.slane %v1824, 1
    %v1832 = vrot.slane %v1825, 1
    %v1833 = vsel %vm455, %v1831, %v1832
    %v1834 = vsel %vm455, %v1830, %v1831
    %v1835 = vsel %vm455, %v1829, %v1830
    %v1836 = vsel %vm455, %v1828, %v1829
    %v1837 = vsel %vm455, %v1827, %v1828
    %v1838 = vsel %vm455, %v1826, %v1827
    %v1839 = vsel %vm455, %v1832, %v1826
    %vm1840 = vcmp.lt.s32.totalorder %v52, 23
    %vm1841 = vcmp.lt.s32.totalorder %v53, 23
    %vm1842 = vcmp.lt.s32.totalorder %v54, 23
    %vm1843 = vcmp.lt.s32.totalorder %v55, 23
    %vm1844 = vcmp.lt.s32.totalorder %v56, 23
    %vm1845 = vcmp.lt.s32.totalorder %v57, 23
    %vm1846 = vcmp.lt.s32.totalorder %v58, 23
    %vm1847 = vmand %vm59, %vm1840
    %vm1848 = vmand %vm60, %vm1841
    %vm1849 = vmand %vm61, %vm1842
    %vm1850 = vmand %vm62, %vm1843
    %vm1851 = vmand %vm63, %vm1844
    %vm1852 = vmand %vm64, %vm1845
    %vm1853 = vmand %vm65, %vm1846
    %vm1854 = vcmp.lt.s32.totalorder %v52, 47
    %vm1855 = vcmp.lt.s32.totalorder %v53, 47
    %vm1856 = vcmp.lt.s32.totalorder %v54, 47
    %vm1857 = vcmp.lt.s32.totalorder %v55, 47
    %vm1858 = vcmp.lt.s32.totalorder %v56, 47
    %vm1859 = vcmp.lt.s32.totalorder %v57, 47
    %vm1860 = vcmp.lt.s32.totalorder %v58, 47
    %vm1861 = vmand %vm80, %vm1854
    %vm1862 = vmand %vm81, %vm1855
    %vm1863 = vmand %vm82, %vm1856
    %vm1864 = vmand %vm83, %vm1857
    %vm1865 = vmand %vm84, %vm1858
    %vm1866 = vmand %vm85, %vm1859
    %vm1867 = vmand %vm86, %vm1860
    %vm1868 = vmor %vm1847, %vm1861
    %vm1869 = vmor %vm1848, %vm1862
    %vm1870 = vmor %vm1849, %vm1863
    %vm1871 = vmor %vm1850, %vm1864
    %vm1872 = vmor %vm1851, %vm1865
    %vm1873 = vmor %vm1852, %vm1866
    %vm1874 = vmor %vm1853, %vm1867
    %v1875 = vsel %vm1868, 1, 0
    %v1876 = vsel %vm1869, 1, 0
    %v1877 = vsel %vm1870, 1, 0
    %v1878 = vsel %vm1871, 1, 0
    %v1879 = vsel %vm1872, 1, 0
    %v1880 = vsel %vm1873, 1, 0
    %v1881 = vsel %vm1874, 1, 0
    %v1882 = vcvt.s32.f32 %v1875
    %v1883 = vcvt.s32.f32 %v1876
    %v1884 = vcvt.s32.f32 %v1877
    %v1885 = vcvt.s32.f32 %v1878
    %v1886 = vcvt.s32.f32 %v1879
    %v1887 = vcvt.s32.f32 %v1880
    %v1888 = vcvt.s32.f32 %v1881
    %v1889 = vadd.f32 %v1819, %v1838
    %v1890 = vadd.f32 %v1820, %v1837
    %v1891 = vadd.f32 %v1821, %v1836
    %v1892 = vadd.f32 %v1822, %v1835
    %v1893 = vadd.f32 %v1823, %v1834
    %v1894 = vadd.f32 %v1824, %v1833
    %v1895 = vadd.f32 %v1825, %v1839
    %v1896 = vmul.f32 %v1889, 0.5
    %v1897 = vmul.f32 %v1890, 0.5
    %v1898 = vmul.f32 %v1891, 0.5
    %v1899 = vmul.f32 %v1892, 0.5
    %v1900 = vmul.f32 %v1893, 0.5
    %v1901 = vmul.f32 %v1894, 0.5
    %v1902 = vmul.f32 %v1895, 0.5
    %v1903 = vmul.f32 %v1896, %v1882
    %v1904 = vmul.f32 %v1897, %v1883
    %v1905 = vmul.f32 %v1898, %v1884
    %v1906 = vmul.f32 %v1899, %v1885
    %v1907 = vmul.f32 %v1900, %v1886
    %v1908 = vmul.f32 %v1901, %v1887
    %v1909 = vmul.f32 %v1902, %v1888
    %v1910 = vld [vmem:[#allocation2 + $0x150] sm:$0xff]
    %v1911 = vld [vmem:[#allocation2 + $0x158] sm:$0xff]
    %v1912 = vld [vmem:[#allocation2 + $0x160] sm:$0xff]
    %v1913 = vld [vmem:[#allocation2 + $0x168] sm:$0xff]
    %v1915 = vsel %vm163, %v1903, 0
    %v1918 = vsel %vm163, %v1904, 0
    %v1921 = vsel %vm163, %v1905, 0
    %v1924 = vsel %vm163, %v1906, 0
    %v1927 = vsel %vm163, %v1907, 0
    %v1930 = vsel %vm163, %v1908, 0
    %v1933 = vsel %vm163, %v1909, 0
    %1935 = vmatpush.msra.mxu0 0.0
    %1936 = vmatpush.msra.mxu0 0.0
    %1937 = vmatpush.msra.mxu0 0.0
    %1938 = vmatpush.msra.mxu0 0.0
    %1939 = vmatpush.msra.mxu0 0.0
    %1940 = vmatpush.msra.mxu0 0.0
    %1941 = vmatpush.msra.mxu0 0.0
    %1942 = vmatpush.msra.mxu0 0.0
    %1943 = vmatpush.msra.mxu0 0.0
    %1944 = vmatpush.msra.mxu0 0.0
    %1945 = vmatpush.msra.mxu0 0.0
    %1946 = vmatpush.msra.mxu0 0.0
    %1947 = vmatpush.msra.mxu0 %v1913
    %1948 = vmatpush.msra.mxu0 %v1912
    %1949 = vmatpush.msra.mxu0 %v1911
    %1950 = vmatpush.msra.mxu0 %v1910
    %1951 = vmatmul.f32.gmra.mxu0 %v1915
    %v1952 = vpop.f32.mrf.mxu0
    %v1953 = vadd.f32 0.0, %v1952
    %1954 = vmatmul.f32.gmra.mxu0 %v1918
    %v1955 = vpop.f32.mrf.mxu0
    %v1956 = vadd.f32 0.0, %v1955
    %1957 = vmatmul.f32.gmra.mxu0 %v1921
    %v1958 = vpop.f32.mrf.mxu0
    %v1959 = vadd.f32 0.0, %v1958
    %1960 = vmatmul.f32.gmra.mxu0 %v1924
    %v1961 = vpop.f32.mrf.mxu0
    %v1962 = vadd.f32 0.0, %v1961
    %1963 = vmatmul.f32.gmra.mxu0 %v1927
    %v1964 = vpop.f32.mrf.mxu0
    %v1965 = vadd.f32 0.0, %v1964
    %1966 = vmatmul.f32.gmra.mxu0 %v1930
    %v1967 = vpop.f32.mrf.mxu0
    %v1968 = vadd.f32 0.0, %v1967
    %1969 = vmatmul.f32.gmra.mxu0 %v1933
    %v1970 = vpop.f32.mrf.mxu0
    %v1971 = vadd.f32 0.0, %v1970
    %1972 = vdwg.mxu0
    %v1973 = vld [vmem:[#allocation4 + $0x8] sm:$0x1]
    %v1974 = vld [vmem:[#allocation4 + $0x9] sm:$0x1]
    %v1975 = vmul.f32 %v1953, %v1882
    %v1976 = vmul.f32 %v1956, %v1883
    %v1977 = vmul.f32 %v1959, %v1884
    %v1978 = vmul.f32 %v1962, %v1885
    %v1979 = vmul.f32 %v1965, %v1886
    %v1980 = vmul.f32 %v1968, %v1887
    %v1981 = vmul.f32 %v1971, %v1888
    %vm1982 = vcmask 523264
    %v1983 = vsel %vm1982, %v1975, 0.0
    %v1984 = vsel %vm1982, %v1976, 0.0
    %v1985 = vadd.f32 %v1983, %v1984
    %v1986 = vsel %vm1982, %v1977, 0.0
    %v1987 = vadd.f32 %v1985, %v1986
    %v1988 = vsel %vm1982, %v1978, 0.0
    %v1989 = vadd.f32 %v1987, %v1988
    %v1990 = vsel %vm1982, %v1979, 0.0
    %v1991 = vadd.f32 %v1989, %v1990
    %v1992 = vsel %vm1982, %v1980, 0.0
    %v1993 = vadd.f32 %v1991, %v1992
    %v1994 = vsel %vm1982, %v1981, 0.0
    %v1995 = vadd.f32 %v1993, %v1994
    %v1996 = vrot.slane %v1995, 4
    %v1997 = vadd.f32 %v1995, %v1996
    %v1998 = vrot.slane %v1997, 2
    %v1999 = vadd.f32 %v1997, %v1998
    %v2000 = vrot.slane %v1999, 1
    %v2001 = vadd.f32 %v1999, %v2000
    %v2002 = vmul.f32 %v2001, 0.033333335
    %v2003 = vsub.f32 %v1953, %v2002
    %v2004 = vsub.f32 %v1956, %v2002
    %v2005 = vsub.f32 %v1959, %v2002
    %v2006 = vsub.f32 %v1962, %v2002
    %v2007 = vsub.f32 %v1965, %v2002
    %v2008 = vsub.f32 %v1968, %v2002
    %v2009 = vsub.f32 %v1971, %v2002
    %v2010 = vmul.f32 %v2003, %v1882
    %v2011 = vmul.f32 %v2004, %v1883
    %v2012 = vmul.f32 %v2005, %v1884
    %v2013 = vmul.f32 %v2006, %v1885
    %v2014 = vmul.f32 %v2007, %v1886
    %v2015 = vmul.f32 %v2008, %v1887
    %v2016 = vmul.f32 %v2009, %v1888
    %v2017 = vmul.f32 %v2010, %v2010
    %v2018 = vmul.f32 %v2011, %v2011
    %v2019 = vmul.f32 %v2012, %v2012
    %v2020 = vmul.f32 %v2013, %v2013
    %v2021 = vmul.f32 %v2014, %v2014
    %v2022 = vmul.f32 %v2015, %v2015
    %v2023 = vmul.f32 %v2016, %v2016
    %v2024 = vsel %vm1982, %v2017, 0.0
    %v2025 = vsel %vm1982, %v2018, 0.0
    %v2026 = vadd.f32 %v2024, %v2025
    %v2027 = vsel %vm1982, %v2019, 0.0
    %v2028 = vadd.f32 %v2026, %v2027
    %v2029 = vsel %vm1982, %v2020, 0.0
    %v2030 = vadd.f32 %v2028, %v2029
    %v2031 = vsel %vm1982, %v2021, 0.0
    %v2032 = vadd.f32 %v2030, %v2031
    %v2033 = vsel %vm1982, %v2022, 0.0
    %v2034 = vadd.f32 %v2032, %v2033
    %v2035 = vsel %vm1982, %v2023, 0.0
    %v2036 = vadd.f32 %v2034, %v2035
    %v2037 = vrot.slane %v2036, 4
    %v2038 = vadd.f32 %v2036, %v2037
    %v2039 = vrot.slane %v2038, 2
    %v2040 = vadd.f32 %v2038, %v2039
    %v2041 = vrot.slane %v2040, 1
    %v2042 = vadd.f32 %v2040, %v2041
    %v2043 = vmul.f32 %v2042, 0.033333335
    %v2044 = vadd.f32 %v2043, 1e-05
    %v2045 = vrsqrt.pop %v2044
    %v2046 = vmul.f32 %v2045, %v2044
    %v2047 = vmul.f32 %v2046, %v2045
    %v2048 = vmul.f32 0.5, %v2047
    %v2049 = vsub.f32 1.5, %v2048
    %v2050 = vmul.f32 %v2045, %v2049
    %vm2051 = vweird.f32 %v2044
    %vm2052 = vweird.f32 %v2045
    %vm2053 = vmor %vm2051, %vm2052
    %v2054 = vsel %vm2053, %v2045, %v2050
    %v2055 = vmul.f32 %v2054, %v1973
    %v2056 = vperm.slane %v2055, 0
    %v2057 = vmul.f32 %v2010, %v2056
    %v2058 = vmul.f32 %v2011, %v2056
    %v2059 = vmul.f32 %v2012, %v2056
    %v2060 = vmul.f32 %v2013, %v2056
    %v2061 = vmul.f32 %v2014, %v2056
    %v2062 = vmul.f32 %v2015, %v2056
    %v2063 = vmul.f32 %v2016, %v2056
    %v2064 = vperm.slane %v1974, 0
    %v2065 = vadd.f32 %v2057, %v2064
    %v2066 = vadd.f32 %v2058, %v2064
    %v2067 = vadd.f32 %v2059, %v2064
    %v2068 = vadd.f32 %v2060, %v2064
    %v2069 = vadd.f32 %v2061, %v2064
    %v2070 = vadd.f32 %v2062, %v2064
    %v2071 = vadd.f32 %v2063, %v2064
    %v2072 = vmul.f32 %v2065, %v1882
    %v2073 = vmul.f32 %v2066, %v1883
    %v2074 = vmul.f32 %v2067, %v1884
    %v2075 = vmul.f32 %v2068, %v1885
    %v2076 = vmul.f32 %v2069, %v1886
    %v2077 = vmul.f32 %v2070, %v1887
    %v2078 = vmul.f32 %v2071, %v1888
    %v2079 = vrot.slane %v1903, 5
    %v2080 = vrot.slane %v1904, 5
    %v2081 = vrot.slane %v1905, 5
    %v2082 = vrot.slane %v1906, 5
    %v2083 = vrot.slane %v1907, 5
    %v2084 = vrot.slane %v1908, 5
    %v2085 = vrot.slane %v1909, 5
    %v2086 = vsel %vm262, %v2084, %v2085
    %v2087 = vsel %vm262, %v2083, %v2084
    %v2088 = vsel %vm262, %v2082, %v2083
    %v2089 = vsel %vm262, %v2081, %v2082
    %v2090 = vsel %vm262, %v2080, %v2081
    %v2091 = vsel %vm262, %v2079, %v2080
    %v2092 = vsel %vm262, %v2085, %v2079
    %v2093 = vld [vmem:[#allocation2 + $0x170] sm:$0xff]
    %v2094 = vld [vmem:[#allocation2 + $0x178] sm:$0xff]
    %v2095 = vld [vmem:[#allocation2 + $0x180] sm:$0xff]
    %v2096 = vld [vmem:[#allocation2 + $0x188] sm:$0xff]
    %v2097 = vrot.slane %v1903, 6
    %v2098 = vrot.slane %v1904, 6
    %v2099 = vrot.slane %v1905, 6
    %v2100 = vrot.slane %v1906, 6
    %v2101 = vrot.slane %v1907, 6
    %v2102 = vrot.slane %v1908, 6
    %v2103 = vrot.slane %v1909, 6
    %v2104 = vsel %vm317, %v2102, %v2103
    %v2105 = vsel %vm317, %v2101, %v2102
    %v2106 = vsel %vm317, %v2100, %v2101
    %v2107 = vsel %vm317, %v2099, %v2100
    %v2108 = vsel %vm317, %v2098, %v2099
    %v2109 = vsel %vm317, %v2097, %v2098
    %v2110 = vsel %vm317, %v2103, %v2097
    %v2111 = vld [vmem:[#allocation2 + $0x190] sm:$0xff]
    %v2112 = vld [vmem:[#allocation2 + $0x198] sm:$0xff]
    %v2113 = vld [vmem:[#allocation2 + $0x1a0] sm:$0xff]
    %v2114 = vld [vmem:[#allocation2 + $0x1a8] sm:$0xff]
    %v2116 = vsel %vm163, %v2110, 0
    %v2119 = vsel %vm163, %v2109, 0
    %v2122 = vsel %vm163, %v2108, 0
    %v2125 = vsel %vm163, %v2107, 0
    %v2128 = vsel %vm163, %v2106, 0
    %v2131 = vsel %vm163, %v2105, 0
    %v2134 = vsel %vm163, %v2104, 0
    %2136 = vmatpush.msra.mxu0 0.0
    %2137 = vmatpush.msra.mxu0 0.0
    %2138 = vmatpush.msra.mxu0 0.0
    %2139 = vmatpush.msra.mxu0 0.0
    %2140 = vmatpush.msra.mxu0 0.0
    %2141 = vmatpush.msra.mxu0 0.0
    %2142 = vmatpush.msra.mxu0 0.0
    %2143 = vmatpush.msra.mxu0 0.0
    %2144 = vmatpush.msra.mxu0 0.0
    %2145 = vmatpush.msra.mxu0 0.0
    %2146 = vmatpush.msra.mxu0 0.0
    %2147 = vmatpush.msra.mxu0 0.0
    %2148 = vmatpush.msra.mxu0 %v2114
    %2149 = vmatpush.msra.mxu0 %v2113
    %2150 = vmatpush.msra.mxu0 %v2112
    %2151 = vmatpush.msra.mxu0 %v2111
    %2152 = vmatmul.f32.gmra.mxu0 %v2116
    %v2153 = vpop.f32.mrf.mxu0
    %v2154 = vadd.f32 0.0, %v2153
    %2155 = vmatmul.f32.gmra.mxu0 %v2119
    %v2156 = vpop.f32.mrf.mxu0
    %v2157 = vadd.f32 0.0, %v2156
    %2158 = vmatmul.f32.gmra.mxu0 %v2122
    %v2159 = vpop.f32.mrf.mxu0
    %v2160 = vadd.f32 0.0, %v2159
    %2161 = vmatmul.f32.gmra.mxu0 %v2125
    %v2162 = vpop.f32.mrf.mxu0
    %v2163 = vadd.f32 0.0, %v2162
    %2164 = vmatmul.f32.gmra.mxu0 %v2128
    %v2165 = vpop.f32.mrf.mxu0
    %v2166 = vadd.f32 0.0, %v2165
    %2167 = vmatmul.f32.gmra.mxu0 %v2131
    %v2168 = vpop.f32.mrf.mxu0
    %v2169 = vadd.f32 0.0, %v2168
    %2170 = vmatmul.f32.gmra.mxu0 %v2134
    %v2171 = vpop.f32.mrf.mxu0
    %v2172 = vadd.f32 0.0, %v2171
    %2173 = vdwg.mxu0
    %v2175 = vsel %vm163, %v2092, 0
    %v2178 = vsel %vm163, %v2091, 0
    %v2181 = vsel %vm163, %v2090, 0
    %v2184 = vsel %vm163, %v2089, 0
    %v2187 = vsel %vm163, %v2088, 0
    %v2190 = vsel %vm163, %v2087, 0
    %v2193 = vsel %vm163, %v2086, 0
    %2195 = vmatpush.msra.mxu0 0.0
    %2196 = vmatpush.msra.mxu0 0.0
    %2197 = vmatpush.msra.mxu0 0.0
    %2198 = vmatpush.msra.mxu0 0.0
    %2199 = vmatpush.msra.mxu0 0.0
    %2200 = vmatpush.msra.mxu0 0.0
    %2201 = vmatpush.msra.mxu0 0.0
    %2202 = vmatpush.msra.mxu0 0.0
    %2203 = vmatpush.msra.mxu0 0.0
    %2204 = vmatpush.msra.mxu0 0.0
    %2205 = vmatpush.msra.mxu0 0.0
    %2206 = vmatpush.msra.mxu0 0.0
    %2207 = vmatpush.msra.mxu0 %v2096
    %2208 = vmatpush.msra.mxu0 %v2095
    %2209 = vmatpush.msra.mxu0 %v2094
    %2210 = vmatpush.msra.mxu0 %v2093
    %2211 = vmatmul.f32.gmra.mxu0 %v2175
    %v2212 = vpop.f32.mrf.mxu0
    %v2213 = vadd.f32 %v2154, %v2212
    %2214 = vmatmul.f32.gmra.mxu0 %v2178
    %v2215 = vpop.f32.mrf.mxu0
    %v2216 = vadd.f32 %v2157, %v2215
    %2217 = vmatmul.f32.gmra.mxu0 %v2181
    %v2218 = vpop.f32.mrf.mxu0
    %v2219 = vadd.f32 %v2160, %v2218
    %2220 = vmatmul.f32.gmra.mxu0 %v2184
    %v2221 = vpop.f32.mrf.mxu0
    %v2222 = vadd.f32 %v2163, %v2221
    %2223 = vmatmul.f32.gmra.mxu0 %v2187
    %v2224 = vpop.f32.mrf.mxu0
    %v2225 = vadd.f32 %v2166, %v2224
    %2226 = vmatmul.f32.gmra.mxu0 %v2190
    %v2227 = vpop.f32.mrf.mxu0
    %v2228 = vadd.f32 %v2169, %v2227
    %2229 = vmatmul.f32.gmra.mxu0 %v2193
    %v2230 = vpop.f32.mrf.mxu0
    %v2231 = vadd.f32 %v2172, %v2230
    %2232 = vdwg.mxu0
    %v2233 = vrot.slane %v1903, 7
    %v2234 = vrot.slane %v1904, 7
    %v2235 = vrot.slane %v1905, 7
    %v2236 = vrot.slane %v1906, 7
    %v2237 = vrot.slane %v1907, 7
    %v2238 = vrot.slane %v1908, 7
    %v2239 = vrot.slane %v1909, 7
    %v2240 = vsel %vm379, %v2238, %v2239
    %v2241 = vsel %vm379, %v2237, %v2238
    %v2242 = vsel %vm379, %v2236, %v2237
    %v2243 = vsel %vm379, %v2235, %v2236
    %v2244 = vsel %vm379, %v2234, %v2235
    %v2245 = vsel %vm379, %v2233, %v2234
    %v2246 = vsel %vm379, %v2239, %v2233
    %v2247 = vld [vmem:[#allocation2 + $0x1b0] sm:$0xff]
    %v2248 = vld [vmem:[#allocation2 + $0x1b8] sm:$0xff]
    %v2249 = vld [vmem:[#allocation2 + $0x1c0] sm:$0xff]
    %v2250 = vld [vmem:[#allocation2 + $0x1c8] sm:$0xff]
    %v2252 = vsel %vm163, %v2246, 0
    %v2255 = vsel %vm163, %v2245, 0
    %v2258 = vsel %vm163, %v2244, 0
    %v2261 = vsel %vm163, %v2243, 0
    %v2264 = vsel %vm163, %v2242, 0
    %v2267 = vsel %vm163, %v2241, 0
    %v2270 = vsel %vm163, %v2240, 0
    %2272 = vmatpush.msra.mxu0 0.0
    %2273 = vmatpush.msra.mxu0 0.0
    %2274 = vmatpush.msra.mxu0 0.0
    %2275 = vmatpush.msra.mxu0 0.0
    %2276 = vmatpush.msra.mxu0 0.0
    %2277 = vmatpush.msra.mxu0 0.0
    %2278 = vmatpush.msra.mxu0 0.0
    %2279 = vmatpush.msra.mxu0 0.0
    %2280 = vmatpush.msra.mxu0 0.0
    %2281 = vmatpush.msra.mxu0 0.0
    %2282 = vmatpush.msra.mxu0 0.0
    %2283 = vmatpush.msra.mxu0 0.0
    %2284 = vmatpush.msra.mxu0 %v2250
    %2285 = vmatpush.msra.mxu0 %v2249
    %2286 = vmatpush.msra.mxu0 %v2248
    %2287 = vmatpush.msra.mxu0 %v2247
    %2288 = vmatmul.f32.gmra.mxu0 %v2252
    %v2289 = vpop.f32.mrf.mxu0
    %v2290 = vadd.f32 0.0, %v2289
    %2291 = vmatmul.f32.gmra.mxu0 %v2255
    %v2292 = vpop.f32.mrf.mxu0
    %v2293 = vadd.f32 0.0, %v2292
    %2294 = vmatmul.f32.gmra.mxu0 %v2258
    %v2295 = vpop.f32.mrf.mxu0
    %v2296 = vadd.f32 0.0, %v2295
    %2297 = vmatmul.f32.gmra.mxu0 %v2261
    %v2298 = vpop.f32.mrf.mxu0
    %v2299 = vadd.f32 0.0, %v2298
    %2300 = vmatmul.f32.gmra.mxu0 %v2264
    %v2301 = vpop.f32.mrf.mxu0
    %v2302 = vadd.f32 0.0, %v2301
    %2303 = vmatmul.f32.gmra.mxu0 %v2267
    %v2304 = vpop.f32.mrf.mxu0
    %v2305 = vadd.f32 0.0, %v2304
    %2306 = vmatmul.f32.gmra.mxu0 %v2270
    %v2307 = vpop.f32.mrf.mxu0
    %v2308 = vadd.f32 0.0, %v2307
    %2309 = vdwg.mxu0
    %v2310 = vadd.f32 %v2213, %v2290
    %v2311 = vadd.f32 %v2216, %v2293
    %v2312 = vadd.f32 %v2219, %v2296
    %v2313 = vadd.f32 %v2222, %v2299
    %v2314 = vadd.f32 %v2225, %v2302
    %v2315 = vadd.f32 %v2228, %v2305
    %v2316 = vadd.f32 %v2231, %v2308
    %v2317 = vld [vmem:[#allocation2 + $0x1d0] sm:$0xff]
    %v2318 = vld [vmem:[#allocation2 + $0x1d8] sm:$0xff]
    %v2319 = vld [vmem:[#allocation2 + $0x1e0] sm:$0xff]
    %v2320 = vld [vmem:[#allocation2 + $0x1e8] sm:$0xff]
    %2321 = vmatpush.msra.mxu0 0.0
    %2322 = vmatpush.msra.mxu0 0.0
    %2323 = vmatpush.msra.mxu0 0.0
    %2324 = vmatpush.msra.mxu0 0.0
    %2325 = vmatpush.msra.mxu0 0.0
    %2326 = vmatpush.msra.mxu0 0.0
    %2327 = vmatpush.msra.mxu0 0.0
    %2328 = vmatpush.msra.mxu0 0.0
    %2329 = vmatpush.msra.mxu0 0.0
    %2330 = vmatpush.msra.mxu0 0.0
    %2331 = vmatpush.msra.mxu0 0.0
    %2332 = vmatpush.msra.mxu0 0.0
    %2333 = vmatpush.msra.mxu0 %v2320
    %2334 = vmatpush.msra.mxu0 %v2319
    %2335 = vmatpush.msra.mxu0 %v2318
    %2336 = vmatpush.msra.mxu0 %v2317
    %2337 = vmatmul.f32.gmra.mxu0 %v1915
    %v2338 = vpop.f32.mrf.mxu0
    %v2339 = vadd.f32 0.0, %v2338
    %2340 = vmatmul.f32.gmra.mxu0 %v1918
    %v2341 = vpop.f32.mrf.mxu0
    %v2342 = vadd.f32 0.0, %v2341
    %2343 = vmatmul.f32.gmra.mxu0 %v1921
    %v2344 = vpop.f32.mrf.mxu0
    %v2345 = vadd.f32 0.0, %v2344
    %2346 = vmatmul.f32.gmra.mxu0 %v1924
    %v2347 = vpop.f32.mrf.mxu0
    %v2348 = vadd.f32 0.0, %v2347
    %2349 = vmatmul.f32.gmra.mxu0 %v1927
    %v2350 = vpop.f32.mrf.mxu0
    %v2351 = vadd.f32 0.0, %v2350
    %2352 = vmatmul.f32.gmra.mxu0 %v1930
    %v2353 = vpop.f32.mrf.mxu0
    %v2354 = vadd.f32 0.0, %v2353
    %2355 = vmatmul.f32.gmra.mxu0 %v1933
    %v2356 = vpop.f32.mrf.mxu0
    %v2357 = vadd.f32 0.0, %v2356
    %2358 = vdwg.mxu0
    %v2359 = vadd.f32 %v2310, %v2339
    %v2360 = vadd.f32 %v2311, %v2342
    %v2361 = vadd.f32 %v2312, %v2345
    %v2362 = vadd.f32 %v2313, %v2348
    %v2363 = vadd.f32 %v2314, %v2351
    %v2364 = vadd.f32 %v2315, %v2354
    %v2365 = vadd.f32 %v2316, %v2357
    %v2366 = vrot.slane %v1903, 1
    %v2367 = vrot.slane %v1904, 1
    %v2368 = vrot.slane %v1905, 1
    %v2369 = vrot.slane %v1906, 1
    %v2370 = vrot.slane %v1907, 1
    %v2371 = vrot.slane %v1908, 1
    %v2372 = vrot.slane %v1909, 1
    %v2373 = vsel %vm455, %v2371, %v2372
    %v2374 = vsel %vm455, %v2370, %v2371
    %v2375 = vsel %vm455, %v2369, %v2370
    %v2376 = vsel %vm455, %v2368, %v2369
    %v2377 = vsel %vm455, %v2367, %v2368
    %v2378 = vsel %vm455, %v2366, %v2367
    %v2379 = vsel %vm455, %v2372, %v2366
    %v2380 = vld [vmem:[#allocation2 + $0x1f0] sm:$0xff]
    %v2381 = vld [vmem:[#allocation2 + $0x1f8] sm:$0xff]
    %v2382 = vld [vmem:[#allocation2 + $0x200] sm:$0xff]
    %v2383 = vld [vmem:[#allocation2 + $0x208] sm:$0xff]
    %v2385 = vsel %vm163, %v2378, 0
    %v2388 = vsel %vm163, %v2377, 0
    %v2391 = vsel %vm163, %v2376, 0
    %v2394 = vsel %vm163, %v2375, 0
    %v2397 = vsel %vm163, %v2374, 0
    %v2400 = vsel %vm163, %v2373, 0
    %v2403 = vsel %vm163, %v2379, 0
    %2405 = vmatpush.msra.mxu0 0.0
    %2406 = vmatpush.msra.mxu0 0.0
    %2407 = vmatpush.msra.mxu0 0.0
    %2408 = vmatpush.msra.mxu0 0.0
    %2409 = vmatpush.msra.mxu0 0.0
    %2410 = vmatpush.msra.mxu0 0.0
    %2411 = vmatpush.msra.mxu0 0.0
    %2412 = vmatpush.msra.mxu0 0.0
    %2413 = vmatpush.msra.mxu0 0.0
    %2414 = vmatpush.msra.mxu0 0.0
    %2415 = vmatpush.msra.mxu0 0.0
    %2416 = vmatpush.msra.mxu0 0.0
    %2417 = vmatpush.msra.mxu0 %v2383
    %2418 = vmatpush.msra.mxu0 %v2382
    %2419 = vmatpush.msra.mxu0 %v2381
    %2420 = vmatpush.msra.mxu0 %v2380
    %2421 = vmatmul.f32.gmra.mxu0 %v2385
    %v2422 = vpop.f32.mrf.mxu0
    %v2423 = vadd.f32 0.0, %v2422
    %2424 = vmatmul.f32.gmra.mxu0 %v2388
    %v2425 = vpop.f32.mrf.mxu0
    %v2426 = vadd.f32 0.0, %v2425
    %2427 = vmatmul.f32.gmra.mxu0 %v2391
    %v2428 = vpop.f32.mrf.mxu0
    %v2429 = vadd.f32 0.0, %v2428
    %2430 = vmatmul.f32.gmra.mxu0 %v2394
    %v2431 = vpop.f32.mrf.mxu0
    %v2432 = vadd.f32 0.0, %v2431
    %2433 = vmatmul.f32.gmra.mxu0 %v2397
    %v2434 = vpop.f32.mrf.mxu0
    %v2435 = vadd.f32 0.0, %v2434
    %2436 = vmatmul.f32.gmra.mxu0 %v2400
    %v2437 = vpop.f32.mrf.mxu0
    %v2438 = vadd.f32 0.0, %v2437
    %2439 = vmatmul.f32.gmra.mxu0 %v2403
    %v2440 = vpop.f32.mrf.mxu0
    %v2441 = vadd.f32 0.0, %v2440
    %2442 = vdwg.mxu0
    %v2443 = vadd.f32 %v2359, %v2423
    %v2444 = vadd.f32 %v2360, %v2426
    %v2445 = vadd.f32 %v2361, %v2429
    %v2446 = vadd.f32 %v2362, %v2432
    %v2447 = vadd.f32 %v2363, %v2435
    %v2448 = vadd.f32 %v2364, %v2438
    %v2449 = vadd.f32 %v2365, %v2441
    %v2450 = vrot.slane %v1903, 2
    %v2451 = vrot.slane %v1904, 2
    %v2452 = vrot.slane %v1905, 2
    %v2453 = vrot.slane %v1906, 2
    %v2454 = vrot.slane %v1907, 2
    %v2455 = vrot.slane %v1908, 2
    %v2456 = vrot.slane %v1909, 2
    %v2457 = vsel %vm517, %v2455, %v2456
    %v2458 = vsel %vm517, %v2454, %v2455
    %v2459 = vsel %vm517, %v2453, %v2454
    %v2460 = vsel %vm517, %v2452, %v2453
    %v2461 = vsel %vm517, %v2451, %v2452
    %v2462 = vsel %vm517, %v2450, %v2451
    %v2463 = vsel %vm517, %v2456, %v2450
    %v2464 = vld [vmem:[#allocation2 + $0x210] sm:$0xff]
    %v2465 = vld [vmem:[#allocation2 + $0x218] sm:$0xff]
    %v2466 = vld [vmem:[#allocation2 + $0x220] sm:$0xff]
    %v2467 = vld [vmem:[#allocation2 + $0x228] sm:$0xff]
    %v2469 = vsel %vm163, %v2462, 0
    %v2472 = vsel %vm163, %v2461, 0
    %v2475 = vsel %vm163, %v2460, 0
    %v2478 = vsel %vm163, %v2459, 0
    %v2481 = vsel %vm163, %v2458, 0
    %v2484 = vsel %vm163, %v2457, 0
    %v2487 = vsel %vm163, %v2463, 0
    %2489 = vmatpush.msra.mxu0 0.0
    %2490 = vmatpush.msra.mxu0 0.0
    %2491 = vmatpush.msra.mxu0 0.0
    %2492 = vmatpush.msra.mxu0 0.0
    %2493 = vmatpush.msra.mxu0 0.0
    %2494 = vmatpush.msra.mxu0 0.0
    %2495 = vmatpush.msra.mxu0 0.0
    %2496 = vmatpush.msra.mxu0 0.0
    %2497 = vmatpush.msra.mxu0 0.0
    %2498 = vmatpush.msra.mxu0 0.0
    %2499 = vmatpush.msra.mxu0 0.0
    %2500 = vmatpush.msra.mxu0 0.0
    %2501 = vmatpush.msra.mxu0 %v2467
    %2502 = vmatpush.msra.mxu0 %v2466
    %2503 = vmatpush.msra.mxu0 %v2465
    %2504 = vmatpush.msra.mxu0 %v2464
    %2505 = vmatmul.f32.gmra.mxu0 %v2469
    %v2506 = vpop.f32.mrf.mxu0
    %v2507 = vadd.f32 0.0, %v2506
    %2508 = vmatmul.f32.gmra.mxu0 %v2472
    %v2509 = vpop.f32.mrf.mxu0
    %v2510 = vadd.f32 0.0, %v2509
    %2511 = vmatmul.f32.gmra.mxu0 %v2475
    %v2512 = vpop.f32.mrf.mxu0
    %v2513 = vadd.f32 0.0, %v2512
    %2514 = vmatmul.f32.gmra.mxu0 %v2478
    %v2515 = vpop.f32.mrf.mxu0
    %v2516 = vadd.f32 0.0, %v2515
    %2517 = vmatmul.f32.gmra.mxu0 %v2481
    %v2518 = vpop.f32.mrf.mxu0
    %v2519 = vadd.f32 0.0, %v2518
    %2520 = vmatmul.f32.gmra.mxu0 %v2484
    %v2521 = vpop.f32.mrf.mxu0
    %v2522 = vadd.f32 0.0, %v2521
    %2523 = vmatmul.f32.gmra.mxu0 %v2487
    %v2524 = vpop.f32.mrf.mxu0
    %v2525 = vadd.f32 0.0, %v2524
    %2526 = vdwg.mxu0
    %v2527 = vadd.f32 %v2443, %v2507
    %v2528 = vadd.f32 %v2444, %v2510
    %v2529 = vadd.f32 %v2445, %v2513
    %v2530 = vadd.f32 %v2446, %v2516
    %v2531 = vadd.f32 %v2447, %v2519
    %v2532 = vadd.f32 %v2448, %v2522
    %v2533 = vadd.f32 %v2449, %v2525
    %v2534 = vrot.slane %v1903, 3
    %v2535 = vrot.slane %v1904, 3
    %v2536 = vrot.slane %v1905, 3
    %v2537 = vrot.slane %v1906, 3
    %v2538 = vrot.slane %v1907, 3
    %v2539 = vrot.slane %v1908, 3
    %v2540 = vrot.slane %v1909, 3
    %v2541 = vsel %vm579, %v2539, %v2540
    %v2542 = vsel %vm579, %v2538, %v2539
    %v2543 = vsel %vm579, %v2537, %v2538
    %v2544 = vsel %vm579, %v2536, %v2537
    %v2545 = vsel %vm579, %v2535, %v2536
    %v2546 = vsel %vm579, %v2534, %v2535
    %v2547 = vsel %vm579, %v2540, %v2534
    %v2548 = vld [vmem:[#allocation2 + $0x230] sm:$0xff]
    %v2549 = vld [vmem:[#allocation2 + $0x238] sm:$0xff]
    %v2550 = vld [vmem:[#allocation2 + $0x240] sm:$0xff]
    %v2551 = vld [vmem:[#allocation2 + $0x248] sm:$0xff]
    %v2553 = vsel %vm163, %v2546, 0
    %v2556 = vsel %vm163, %v2545, 0
    %v2559 = vsel %vm163, %v2544, 0
    %v2562 = vsel %vm163, %v2543, 0
    %v2565 = vsel %vm163, %v2542, 0
    %v2568 = vsel %vm163, %v2541, 0
    %v2571 = vsel %vm163, %v2547, 0
    %2573 = vmatpush.msra.mxu0 0.0
    %2574 = vmatpush.msra.mxu0 0.0
    %2575 = vmatpush.msra.mxu0 0.0
    %2576 = vmatpush.msra.mxu0 0.0
    %2577 = vmatpush.msra.mxu0 0.0
    %2578 = vmatpush.msra.mxu0 0.0
    %2579 = vmatpush.msra.mxu0 0.0
    %2580 = vmatpush.msra.mxu0 0.0
    %2581 = vmatpush.msra.mxu0 0.0
    %2582 = vmatpush.msra.mxu0 0.0
    %2583 = vmatpush.msra.mxu0 0.0
    %2584 = vmatpush.msra.mxu0 0.0
    %2585 = vmatpush.msra.mxu0 %v2551
    %2586 = vmatpush.msra.mxu0 %v2550
    %2587 = vmatpush.msra.mxu0 %v2549
    %2588 = vmatpush.msra.mxu0 %v2548
    %2589 = vmatmul.f32.gmra.mxu0 %v2553
    %v2590 = vpop.f32.mrf.mxu0
    %v2591 = vadd.f32 0.0, %v2590
    %2592 = vmatmul.f32.gmra.mxu0 %v2556
    %v2593 = vpop.f32.mrf.mxu0
    %v2594 = vadd.f32 0.0, %v2593
    %2595 = vmatmul.f32.gmra.mxu0 %v2559
    %v2596 = vpop.f32.mrf.mxu0
    %v2597 = vadd.f32 0.0, %v2596
    %2598 = vmatmul.f32.gmra.mxu0 %v2562
    %v2599 = vpop.f32.mrf.mxu0
    %v2600 = vadd.f32 0.0, %v2599
    %2601 = vmatmul.f32.gmra.mxu0 %v2565
    %v2602 = vpop.f32.mrf.mxu0
    %v2603 = vadd.f32 0.0, %v2602
    %2604 = vmatmul.f32.gmra.mxu0 %v2568
    %v2605 = vpop.f32.mrf.mxu0
    %v2606 = vadd.f32 0.0, %v2605
    %2607 = vmatmul.f32.gmra.mxu0 %v2571
    %v2608 = vpop.f32.mrf.mxu0
    %v2609 = vadd.f32 0.0, %v2608
    %2610 = vdwg.mxu0
    %v2611 = vadd.f32 %v2527, %v2591
    %v2612 = vadd.f32 %v2528, %v2594
    %v2613 = vadd.f32 %v2529, %v2597
    %v2614 = vadd.f32 %v2530, %v2600
    %v2615 = vadd.f32 %v2531, %v2603
    %v2616 = vadd.f32 %v2532, %v2606
    %v2617 = vadd.f32 %v2533, %v2609
    %v2618 = vrot.slane %v1903, 4
    %v2619 = vrot.slane %v1904, 4
    %v2620 = vrot.slane %v1905, 4
    %v2621 = vrot.slane %v1906, 4
    %v2622 = vrot.slane %v1907, 4
    %v2623 = vrot.slane %v1908, 4
    %v2624 = vrot.slane %v1909, 4
    %v2625 = vsel %vm641, %v2623, %v2624
    %v2626 = vsel %vm641, %v2622, %v2623
    %v2627 = vsel %vm641, %v2621, %v2622
    %v2628 = vsel %vm641, %v2620, %v2621
    %v2629 = vsel %vm641, %v2619, %v2620
    %v2630 = vsel %vm641, %v2618, %v2619
    %v2631 = vsel %vm641, %v2624, %v2618
    %v2632 = vld [vmem:[#allocation2 + $0x250] sm:$0xff]
    %v2633 = vld [vmem:[#allocation2 + $0x258] sm:$0xff]
    %v2634 = vld [vmem:[#allocation2 + $0x260] sm:$0xff]
    %v2635 = vld [vmem:[#allocation2 + $0x268] sm:$0xff]
    %v2637 = vsel %vm163, %v2630, 0
    %v2640 = vsel %vm163, %v2629, 0
    %v2643 = vsel %vm163, %v2628, 0
    %v2646 = vsel %vm163, %v2627, 0
    %v2649 = vsel %vm163, %v2626, 0
    %v2652 = vsel %vm163, %v2625, 0
    %v2655 = vsel %vm163, %v2631, 0
    %2657 = vmatpush.msra.mxu0 0.0
    %2658 = vmatpush.msra.mxu0 0.0
    %2659 = vmatpush.msra.mxu0 0.0
    %2660 = vmatpush.msra.mxu0 0.0
    %2661 = vmatpush.msra.mxu0 0.0
    %2662 = vmatpush.msra.mxu0 0.0
    %2663 = vmatpush.msra.mxu0 0.0
    %2664 = vmatpush.msra.mxu0 0.0
    %2665 = vmatpush.msra.mxu0 0.0
    %2666 = vmatpush.msra.mxu0 0.0
    %2667 = vmatpush.msra.mxu0 0.0
    %2668 = vmatpush.msra.mxu0 0.0
    %2669 = vmatpush.msra.mxu0 %v2635
    %2670 = vmatpush.msra.mxu0 %v2634
    %2671 = vmatpush.msra.mxu0 %v2633
    %2672 = vmatpush.msra.mxu0 %v2632
    %2673 = vmatmul.f32.gmra.mxu0 %v2637
    %v2674 = vpop.f32.mrf.mxu0
    %v2675 = vadd.f32 0.0, %v2674
    %2676 = vmatmul.f32.gmra.mxu0 %v2640
    %v2677 = vpop.f32.mrf.mxu0
    %v2678 = vadd.f32 0.0, %v2677
    %2679 = vmatmul.f32.gmra.mxu0 %v2643
    %v2680 = vpop.f32.mrf.mxu0
    %v2681 = vadd.f32 0.0, %v2680
    %2682 = vmatmul.f32.gmra.mxu0 %v2646
    %v2683 = vpop.f32.mrf.mxu0
    %v2684 = vadd.f32 0.0, %v2683
    %2685 = vmatmul.f32.gmra.mxu0 %v2649
    %v2686 = vpop.f32.mrf.mxu0
    %v2687 = vadd.f32 0.0, %v2686
    %2688 = vmatmul.f32.gmra.mxu0 %v2652
    %v2689 = vpop.f32.mrf.mxu0
    %v2690 = vadd.f32 0.0, %v2689
    %2691 = vmatmul.f32.gmra.mxu0 %v2655
    %v2692 = vpop.f32.mrf.mxu0
    %v2693 = vadd.f32 0.0, %v2692
    %2694 = vdwg.mxu0
    %v2695 = vadd.f32 %v2611, %v2675
    %v2696 = vadd.f32 %v2612, %v2678
    %v2697 = vadd.f32 %v2613, %v2681
    %v2698 = vadd.f32 %v2614, %v2684
    %v2699 = vadd.f32 %v2615, %v2687
    %v2700 = vadd.f32 %v2616, %v2690
    %v2701 = vadd.f32 %v2617, %v2693
    %v2702 = vld [vmem:[#allocation4 + $0xa] sm:$0x1]
    %v2703 = vld [vmem:[#allocation4 + $0xb] sm:$0x1]
    %v2704 = vmul.f32 %v2695, %v1882
    %v2705 = vmul.f32 %v2696, %v1883
    %v2706 = vmul.f32 %v2697, %v1884
    %v2707 = vmul.f32 %v2698, %v1885
    %v2708 = vmul.f32 %v2699, %v1886
    %v2709 = vmul.f32 %v2700, %v1887
    %v2710 = vmul.f32 %v2701, %v1888
    %v2711 = vsel %vm1982, %v2704, 0.0
    %v2712 = vsel %vm1982, %v2705, 0.0
    %v2713 = vadd.f32 %v2711, %v2712
    %v2714 = vsel %vm1982, %v2706, 0.0
    %v2715 = vadd.f32 %v2713, %v2714
    %v2716 = vsel %vm1982, %v2707, 0.0
    %v2717 = vadd.f32 %v2715, %v2716
    %v2718 = vsel %vm1982, %v2708, 0.0
    %v2719 = vadd.f32 %v2717, %v2718
    %v2720 = vsel %vm1982, %v2709, 0.0
    %v2721 = vadd.f32 %v2719, %v2720
    %v2722 = vsel %vm1982, %v2710, 0.0
    %v2723 = vadd.f32 %v2721, %v2722
    %v2724 = vrot.slane %v2723, 4
    %v2725 = vadd.f32 %v2723, %v2724
    %v2726 = vrot.slane %v2725, 2
    %v2727 = vadd.f32 %v2725, %v2726
    %v2728 = vrot.slane %v2727, 1
    %v2729 = vadd.f32 %v2727, %v2728
    %v2730 = vmul.f32 %v2729, 0.033333335
    %v2731 = vsub.f32 %v2695, %v2730
    %v2732 = vsub.f32 %v2696, %v2730
    %v2733 = vsub.f32 %v2697, %v2730
    %v2734 = vsub.f32 %v2698, %v2730
    %v2735 = vsub.f32 %v2699, %v2730
    %v2736 = vsub.f32 %v2700, %v2730
    %v2737 = vsub.f32 %v2701, %v2730
    %v2738 = vmul.f32 %v2731, %v1882
    %v2739 = vmul.f32 %v2732, %v1883
    %v2740 = vmul.f32 %v2733, %v1884
    %v2741 = vmul.f32 %v2734, %v1885
    %v2742 = vmul.f32 %v2735, %v1886
    %v2743 = vmul.f32 %v2736, %v1887
    %v2744 = vmul.f32 %v2737, %v1888
    %v2745 = vmul.f32 %v2738, %v2738
    %v2746 = vmul.f32 %v2739, %v2739
    %v2747 = vmul.f32 %v2740, %v2740
    %v2748 = vmul.f32 %v2741, %v2741
    %v2749 = vmul.f32 %v2742, %v2742
    %v2750 = vmul.f32 %v2743, %v2743
    %v2751 = vmul.f32 %v2744, %v2744
    %v2752 = vsel %vm1982, %v2745, 0.0
    %v2753 = vsel %vm1982, %v2746, 0.0
    %v2754 = vadd.f32 %v2752, %v2753
    %v2755 = vsel %vm1982, %v2747, 0.0
    %v2756 = vadd.f32 %v2754, %v2755
    %v2757 = vsel %vm1982, %v2748, 0.0
    %v2758 = vadd.f32 %v2756, %v2757
    %v2759 = vsel %vm1982, %v2749, 0.0
    %v2760 = vadd.f32 %v2758, %v2759
    %v2761 = vsel %vm1982, %v2750, 0.0
    %v2762 = vadd.f32 %v2760, %v2761
    %v2763 = vsel %vm1982, %v2751, 0.0
    %v2764 = vadd.f32 %v2762, %v2763
    %v2765 = vrot.slane %v2764, 4
    %v2766 = vadd.f32 %v2764, %v2765
    %v2767 = vrot.slane %v2766, 2
    %v2768 = vadd.f32 %v2766, %v2767
    %v2769 = vrot.slane %v2768, 1
    %v2770 = vadd.f32 %v2768, %v2769
    %v2771 = vmul.f32 %v2770, 0.033333335
    %v2772 = vadd.f32 %v2771, 1e-05
    %v2773 = vrsqrt.pop %v2772
    %v2774 = vmul.f32 %v2773, %v2772
    %v2775 = vmul.f32 %v2774, %v2773
    %v2776 = vmul.f32 0.5, %v2775
    %v2777 = vsub.f32 1.5, %v2776
    %v2778 = vmul.f32 %v2773, %v2777
    %vm2779 = vweird.f32 %v2772
    %vm2780 = vweird.f32 %v2773
    %vm2781 = vmor %vm2779, %vm2780
    %v2782 = vsel %vm2781, %v2773, %v2778
    %v2783 = vmul.f32 %v2782, %v2702
    %v2784 = vperm.slane %v2783, 0
    %v2785 = vmul.f32 %v2738, %v2784
    %v2786 = vmul.f32 %v2739, %v2784
    %v2787 = vmul.f32 %v2740, %v2784
    %v2788 = vmul.f32 %v2741, %v2784
    %v2789 = vmul.f32 %v2742, %v2784
    %v2790 = vmul.f32 %v2743, %v2784
    %v2791 = vmul.f32 %v2744, %v2784
    %v2792 = vperm.slane %v2703, 0
    %v2793 = vadd.f32 %v2785, %v2792
    %v2794 = vadd.f32 %v2786, %v2792
    %v2795 = vadd.f32 %v2787, %v2792
    %v2796 = vadd.f32 %v2788, %v2792
    %v2797 = vadd.f32 %v2789, %v2792
    %v2798 = vadd.f32 %v2790, %v2792
    %v2799 = vadd.f32 %v2791, %v2792
    %v2800 = vmax.f32 %v2793, 0.0
    %v2801 = vmax.f32 %v2794, 0.0
    %v2802 = vmax.f32 %v2795, 0.0
    %v2803 = vmax.f32 %v2796, 0.0
    %v2804 = vmax.f32 %v2797, 0.0
    %v2805 = vmax.f32 %v2798, 0.0
    %v2806 = vmax.f32 %v2799, 0.0
    %v2807 = vmul.f32 %v2800, %v1882
    %v2808 = vmul.f32 %v2801, %v1883
    %v2809 = vmul.f32 %v2802, %v1884
    %v2810 = vmul.f32 %v2803, %v1885
    %v2811 = vmul.f32 %v2804, %v1886
    %v2812 = vmul.f32 %v2805, %v1887
    %v2813 = vmul.f32 %v2806, %v1888
    %v2814 = vrot.slane %v2807, 6
    %v2815 = vrot.slane %v2808, 6
    %v2816 = vrot.slane %v2809, 6
    %v2817 = vrot.slane %v2810, 6
    %v2818 = vrot.slane %v2811, 6
    %v2819 = vrot.slane %v2812, 6
    %v2820 = vrot.slane %v2813, 6
    %v2821 = vsel %vm317, %v2819, %v2820
    %v2822 = vsel %vm317, %v2818, %v2819
    %v2823 = vsel %vm317, %v2817, %v2818
    %v2824 = vsel %vm317, %v2816, %v2817
    %v2825 = vsel %vm317, %v2815, %v2816
    %v2826 = vsel %vm317, %v2814, %v2815
    %v2827 = vsel %vm317, %v2820, %v2814
    %v2828 = vld [vmem:[#allocation2 + $0x270] sm:$0xff]
    %v2829 = vld [vmem:[#allocation2 + $0x278] sm:$0xff]
    %v2830 = vld [vmem:[#allocation2 + $0x280] sm:$0xff]
    %v2831 = vld [vmem:[#allocation2 + $0x288] sm:$0xff]
    %v2832 = vld [vmem:[#allocation2 + $0x290] sm:$0xff]
    %v2833 = vld [vmem:[#allocation2 + $0x298] sm:$0xff]
    %v2834 = vld [vmem:[#allocation2 + $0x2a0] sm:$0xff]
    %v2835 = vld [vmem:[#allocation2 + $0x2a8] sm:$0xff]
    %v2836 = vrot.slane %v2807, 7
    %v2837 = vrot.slane %v2808, 7
    %v2838 = vrot.slane %v2809, 7
    %v2839 = vrot.slane %v2810, 7
    %v2840 = vrot.slane %v2811, 7
    %v2841 = vrot.slane %v2812, 7
    %v2842 = vrot.slane %v2813, 7
    %v2843 = vsel %vm379, %v2841, %v2842
    %v2844 = vsel %vm379, %v2840, %v2841
    %v2845 = vsel %vm379, %v2839, %v2840
    %v2846 = vsel %vm379, %v2838, %v2839
    %v2847 = vsel %vm379, %v2837, %v2838
    %v2848 = vsel %vm379, %v2836, %v2837
    %v2849 = vsel %vm379, %v2842, %v2836
    %v2850 = vld [vmem:[#allocation2 + $0x2b0] sm:$0xff]
    %v2851 = vld [vmem:[#allocation2 + $0x2b8] sm:$0xff]
    %v2852 = vld [vmem:[#allocation2 + $0x2c0] sm:$0xff]
    %v2853 = vld [vmem:[#allocation2 + $0x2c8] sm:$0xff]
    %v2854 = vld [vmem:[#allocation2 + $0x2d0] sm:$0xff]
    %v2855 = vld [vmem:[#allocation2 + $0x2d8] sm:$0xff]
    %v2856 = vld [vmem:[#allocation2 + $0x2e0] sm:$0xff]
    %v2857 = vld [vmem:[#allocation2 + $0x2e8] sm:$0xff]
    %v2859 = vsel %vm1982, %v2849, 0
    %v2862 = vsel %vm1982, %v2848, 0
    %v2865 = vsel %vm1982, %v2847, 0
    %v2868 = vsel %vm1982, %v2846, 0
    %v2871 = vsel %vm1982, %v2845, 0
    %v2874 = vsel %vm1982, %v2844, 0
    %v2877 = vsel %vm1982, %v2843, 0
    %2879 = vmatpush.msra.mxu0 0.0
    %2880 = vmatpush.msra.mxu0 0.0
    %2881 = vmatpush.msra.mxu0 0.0
    %2882 = vmatpush.msra.mxu0 0.0
    %2883 = vmatpush.msra.mxu0 0.0
    %2884 = vmatpush.msra.mxu0 0.0
    %2885 = vmatpush.msra.mxu0 0.0
    %2886 = vmatpush.msra.mxu0 0.0
    %2887 = vmatpush.msra.mxu0 %v2857
    %2888 = vmatpush.msra.mxu0 %v2856
    %2889 = vmatpush.msra.mxu0 %v2855
    %2890 = vmatpush.msra.mxu0 %v2854
    %2891 = vmatpush.msra.mxu0 %v2853
    %2892 = vmatpush.msra.mxu0 %v2852
    %2893 = vmatpush.msra.mxu0 %v2851
    %2894 = vmatpush.msra.mxu0 %v2850
    %2895 = vmatmul.f32.gmra.mxu0 %v2859
    %v2896 = vpop.f32.mrf.mxu0
    %v2897 = vadd.f32 0.0, %v2896
    %2898 = vmatmul.f32.gmra.mxu0 %v2862
    %v2899 = vpop.f32.mrf.mxu0
    %v2900 = vadd.f32 0.0, %v2899
    %2901 = vmatmul.f32.gmra.mxu0 %v2865
    %v2902 = vpop.f32.mrf.mxu0
    %v2903 = vadd.f32 0.0, %v2902
    %2904 = vmatmul.f32.gmra.mxu0 %v2868
    %v2905 = vpop.f32.mrf.mxu0
    %v2906 = vadd.f32 0.0, %v2905
    %2907 = vmatmul.f32.gmra.mxu0 %v2871
    %v2908 = vpop.f32.mrf.mxu0
    %v2909 = vadd.f32 0.0, %v2908
    %2910 = vmatmul.f32.gmra.mxu0 %v2874
    %v2911 = vpop.f32.mrf.mxu0
    %v2912 = vadd.f32 0.0, %v2911
    %2913 = vmatmul.f32.gmra.mxu0 %v2877
    %v2914 = vpop.f32.mrf.mxu0
    %v2915 = vadd.f32 0.0, %v2914
    %2916 = vdwg.mxu0
    %v2918 = vsel %vm1982, %v2827, 0
    %v2921 = vsel %vm1982, %v2826, 0
    %v2924 = vsel %vm1982, %v2825, 0
    %v2927 = vsel %vm1982, %v2824, 0
    %v2930 = vsel %vm1982, %v2823, 0
    %v2933 = vsel %vm1982, %v2822, 0
    %v2936 = vsel %vm1982, %v2821, 0
    %2938 = vmatpush.msra.mxu0 0.0
    %2939 = vmatpush.msra.mxu0 0.0
    %2940 = vmatpush.msra.mxu0 0.0
    %2941 = vmatpush.msra.mxu0 0.0
    %2942 = vmatpush.msra.mxu0 0.0
    %2943 = vmatpush.msra.mxu0 0.0
    %2944 = vmatpush.msra.mxu0 0.0
    %2945 = vmatpush.msra.mxu0 0.0
    %2946 = vmatpush.msra.mxu0 %v2835
    %2947 = vmatpush.msra.mxu0 %v2834
    %2948 = vmatpush.msra.mxu0 %v2833
    %2949 = vmatpush.msra.mxu0 %v2832
    %2950 = vmatpush.msra.mxu0 %v2831
    %2951 = vmatpush.msra.mxu0 %v2830
    %2952 = vmatpush.msra.mxu0 %v2829
    %2953 = vmatpush.msra.mxu0 %v2828
    %2954 = vmatmul.f32.gmra.mxu0 %v2918
    %v2955 = vpop.f32.mrf.mxu0
    %v2956 = vadd.f32 %v2897, %v2955
    %2957 = vmatmul.f32.gmra.mxu0 %v2921
    %v2958 = vpop.f32.mrf.mxu0
    %v2959 = vadd.f32 %v2900, %v2958
    %2960 = vmatmul.f32.gmra.mxu0 %v2924
    %v2961 = vpop.f32.mrf.mxu0
    %v2962 = vadd.f32 %v2903, %v2961
    %2963 = vmatmul.f32.gmra.mxu0 %v2927
    %v2964 = vpop.f32.mrf.mxu0
    %v2965 = vadd.f32 %v2906, %v2964
    %2966 = vmatmul.f32.gmra.mxu0 %v2930
    %v2967 = vpop.f32.mrf.mxu0
    %v2968 = vadd.f32 %v2909, %v2967
    %2969 = vmatmul.f32.gmra.mxu0 %v2933
    %v2970 = vpop.f32.mrf.mxu0
    %v2971 = vadd.f32 %v2912, %v2970
    %2972 = vmatmul.f32.gmra.mxu0 %v2936
    %v2973 = vpop.f32.mrf.mxu0
    %v2974 = vadd.f32 %v2915, %v2973
    %2975 = vdwg.mxu0
    %v2976 = vld [vmem:[#allocation2 + $0x2f0] sm:$0xff]
    %v2977 = vld [vmem:[#allocation2 + $0x2f8] sm:$0xff]
    %v2978 = vld [vmem:[#allocation2 + $0x300] sm:$0xff]
    %v2979 = vld [vmem:[#allocation2 + $0x308] sm:$0xff]
    %v2980 = vld [vmem:[#allocation2 + $0x310] sm:$0xff]
    %v2981 = vld [vmem:[#allocation2 + $0x318] sm:$0xff]
    %v2982 = vld [vmem:[#allocation2 + $0x320] sm:$0xff]
    %v2983 = vld [vmem:[#allocation2 + $0x328] sm:$0xff]
    %v2985 = vsel %vm1982, %v2807, 0
    %v2988 = vsel %vm1982, %v2808, 0
    %v2991 = vsel %vm1982, %v2809, 0
    %v2994 = vsel %vm1982, %v2810, 0
    %v2997 = vsel %vm1982, %v2811, 0
    %v3000 = vsel %vm1982, %v2812, 0
    %v3003 = vsel %vm1982, %v2813, 0
    %3005 = vmatpush.msra.mxu0 0.0
    %3006 = vmatpush.msra.mxu0 0.0
    %3007 = vmatpush.msra.mxu0 0.0
    %3008 = vmatpush.msra.mxu0 0.0
    %3009 = vmatpush.msra.mxu0 0.0
    %3010 = vmatpush.msra.mxu0 0.0
    %3011 = vmatpush.msra.mxu0 0.0
    %3012 = vmatpush.msra.mxu0 0.0
    %3013 = vmatpush.msra.mxu0 %v2983
    %3014 = vmatpush.msra.mxu0 %v2982
    %3015 = vmatpush.msra.mxu0 %v2981
    %3016 = vmatpush.msra.mxu0 %v2980
    %3017 = vmatpush.msra.mxu0 %v2979
    %3018 = vmatpush.msra.mxu0 %v2978
    %3019 = vmatpush.msra.mxu0 %v2977
    %3020 = vmatpush.msra.mxu0 %v2976
    %3021 = vmatmul.f32.gmra.mxu0 %v2985
    %v3022 = vpop.f32.mrf.mxu0
    %v3023 = vadd.f32 0.0, %v3022
    %3024 = vmatmul.f32.gmra.mxu0 %v2988
    %v3025 = vpop.f32.mrf.mxu0
    %v3026 = vadd.f32 0.0, %v3025
    %3027 = vmatmul.f32.gmra.mxu0 %v2991
    %v3028 = vpop.f32.mrf.mxu0
    %v3029 = vadd.f32 0.0, %v3028
    %3030 = vmatmul.f32.gmra.mxu0 %v2994
    %v3031 = vpop.f32.mrf.mxu0
    %v3032 = vadd.f32 0.0, %v3031
    %3033 = vmatmul.f32.gmra.mxu0 %v2997
    %v3034 = vpop.f32.mrf.mxu0
    %v3035 = vadd.f32 0.0, %v3034
    %3036 = vmatmul.f32.gmra.mxu0 %v3000
    %v3037 = vpop.f32.mrf.mxu0
    %v3038 = vadd.f32 0.0, %v3037
    %3039 = vmatmul.f32.gmra.mxu0 %v3003
    %v3040 = vpop.f32.mrf.mxu0
    %v3041 = vadd.f32 0.0, %v3040
    %3042 = vdwg.mxu0
    %v3043 = vadd.f32 %v2956, %v3023
    %v3044 = vadd.f32 %v2959, %v3026
    %v3045 = vadd.f32 %v2962, %v3029
    %v3046 = vadd.f32 %v2965, %v3032
    %v3047 = vadd.f32 %v2968, %v3035
    %v3048 = vadd.f32 %v2971, %v3038
    %v3049 = vadd.f32 %v2974, %v3041
    %v3050 = vrot.slane %v2807, 1
    %v3051 = vrot.slane %v2808, 1
    %v3052 = vrot.slane %v2809, 1
    %v3053 = vrot.slane %v2810, 1
    %v3054 = vrot.slane %v2811, 1
    %v3055 = vrot.slane %v2812, 1
    %v3056 = vrot.slane %v2813, 1
    %v3057 = vsel %vm455, %v3055, %v3056
    %v3058 = vsel %vm455, %v3054, %v3055
    %v3059 = vsel %vm455, %v3053, %v3054
    %v3060 = vsel %vm455, %v3052, %v3053
    %v3061 = vsel %vm455, %v3051, %v3052
    %v3062 = vsel %vm455, %v3050, %v3051
    %v3063 = vsel %vm455, %v3056, %v3050
    %v3064 = vld [vmem:[#allocation2 + $0x330] sm:$0xff]
    %v3065 = vld [vmem:[#allocation2 + $0x338] sm:$0xff]
    %v3066 = vld [vmem:[#allocation2 + $0x340] sm:$0xff]
    %v3067 = vld [vmem:[#allocation2 + $0x348] sm:$0xff]
    %v3068 = vld [vmem:[#allocation2 + $0x350] sm:$0xff]
    %v3069 = vld [vmem:[#allocation2 + $0x358] sm:$0xff]
    %v3070 = vld [vmem:[#allocation2 + $0x360] sm:$0xff]
    %v3071 = vld [vmem:[#allocation2 + $0x368] sm:$0xff]
    %v3073 = vsel %vm1982, %v3062, 0
    %v3076 = vsel %vm1982, %v3061, 0
    %v3079 = vsel %vm1982, %v3060, 0
    %v3082 = vsel %vm1982, %v3059, 0
    %v3085 = vsel %vm1982, %v3058, 0
    %v3088 = vsel %vm1982, %v3057, 0
    %v3091 = vsel %vm1982, %v3063, 0
    %3093 = vmatpush.msra.mxu0 0.0
    %3094 = vmatpush.msra.mxu0 0.0
    %3095 = vmatpush.msra.mxu0 0.0
    %3096 = vmatpush.msra.mxu0 0.0
    %3097 = vmatpush.msra.mxu0 0.0
    %3098 = vmatpush.msra.mxu0 0.0
    %3099 = vmatpush.msra.mxu0 0.0
    %3100 = vmatpush.msra.mxu0 0.0
    %3101 = vmatpush.msra.mxu0 %v3071
    %3102 = vmatpush.msra.mxu0 %v3070
    %3103 = vmatpush.msra.mxu0 %v3069
    %3104 = vmatpush.msra.mxu0 %v3068
    %3105 = vmatpush.msra.mxu0 %v3067
    %3106 = vmatpush.msra.mxu0 %v3066
    %3107 = vmatpush.msra.mxu0 %v3065
    %3108 = vmatpush.msra.mxu0 %v3064
    %3109 = vmatmul.f32.gmra.mxu0 %v3073
    %v3110 = vpop.f32.mrf.mxu0
    %v3111 = vadd.f32 0.0, %v3110
    %3112 = vmatmul.f32.gmra.mxu0 %v3076
    %v3113 = vpop.f32.mrf.mxu0
    %v3114 = vadd.f32 0.0, %v3113
    %3115 = vmatmul.f32.gmra.mxu0 %v3079
    %v3116 = vpop.f32.mrf.mxu0
    %v3117 = vadd.f32 0.0, %v3116
    %3118 = vmatmul.f32.gmra.mxu0 %v3082
    %v3119 = vpop.f32.mrf.mxu0
    %v3120 = vadd.f32 0.0, %v3119
    %3121 = vmatmul.f32.gmra.mxu0 %v3085
    %v3122 = vpop.f32.mrf.mxu0
    %v3123 = vadd.f32 0.0, %v3122
    %3124 = vmatmul.f32.gmra.mxu0 %v3088
    %v3125 = vpop.f32.mrf.mxu0
    %v3126 = vadd.f32 0.0, %v3125
    %3127 = vmatmul.f32.gmra.mxu0 %v3091
    %v3128 = vpop.f32.mrf.mxu0
    %v3129 = vadd.f32 0.0, %v3128
    %3130 = vdwg.mxu0
    %v3131 = vadd.f32 %v3043, %v3111
    %v3132 = vadd.f32 %v3044, %v3114
    %v3133 = vadd.f32 %v3045, %v3117
    %v3134 = vadd.f32 %v3046, %v3120
    %v3135 = vadd.f32 %v3047, %v3123
    %v3136 = vadd.f32 %v3048, %v3126
    %v3137 = vadd.f32 %v3049, %v3129
    %v3138 = vrot.slane %v2807, 2
    %v3139 = vrot.slane %v2808, 2
    %v3140 = vrot.slane %v2809, 2
    %v3141 = vrot.slane %v2810, 2
    %v3142 = vrot.slane %v2811, 2
    %v3143 = vrot.slane %v2812, 2
    %v3144 = vrot.slane %v2813, 2
    %v3145 = vsel %vm517, %v3143, %v3144
    %v3146 = vsel %vm517, %v3142, %v3143
    %v3147 = vsel %vm517, %v3141, %v3142
    %v3148 = vsel %vm517, %v3140, %v3141
    %v3149 = vsel %vm517, %v3139, %v3140
    %v3150 = vsel %vm517, %v3138, %v3139
    %v3151 = vsel %vm517, %v3144, %v3138
    %v3152 = vld [vmem:[#allocation2 + $0x370] sm:$0xff]
    %v3153 = vld [vmem:[#allocation2 + $0x378] sm:$0xff]
    %v3154 = vld [vmem:[#allocation2 + $0x380] sm:$0xff]
    %v3155 = vld [vmem:[#allocation2 + $0x388] sm:$0xff]
    %v3156 = vld [vmem:[#allocation2 + $0x390] sm:$0xff]
    %v3157 = vld [vmem:[#allocation2 + $0x398] sm:$0xff]
    %v3158 = vld [vmem:[#allocation2 + $0x3a0] sm:$0xff]
    %v3159 = vld [vmem:[#allocation2 + $0x3a8] sm:$0xff]
    %v3161 = vsel %vm1982, %v3150, 0
    %v3164 = vsel %vm1982, %v3149, 0
    %v3167 = vsel %vm1982, %v3148, 0
    %v3170 = vsel %vm1982, %v3147, 0
    %v3173 = vsel %vm1982, %v3146, 0
    %v3176 = vsel %vm1982, %v3145, 0
    %v3179 = vsel %vm1982, %v3151, 0
    %3181 = vmatpush.msra.mxu0 0.0
    %3182 = vmatpush.msra.mxu0 0.0
    %3183 = vmatpush.msra.mxu0 0.0
    %3184 = vmatpush.msra.mxu0 0.0
    %3185 = vmatpush.msra.mxu0 0.0
    %3186 = vmatpush.msra.mxu0 0.0
    %3187 = vmatpush.msra.mxu0 0.0
    %3188 = vmatpush.msra.mxu0 0.0
    %3189 = vmatpush.msra.mxu0 %v3159
    %3190 = vmatpush.msra.mxu0 %v3158
    %3191 = vmatpush.msra.mxu0 %v3157
    %3192 = vmatpush.msra.mxu0 %v3156
    %3193 = vmatpush.msra.mxu0 %v3155
    %3194 = vmatpush.msra.mxu0 %v3154
    %3195 = vmatpush.msra.mxu0 %v3153
    %3196 = vmatpush.msra.mxu0 %v3152
    %3197 = vmatmul.f32.gmra.mxu0 %v3161
    %v3198 = vpop.f32.mrf.mxu0
    %v3199 = vadd.f32 0.0, %v3198
    %3200 = vmatmul.f32.gmra.mxu0 %v3164
    %v3201 = vpop.f32.mrf.mxu0
    %v3202 = vadd.f32 0.0, %v3201
    %3203 = vmatmul.f32.gmra.mxu0 %v3167
    %v3204 = vpop.f32.mrf.mxu0
    %v3205 = vadd.f32 0.0, %v3204
    %3206 = vmatmul.f32.gmra.mxu0 %v3170
    %v3207 = vpop.f32.mrf.mxu0
    %v3208 = vadd.f32 0.0, %v3207
    %3209 = vmatmul.f32.gmra.mxu0 %v3173
    %v3210 = vpop.f32.mrf.mxu0
    %v3211 = vadd.f32 0.0, %v3210
    %3212 = vmatmul.f32.gmra.mxu0 %v3176
    %v3213 = vpop.f32.mrf.mxu0
    %v3214 = vadd.f32 0.0, %v3213
    %3215 = vmatmul.f32.gmra.mxu0 %v3179
    %v3216 = vpop.f32.mrf.mxu0
    %v3217 = vadd.f32 0.0, %v3216
    %3218 = vdwg.mxu0
    %v3219 = vadd.f32 %v3131, %v3199
    %v3220 = vadd.f32 %v3132, %v3202
    %v3221 = vadd.f32 %v3133, %v3205
    %v3222 = vadd.f32 %v3134, %v3208
    %v3223 = vadd.f32 %v3135, %v3211
    %v3224 = vadd.f32 %v3136, %v3214
    %v3225 = vadd.f32 %v3137, %v3217
    %v3226 = vld [vmem:[#allocation4 + $0xc] sm:$0x1]
    %v3227 = vld [vmem:[#allocation4 + $0xd] sm:$0x1]
    %v3228 = vmul.f32 %v3219, %v1882
    %v3229 = vmul.f32 %v3220, %v1883
    %v3230 = vmul.f32 %v3221, %v1884
    %v3231 = vmul.f32 %v3222, %v1885
    %v3232 = vmul.f32 %v3223, %v1886
    %v3233 = vmul.f32 %v3224, %v1887
    %v3234 = vmul.f32 %v3225, %v1888
    %v3235 = vsel %vm1982, %v3228, 0.0
    %v3236 = vsel %vm1982, %v3229, 0.0
    %v3237 = vadd.f32 %v3235, %v3236
    %v3238 = vsel %vm1982, %v3230, 0.0
    %v3239 = vadd.f32 %v3237, %v3238
    %v3240 = vsel %vm1982, %v3231, 0.0
    %v3241 = vadd.f32 %v3239, %v3240
    %v3242 = vsel %vm1982, %v3232, 0.0
    %v3243 = vadd.f32 %v3241, %v3242
    %v3244 = vsel %vm1982, %v3233, 0.0
    %v3245 = vadd.f32 %v3243, %v3244
    %v3246 = vsel %vm1982, %v3234, 0.0
    %v3247 = vadd.f32 %v3245, %v3246
    %v3248 = vrot.slane %v3247, 4
    %v3249 = vadd.f32 %v3247, %v3248
    %v3250 = vrot.slane %v3249, 2
    %v3251 = vadd.f32 %v3249, %v3250
    %v3252 = vrot.slane %v3251, 1
    %v3253 = vadd.f32 %v3251, %v3252
    %v3254 = vmul.f32 %v3253, 0.033333335
    %v3255 = vsub.f32 %v3219, %v3254
    %v3256 = vsub.f32 %v3220, %v3254
    %v3257 = vsub.f32 %v3221, %v3254
    %v3258 = vsub.f32 %v3222, %v3254
    %v3259 = vsub.f32 %v3223, %v3254
    %v3260 = vsub.f32 %v3224, %v3254
    %v3261 = vsub.f32 %v3225, %v3254
    %v3262 = vmul.f32 %v3255, %v1882
    %v3263 = vmul.f32 %v3256, %v1883
    %v3264 = vmul.f32 %v3257, %v1884
    %v3265 = vmul.f32 %v3258, %v1885
    %v3266 = vmul.f32 %v3259, %v1886
    %v3267 = vmul.f32 %v3260, %v1887
    %v3268 = vmul.f32 %v3261, %v1888
    %v3269 = vmul.f32 %v3262, %v3262
    %v3270 = vmul.f32 %v3263, %v3263
    %v3271 = vmul.f32 %v3264, %v3264
    %v3272 = vmul.f32 %v3265, %v3265
    %v3273 = vmul.f32 %v3266, %v3266
    %v3274 = vmul.f32 %v3267, %v3267
    %v3275 = vmul.f32 %v3268, %v3268
    %v3276 = vsel %vm1982, %v3269, 0.0
    %v3277 = vsel %vm1982, %v3270, 0.0
    %v3278 = vadd.f32 %v3276, %v3277
    %v3279 = vsel %vm1982, %v3271, 0.0
    %v3280 = vadd.f32 %v3278, %v3279
    %v3281 = vsel %vm1982, %v3272, 0.0
    %v3282 = vadd.f32 %v3280, %v3281
    %v3283 = vsel %vm1982, %v3273, 0.0
    %v3284 = vadd.f32 %v3282, %v3283
    %v3285 = vsel %vm1982, %v3274, 0.0
    %v3286 = vadd.f32 %v3284, %v3285
    %v3287 = vsel %vm1982, %v3275, 0.0
    %v3288 = vadd.f32 %v3286, %v3287
    %v3289 = vrot.slane %v3288, 4
    %v3290 = vadd.f32 %v3288, %v3289
    %v3291 = vrot.slane %v3290, 2
    %v3292 = vadd.f32 %v3290, %v3291
    %v3293 = vrot.slane %v3292, 1
    %v3294 = vadd.f32 %v3292, %v3293
    %v3295 = vmul.f32 %v3294, 0.033333335
    %v3296 = vadd.f32 %v3295, 1e-05
    %v3297 = vrsqrt.pop %v3296
    %v3298 = vmul.f32 %v3297, %v3296
    %v3299 = vmul.f32 %v3298, %v3297
    %v3300 = vmul.f32 0.5, %v3299
    %v3301 = vsub.f32 1.5, %v3300
    %v3302 = vmul.f32 %v3297, %v3301
    %vm3303 = vweird.f32 %v3296
    %vm3304 = vweird.f32 %v3297
    %vm3305 = vmor %vm3303, %vm3304
    %v3306 = vsel %vm3305, %v3297, %v3302
    %v3307 = vmul.f32 %v3306, %v3226
    %v3308 = vperm.slane %v3307, 0
    %v3309 = vmul.f32 %v3262, %v3308
    %v3310 = vmul.f32 %v3263, %v3308
    %v3311 = vmul.f32 %v3264, %v3308
    %v3312 = vmul.f32 %v3265, %v3308
    %v3313 = vmul.f32 %v3266, %v3308
    %v3314 = vmul.f32 %v3267, %v3308
    %v3315 = vmul.f32 %v3268, %v3308
    %v3316 = vperm.slane %v3227, 0
    %v3317 = vadd.f32 %v3309, %v3316
    %v3318 = vadd.f32 %v3310, %v3316
    %v3319 = vadd.f32 %v3311, %v3316
    %v3320 = vadd.f32 %v3312, %v3316
    %v3321 = vadd.f32 %v3313, %v3316
    %v3322 = vadd.f32 %v3314, %v3316
    %v3323 = vadd.f32 %v3315, %v3316
    %v3324 = vmax.f32 %v3317, 0.0
    %v3325 = vmax.f32 %v3318, 0.0
    %v3326 = vmax.f32 %v3319, 0.0
    %v3327 = vmax.f32 %v3320, 0.0
    %v3328 = vmax.f32 %v3321, 0.0
    %v3329 = vmax.f32 %v3322, 0.0
    %v3330 = vmax.f32 %v3323, 0.0
    %v3331 = vmul.f32 %v3324, %v1882
    %v3332 = vmul.f32 %v3325, %v1883
    %v3333 = vmul.f32 %v3326, %v1884
    %v3334 = vmul.f32 %v3327, %v1885
    %v3335 = vmul.f32 %v3328, %v1886
    %v3336 = vmul.f32 %v3329, %v1887
    %v3337 = vmul.f32 %v3330, %v1888
    %v3338 = vrot.slane %v3331, 6
    %v3339 = vrot.slane %v3332, 6
    %v3340 = vrot.slane %v3333, 6
    %v3341 = vrot.slane %v3334, 6
    %v3342 = vrot.slane %v3335, 6
    %v3343 = vrot.slane %v3336, 6
    %v3344 = vrot.slane %v3337, 6
    %v3345 = vsel %vm317, %v3343, %v3344
    %v3346 = vsel %vm317, %v3342, %v3343
    %v3347 = vsel %vm317, %v3341, %v3342
    %v3348 = vsel %vm317, %v3340, %v3341
    %v3349 = vsel %vm317, %v3339, %v3340
    %v3350 = vsel %vm317, %v3338, %v3339
    %v3351 = vsel %vm317, %v3344, %v3338
    %v3352 = vld [vmem:[#allocation2 + $0x3b0] sm:$0xff]
    %v3353 = vld [vmem:[#allocation2 + $0x3b8] sm:$0xff]
    %v3354 = vld [vmem:[#allocation2 + $0x3c0] sm:$0xff]
    %v3355 = vld [vmem:[#allocation2 + $0x3c8] sm:$0xff]
    %v3356 = vld [vmem:[#allocation2 + $0x3d0] sm:$0xff]
    %v3357 = vld [vmem:[#allocation2 + $0x3d8] sm:$0xff]
    %v3358 = vld [vmem:[#allocation2 + $0x3e0] sm:$0xff]
    %v3359 = vld [vmem:[#allocation2 + $0x3e8] sm:$0xff]
    %v3360 = vrot.slane %v3331, 7
    %v3361 = vrot.slane %v3332, 7
    %v3362 = vrot.slane %v3333, 7
    %v3363 = vrot.slane %v3334, 7
    %v3364 = vrot.slane %v3335, 7
    %v3365 = vrot.slane %v3336, 7
    %v3366 = vrot.slane %v3337, 7
    %v3367 = vsel %vm379, %v3365, %v3366
    %v3368 = vsel %vm379, %v3364, %v3365
    %v3369 = vsel %vm379, %v3363, %v3364
    %v3370 = vsel %vm379, %v3362, %v3363
    %v3371 = vsel %vm379, %v3361, %v3362
    %v3372 = vsel %vm379, %v3360, %v3361
    %v3373 = vsel %vm379, %v3366, %v3360
    %v3374 = vld [vmem:[#allocation2 + $0x3f0] sm:$0xff]
    %v3375 = vld [vmem:[#allocation2 + $0x3f8] sm:$0xff]
    %v3376 = vld [vmem:[#allocation2 + $0x400] sm:$0xff]
    %v3377 = vld [vmem:[#allocation2 + $0x408] sm:$0xff]
    %v3378 = vld [vmem:[#allocation2 + $0x410] sm:$0xff]
    %v3379 = vld [vmem:[#allocation2 + $0x418] sm:$0xff]
    %v3380 = vld [vmem:[#allocation2 + $0x420] sm:$0xff]
    %v3381 = vld [vmem:[#allocation2 + $0x428] sm:$0xff]
    %v3383 = vsel %vm1982, %v3373, 0
    %v3386 = vsel %vm1982, %v3372, 0
    %v3389 = vsel %vm1982, %v3371, 0
    %v3392 = vsel %vm1982, %v3370, 0
    %v3395 = vsel %vm1982, %v3369, 0
    %v3398 = vsel %vm1982, %v3368, 0
    %v3401 = vsel %vm1982, %v3367, 0
    %3403 = vmatpush.msra.mxu0 0.0
    %3404 = vmatpush.msra.mxu0 0.0
    %3405 = vmatpush.msra.mxu0 0.0
    %3406 = vmatpush.msra.mxu0 0.0
    %3407 = vmatpush.msra.mxu0 0.0
    %3408 = vmatpush.msra.mxu0 0.0
    %3409 = vmatpush.msra.mxu0 0.0
    %3410 = vmatpush.msra.mxu0 0.0
    %3411 = vmatpush.msra.mxu0 %v3381
    %3412 = vmatpush.msra.mxu0 %v3380
    %3413 = vmatpush.msra.mxu0 %v3379
    %3414 = vmatpush.msra.mxu0 %v3378
    %3415 = vmatpush.msra.mxu0 %v3377
    %3416 = vmatpush.msra.mxu0 %v3376
    %3417 = vmatpush.msra.mxu0 %v3375
    %3418 = vmatpush.msra.mxu0 %v3374
    %3419 = vmatmul.f32.gmra.mxu0 %v3383
    %v3420 = vpop.f32.mrf.mxu0
    %v3421 = vadd.f32 0.0, %v3420
    %3422 = vmatmul.f32.gmra.mxu0 %v3386
    %v3423 = vpop.f32.mrf.mxu0
    %v3424 = vadd.f32 0.0, %v3423
    %3425 = vmatmul.f32.gmra.mxu0 %v3389
    %v3426 = vpop.f32.mrf.mxu0
    %v3427 = vadd.f32 0.0, %v3426
    %3428 = vmatmul.f32.gmra.mxu0 %v3392
    %v3429 = vpop.f32.mrf.mxu0
    %v3430 = vadd.f32 0.0, %v3429
    %3431 = vmatmul.f32.gmra.mxu0 %v3395
    %v3432 = vpop.f32.mrf.mxu0
    %v3433 = vadd.f32 0.0, %v3432
    %3434 = vmatmul.f32.gmra.mxu0 %v3398
    %v3435 = vpop.f32.mrf.mxu0
    %v3436 = vadd.f32 0.0, %v3435
    %3437 = vmatmul.f32.gmra.mxu0 %v3401
    %v3438 = vpop.f32.mrf.mxu0
    %v3439 = vadd.f32 0.0, %v3438
    %3440 = vdwg.mxu0
    %v3442 = vsel %vm1982, %v3351, 0
    %v3445 = vsel %vm1982, %v3350, 0
    %v3448 = vsel %vm1982, %v3349, 0
    %v3451 = vsel %vm1982, %v3348, 0
    %v3454 = vsel %vm1982, %v3347, 0
    %v3457 = vsel %vm1982, %v3346, 0
    %v3460 = vsel %vm1982, %v3345, 0
    %3462 = vmatpush.msra.mxu0 0.0
    %3463 = vmatpush.msra.mxu0 0.0
    %3464 = vmatpush.msra.mxu0 0.0
    %3465 = vmatpush.msra.mxu0 0.0
    %3466 = vmatpush.msra.mxu0 0.0
    %3467 = vmatpush.msra.mxu0 0.0
    %3468 = vmatpush.msra.mxu0 0.0
    %3469 = vmatpush.msra.mxu0 0.0
    %3470 = vmatpush.msra.mxu0 %v3359
    %3471 = vmatpush.msra.mxu0 %v3358
    %3472 = vmatpush.msra.mxu0 %v3357
    %3473 = vmatpush.msra.mxu0 %v3356
    %3474 = vmatpush.msra.mxu0 %v3355
    %3475 = vmatpush.msra.mxu0 %v3354
    %3476 = vmatpush.msra.mxu0 %v3353
    %3477 = vmatpush.msra.mxu0 %v3352
    %3478 = vmatmul.f32.gmra.mxu0 %v3442
    %v3479 = vpop.f32.mrf.mxu0
    %v3480 = vadd.f32 %v3421, %v3479
    %3481 = vmatmul.f32.gmra.mxu0 %v3445
    %v3482 = vpop.f32.mrf.mxu0
    %v3483 = vadd.f32 %v3424, %v3482
    %3484 = vmatmul.f32.gmra.mxu0 %v3448
    %v3485 = vpop.f32.mrf.mxu0
    %v3486 = vadd.f32 %v3427, %v3485
    %3487 = vmatmul.f32.gmra.mxu0 %v3451
    %v3488 = vpop.f32.mrf.mxu0
    %v3489 = vadd.f32 %v3430, %v3488
    %3490 = vmatmul.f32.gmra.mxu0 %v3454
    %v3491 = vpop.f32.mrf.mxu0
    %v3492 = vadd.f32 %v3433, %v3491
    %3493 = vmatmul.f32.gmra.mxu0 %v3457
    %v3494 = vpop.f32.mrf.mxu0
    %v3495 = vadd.f32 %v3436, %v3494
    %3496 = vmatmul.f32.gmra.mxu0 %v3460
    %v3497 = vpop.f32.mrf.mxu0
    %v3498 = vadd.f32 %v3439, %v3497
    %3499 = vdwg.mxu0
    %v3500 = vld [vmem:[#allocation2 + $0x430] sm:$0xff]
    %v3501 = vld [vmem:[#allocation2 + $0x438] sm:$0xff]
    %v3502 = vld [vmem:[#allocation2 + $0x440] sm:$0xff]
    %v3503 = vld [vmem:[#allocation2 + $0x448] sm:$0xff]
    %v3504 = vld [vmem:[#allocation2 + $0x450] sm:$0xff]
    %v3505 = vld [vmem:[#allocation2 + $0x458] sm:$0xff]
    %v3506 = vld [vmem:[#allocation2 + $0x460] sm:$0xff]
    %v3507 = vld [vmem:[#allocation2 + $0x468] sm:$0xff]
    %v3509 = vsel %vm1982, %v3331, 0
    %v3512 = vsel %vm1982, %v3332, 0
    %v3515 = vsel %vm1982, %v3333, 0
    %v3518 = vsel %vm1982, %v3334, 0
    %v3521 = vsel %vm1982, %v3335, 0
    %v3524 = vsel %vm1982, %v3336, 0
    %v3527 = vsel %vm1982, %v3337, 0
    %3529 = vmatpush.msra.mxu0 0.0
    %3530 = vmatpush.msra.mxu0 0.0
    %3531 = vmatpush.msra.mxu0 0.0
    %3532 = vmatpush.msra.mxu0 0.0
    %3533 = vmatpush.msra.mxu0 0.0
    %3534 = vmatpush.msra.mxu0 0.0
    %3535 = vmatpush.msra.mxu0 0.0
    %3536 = vmatpush.msra.mxu0 0.0
    %3537 = vmatpush.msra.mxu0 %v3507
    %3538 = vmatpush.msra.mxu0 %v3506
    %3539 = vmatpush.msra.mxu0 %v3505
    %3540 = vmatpush.msra.mxu0 %v3504
    %3541 = vmatpush.msra.mxu0 %v3503
    %3542 = vmatpush.msra.mxu0 %v3502
    %3543 = vmatpush.msra.mxu0 %v3501
    %3544 = vmatpush.msra.mxu0 %v3500
    %3545 = vmatmul.f32.gmra.mxu0 %v3509
    %v3546 = vpop.f32.mrf.mxu0
    %v3547 = vadd.f32 0.0, %v3546
    %3548 = vmatmul.f32.gmra.mxu0 %v3512
    %v3549 = vpop.f32.mrf.mxu0
    %v3550 = vadd.f32 0.0, %v3549
    %3551 = vmatmul.f32.gmra.mxu0 %v3515
    %v3552 = vpop.f32.mrf.mxu0
    %v3553 = vadd.f32 0.0, %v3552
    %3554 = vmatmul.f32.gmra.mxu0 %v3518
    %v3555 = vpop.f32.mrf.mxu0
    %v3556 = vadd.f32 0.0, %v3555
    %3557 = vmatmul.f32.gmra.mxu0 %v3521
    %v3558 = vpop.f32.mrf.mxu0
    %v3559 = vadd.f32 0.0, %v3558
    %3560 = vmatmul.f32.gmra.mxu0 %v3524
    %v3561 = vpop.f32.mrf.mxu0
    %v3562 = vadd.f32 0.0, %v3561
    %3563 = vmatmul.f32.gmra.mxu0 %v3527
    %v3564 = vpop.f32.mrf.mxu0
    %v3565 = vadd.f32 0.0, %v3564
    %3566 = vdwg.mxu0
    %v3567 = vadd.f32 %v3480, %v3547
    %v3568 = vadd.f32 %v3483, %v3550
    %v3569 = vadd.f32 %v3486, %v3553
    %v3570 = vadd.f32 %v3489, %v3556
    %v3571 = vadd.f32 %v3492, %v3559
    %v3572 = vadd.f32 %v3495, %v3562
    %v3573 = vadd.f32 %v3498, %v3565
    %v3574 = vrot.slane %v3331, 1
    %v3575 = vrot.slane %v3332, 1
    %v3576 = vrot.slane %v3333, 1
    %v3577 = vrot.slane %v3334, 1
    %v3578 = vrot.slane %v3335, 1
    %v3579 = vrot.slane %v3336, 1
    %v3580 = vrot.slane %v3337, 1
    %v3581 = vsel %vm455, %v3579, %v3580
    %v3582 = vsel %vm455, %v3578, %v3579
    %v3583 = vsel %vm455, %v3577, %v3578
    %v3584 = vsel %vm455, %v3576, %v3577
    %v3585 = vsel %vm455, %v3575, %v3576
    %v3586 = vsel %vm455, %v3574, %v3575
    %v3587 = vsel %vm455, %v3580, %v3574
    %v3588 = vld [vmem:[#allocation2 + $0x470] sm:$0xff]
    %v3589 = vld [vmem:[#allocation2 + $0x478] sm:$0xff]
    %v3590 = vld [vmem:[#allocation2 + $0x480] sm:$0xff]
    %v3591 = vld [vmem:[#allocation2 + $0x488] sm:$0xff]
    %v3592 = vld [vmem:[#allocation2 + $0x490] sm:$0xff]
    %v3593 = vld [vmem:[#allocation2 + $0x498] sm:$0xff]
    %v3594 = vld [vmem:[#allocation2 + $0x4a0] sm:$0xff]
    %v3595 = vld [vmem:[#allocation2 + $0x4a8] sm:$0xff]
    %v3597 = vsel %vm1982, %v3586, 0
    %v3600 = vsel %vm1982, %v3585, 0
    %v3603 = vsel %vm1982, %v3584, 0
    %v3606 = vsel %vm1982, %v3583, 0
    %v3609 = vsel %vm1982, %v3582, 0
    %v3612 = vsel %vm1982, %v3581, 0
    %v3615 = vsel %vm1982, %v3587, 0
    %3617 = vmatpush.msra.mxu0 0.0
    %3618 = vmatpush.msra.mxu0 0.0
    %3619 = vmatpush.msra.mxu0 0.0
    %3620 = vmatpush.msra.mxu0 0.0
    %3621 = vmatpush.msra.mxu0 0.0
    %3622 = vmatpush.msra.mxu0 0.0
    %3623 = vmatpush.msra.mxu0 0.0
    %3624 = vmatpush.msra.mxu0 0.0
    %3625 = vmatpush.msra.mxu0 %v3595
    %3626 = vmatpush.msra.mxu0 %v3594
    %3627 = vmatpush.msra.mxu0 %v3593
    %3628 = vmatpush.msra.mxu0 %v3592
    %3629 = vmatpush.msra.mxu0 %v3591
    %3630 = vmatpush.msra.mxu0 %v3590
    %3631 = vmatpush.msra.mxu0 %v3589
    %3632 = vmatpush.msra.mxu0 %v3588
    %3633 = vmatmul.f32.gmra.mxu0 %v3597
    %v3634 = vpop.f32.mrf.mxu0
    %v3635 = vadd.f32 0.0, %v3634
    %3636 = vmatmul.f32.gmra.mxu0 %v3600
    %v3637 = vpop.f32.mrf.mxu0
    %v3638 = vadd.f32 0.0, %v3637
    %3639 = vmatmul.f32.gmra.mxu0 %v3603
    %v3640 = vpop.f32.mrf.mxu0
    %v3641 = vadd.f32 0.0, %v3640
    %3642 = vmatmul.f32.gmra.mxu0 %v3606
    %v3643 = vpop.f32.mrf.mxu0
    %v3644 = vadd.f32 0.0, %v3643
    %3645 = vmatmul.f32.gmra.mxu0 %v3609
    %v3646 = vpop.f32.mrf.mxu0
    %v3647 = vadd.f32 0.0, %v3646
    %3648 = vmatmul.f32.gmra.mxu0 %v3612
    %v3649 = vpop.f32.mrf.mxu0
    %v3650 = vadd.f32 0.0, %v3649
    %3651 = vmatmul.f32.gmra.mxu0 %v3615
    %v3652 = vpop.f32.mrf.mxu0
    %v3653 = vadd.f32 0.0, %v3652
    %3654 = vdwg.mxu0
    %v3655 = vadd.f32 %v3567, %v3635
    %v3656 = vadd.f32 %v3568, %v3638
    %v3657 = vadd.f32 %v3569, %v3641
    %v3658 = vadd.f32 %v3570, %v3644
    %v3659 = vadd.f32 %v3571, %v3647
    %v3660 = vadd.f32 %v3572, %v3650
    %v3661 = vadd.f32 %v3573, %v3653
    %v3662 = vrot.slane %v3331, 2
    %v3663 = vrot.slane %v3332, 2
    %v3664 = vrot.slane %v3333, 2
    %v3665 = vrot.slane %v3334, 2
    %v3666 = vrot.slane %v3335, 2
    %v3667 = vrot.slane %v3336, 2
    %v3668 = vrot.slane %v3337, 2
    %v3669 = vsel %vm517, %v3667, %v3668
    %v3670 = vsel %vm517, %v3666, %v3667
    %v3671 = vsel %vm517, %v3665, %v3666
    %v3672 = vsel %vm517, %v3664, %v3665
    %v3673 = vsel %vm517, %v3663, %v3664
    %v3674 = vsel %vm517, %v3662, %v3663
    %v3675 = vsel %vm517, %v3668, %v3662
    %v3676 = vld [vmem:[#allocation2 + $0x4b0] sm:$0xff]
    %v3677 = vld [vmem:[#allocation2 + $0x4b8] sm:$0xff]
    %v3678 = vld [vmem:[#allocation2 + $0x4c0] sm:$0xff]
    %v3679 = vld [vmem:[#allocation2 + $0x4c8] sm:$0xff]
    %v3680 = vld [vmem:[#allocation2 + $0x4d0] sm:$0xff]
    %v3681 = vld [vmem:[#allocation2 + $0x4d8] sm:$0xff]
    %v3682 = vld [vmem:[#allocation2 + $0x4e0] sm:$0xff]
    %v3683 = vld [vmem:[#allocation2 + $0x4e8] sm:$0xff]
    %v3685 = vsel %vm1982, %v3674, 0
    %v3688 = vsel %vm1982, %v3673, 0
    %v3691 = vsel %vm1982, %v3672, 0
    %v3694 = vsel %vm1982, %v3671, 0
    %v3697 = vsel %vm1982, %v3670, 0
    %v3700 = vsel %vm1982, %v3669, 0
    %v3703 = vsel %vm1982, %v3675, 0
    %3705 = vmatpush.msra.mxu0 0.0
    %3706 = vmatpush.msra.mxu0 0.0
    %3707 = vmatpush.msra.mxu0 0.0
    %3708 = vmatpush.msra.mxu0 0.0
    %3709 = vmatpush.msra.mxu0 0.0
    %3710 = vmatpush.msra.mxu0 0.0
    %3711 = vmatpush.msra.mxu0 0.0
    %3712 = vmatpush.msra.mxu0 0.0
    %3713 = vmatpush.msra.mxu0 %v3683
    %3714 = vmatpush.msra.mxu0 %v3682
    %3715 = vmatpush.msra.mxu0 %v3681
    %3716 = vmatpush.msra.mxu0 %v3680
    %3717 = vmatpush.msra.mxu0 %v3679
    %3718 = vmatpush.msra.mxu0 %v3678
    %3719 = vmatpush.msra.mxu0 %v3677
    %3720 = vmatpush.msra.mxu0 %v3676
    %3721 = vmatmul.f32.gmra.mxu0 %v3685
    %v3722 = vpop.f32.mrf.mxu0
    %v3723 = vadd.f32 0.0, %v3722
    %3724 = vmatmul.f32.gmra.mxu0 %v3688
    %v3725 = vpop.f32.mrf.mxu0
    %v3726 = vadd.f32 0.0, %v3725
    %3727 = vmatmul.f32.gmra.mxu0 %v3691
    %v3728 = vpop.f32.mrf.mxu0
    %v3729 = vadd.f32 0.0, %v3728
    %3730 = vmatmul.f32.gmra.mxu0 %v3694
    %v3731 = vpop.f32.mrf.mxu0
    %v3732 = vadd.f32 0.0, %v3731
    %3733 = vmatmul.f32.gmra.mxu0 %v3697
    %v3734 = vpop.f32.mrf.mxu0
    %v3735 = vadd.f32 0.0, %v3734
    %3736 = vmatmul.f32.gmra.mxu0 %v3700
    %v3737 = vpop.f32.mrf.mxu0
    %v3738 = vadd.f32 0.0, %v3737
    %3739 = vmatmul.f32.gmra.mxu0 %v3703
    %v3740 = vpop.f32.mrf.mxu0
    %v3741 = vadd.f32 0.0, %v3740
    %3742 = vdwg.mxu0
    %v3743 = vadd.f32 %v3655, %v3723
    %v3744 = vadd.f32 %v3656, %v3726
    %v3745 = vadd.f32 %v3657, %v3729
    %v3746 = vadd.f32 %v3658, %v3732
    %v3747 = vadd.f32 %v3659, %v3735
    %v3748 = vadd.f32 %v3660, %v3738
    %v3749 = vadd.f32 %v3661, %v3741
    %v3750 = vld [vmem:[#allocation4 + $0xe] sm:$0x1]
    %v3751 = vld [vmem:[#allocation4 + $0xf] sm:$0x1]
    %v3752 = vmul.f32 %v3743, %v1882
    %v3753 = vmul.f32 %v3744, %v1883
    %v3754 = vmul.f32 %v3745, %v1884
    %v3755 = vmul.f32 %v3746, %v1885
    %v3756 = vmul.f32 %v3747, %v1886
    %v3757 = vmul.f32 %v3748, %v1887
    %v3758 = vmul.f32 %v3749, %v1888
    %v3759 = vsel %vm1982, %v3752, 0.0
    %v3760 = vsel %vm1982, %v3753, 0.0
    %v3761 = vadd.f32 %v3759, %v3760
    %v3762 = vsel %vm1982, %v3754, 0.0
    %v3763 = vadd.f32 %v3761, %v3762
    %v3764 = vsel %vm1982, %v3755, 0.0
    %v3765 = vadd.f32 %v3763, %v3764
    %v3766 = vsel %vm1982, %v3756, 0.0
    %v3767 = vadd.f32 %v3765, %v3766
    %v3768 = vsel %vm1982, %v3757, 0.0
    %v3769 = vadd.f32 %v3767, %v3768
    %v3770 = vsel %vm1982, %v3758, 0.0
    %v3771 = vadd.f32 %v3769, %v3770
    %v3772 = vrot.slane %v3771, 4
    %v3773 = vadd.f32 %v3771, %v3772
    %v3774 = vrot.slane %v3773, 2
    %v3775 = vadd.f32 %v3773, %v3774
    %v3776 = vrot.slane %v3775, 1
    %v3777 = vadd.f32 %v3775, %v3776
    %v3778 = vmul.f32 %v3777, 0.033333335
    %v3779 = vsub.f32 %v3743, %v3778
    %v3780 = vsub.f32 %v3744, %v3778
    %v3781 = vsub.f32 %v3745, %v3778
    %v3782 = vsub.f32 %v3746, %v3778
    %v3783 = vsub.f32 %v3747, %v3778
    %v3784 = vsub.f32 %v3748, %v3778
    %v3785 = vsub.f32 %v3749, %v3778
    %v3786 = vmul.f32 %v3779, %v1882
    %v3787 = vmul.f32 %v3780, %v1883
    %v3788 = vmul.f32 %v3781, %v1884
    %v3789 = vmul.f32 %v3782, %v1885
    %v3790 = vmul.f32 %v3783, %v1886
    %v3791 = vmul.f32 %v3784, %v1887
    %v3792 = vmul.f32 %v3785, %v1888
    %v3793 = vmul.f32 %v3786, %v3786
    %v3794 = vmul.f32 %v3787, %v3787
    %v3795 = vmul.f32 %v3788, %v3788
    %v3796 = vmul.f32 %v3789, %v3789
    %v3797 = vmul.f32 %v3790, %v3790
    %v3798 = vmul.f32 %v3791, %v3791
    %v3799 = vmul.f32 %v3792, %v3792
    %v3800 = vsel %vm1982, %v3793, 0.0
    %v3801 = vsel %vm1982, %v3794, 0.0
    %v3802 = vadd.f32 %v3800, %v3801
    %v3803 = vsel %vm1982, %v3795, 0.0
    %v3804 = vadd.f32 %v3802, %v3803
    %v3805 = vsel %vm1982, %v3796, 0.0
    %v3806 = vadd.f32 %v3804, %v3805
    %v3807 = vsel %vm1982, %v3797, 0.0
    %v3808 = vadd.f32 %v3806, %v3807
    %v3809 = vsel %vm1982, %v3798, 0.0
    %v3810 = vadd.f32 %v3808, %v3809
    %v3811 = vsel %vm1982, %v3799, 0.0
    %v3812 = vadd.f32 %v3810, %v3811
    %v3813 = vrot.slane %v3812, 4
    %v3814 = vadd.f32 %v3812, %v3813
    %v3815 = vrot.slane %v3814, 2
    %v3816 = vadd.f32 %v3814, %v3815
    %v3817 = vrot.slane %v3816, 1
    %v3818 = vadd.f32 %v3816, %v3817
    %v3819 = vmul.f32 %v3818, 0.033333335
    %v3820 = vadd.f32 %v3819, 1e-05
    %v3821 = vrsqrt.pop %v3820
    %v3822 = vmul.f32 %v3821, %v3820
    %v3823 = vmul.f32 %v3822, %v3821
    %v3824 = vmul.f32 0.5, %v3823
    %v3825 = vsub.f32 1.5, %v3824
    %v3826 = vmul.f32 %v3821, %v3825
    %vm3827 = vweird.f32 %v3820
    %vm3828 = vweird.f32 %v3821
    %vm3829 = vmor %vm3827, %vm3828
    %v3830 = vsel %vm3829, %v3821, %v3826
    %v3831 = vmul.f32 %v3830, %v3750
    %v3832 = vperm.slane %v3831, 0
    %v3833 = vmul.f32 %v3786, %v3832
    %v3834 = vmul.f32 %v3787, %v3832
    %v3835 = vmul.f32 %v3788, %v3832
    %v3836 = vmul.f32 %v3789, %v3832
    %v3837 = vmul.f32 %v3790, %v3832
    %v3838 = vmul.f32 %v3791, %v3832
    %v3839 = vmul.f32 %v3792, %v3832
    %v3840 = vperm.slane %v3751, 0
    %v3841 = vadd.f32 %v3833, %v3840
    %v3842 = vadd.f32 %v3834, %v3840
    %v3843 = vadd.f32 %v3835, %v3840
    %v3844 = vadd.f32 %v3836, %v3840
    %v3845 = vadd.f32 %v3837, %v3840
    %v3846 = vadd.f32 %v3838, %v3840
    %v3847 = vadd.f32 %v3839, %v3840
    %v3848 = vmul.f32 %v3841, %v1882
    %v3849 = vmul.f32 %v3842, %v1883
    %v3850 = vmul.f32 %v3843, %v1884
    %v3851 = vmul.f32 %v3844, %v1885
    %v3852 = vmul.f32 %v3845, %v1886
    %v3853 = vmul.f32 %v3846, %v1887
    %v3854 = vmul.f32 %v3847, %v1888
    %v3855 = vadd.f32 %v3848, %v2072
    %v3856 = vadd.f32 %v3849, %v2073
    %v3857 = vadd.f32 %v3850, %v2074
    %v3858 = vadd.f32 %v3851, %v2075
    %v3859 = vadd.f32 %v3852, %v2076
    %v3860 = vadd.f32 %v3853, %v2077
    %v3861 = vadd.f32 %v3854, %v2078
    %v3862 = vmax.f32 %v3855, 0.0
    %v3863 = vmax.f32 %v3856, 0.0
    %v3864 = vmax.f32 %v3857, 0.0
    %v3865 = vmax.f32 %v3858, 0.0
    %v3866 = vmax.f32 %v3859, 0.0
    %v3867 = vmax.f32 %v3860, 0.0
    %v3868 = vmax.f32 %v3861, 0.0
    %v3869 = vrot.slane %v3862, 1
    %v3870 = vrot.slane %v3863, 1
    %v3871 = vrot.slane %v3864, 1
    %v3872 = vrot.slane %v3865, 1
    %v3873 = vrot.slane %v3866, 1
    %v3874 = vrot.slane %v3867, 1
    %v3875 = vrot.slane %v3868, 1
    %v3876 = vsel %vm455, %v3874, %v3875
    %v3877 = vsel %vm455, %v3873, %v3874
    %v3878 = vsel %vm455, %v3872, %v3873
    %v3879 = vsel %vm455, %v3871, %v3872
    %v3880 = vsel %vm455, %v3870, %v3871
    %v3881 = vsel %vm455, %v3869, %v3870
    %v3882 = vsel %vm455, %v3875, %v3869
    %vm3883 = vcmp.lt.s32.totalorder %v52, 22
    %vm3884 = vcmp.lt.s32.totalorder %v53, 22
    %vm3885 = vcmp.lt.s32.totalorder %v54, 22
    %vm3886 = vcmp.lt.s32.totalorder %v55, 22
    %vm3887 = vcmp.lt.s32.totalorder %v56, 22
    %vm3888 = vcmp.lt.s32.totalorder %v57, 22
    %vm3889 = vcmp.lt.s32.totalorder %v58, 22
    %vm3890 = vmand %vm59, %vm3883
    %vm3891 = vmand %vm60, %vm3884
    %vm3892 = vmand %vm61, %vm3885
    %vm3893 = vmand %vm62, %vm3886
    %vm3894 = vmand %vm63, %vm3887
    %vm3895 = vmand %vm64, %vm3888
    %vm3896 = vmand %vm65, %vm3889
    %vm3897 = vcmp.lt.s32.totalorder %v52, 46
    %vm3898 = vcmp.lt.s32.totalorder %v53, 46
    %vm3899 = vcmp.lt.s32.totalorder %v54, 46
    %vm3900 = vcmp.lt.s32.totalorder %v55, 46
    %vm3901 = vcmp.lt.s32.totalorder %v56, 46
    %vm3902 = vcmp.lt.s32.totalorder %v57, 46
    %vm3903 = vcmp.lt.s32.totalorder %v58, 46
    %vm3904 = vmand %vm80, %vm3897
    %vm3905 = vmand %vm81, %vm3898
    %vm3906 = vmand %vm82, %vm3899
    %vm3907 = vmand %vm83, %vm3900
    %vm3908 = vmand %vm84, %vm3901
    %vm3909 = vmand %vm85, %vm3902
    %vm3910 = vmand %vm86, %vm3903
    %vm3911 = vmor %vm3890, %vm3904
    %vm3912 = vmor %vm3891, %vm3905
    %vm3913 = vmor %vm3892, %vm3906
    %vm3914 = vmor %vm3893, %vm3907
    %vm3915 = vmor %vm3894, %vm3908
    %vm3916 = vmor %vm3895, %vm3909
    %vm3917 = vmor %vm3896, %vm3910
    %v3918 = vsel %vm3911, 1, 0
    %v3919 = vsel %vm3912, 1, 0
    %v3920 = vsel %vm3913, 1, 0
    %v3921 = vsel %vm3914, 1, 0
    %v3922 = vsel %vm3915, 1, 0
    %v3923 = vsel %vm3916, 1, 0
    %v3924 = vsel %vm3917, 1, 0
    %v3925 = vcvt.s32.f32 %v3918
    %v3926 = vcvt.s32.f32 %v3919
    %v3927 = vcvt.s32.f32 %v3920
    %v3928 = vcvt.s32.f32 %v3921
    %v3929 = vcvt.s32.f32 %v3922
    %v3930 = vcvt.s32.f32 %v3923
    %v3931 = vcvt.s32.f32 %v3924
    %v3932 = vadd.f32 %v3862, %v3881
    %v3933 = vadd.f32 %v3863, %v3880
    %v3934 = vadd.f32 %v3864, %v3879
    %v3935 = vadd.f32 %v3865, %v3878
    %v3936 = vadd.f32 %v3866, %v3877
    %v3937 = vadd.f32 %v3867, %v3876
    %v3938 = vadd.f32 %v3868, %v3882
    %v3939 = vmul.f32 %v3932, 0.5
    %v3940 = vmul.f32 %v3933, 0.5
    %v3941 = vmul.f32 %v3934, 0.5
    %v3942 = vmul.f32 %v3935, 0.5
    %v3943 = vmul.f32 %v3936, 0.5
    %v3944 = vmul.f32 %v3937, 0.5
    %v3945 = vmul.f32 %v3938, 0.5
    %v3946 = vmul.f32 %v3939, %v3925
    %v3947 = vmul.f32 %v3940, %v3926
    %v3948 = vmul.f32 %v3941, %v3927
    %v3949 = vmul.f32 %v3942, %v3928
    %v3950 = vmul.f32 %v3943, %v3929
    %v3951 = vmul.f32 %v3944, %v3930
    %v3952 = vmul.f32 %v3945, %v3931
    %v3953 = vld [vmem:[#allocation4 + $0x10] sm:$0x1]
    %v3954 = vld [vmem:[#allocation4 + $0x11] sm:$0x1]
    %v3955 = vmul.f32 %v3946, %v3925
    %v3956 = vmul.f32 %v3947, %v3926
    %v3957 = vmul.f32 %v3948, %v3927
    %v3958 = vmul.f32 %v3949, %v3928
    %v3959 = vmul.f32 %v3950, %v3929
    %v3960 = vmul.f32 %v3951, %v3930
    %v3961 = vmul.f32 %v3952, %v3931
    %v3962 = vsel %vm1982, %v3955, 0.0
    %v3963 = vsel %vm1982, %v3956, 0.0
    %v3964 = vadd.f32 %v3962, %v3963
    %v3965 = vsel %vm1982, %v3957, 0.0
    %v3966 = vadd.f32 %v3964, %v3965
    %v3967 = vsel %vm1982, %v3958, 0.0
    %v3968 = vadd.f32 %v3966, %v3967
    %v3969 = vsel %vm1982, %v3959, 0.0
    %v3970 = vadd.f32 %v3968, %v3969
    %v3971 = vsel %vm1982, %v3960, 0.0
    %v3972 = vadd.f32 %v3970, %v3971
    %v3973 = vsel %vm1982, %v3961, 0.0
    %v3974 = vadd.f32 %v3972, %v3973
    %v3975 = vrot.slane %v3974, 4
    %v3976 = vadd.f32 %v3974, %v3975
    %v3977 = vrot.slane %v3976, 2
    %v3978 = vadd.f32 %v3976, %v3977
    %v3979 = vrot.slane %v3978, 1
    %v3980 = vadd.f32 %v3978, %v3979
    %v3981 = vmul.f32 %v3980, 0.035714287
    %v3982 = vsub.f32 %v3946, %v3981
    %v3983 = vsub.f32 %v3947, %v3981
    %v3984 = vsub.f32 %v3948, %v3981
    %v3985 = vsub.f32 %v3949, %v3981
    %v3986 = vsub.f32 %v3950, %v3981
    %v3987 = vsub.f32 %v3951, %v3981
    %v3988 = vsub.f32 %v3952, %v3981
    %v3989 = vmul.f32 %v3982, %v3925
    %v3990 = vmul.f32 %v3983, %v3926
    %v3991 = vmul.f32 %v3984, %v3927
    %v3992 = vmul.f32 %v3985, %v3928
    %v3993 = vmul.f32 %v3986, %v3929
    %v3994 = vmul.f32 %v3987, %v3930
    %v3995 = vmul.f32 %v3988, %v3931
    %v3996 = vmul.f32 %v3989, %v3989
    %v3997 = vmul.f32 %v3990, %v3990
    %v3998 = vmul.f32 %v3991, %v3991
    %v3999 = vmul.f32 %v3992, %v3992
    %v4000 = vmul.f32 %v3993, %v3993
    %v4001 = vmul.f32 %v3994, %v3994
    %v4002 = vmul.f32 %v3995, %v3995
    %v4003 = vsel %vm1982, %v3996, 0.0
    %v4004 = vsel %vm1982, %v3997, 0.0
    %v4005 = vadd.f32 %v4003, %v4004
    %v4006 = vsel %vm1982, %v3998, 0.0
    %v4007 = vadd.f32 %v4005, %v4006
    %v4008 = vsel %vm1982, %v3999, 0.0
    %v4009 = vadd.f32 %v4007, %v4008
    %v4010 = vsel %vm1982, %v4000, 0.0
    %v4011 = vadd.f32 %v4009, %v4010
    %v4012 = vsel %vm1982, %v4001, 0.0
    %v4013 = vadd.f32 %v4011, %v4012
    %v4014 = vsel %vm1982, %v4002, 0.0
    %v4015 = vadd.f32 %v4013, %v4014
    %v4016 = vrot.slane %v4015, 4
    %v4017 = vadd.f32 %v4015, %v4016
    %v4018 = vrot.slane %v4017, 2
    %v4019 = vadd.f32 %v4017, %v4018
    %v4020 = vrot.slane %v4019, 1
    %v4021 = vadd.f32 %v4019, %v4020
    %v4022 = vmul.f32 %v4021, 0.035714287
    %v4023 = vadd.f32 %v4022, 1e-05
    %v4024 = vrsqrt.pop %v4023
    %v4025 = vmul.f32 %v4024, %v4023
    %v4026 = vmul.f32 %v4025, %v4024
    %v4027 = vmul.f32 0.5, %v4026
    %v4028 = vsub.f32 1.5, %v4027
    %v4029 = vmul.f32 %v4024, %v4028
    %vm4030 = vweird.f32 %v4023
    %vm4031 = vweird.f32 %v4024
    %vm4032 = vmor %vm4030, %vm4031
    %v4033 = vsel %vm4032, %v4024, %v4029
    %v4034 = vmul.f32 %v4033, %v3953
    %v4035 = vperm.slane %v4034, 0
    %v4036 = vmul.f32 %v3989, %v4035
    %v4037 = vmul.f32 %v3990, %v4035
    %v4038 = vmul.f32 %v3991, %v4035
    %v4039 = vmul.f32 %v3992, %v4035
    %v4040 = vmul.f32 %v3993, %v4035
    %v4041 = vmul.f32 %v3994, %v4035
    %v4042 = vmul.f32 %v3995, %v4035
    %v4043 = vperm.slane %v3954, 0
    %v4044 = vadd.f32 %v4036, %v4043
    %v4045 = vadd.f32 %v4037, %v4043
    %v4046 = vadd.f32 %v4038, %v4043
    %v4047 = vadd.f32 %v4039, %v4043
    %v4048 = vadd.f32 %v4040, %v4043
    %v4049 = vadd.f32 %v4041, %v4043
    %v4050 = vadd.f32 %v4042, %v4043
    %v4051 = vmul.f32 %v4044, %v3925
    %v4052 = vmul.f32 %v4045, %v3926
    %v4053 = vmul.f32 %v4046, %v3927
    %v4054 = vmul.f32 %v4047, %v3928
    %v4055 = vmul.f32 %v4048, %v3929
    %v4056 = vmul.f32 %v4049, %v3930
    %v4057 = vmul.f32 %v4050, %v3931
    %v4058 = vrot.slane %v3946, 5
    %v4059 = vrot.slane %v3947, 5
    %v4060 = vrot.slane %v3948, 5
    %v4061 = vrot.slane %v3949, 5
    %v4062 = vrot.slane %v3950, 5
    %v4063 = vrot.slane %v3951, 5
    %v4064 = vrot.slane %v3952, 5
    %v4065 = vsel %vm262, %v4063, %v4064
    %v4066 = vsel %vm262, %v4062, %v4063
    %v4067 = vsel %vm262, %v4061, %v4062
    %v4068 = vsel %vm262, %v4060, %v4061
    %v4069 = vsel %vm262, %v4059, %v4060
    %v4070 = vsel %vm262, %v4058, %v4059
    %v4071 = vsel %vm262, %v4064, %v4058
    %v4072 = vld [vmem:[#allocation2 + $0x4f0] sm:$0xff]
    %v4073 = vld [vmem:[#allocation2 + $0x4f8] sm:$0xff]
    %v4074 = vld [vmem:[#allocation2 + $0x500] sm:$0xff]
    %v4075 = vld [vmem:[#allocation2 + $0x508] sm:$0xff]
    %v4076 = vld [vmem:[#allocation2 + $0x510] sm:$0xff]
    %v4077 = vld [vmem:[#allocation2 + $0x518] sm:$0xff]
    %v4078 = vld [vmem:[#allocation2 + $0x520] sm:$0xff]
    %v4079 = vld [vmem:[#allocation2 + $0x528] sm:$0xff]
    %v4080 = vrot.slane %v3946, 6
    %v4081 = vrot.slane %v3947, 6
    %v4082 = vrot.slane %v3948, 6
    %v4083 = vrot.slane %v3949, 6
    %v4084 = vrot.slane %v3950, 6
    %v4085 = vrot.slane %v3951, 6
    %v4086 = vrot.slane %v3952, 6
    %v4087 = vsel %vm317, %v4085, %v4086
    %v4088 = vsel %vm317, %v4084, %v4085
    %v4089 = vsel %vm317, %v4083, %v4084
    %v4090 = vsel %vm317, %v4082, %v4083
    %v4091 = vsel %vm317, %v4081, %v4082
    %v4092 = vsel %vm317, %v4080, %v4081
    %v4093 = vsel %vm317, %v4086, %v4080
    %v4094 = vld [vmem:[#allocation2 + $0x530] sm:$0xff]
    %v4095 = vld [vmem:[#allocation2 + $0x538] sm:$0xff]
    %v4096 = vld [vmem:[#allocation2 + $0x540] sm:$0xff]
    %v4097 = vld [vmem:[#allocation2 + $0x548] sm:$0xff]
    %v4098 = vld [vmem:[#allocation2 + $0x550] sm:$0xff]
    %v4099 = vld [vmem:[#allocation2 + $0x558] sm:$0xff]
    %v4100 = vld [vmem:[#allocation2 + $0x560] sm:$0xff]
    %v4101 = vld [vmem:[#allocation2 + $0x568] sm:$0xff]
    %v4103 = vsel %vm1982, %v4093, 0
    %v4106 = vsel %vm1982, %v4092, 0
    %v4109 = vsel %vm1982, %v4091, 0
    %v4112 = vsel %vm1982, %v4090, 0
    %v4115 = vsel %vm1982, %v4089, 0
    %v4118 = vsel %vm1982, %v4088, 0
    %v4121 = vsel %vm1982, %v4087, 0
    %4123 = vmatpush.msra.mxu0 0.0
    %4124 = vmatpush.msra.mxu0 0.0
    %4125 = vmatpush.msra.mxu0 0.0
    %4126 = vmatpush.msra.mxu0 0.0
    %4127 = vmatpush.msra.mxu0 0.0
    %4128 = vmatpush.msra.mxu0 0.0
    %4129 = vmatpush.msra.mxu0 0.0
    %4130 = vmatpush.msra.mxu0 0.0
    %4131 = vmatpush.msra.mxu0 %v4101
    %4132 = vmatpush.msra.mxu0 %v4100
    %4133 = vmatpush.msra.mxu0 %v4099
    %4134 = vmatpush.msra.mxu0 %v4098
    %4135 = vmatpush.msra.mxu0 %v4097
    %4136 = vmatpush.msra.mxu0 %v4096
    %4137 = vmatpush.msra.mxu0 %v4095
    %4138 = vmatpush.msra.mxu0 %v4094
    %4139 = vmatmul.f32.gmra.mxu0 %v4103
    %v4140 = vpop.f32.mrf.mxu0
    %v4141 = vadd.f32 0.0, %v4140
    %4142 = vmatmul.f32.gmra.mxu0 %v4106
    %v4143 = vpop.f32.mrf.mxu0
    %v4144 = vadd.f32 0.0, %v4143
    %4145 = vmatmul.f32.gmra.mxu0 %v4109
    %v4146 = vpop.f32.mrf.mxu0
    %v4147 = vadd.f32 0.0, %v4146
    %4148 = vmatmul.f32.gmra.mxu0 %v4112
    %v4149 = vpop.f32.mrf.mxu0
    %v4150 = vadd.f32 0.0, %v4149
    %4151 = vmatmul.f32.gmra.mxu0 %v4115
    %v4152 = vpop.f32.mrf.mxu0
    %v4153 = vadd.f32 0.0, %v4152
    %4154 = vmatmul.f32.gmra.mxu0 %v4118
    %v4155 = vpop.f32.mrf.mxu0
    %v4156 = vadd.f32 0.0, %v4155
    %4157 = vmatmul.f32.gmra.mxu0 %v4121
    %v4158 = vpop.f32.mrf.mxu0
    %v4159 = vadd.f32 0.0, %v4158
    %4160 = vdwg.mxu0
    %v4162 = vsel %vm1982, %v4071, 0
    %v4165 = vsel %vm1982, %v4070, 0
    %v4168 = vsel %vm1982, %v4069, 0
    %v4171 = vsel %vm1982, %v4068, 0
    %v4174 = vsel %vm1982, %v4067, 0
    %v4177 = vsel %vm1982, %v4066, 0
    %v4180 = vsel %vm1982, %v4065, 0
    %4182 = vmatpush.msra.mxu0 0.0
    %4183 = vmatpush.msra.mxu0 0.0
    %4184 = vmatpush.msra.mxu0 0.0
    %4185 = vmatpush.msra.mxu0 0.0
    %4186 = vmatpush.msra.mxu0 0.0
    %4187 = vmatpush.msra.mxu0 0.0
    %4188 = vmatpush.msra.mxu0 0.0
    %4189 = vmatpush.msra.mxu0 0.0
    %4190 = vmatpush.msra.mxu0 %v4079
    %4191 = vmatpush.msra.mxu0 %v4078
    %4192 = vmatpush.msra.mxu0 %v4077
    %4193 = vmatpush.msra.mxu0 %v4076
    %4194 = vmatpush.msra.mxu0 %v4075
    %4195 = vmatpush.msra.mxu0 %v4074
    %4196 = vmatpush.msra.mxu0 %v4073
    %4197 = vmatpush.msra.mxu0 %v4072
    %4198 = vmatmul.f32.gmra.mxu0 %v4162
    %v4199 = vpop.f32.mrf.mxu0
    %v4200 = vadd.f32 %v4141, %v4199
    %4201 = vmatmul.f32.gmra.mxu0 %v4165
    %v4202 = vpop.f32.mrf.mxu0
    %v4203 = vadd.f32 %v4144, %v4202
    %4204 = vmatmul.f32.gmra.mxu0 %v4168
    %v4205 = vpop.f32.mrf.mxu0
    %v4206 = vadd.f32 %v4147, %v4205
    %4207 = vmatmul.f32.gmra.mxu0 %v4171
    %v4208 = vpop.f32.mrf.mxu0
    %v4209 = vadd.f32 %v4150, %v4208
    %4210 = vmatmul.f32.gmra.mxu0 %v4174
    %v4211 = vpop.f32.mrf.mxu0
    %v4212 = vadd.f32 %v4153, %v4211
    %4213 = vmatmul.f32.gmra.mxu0 %v4177
    %v4214 = vpop.f32.mrf.mxu0
    %v4215 = vadd.f32 %v4156, %v4214
    %4216 = vmatmul.f32.gmra.mxu0 %v4180
    %v4217 = vpop.f32.mrf.mxu0
    %v4218 = vadd.f32 %v4159, %v4217
    %4219 = vdwg.mxu0
    %v4220 = vrot.slane %v3946, 7
    %v4221 = vrot.slane %v3947, 7
    %v4222 = vrot.slane %v3948, 7
    %v4223 = vrot.slane %v3949, 7
    %v4224 = vrot.slane %v3950, 7
    %v4225 = vrot.slane %v3951, 7
    %v4226 = vrot.slane %v3952, 7
    %v4227 = vsel %vm379, %v4225, %v4226
    %v4228 = vsel %vm379, %v4224, %v4225
    %v4229 = vsel %vm379, %v4223, %v4224
    %v4230 = vsel %vm379, %v4222, %v4223
    %v4231 = vsel %vm379, %v4221, %v4222
    %v4232 = vsel %vm379, %v4220, %v4221
    %v4233 = vsel %vm379, %v4226, %v4220
    %v4234 = vld [vmem:[#allocation2 + $0x570] sm:$0xff]
    %v4235 = vld [vmem:[#allocation2 + $0x578] sm:$0xff]
    %v4236 = vld [vmem:[#allocation2 + $0x580] sm:$0xff]
    %v4237 = vld [vmem:[#allocation2 + $0x588] sm:$0xff]
    %v4238 = vld [vmem:[#allocation2 + $0x590] sm:$0xff]
    %v4239 = vld [vmem:[#allocation2 + $0x598] sm:$0xff]
    %v4240 = vld [vmem:[#allocation2 + $0x5a0] sm:$0xff]
    %v4241 = vld [vmem:[#allocation2 + $0x5a8] sm:$0xff]
    %v4243 = vsel %vm1982, %v4233, 0
    %v4246 = vsel %vm1982, %v4232, 0
    %v4249 = vsel %vm1982, %v4231, 0
    %v4252 = vsel %vm1982, %v4230, 0
    %v4255 = vsel %vm1982, %v4229, 0
    %v4258 = vsel %vm1982, %v4228, 0
    %v4261 = vsel %vm1982, %v4227, 0
    %4263 = vmatpush.msra.mxu0 0.0
    %4264 = vmatpush.msra.mxu0 0.0
    %4265 = vmatpush.msra.mxu0 0.0
    %4266 = vmatpush.msra.mxu0 0.0
    %4267 = vmatpush.msra.mxu0 0.0
    %4268 = vmatpush.msra.mxu0 0.0
    %4269 = vmatpush.msra.mxu0 0.0
    %4270 = vmatpush.msra.mxu0 0.0
    %4271 = vmatpush.msra.mxu0 %v4241
    %4272 = vmatpush.msra.mxu0 %v4240
    %4273 = vmatpush.msra.mxu0 %v4239
    %4274 = vmatpush.msra.mxu0 %v4238
    %4275 = vmatpush.msra.mxu0 %v4237
    %4276 = vmatpush.msra.mxu0 %v4236
    %4277 = vmatpush.msra.mxu0 %v4235
    %4278 = vmatpush.msra.mxu0 %v4234
    %4279 = vmatmul.f32.gmra.mxu0 %v4243
    %v4280 = vpop.f32.mrf.mxu0
    %v4281 = vadd.f32 0.0, %v4280
    %4282 = vmatmul.f32.gmra.mxu0 %v4246
    %v4283 = vpop.f32.mrf.mxu0
    %v4284 = vadd.f32 0.0, %v4283
    %4285 = vmatmul.f32.gmra.mxu0 %v4249
    %v4286 = vpop.f32.mrf.mxu0
    %v4287 = vadd.f32 0.0, %v4286
    %4288 = vmatmul.f32.gmra.mxu0 %v4252
    %v4289 = vpop.f32.mrf.mxu0
    %v4290 = vadd.f32 0.0, %v4289
    %4291 = vmatmul.f32.gmra.mxu0 %v4255
    %v4292 = vpop.f32.mrf.mxu0
    %v4293 = vadd.f32 0.0, %v4292
    %4294 = vmatmul.f32.gmra.mxu0 %v4258
    %v4295 = vpop.f32.mrf.mxu0
    %v4296 = vadd.f32 0.0, %v4295
    %4297 = vmatmul.f32.gmra.mxu0 %v4261
    %v4298 = vpop.f32.mrf.mxu0
    %v4299 = vadd.f32 0.0, %v4298
    %4300 = vdwg.mxu0
    %v4301 = vadd.f32 %v4200, %v4281
    %v4302 = vadd.f32 %v4203, %v4284
    %v4303 = vadd.f32 %v4206, %v4287
    %v4304 = vadd.f32 %v4209, %v4290
    %v4305 = vadd.f32 %v4212, %v4293
    %v4306 = vadd.f32 %v4215, %v4296
    %v4307 = vadd.f32 %v4218, %v4299
    %v4308 = vld [vmem:[#allocation2 + $0x5b0] sm:$0xff]
    %v4309 = vld [vmem:[#allocation2 + $0x5b8] sm:$0xff]
    %v4310 = vld [vmem:[#allocation2 + $0x5c0] sm:$0xff]
    %v4311 = vld [vmem:[#allocation2 + $0x5c8] sm:$0xff]
    %v4312 = vld [vmem:[#allocation2 + $0x5d0] sm:$0xff]
    %v4313 = vld [vmem:[#allocation2 + $0x5d8] sm:$0xff]
    %v4314 = vld [vmem:[#allocation2 + $0x5e0] sm:$0xff]
    %v4315 = vld [vmem:[#allocation2 + $0x5e8] sm:$0xff]
    %v4317 = vsel %vm1982, %v3946, 0
    %v4320 = vsel %vm1982, %v3947, 0
    %v4323 = vsel %vm1982, %v3948, 0
    %v4326 = vsel %vm1982, %v3949, 0
    %v4329 = vsel %vm1982, %v3950, 0
    %v4332 = vsel %vm1982, %v3951, 0
    %v4335 = vsel %vm1982, %v3952, 0
    %4337 = vmatpush.msra.mxu0 0.0
    %4338 = vmatpush.msra.mxu0 0.0
    %4339 = vmatpush.msra.mxu0 0.0
    %4340 = vmatpush.msra.mxu0 0.0
    %4341 = vmatpush.msra.mxu0 0.0
    %4342 = vmatpush.msra.mxu0 0.0
    %4343 = vmatpush.msra.mxu0 0.0
    %4344 = vmatpush.msra.mxu0 0.0
    %4345 = vmatpush.msra.mxu0 %v4315
    %4346 = vmatpush.msra.mxu0 %v4314
    %4347 = vmatpush.msra.mxu0 %v4313
    %4348 = vmatpush.msra.mxu0 %v4312
    %4349 = vmatpush.msra.mxu0 %v4311
    %4350 = vmatpush.msra.mxu0 %v4310
    %4351 = vmatpush.msra.mxu0 %v4309
    %4352 = vmatpush.msra.mxu0 %v4308
    %4353 = vmatmul.f32.gmra.mxu0 %v4317
    %v4354 = vpop.f32.mrf.mxu0
    %v4355 = vadd.f32 0.0, %v4354
    %4356 = vmatmul.f32.gmra.mxu0 %v4320
    %v4357 = vpop.f32.mrf.mxu0
    %v4358 = vadd.f32 0.0, %v4357
    %4359 = vmatmul.f32.gmra.mxu0 %v4323
    %v4360 = vpop.f32.mrf.mxu0
    %v4361 = vadd.f32 0.0, %v4360
    %4362 = vmatmul.f32.gmra.mxu0 %v4326
    %v4363 = vpop.f32.mrf.mxu0
    %v4364 = vadd.f32 0.0, %v4363
    %4365 = vmatmul.f32.gmra.mxu0 %v4329
    %v4366 = vpop.f32.mrf.mxu0
    %v4367 = vadd.f32 0.0, %v4366
    %4368 = vmatmul.f32.gmra.mxu0 %v4332
    %v4369 = vpop.f32.mrf.mxu0
    %v4370 = vadd.f32 0.0, %v4369
    %4371 = vmatmul.f32.gmra.mxu0 %v4335
    %v4372 = vpop.f32.mrf.mxu0
    %v4373 = vadd.f32 0.0, %v4372
    %4374 = vdwg.mxu0
    %v4375 = vadd.f32 %v4301, %v4355
    %v4376 = vadd.f32 %v4302, %v4358
    %v4377 = vadd.f32 %v4303, %v4361
    %v4378 = vadd.f32 %v4304, %v4364
    %v4379 = vadd.f32 %v4305, %v4367
    %v4380 = vadd.f32 %v4306, %v4370
    %v4381 = vadd.f32 %v4307, %v4373
    %v4382 = vrot.slane %v3946, 1
    %v4383 = vrot.slane %v3947, 1
    %v4384 = vrot.slane %v3948, 1
    %v4385 = vrot.slane %v3949, 1
    %v4386 = vrot.slane %v3950, 1
    %v4387 = vrot.slane %v3951, 1
    %v4388 = vrot.slane %v3952, 1
    %v4389 = vsel %vm455, %v4387, %v4388
    %v4390 = vsel %vm455, %v4386, %v4387
    %v4391 = vsel %vm455, %v4385, %v4386
    %v4392 = vsel %vm455, %v4384, %v4385
    %v4393 = vsel %vm455, %v4383, %v4384
    %v4394 = vsel %vm455, %v4382, %v4383
    %v4395 = vsel %vm455, %v4388, %v4382
    %v4396 = vld [vmem:[#allocation2 + $0x5f0] sm:$0xff]
    %v4397 = vld [vmem:[#allocation2 + $0x5f8] sm:$0xff]
    %v4398 = vld [vmem:[#allocation2 + $0x600] sm:$0xff]
    %v4399 = vld [vmem:[#allocation2 + $0x608] sm:$0xff]
    %v4400 = vld [vmem:[#allocation2 + $0x610] sm:$0xff]
    %v4401 = vld [vmem:[#allocation2 + $0x618] sm:$0xff]
    %v4402 = vld [vmem:[#allocation2 + $0x620] sm:$0xff]
    %v4403 = vld [vmem:[#allocation2 + $0x628] sm:$0xff]
    %v4405 = vsel %vm1982, %v4394, 0
    %v4408 = vsel %vm1982, %v4393, 0
    %v4411 = vsel %vm1982, %v4392, 0
    %v4414 = vsel %vm1982, %v4391, 0
    %v4417 = vsel %vm1982, %v4390, 0
    %v4420 = vsel %vm1982, %v4389, 0
    %v4423 = vsel %vm1982, %v4395, 0
    %4425 = vmatpush.msra.mxu0 0.0
    %4426 = vmatpush.msra.mxu0 0.0
    %4427 = vmatpush.msra.mxu0 0.0
    %4428 = vmatpush.msra.mxu0 0.0
    %4429 = vmatpush.msra.mxu0 0.0
    %4430 = vmatpush.msra.mxu0 0.0
    %4431 = vmatpush.msra.mxu0 0.0
    %4432 = vmatpush.msra.mxu0 0.0
    %4433 = vmatpush.msra.mxu0 %v4403
    %4434 = vmatpush.msra.mxu0 %v4402
    %4435 = vmatpush.msra.mxu0 %v4401
    %4436 = vmatpush.msra.mxu0 %v4400
    %4437 = vmatpush.msra.mxu0 %v4399
    %4438 = vmatpush.msra.mxu0 %v4398
    %4439 = vmatpush.msra.mxu0 %v4397
    %4440 = vmatpush.msra.mxu0 %v4396
    %4441 = vmatmul.f32.gmra.mxu0 %v4405
    %v4442 = vpop.f32.mrf.mxu0
    %v4443 = vadd.f32 0.0, %v4442
    %4444 = vmatmul.f32.gmra.mxu0 %v4408
    %v4445 = vpop.f32.mrf.mxu0
    %v4446 = vadd.f32 0.0, %v4445
    %4447 = vmatmul.f32.gmra.mxu0 %v4411
    %v4448 = vpop.f32.mrf.mxu0
    %v4449 = vadd.f32 0.0, %v4448
    %4450 = vmatmul.f32.gmra.mxu0 %v4414
    %v4451 = vpop.f32.mrf.mxu0
    %v4452 = vadd.f32 0.0, %v4451
    %4453 = vmatmul.f32.gmra.mxu0 %v4417
    %v4454 = vpop.f32.mrf.mxu0
    %v4455 = vadd.f32 0.0, %v4454
    %4456 = vmatmul.f32.gmra.mxu0 %v4420
    %v4457 = vpop.f32.mrf.mxu0
    %v4458 = vadd.f32 0.0, %v4457
    %4459 = vmatmul.f32.gmra.mxu0 %v4423
    %v4460 = vpop.f32.mrf.mxu0
    %v4461 = vadd.f32 0.0, %v4460
    %4462 = vdwg.mxu0
    %v4463 = vadd.f32 %v4375, %v4443
    %v4464 = vadd.f32 %v4376, %v4446
    %v4465 = vadd.f32 %v4377, %v4449
    %v4466 = vadd.f32 %v4378, %v4452
    %v4467 = vadd.f32 %v4379, %v4455
    %v4468 = vadd.f32 %v4380, %v4458
    %v4469 = vadd.f32 %v4381, %v4461
    %v4470 = vrot.slane %v3946, 2
    %v4471 = vrot.slane %v3947, 2
    %v4472 = vrot.slane %v3948, 2
    %v4473 = vrot.slane %v3949, 2
    %v4474 = vrot.slane %v3950, 2
    %v4475 = vrot.slane %v3951, 2
    %v4476 = vrot.slane %v3952, 2
    %v4477 = vsel %vm517, %v4475, %v4476
    %v4478 = vsel %vm517, %v4474, %v4475
    %v4479 = vsel %vm517, %v4473, %v4474
    %v4480 = vsel %vm517, %v4472, %v4473
    %v4481 = vsel %vm517, %v4471, %v4472
    %v4482 = vsel %vm517, %v4470, %v4471
    %v4483 = vsel %vm517, %v4476, %v4470
    %v4484 = vld [vmem:[#allocation2 + $0x630] sm:$0xff]
    %v4485 = vld [vmem:[#allocation2 + $0x638] sm:$0xff]
    %v4486 = vld [vmem:[#allocation2 + $0x640] sm:$0xff]
    %v4487 = vld [vmem:[#allocation2 + $0x648] sm:$0xff]
    %v4488 = vld [vmem:[#allocation2 + $0x650] sm:$0xff]
    %v4489 = vld [vmem:[#allocation2 + $0x658] sm:$0xff]
    %v4490 = vld [vmem:[#allocation2 + $0x660] sm:$0xff]
    %v4491 = vld [vmem:[#allocation2 + $0x668] sm:$0xff]
    %v4493 = vsel %vm1982, %v4482, 0
    %v4496 = vsel %vm1982, %v4481, 0
    %v4499 = vsel %vm1982, %v4480, 0
    %v4502 = vsel %vm1982, %v4479, 0
    %v4505 = vsel %vm1982, %v4478, 0
    %v4508 = vsel %vm1982, %v4477, 0
    %v4511 = vsel %vm1982, %v4483, 0
    %4513 = vmatpush.msra.mxu0 0.0
    %4514 = vmatpush.msra.mxu0 0.0
    %4515 = vmatpush.msra.mxu0 0.0
    %4516 = vmatpush.msra.mxu0 0.0
    %4517 = vmatpush.msra.mxu0 0.0
    %4518 = vmatpush.msra.mxu0 0.0
    %4519 = vmatpush.msra.mxu0 0.0
    %4520 = vmatpush.msra.mxu0 0.0
    %4521 = vmatpush.msra.mxu0 %v4491
    %4522 = vmatpush.msra.mxu0 %v4490
    %4523 = vmatpush.msra.mxu0 %v4489
    %4524 = vmatpush.msra.mxu0 %v4488
    %4525 = vmatpush.msra.mxu0 %v4487
    %4526 = vmatpush.msra.mxu0 %v4486
    %4527 = vmatpush.msra.mxu0 %v4485
    %4528 = vmatpush.msra.mxu0 %v4484
    %4529 = vmatmul.f32.gmra.mxu0 %v4493
    %v4530 = vpop.f32.mrf.mxu0
    %v4531 = vadd.f32 0.0, %v4530
    %4532 = vmatmul.f32.gmra.mxu0 %v4496
    %v4533 = vpop.f32.mrf.mxu0
    %v4534 = vadd.f32 0.0, %v4533
    %4535 = vmatmul.f32.gmra.mxu0 %v4499
    %v4536 = vpop.f32.mrf.mxu0
    %v4537 = vadd.f32 0.0, %v4536
    %4538 = vmatmul.f32.gmra.mxu0 %v4502
    %v4539 = vpop.f32.mrf.mxu0
    %v4540 = vadd.f32 0.0, %v4539
    %4541 = vmatmul.f32.gmra.mxu0 %v4505
    %v4542 = vpop.f32.mrf.mxu0
    %v4543 = vadd.f32 0.0, %v4542
    %4544 = vmatmul.f32.gmra.mxu0 %v4508
    %v4545 = vpop.f32.mrf.mxu0
    %v4546 = vadd.f32 0.0, %v4545
    %4547 = vmatmul.f32.gmra.mxu0 %v4511
    %v4548 = vpop.f32.mrf.mxu0
    %v4549 = vadd.f32 0.0, %v4548
    %4550 = vdwg.mxu0
    %v4551 = vadd.f32 %v4463, %v4531
    %v4552 = vadd.f32 %v4464, %v4534
    %v4553 = vadd.f32 %v4465, %v4537
    %v4554 = vadd.f32 %v4466, %v4540
    %v4555 = vadd.f32 %v4467, %v4543
    %v4556 = vadd.f32 %v4468, %v4546
    %v4557 = vadd.f32 %v4469, %v4549
    %v4558 = vrot.slane %v3946, 3
    %v4559 = vrot.slane %v3947, 3
    %v4560 = vrot.slane %v3948, 3
    %v4561 = vrot.slane %v3949, 3
    %v4562 = vrot.slane %v3950, 3
    %v4563 = vrot.slane %v3951, 3
    %v4564 = vrot.slane %v3952, 3
    %v4565 = vsel %vm579, %v4563, %v4564
    %v4566 = vsel %vm579, %v4562, %v4563
    %v4567 = vsel %vm579, %v4561, %v4562
    %v4568 = vsel %vm579, %v4560, %v4561
    %v4569 = vsel %vm579, %v4559, %v4560
    %v4570 = vsel %vm579, %v4558, %v4559
    %v4571 = vsel %vm579, %v4564, %v4558
    %v4572 = vld [vmem:[#allocation2 + $0x670] sm:$0xff]
    %v4573 = vld [vmem:[#allocation2 + $0x678] sm:$0xff]
    %v4574 = vld [vmem:[#allocation2 + $0x680] sm:$0xff]
    %v4575 = vld [vmem:[#allocation2 + $0x688] sm:$0xff]
    %v4576 = vld [vmem:[#allocation2 + $0x690] sm:$0xff]
    %v4577 = vld [vmem:[#allocation2 + $0x698] sm:$0xff]
    %v4578 = vld [vmem:[#allocation2 + $0x6a0] sm:$0xff]
    %v4579 = vld [vmem:[#allocation2 + $0x6a8] sm:$0xff]
    %v4581 = vsel %vm1982, %v4570, 0
    %v4584 = vsel %vm1982, %v4569, 0
    %v4587 = vsel %vm1982, %v4568, 0
    %v4590 = vsel %vm1982, %v4567, 0
    %v4593 = vsel %vm1982, %v4566, 0
    %v4596 = vsel %vm1982, %v4565, 0
    %v4599 = vsel %vm1982, %v4571, 0
    %4601 = vmatpush.msra.mxu0 0.0
    %4602 = vmatpush.msra.mxu0 0.0
    %4603 = vmatpush.msra.mxu0 0.0
    %4604 = vmatpush.msra.mxu0 0.0
    %4605 = vmatpush.msra.mxu0 0.0
    %4606 = vmatpush.msra.mxu0 0.0
    %4607 = vmatpush.msra.mxu0 0.0
    %4608 = vmatpush.msra.mxu0 0.0
    %4609 = vmatpush.msra.mxu0 %v4579
    %4610 = vmatpush.msra.mxu0 %v4578
    %4611 = vmatpush.msra.mxu0 %v4577
    %4612 = vmatpush.msra.mxu0 %v4576
    %4613 = vmatpush.msra.mxu0 %v4575
    %4614 = vmatpush.msra.mxu0 %v4574
    %4615 = vmatpush.msra.mxu0 %v4573
    %4616 = vmatpush.msra.mxu0 %v4572
    %4617 = vmatmul.f32.gmra.mxu0 %v4581
    %v4618 = vpop.f32.mrf.mxu0
    %v4619 = vadd.f32 0.0, %v4618
    %4620 = vmatmul.f32.gmra.mxu0 %v4584
    %v4621 = vpop.f32.mrf.mxu0
    %v4622 = vadd.f32 0.0, %v4621
    %4623 = vmatmul.f32.gmra.mxu0 %v4587
    %v4624 = vpop.f32.mrf.mxu0
    %v4625 = vadd.f32 0.0, %v4624
    %4626 = vmatmul.f32.gmra.mxu0 %v4590
    %v4627 = vpop.f32.mrf.mxu0
    %v4628 = vadd.f32 0.0, %v4627
    %4629 = vmatmul.f32.gmra.mxu0 %v4593
    %v4630 = vpop.f32.mrf.mxu0
    %v4631 = vadd.f32 0.0, %v4630
    %4632 = vmatmul.f32.gmra.mxu0 %v4596
    %v4633 = vpop.f32.mrf.mxu0
    %v4634 = vadd.f32 0.0, %v4633
    %4635 = vmatmul.f32.gmra.mxu0 %v4599
    %v4636 = vpop.f32.mrf.mxu0
    %v4637 = vadd.f32 0.0, %v4636
    %4638 = vdwg.mxu0
    %v4639 = vadd.f32 %v4551, %v4619
    %v4640 = vadd.f32 %v4552, %v4622
    %v4641 = vadd.f32 %v4553, %v4625
    %v4642 = vadd.f32 %v4554, %v4628
    %v4643 = vadd.f32 %v4555, %v4631
    %v4644 = vadd.f32 %v4556, %v4634
    %v4645 = vadd.f32 %v4557, %v4637
    %v4646 = vrot.slane %v3946, 4
    %v4647 = vrot.slane %v3947, 4
    %v4648 = vrot.slane %v3948, 4
    %v4649 = vrot.slane %v3949, 4
    %v4650 = vrot.slane %v3950, 4
    %v4651 = vrot.slane %v3951, 4
    %v4652 = vrot.slane %v3952, 4
    %v4653 = vsel %vm641, %v4651, %v4652
    %v4654 = vsel %vm641, %v4650, %v4651
    %v4655 = vsel %vm641, %v4649, %v4650
    %v4656 = vsel %vm641, %v4648, %v4649
    %v4657 = vsel %vm641, %v4647, %v4648
    %v4658 = vsel %vm641, %v4646, %v4647
    %v4659 = vsel %vm641, %v4652, %v4646
    %v4660 = vld [vmem:[#allocation2 + $0x6b0] sm:$0xff]
    %v4661 = vld [vmem:[#allocation2 + $0x6b8] sm:$0xff]
    %v4662 = vld [vmem:[#allocation2 + $0x6c0] sm:$0xff]
    %v4663 = vld [vmem:[#allocation2 + $0x6c8] sm:$0xff]
    %v4664 = vld [vmem:[#allocation2 + $0x6d0] sm:$0xff]
    %v4665 = vld [vmem:[#allocation2 + $0x6d8] sm:$0xff]
    %v4666 = vld [vmem:[#allocation2 + $0x6e0] sm:$0xff]
    %v4667 = vld [vmem:[#allocation2 + $0x6e8] sm:$0xff]
    %v4669 = vsel %vm1982, %v4658, 0
    %v4672 = vsel %vm1982, %v4657, 0
    %v4675 = vsel %vm1982, %v4656, 0
    %v4678 = vsel %vm1982, %v4655, 0
    %v4681 = vsel %vm1982, %v4654, 0
    %v4684 = vsel %vm1982, %v4653, 0
    %v4687 = vsel %vm1982, %v4659, 0
    %4689 = vmatpush.msra.mxu0 0.0
    %4690 = vmatpush.msra.mxu0 0.0
    %4691 = vmatpush.msra.mxu0 0.0
    %4692 = vmatpush.msra.mxu0 0.0
    %4693 = vmatpush.msra.mxu0 0.0
    %4694 = vmatpush.msra.mxu0 0.0
    %4695 = vmatpush.msra.mxu0 0.0
    %4696 = vmatpush.msra.mxu0 0.0
    %4697 = vmatpush.msra.mxu0 %v4667
    %4698 = vmatpush.msra.mxu0 %v4666
    %4699 = vmatpush.msra.mxu0 %v4665
    %4700 = vmatpush.msra.mxu0 %v4664
    %4701 = vmatpush.msra.mxu0 %v4663
    %4702 = vmatpush.msra.mxu0 %v4662
    %4703 = vmatpush.msra.mxu0 %v4661
    %4704 = vmatpush.msra.mxu0 %v4660
    %4705 = vmatmul.f32.gmra.mxu0 %v4669
    %v4706 = vpop.f32.mrf.mxu0
    %v4707 = vadd.f32 0.0, %v4706
    %4708 = vmatmul.f32.gmra.mxu0 %v4672
    %v4709 = vpop.f32.mrf.mxu0
    %v4710 = vadd.f32 0.0, %v4709
    %4711 = vmatmul.f32.gmra.mxu0 %v4675
    %v4712 = vpop.f32.mrf.mxu0
    %v4713 = vadd.f32 0.0, %v4712
    %4714 = vmatmul.f32.gmra.mxu0 %v4678
    %v4715 = vpop.f32.mrf.mxu0
    %v4716 = vadd.f32 0.0, %v4715
    %4717 = vmatmul.f32.gmra.mxu0 %v4681
    %v4718 = vpop.f32.mrf.mxu0
    %v4719 = vadd.f32 0.0, %v4718
    %4720 = vmatmul.f32.gmra.mxu0 %v4684
    %v4721 = vpop.f32.mrf.mxu0
    %v4722 = vadd.f32 0.0, %v4721
    %4723 = vmatmul.f32.gmra.mxu0 %v4687
    %v4724 = vpop.f32.mrf.mxu0
    %v4725 = vadd.f32 0.0, %v4724
    %4726 = vdwg.mxu0
    %v4727 = vadd.f32 %v4639, %v4707
    %v4728 = vadd.f32 %v4640, %v4710
    %v4729 = vadd.f32 %v4641, %v4713
    %v4730 = vadd.f32 %v4642, %v4716
    %v4731 = vadd.f32 %v4643, %v4719
    %v4732 = vadd.f32 %v4644, %v4722
    %v4733 = vadd.f32 %v4645, %v4725
    %v4734 = vld [vmem:[#allocation4 + $0x12] sm:$0x1]
    %v4735 = vld [vmem:[#allocation4 + $0x13] sm:$0x1]
    %v4736 = vmul.f32 %v4727, %v3925
    %v4737 = vmul.f32 %v4728, %v3926
    %v4738 = vmul.f32 %v4729, %v3927
    %v4739 = vmul.f32 %v4730, %v3928
    %v4740 = vmul.f32 %v4731, %v3929
    %v4741 = vmul.f32 %v4732, %v3930
    %v4742 = vmul.f32 %v4733, %v3931
    %v4743 = vsel %vm1982, %v4736, 0.0
    %v4744 = vsel %vm1982, %v4737, 0.0
    %v4745 = vadd.f32 %v4743, %v4744
    %v4746 = vsel %vm1982, %v4738, 0.0
    %v4747 = vadd.f32 %v4745, %v4746
    %v4748 = vsel %vm1982, %v4739, 0.0
    %v4749 = vadd.f32 %v4747, %v4748
    %v4750 = vsel %vm1982, %v4740, 0.0
    %v4751 = vadd.f32 %v4749, %v4750
    %v4752 = vsel %vm1982, %v4741, 0.0
    %v4753 = vadd.f32 %v4751, %v4752
    %v4754 = vsel %vm1982, %v4742, 0.0
    %v4755 = vadd.f32 %v4753, %v4754
    %v4756 = vrot.slane %v4755, 4
    %v4757 = vadd.f32 %v4755, %v4756
    %v4758 = vrot.slane %v4757, 2
    %v4759 = vadd.f32 %v4757, %v4758
    %v4760 = vrot.slane %v4759, 1
    %v4761 = vadd.f32 %v4759, %v4760
    %v4762 = vmul.f32 %v4761, 0.035714287
    %v4763 = vsub.f32 %v4727, %v4762
    %v4764 = vsub.f32 %v4728, %v4762
    %v4765 = vsub.f32 %v4729, %v4762
    %v4766 = vsub.f32 %v4730, %v4762
    %v4767 = vsub.f32 %v4731, %v4762
    %v4768 = vsub.f32 %v4732, %v4762
    %v4769 = vsub.f32 %v4733, %v4762
    %v4770 = vmul.f32 %v4763, %v3925
    %v4771 = vmul.f32 %v4764, %v3926
    %v4772 = vmul.f32 %v4765, %v3927
    %v4773 = vmul.f32 %v4766, %v3928
    %v4774 = vmul.f32 %v4767, %v3929
    %v4775 = vmul.f32 %v4768, %v3930
    %v4776 = vmul.f32 %v4769, %v3931
    %v4777 = vmul.f32 %v4770, %v4770
    %v4778 = vmul.f32 %v4771, %v4771
    %v4779 = vmul.f32 %v4772, %v4772
    %v4780 = vmul.f32 %v4773, %v4773
    %v4781 = vmul.f32 %v4774, %v4774
    %v4782 = vmul.f32 %v4775, %v4775
    %v4783 = vmul.f32 %v4776, %v4776
    %v4784 = vsel %vm1982, %v4777, 0.0
    %v4785 = vsel %vm1982, %v4778, 0.0
    %v4786 = vadd.f32 %v4784, %v4785
    %v4787 = vsel %vm1982, %v4779, 0.0
    %v4788 = vadd.f32 %v4786, %v4787
    %v4789 = vsel %vm1982, %v4780, 0.0
    %v4790 = vadd.f32 %v4788, %v4789
    %v4791 = vsel %vm1982, %v4781, 0.0
    %v4792 = vadd.f32 %v4790, %v4791
    %v4793 = vsel %vm1982, %v4782, 0.0
    %v4794 = vadd.f32 %v4792, %v4793
    %v4795 = vsel %vm1982, %v4783, 0.0
    %v4796 = vadd.f32 %v4794, %v4795
    %v4797 = vrot.slane %v4796, 4
    %v4798 = vadd.f32 %v4796, %v4797
    %v4799 = vrot.slane %v4798, 2
    %v4800 = vadd.f32 %v4798, %v4799
    %v4801 = vrot.slane %v4800, 1
    %v4802 = vadd.f32 %v4800, %v4801
    %v4803 = vmul.f32 %v4802, 0.035714287
    %v4804 = vadd.f32 %v4803, 1e-05
    %v4805 = vrsqrt.pop %v4804
    %v4806 = vmul.f32 %v4805, %v4804
    %v4807 = vmul.f32 %v4806, %v4805
    %v4808 = vmul.f32 0.5, %v4807
    %v4809 = vsub.f32 1.5, %v4808
    %v4810 = vmul.f32 %v4805, %v4809
    %vm4811 = vweird.f32 %v4804
    %vm4812 = vweird.f32 %v4805
    %vm4813 = vmor %vm4811, %vm4812
    %v4814 = vsel %vm4813, %v4805, %v4810
    %v4815 = vmul.f32 %v4814, %v4734
    %v4816 = vperm.slane %v4815, 0
    %v4817 = vmul.f32 %v4770, %v4816
    %v4818 = vmul.f32 %v4771, %v4816
    %v4819 = vmul.f32 %v4772, %v4816
    %v4820 = vmul.f32 %v4773, %v4816
    %v4821 = vmul.f32 %v4774, %v4816
    %v4822 = vmul.f32 %v4775, %v4816
    %v4823 = vmul.f32 %v4776, %v4816
    %v4824 = vperm.slane %v4735, 0
    %v4825 = vadd.f32 %v4817, %v4824
    %v4826 = vadd.f32 %v4818, %v4824
    %v4827 = vadd.f32 %v4819, %v4824
    %v4828 = vadd.f32 %v4820, %v4824
    %v4829 = vadd.f32 %v4821, %v4824
    %v4830 = vadd.f32 %v4822, %v4824
    %v4831 = vadd.f32 %v4823, %v4824
    %v4832 = vmax.f32 %v4825, 0.0
    %v4833 = vmax.f32 %v4826, 0.0
    %v4834 = vmax.f32 %v4827, 0.0
    %v4835 = vmax.f32 %v4828, 0.0
    %v4836 = vmax.f32 %v4829, 0.0
    %v4837 = vmax.f32 %v4830, 0.0
    %v4838 = vmax.f32 %v4831, 0.0
    %v4839 = vmul.f32 %v4832, %v3925
    %v4840 = vmul.f32 %v4833, %v3926
    %v4841 = vmul.f32 %v4834, %v3927
    %v4842 = vmul.f32 %v4835, %v3928
    %v4843 = vmul.f32 %v4836, %v3929
    %v4844 = vmul.f32 %v4837, %v3930
    %v4845 = vmul.f32 %v4838, %v3931
    %v4846 = vrot.slane %v4839, 6
    %v4847 = vrot.slane %v4840, 6
    %v4848 = vrot.slane %v4841, 6
    %v4849 = vrot.slane %v4842, 6
    %v4850 = vrot.slane %v4843, 6
    %v4851 = vrot.slane %v4844, 6
    %v4852 = vrot.slane %v4845, 6
    %v4853 = vsel %vm317, %v4851, %v4852
    %v4854 = vsel %vm317, %v4850, %v4851
    %v4855 = vsel %vm317, %v4849, %v4850
    %v4856 = vsel %vm317, %v4848, %v4849
    %v4857 = vsel %vm317, %v4847, %v4848
    %v4858 = vsel %vm317, %v4846, %v4847
    %v4859 = vsel %vm317, %v4852, %v4846
    %v4860 = vld [vmem:[#allocation2 + $0x6f0] sm:$0xff]
    %v4861 = vld [vmem:[#allocation2 + $0x6f8] sm:$0xff]
    %v4862 = vld [vmem:[#allocation2 + $0x700] sm:$0xff]
    %v4863 = vld [vmem:[#allocation2 + $0x708] sm:$0xff]
    %v4864 = vld [vmem:[#allocation2 + $0x710] sm:$0xff]
    %v4865 = vld [vmem:[#allocation2 + $0x718] sm:$0xff]
    %v4866 = vld [vmem:[#allocation2 + $0x720] sm:$0xff]
    %v4867 = vld [vmem:[#allocation2 + $0x728] sm:$0xff]
    %v4868 = vrot.slane %v4839, 7
    %v4869 = vrot.slane %v4840, 7
    %v4870 = vrot.slane %v4841, 7
    %v4871 = vrot.slane %v4842, 7
    %v4872 = vrot.slane %v4843, 7
    %v4873 = vrot.slane %v4844, 7
    %v4874 = vrot.slane %v4845, 7
    %v4875 = vsel %vm379, %v4873, %v4874
    %v4876 = vsel %vm379, %v4872, %v4873
    %v4877 = vsel %vm379, %v4871, %v4872
    %v4878 = vsel %vm379, %v4870, %v4871
    %v4879 = vsel %vm379, %v4869, %v4870
    %v4880 = vsel %vm379, %v4868, %v4869
    %v4881 = vsel %vm379, %v4874, %v4868
    %v4882 = vld [vmem:[#allocation2 + $0x730] sm:$0xff]
    %v4883 = vld [vmem:[#allocation2 + $0x738] sm:$0xff]
    %v4884 = vld [vmem:[#allocation2 + $0x740] sm:$0xff]
    %v4885 = vld [vmem:[#allocation2 + $0x748] sm:$0xff]
    %v4886 = vld [vmem:[#allocation2 + $0x750] sm:$0xff]
    %v4887 = vld [vmem:[#allocation2 + $0x758] sm:$0xff]
    %v4888 = vld [vmem:[#allocation2 + $0x760] sm:$0xff]
    %v4889 = vld [vmem:[#allocation2 + $0x768] sm:$0xff]
    %v4891 = vsel %vm1982, %v4881, 0
    %v4894 = vsel %vm1982, %v4880, 0
    %v4897 = vsel %vm1982, %v4879, 0
    %v4900 = vsel %vm1982, %v4878, 0
    %v4903 = vsel %vm1982, %v4877, 0
    %v4906 = vsel %vm1982, %v4876, 0
    %v4909 = vsel %vm1982, %v4875, 0
    %4911 = vmatpush.msra.mxu0 0.0
    %4912 = vmatpush.msra.mxu0 0.0
    %4913 = vmatpush.msra.mxu0 0.0
    %4914 = vmatpush.msra.mxu0 0.0
    %4915 = vmatpush.msra.mxu0 0.0
    %4916 = vmatpush.msra.mxu0 0.0
    %4917 = vmatpush.msra.mxu0 0.0
    %4918 = vmatpush.msra.mxu0 0.0
    %4919 = vmatpush.msra.mxu0 %v4889
    %4920 = vmatpush.msra.mxu0 %v4888
    %4921 = vmatpush.msra.mxu0 %v4887
    %4922 = vmatpush.msra.mxu0 %v4886
    %4923 = vmatpush.msra.mxu0 %v4885
    %4924 = vmatpush.msra.mxu0 %v4884
    %4925 = vmatpush.msra.mxu0 %v4883
    %4926 = vmatpush.msra.mxu0 %v4882
    %4927 = vmatmul.f32.gmra.mxu0 %v4891
    %v4928 = vpop.f32.mrf.mxu0
    %v4929 = vadd.f32 0.0, %v4928
    %4930 = vmatmul.f32.gmra.mxu0 %v4894
    %v4931 = vpop.f32.mrf.mxu0
    %v4932 = vadd.f32 0.0, %v4931
    %4933 = vmatmul.f32.gmra.mxu0 %v4897
    %v4934 = vpop.f32.mrf.mxu0
    %v4935 = vadd.f32 0.0, %v4934
    %4936 = vmatmul.f32.gmra.mxu0 %v4900
    %v4937 = vpop.f32.mrf.mxu0
    %v4938 = vadd.f32 0.0, %v4937
    %4939 = vmatmul.f32.gmra.mxu0 %v4903
    %v4940 = vpop.f32.mrf.mxu0
    %v4941 = vadd.f32 0.0, %v4940
    %4942 = vmatmul.f32.gmra.mxu0 %v4906
    %v4943 = vpop.f32.mrf.mxu0
    %v4944 = vadd.f32 0.0, %v4943
    %4945 = vmatmul.f32.gmra.mxu0 %v4909
    %v4946 = vpop.f32.mrf.mxu0
    %v4947 = vadd.f32 0.0, %v4946
    %4948 = vdwg.mxu0
    %v4950 = vsel %vm1982, %v4859, 0
    %v4953 = vsel %vm1982, %v4858, 0
    %v4956 = vsel %vm1982, %v4857, 0
    %v4959 = vsel %vm1982, %v4856, 0
    %v4962 = vsel %vm1982, %v4855, 0
    %v4965 = vsel %vm1982, %v4854, 0
    %v4968 = vsel %vm1982, %v4853, 0
    %4970 = vmatpush.msra.mxu0 0.0
    %4971 = vmatpush.msra.mxu0 0.0
    %4972 = vmatpush.msra.mxu0 0.0
    %4973 = vmatpush.msra.mxu0 0.0
    %4974 = vmatpush.msra.mxu0 0.0
    %4975 = vmatpush.msra.mxu0 0.0
    %4976 = vmatpush.msra.mxu0 0.0
    %4977 = vmatpush.msra.mxu0 0.0
    %4978 = vmatpush.msra.mxu0 %v4867
    %4979 = vmatpush.msra.mxu0 %v4866
    %4980 = vmatpush.msra.mxu0 %v4865
    %4981 = vmatpush.msra.mxu0 %v4864
    %4982 = vmatpush.msra.mxu0 %v4863
    %4983 = vmatpush.msra.mxu0 %v4862
    %4984 = vmatpush.msra.mxu0 %v4861
    %4985 = vmatpush.msra.mxu0 %v4860
    %4986 = vmatmul.f32.gmra.mxu0 %v4950
    %v4987 = vpop.f32.mrf.mxu0
    %v4988 = vadd.f32 %v4929, %v4987
    %4989 = vmatmul.f32.gmra.mxu0 %v4953
    %v4990 = vpop.f32.mrf.mxu0
    %v4991 = vadd.f32 %v4932, %v4990
    %4992 = vmatmul.f32.gmra.mxu0 %v4956
    %v4993 = vpop.f32.mrf.mxu0
    %v4994 = vadd.f32 %v4935, %v4993
    %4995 = vmatmul.f32.gmra.mxu0 %v4959
    %v4996 = vpop.f32.mrf.mxu0
    %v4997 = vadd.f32 %v4938, %v4996
    %4998 = vmatmul.f32.gmra.mxu0 %v4962
    %v4999 = vpop.f32.mrf.mxu0
    %v5000 = vadd.f32 %v4941, %v4999
    %5001 = vmatmul.f32.gmra.mxu0 %v4965
    %v5002 = vpop.f32.mrf.mxu0
    %v5003 = vadd.f32 %v4944, %v5002
    %5004 = vmatmul.f32.gmra.mxu0 %v4968
    %v5005 = vpop.f32.mrf.mxu0
    %v5006 = vadd.f32 %v4947, %v5005
    %5007 = vdwg.mxu0
    %v5008 = vld [vmem:[#allocation2 + $0x770] sm:$0xff]
    %v5009 = vld [vmem:[#allocation2 + $0x778] sm:$0xff]
    %v5010 = vld [vmem:[#allocation2 + $0x780] sm:$0xff]
    %v5011 = vld [vmem:[#allocation2 + $0x788] sm:$0xff]
    %v5012 = vld [vmem:[#allocation2 + $0x790] sm:$0xff]
    %v5013 = vld [vmem:[#allocation2 + $0x798] sm:$0xff]
    %v5014 = vld [vmem:[#allocation2 + $0x7a0] sm:$0xff]
    %v5015 = vld [vmem:[#allocation2 + $0x7a8] sm:$0xff]
    %v5017 = vsel %vm1982, %v4839, 0
    %v5020 = vsel %vm1982, %v4840, 0
    %v5023 = vsel %vm1982, %v4841, 0
    %v5026 = vsel %vm1982, %v4842, 0
    %v5029 = vsel %vm1982, %v4843, 0
    %v5032 = vsel %vm1982, %v4844, 0
    %v5035 = vsel %vm1982, %v4845, 0
    %5037 = vmatpush.msra.mxu0 0.0
    %5038 = vmatpush.msra.mxu0 0.0
    %5039 = vmatpush.msra.mxu0 0.0
    %5040 = vmatpush.msra.mxu0 0.0
    %5041 = vmatpush.msra.mxu0 0.0
    %5042 = vmatpush.msra.mxu0 0.0
    %5043 = vmatpush.msra.mxu0 0.0
    %5044 = vmatpush.msra.mxu0 0.0
    %5045 = vmatpush.msra.mxu0 %v5015
    %5046 = vmatpush.msra.mxu0 %v5014
    %5047 = vmatpush.msra.mxu0 %v5013
    %5048 = vmatpush.msra.mxu0 %v5012
    %5049 = vmatpush.msra.mxu0 %v5011
    %5050 = vmatpush.msra.mxu0 %v5010
    %5051 = vmatpush.msra.mxu0 %v5009
    %5052 = vmatpush.msra.mxu0 %v5008
    %5053 = vmatmul.f32.gmra.mxu0 %v5017
    %v5054 = vpop.f32.mrf.mxu0
    %v5055 = vadd.f32 0.0, %v5054
    %5056 = vmatmul.f32.gmra.mxu0 %v5020
    %v5057 = vpop.f32.mrf.mxu0
    %v5058 = vadd.f32 0.0, %v5057
    %5059 = vmatmul.f32.gmra.mxu0 %v5023
    %v5060 = vpop.f32.mrf.mxu0
    %v5061 = vadd.f32 0.0, %v5060
    %5062 = vmatmul.f32.gmra.mxu0 %v5026
    %v5063 = vpop.f32.mrf.mxu0
    %v5064 = vadd.f32 0.0, %v5063
    %5065 = vmatmul.f32.gmra.mxu0 %v5029
    %v5066 = vpop.f32.mrf.mxu0
    %v5067 = vadd.f32 0.0, %v5066
    %5068 = vmatmul.f32.gmra.mxu0 %v5032
    %v5069 = vpop.f32.mrf.mxu0
    %v5070 = vadd.f32 0.0, %v5069
    %5071 = vmatmul.f32.gmra.mxu0 %v5035
    %v5072 = vpop.f32.mrf.mxu0
    %v5073 = vadd.f32 0.0, %v5072
    %5074 = vdwg.mxu0
    %v5075 = vadd.f32 %v4988, %v5055
    %v5076 = vadd.f32 %v4991, %v5058
    %v5077 = vadd.f32 %v4994, %v5061
    %v5078 = vadd.f32 %v4997, %v5064
    %v5079 = vadd.f32 %v5000, %v5067
    %v5080 = vadd.f32 %v5003, %v5070
    %v5081 = vadd.f32 %v5006, %v5073
    %v5082 = vrot.slane %v4839, 1
    %v5083 = vrot.slane %v4840, 1
    %v5084 = vrot.slane %v4841, 1
    %v5085 = vrot.slane %v4842, 1
    %v5086 = vrot.slane %v4843, 1
    %v5087 = vrot.slane %v4844, 1
    %v5088 = vrot.slane %v4845, 1
    %v5089 = vsel %vm455, %v5087, %v5088
    %v5090 = vsel %vm455, %v5086, %v5087
    %v5091 = vsel %vm455, %v5085, %v5086
    %v5092 = vsel %vm455, %v5084, %v5085
    %v5093 = vsel %vm455, %v5083, %v5084
    %v5094 = vsel %vm455, %v5082, %v5083
    %v5095 = vsel %vm455, %v5088, %v5082
    %v5096 = vld [vmem:[#allocation2 + $0x7b0] sm:$0xff]
    %v5097 = vld [vmem:[#allocation2 + $0x7b8] sm:$0xff]
    %v5098 = vld [vmem:[#allocation2 + $0x7c0] sm:$0xff]
    %v5099 = vld [vmem:[#allocation2 + $0x7c8] sm:$0xff]
    %v5100 = vld [vmem:[#allocation2 + $0x7d0] sm:$0xff]
    %v5101 = vld [vmem:[#allocation2 + $0x7d8] sm:$0xff]
    %v5102 = vld [vmem:[#allocation2 + $0x7e0] sm:$0xff]
    %v5103 = vld [vmem:[#allocation2 + $0x7e8] sm:$0xff]
    %v5105 = vsel %vm1982, %v5094, 0
    %v5108 = vsel %vm1982, %v5093, 0
    %v5111 = vsel %vm1982, %v5092, 0
    %v5114 = vsel %vm1982, %v5091, 0
    %v5117 = vsel %vm1982, %v5090, 0
    %v5120 = vsel %vm1982, %v5089, 0
    %v5123 = vsel %vm1982, %v5095, 0
    %5125 = vmatpush.msra.mxu0 0.0
    %5126 = vmatpush.msra.mxu0 0.0
    %5127 = vmatpush.msra.mxu0 0.0
    %5128 = vmatpush.msra.mxu0 0.0
    %5129 = vmatpush.msra.mxu0 0.0
    %5130 = vmatpush.msra.mxu0 0.0
    %5131 = vmatpush.msra.mxu0 0.0
    %5132 = vmatpush.msra.mxu0 0.0
    %5133 = vmatpush.msra.mxu0 %v5103
    %5134 = vmatpush.msra.mxu0 %v5102
    %5135 = vmatpush.msra.mxu0 %v5101
    %5136 = vmatpush.msra.mxu0 %v5100
    %5137 = vmatpush.msra.mxu0 %v5099
    %5138 = vmatpush.msra.mxu0 %v5098
    %5139 = vmatpush.msra.mxu0 %v5097
    %5140 = vmatpush.msra.mxu0 %v5096
    %5141 = vmatmul.f32.gmra.mxu0 %v5105
    %v5142 = vpop.f32.mrf.mxu0
    %v5143 = vadd.f32 0.0, %v5142
    %5144 = vmatmul.f32.gmra.mxu0 %v5108
    %v5145 = vpop.f32.mrf.mxu0
    %v5146 = vadd.f32 0.0, %v5145
    %5147 = vmatmul.f32.gmra.mxu0 %v5111
    %v5148 = vpop.f32.mrf.mxu0
    %v5149 = vadd.f32 0.0, %v5148
    %5150 = vmatmul.f32.gmra.mxu0 %v5114
    %v5151 = vpop.f32.mrf.mxu0
    %v5152 = vadd.f32 0.0, %v5151
    %5153 = vmatmul.f32.gmra.mxu0 %v5117
    %v5154 = vpop.f32.mrf.mxu0
    %v5155 = vadd.f32 0.0, %v5154
    %5156 = vmatmul.f32.gmra.mxu0 %v5120
    %v5157 = vpop.f32.mrf.mxu0
    %v5158 = vadd.f32 0.0, %v5157
    %5159 = vmatmul.f32.gmra.mxu0 %v5123
    %v5160 = vpop.f32.mrf.mxu0
    %v5161 = vadd.f32 0.0, %v5160
    %5162 = vdwg.mxu0
    %v5163 = vadd.f32 %v5075, %v5143
    %v5164 = vadd.f32 %v5076, %v5146
    %v5165 = vadd.f32 %v5077, %v5149
    %v5166 = vadd.f32 %v5078, %v5152
    %v5167 = vadd.f32 %v5079, %v5155
    %v5168 = vadd.f32 %v5080, %v5158
    %v5169 = vadd.f32 %v5081, %v5161
    %v5170 = vrot.slane %v4839, 2
    %v5171 = vrot.slane %v4840, 2
    %v5172 = vrot.slane %v4841, 2
    %v5173 = vrot.slane %v4842, 2
    %v5174 = vrot.slane %v4843, 2
    %v5175 = vrot.slane %v4844, 2
    %v5176 = vrot.slane %v4845, 2
    %v5177 = vsel %vm517, %v5175, %v5176
    %v5178 = vsel %vm517, %v5174, %v5175
    %v5179 = vsel %vm517, %v5173, %v5174
    %v5180 = vsel %vm517, %v5172, %v5173
    %v5181 = vsel %vm517, %v5171, %v5172
    %v5182 = vsel %vm517, %v5170, %v5171
    %v5183 = vsel %vm517, %v5176, %v5170
    %v5184 = vld [vmem:[#allocation2 + $0x7f0] sm:$0xff]
    %v5185 = vld [vmem:[#allocation2 + $0x7f8] sm:$0xff]
    %v5186 = vld [vmem:[#allocation2 + $0x800] sm:$0xff]
    %v5187 = vld [vmem:[#allocation2 + $0x808] sm:$0xff]
    %v5188 = vld [vmem:[#allocation2 + $0x810] sm:$0xff]
    %v5189 = vld [vmem:[#allocation2 + $0x818] sm:$0xff]
    %v5190 = vld [vmem:[#allocation2 + $0x820] sm:$0xff]
    %v5191 = vld [vmem:[#allocation2 + $0x828] sm:$0xff]
    %v5193 = vsel %vm1982, %v5182, 0
    %v5196 = vsel %vm1982, %v5181, 0
    %v5199 = vsel %vm1982, %v5180, 0
    %v5202 = vsel %vm1982, %v5179, 0
    %v5205 = vsel %vm1982, %v5178, 0
    %v5208 = vsel %vm1982, %v5177, 0
    %v5211 = vsel %vm1982, %v5183, 0
    %5213 = vmatpush.msra.mxu0 0.0
    %5214 = vmatpush.msra.mxu0 0.0
    %5215 = vmatpush.msra.mxu0 0.0
    %5216 = vmatpush.msra.mxu0 0.0
    %5217 = vmatpush.msra.mxu0 0.0
    %5218 = vmatpush.msra.mxu0 0.0
    %5219 = vmatpush.msra.mxu0 0.0
    %5220 = vmatpush.msra.mxu0 0.0
    %5221 = vmatpush.msra.mxu0 %v5191
    %5222 = vmatpush.msra.mxu0 %v5190
    %5223 = vmatpush.msra.mxu0 %v5189
    %5224 = vmatpush.msra.mxu0 %v5188
    %5225 = vmatpush.msra.mxu0 %v5187
    %5226 = vmatpush.msra.mxu0 %v5186
    %5227 = vmatpush.msra.mxu0 %v5185
    %5228 = vmatpush.msra.mxu0 %v5184
    %5229 = vmatmul.f32.gmra.mxu0 %v5193
    %v5230 = vpop.f32.mrf.mxu0
    %v5231 = vadd.f32 0.0, %v5230
    %5232 = vmatmul.f32.gmra.mxu0 %v5196
    %v5233 = vpop.f32.mrf.mxu0
    %v5234 = vadd.f32 0.0, %v5233
    %5235 = vmatmul.f32.gmra.mxu0 %v5199
    %v5236 = vpop.f32.mrf.mxu0
    %v5237 = vadd.f32 0.0, %v5236
    %5238 = vmatmul.f32.gmra.mxu0 %v5202
    %v5239 = vpop.f32.mrf.mxu0
    %v5240 = vadd.f32 0.0, %v5239
    %5241 = vmatmul.f32.gmra.mxu0 %v5205
    %v5242 = vpop.f32.mrf.mxu0
    %v5243 = vadd.f32 0.0, %v5242
    %5244 = vmatmul.f32.gmra.mxu0 %v5208
    %v5245 = vpop.f32.mrf.mxu0
    %v5246 = vadd.f32 0.0, %v5245
    %5247 = vmatmul.f32.gmra.mxu0 %v5211
    %v5248 = vpop.f32.mrf.mxu0
    %v5249 = vadd.f32 0.0, %v5248
    %5250 = vdwg.mxu0
    %v5251 = vadd.f32 %v5163, %v5231
    %v5252 = vadd.f32 %v5164, %v5234
    %v5253 = vadd.f32 %v5165, %v5237
    %v5254 = vadd.f32 %v5166, %v5240
    %v5255 = vadd.f32 %v5167, %v5243
    %v5256 = vadd.f32 %v5168, %v5246
    %v5257 = vadd.f32 %v5169, %v5249
    %v5258 = vld [vmem:[#allocation4 + $0x14] sm:$0x1]
    %v5259 = vld [vmem:[#allocation4 + $0x15] sm:$0x1]
    %v5260 = vmul.f32 %v5251, %v3925
    %v5261 = vmul.f32 %v5252, %v3926
    %v5262 = vmul.f32 %v5253, %v3927
    %v5263 = vmul.f32 %v5254, %v3928
    %v5264 = vmul.f32 %v5255, %v3929
    %v5265 = vmul.f32 %v5256, %v3930
    %v5266 = vmul.f32 %v5257, %v3931
    %v5267 = vsel %vm1982, %v5260, 0.0
    %v5268 = vsel %vm1982, %v5261, 0.0
    %v5269 = vadd.f32 %v5267, %v5268
    %v5270 = vsel %vm1982, %v5262, 0.0
    %v5271 = vadd.f32 %v5269, %v5270
    %v5272 = vsel %vm1982, %v5263, 0.0
    %v5273 = vadd.f32 %v5271, %v5272
    %v5274 = vsel %vm1982, %v5264, 0.0
    %v5275 = vadd.f32 %v5273, %v5274
    %v5276 = vsel %vm1982, %v5265, 0.0
    %v5277 = vadd.f32 %v5275, %v5276
    %v5278 = vsel %vm1982, %v5266, 0.0
    %v5279 = vadd.f32 %v5277, %v5278
    %v5280 = vrot.slane %v5279, 4
    %v5281 = vadd.f32 %v5279, %v5280
    %v5282 = vrot.slane %v5281, 2
    %v5283 = vadd.f32 %v5281, %v5282
    %v5284 = vrot.slane %v5283, 1
    %v5285 = vadd.f32 %v5283, %v5284
    %v5286 = vmul.f32 %v5285, 0.035714287
    %v5287 = vsub.f32 %v5251, %v5286
    %v5288 = vsub.f32 %v5252, %v5286
    %v5289 = vsub.f32 %v5253, %v5286
    %v5290 = vsub.f32 %v5254, %v5286
    %v5291 = vsub.f32 %v5255, %v5286
    %v5292 = vsub.f32 %v5256, %v5286
    %v5293 = vsub.f32 %v5257, %v5286
    %v5294 = vmul.f32 %v5287, %v3925
    %v5295 = vmul.f32 %v5288, %v3926
    %v5296 = vmul.f32 %v5289, %v3927
    %v5297 = vmul.f32 %v5290, %v3928
    %v5298 = vmul.f32 %v5291, %v3929
    %v5299 = vmul.f32 %v5292, %v3930
    %v5300 = vmul.f32 %v5293, %v3931
    %v5301 = vmul.f32 %v5294, %v5294
    %v5302 = vmul.f32 %v5295, %v5295
    %v5303 = vmul.f32 %v5296, %v5296
    %v5304 = vmul.f32 %v5297, %v5297
    %v5305 = vmul.f32 %v5298, %v5298
    %v5306 = vmul.f32 %v5299, %v5299
    %v5307 = vmul.f32 %v5300, %v5300
    %v5308 = vsel %vm1982, %v5301, 0.0
    %v5309 = vsel %vm1982, %v5302, 0.0
    %v5310 = vadd.f32 %v5308, %v5309
    %v5311 = vsel %vm1982, %v5303, 0.0
    %v5312 = vadd.f32 %v5310, %v5311
    %v5313 = vsel %vm1982, %v5304, 0.0
    %v5314 = vadd.f32 %v5312, %v5313
    %v5315 = vsel %vm1982, %v5305, 0.0
    %v5316 = vadd.f32 %v5314, %v5315
    %v5317 = vsel %vm1982, %v5306, 0.0
    %v5318 = vadd.f32 %v5316, %v5317
    %v5319 = vsel %vm1982, %v5307, 0.0
    %v5320 = vadd.f32 %v5318, %v5319
    %v5321 = vrot.slane %v5320, 4
    %v5322 = vadd.f32 %v5320, %v5321
    %v5323 = vrot.slane %v5322, 2
    %v5324 = vadd.f32 %v5322, %v5323
    %v5325 = vrot.slane %v5324, 1
    %v5326 = vadd.f32 %v5324, %v5325
    %v5327 = vmul.f32 %v5326, 0.035714287
    %v5328 = vadd.f32 %v5327, 1e-05
    %v5329 = vrsqrt.pop %v5328
    %v5330 = vmul.f32 %v5329, %v5328
    %v5331 = vmul.f32 %v5330, %v5329
    %v5332 = vmul.f32 0.5, %v5331
    %v5333 = vsub.f32 1.5, %v5332
    %v5334 = vmul.f32 %v5329, %v5333
    %vm5335 = vweird.f32 %v5328
    %vm5336 = vweird.f32 %v5329
    %vm5337 = vmor %vm5335, %vm5336
    %v5338 = vsel %vm5337, %v5329, %v5334
    %v5339 = vmul.f32 %v5338, %v5258
    %v5340 = vperm.slane %v5339, 0
    %v5341 = vmul.f32 %v5294, %v5340
    %v5342 = vmul.f32 %v5295, %v5340
    %v5343 = vmul.f32 %v5296, %v5340
    %v5344 = vmul.f32 %v5297, %v5340
    %v5345 = vmul.f32 %v5298, %v5340
    %v5346 = vmul.f32 %v5299, %v5340
    %v5347 = vmul.f32 %v5300, %v5340
    %v5348 = vperm.slane %v5259, 0
    %v5349 = vadd.f32 %v5341, %v5348
    %v5350 = vadd.f32 %v5342, %v5348
    %v5351 = vadd.f32 %v5343, %v5348
    %v5352 = vadd.f32 %v5344, %v5348
    %v5353 = vadd.f32 %v5345, %v5348
    %v5354 = vadd.f32 %v5346, %v5348
    %v5355 = vadd.f32 %v5347, %v5348
    %v5356 = vmax.f32 %v5349, 0.0
    %v5357 = vmax.f32 %v5350, 0.0
    %v5358 = vmax.f32 %v5351, 0.0
    %v5359 = vmax.f32 %v5352, 0.0
    %v5360 = vmax.f32 %v5353, 0.0
    %v5361 = vmax.f32 %v5354, 0.0
    %v5362 = vmax.f32 %v5355, 0.0
    %v5363 = vmul.f32 %v5356, %v3925
    %v5364 = vmul.f32 %v5357, %v3926
    %v5365 = vmul.f32 %v5358, %v3927
    %v5366 = vmul.f32 %v5359, %v3928
    %v5367 = vmul.f32 %v5360, %v3929
    %v5368 = vmul.f32 %v5361, %v3930
    %v5369 = vmul.f32 %v5362, %v3931
    %v5370 = vrot.slane %v5363, 6
    %v5371 = vrot.slane %v5364, 6
    %v5372 = vrot.slane %v5365, 6
    %v5373 = vrot.slane %v5366, 6
    %v5374 = vrot.slane %v5367, 6
    %v5375 = vrot.slane %v5368, 6
    %v5376 = vrot.slane %v5369, 6
    %v5377 = vsel %vm317, %v5375, %v5376
    %v5378 = vsel %vm317, %v5374, %v5375
    %v5379 = vsel %vm317, %v5373, %v5374
    %v5380 = vsel %vm317, %v5372, %v5373
    %v5381 = vsel %vm317, %v5371, %v5372
    %v5382 = vsel %vm317, %v5370, %v5371
    %v5383 = vsel %vm317, %v5376, %v5370
    %v5384 = vld [vmem:[#allocation2 + $0x830] sm:$0xff]
    %v5385 = vld [vmem:[#allocation2 + $0x838] sm:$0xff]
    %v5386 = vld [vmem:[#allocation2 + $0x840] sm:$0xff]
    %v5387 = vld [vmem:[#allocation2 + $0x848] sm:$0xff]
    %v5388 = vld [vmem:[#allocation2 + $0x850] sm:$0xff]
    %v5389 = vld [vmem:[#allocation2 + $0x858] sm:$0xff]
    %v5390 = vld [vmem:[#allocation2 + $0x860] sm:$0xff]
    %v5391 = vld [vmem:[#allocation2 + $0x868] sm:$0xff]
    %v5392 = vrot.slane %v5363, 7
    %v5393 = vrot.slane %v5364, 7
    %v5394 = vrot.slane %v5365, 7
    %v5395 = vrot.slane %v5366, 7
    %v5396 = vrot.slane %v5367, 7
    %v5397 = vrot.slane %v5368, 7
    %v5398 = vrot.slane %v5369, 7
    %v5399 = vsel %vm379, %v5397, %v5398
    %v5400 = vsel %vm379, %v5396, %v5397
    %v5401 = vsel %vm379, %v5395, %v5396
    %v5402 = vsel %vm379, %v5394, %v5395
    %v5403 = vsel %vm379, %v5393, %v5394
    %v5404 = vsel %vm379, %v5392, %v5393
    %v5405 = vsel %vm379, %v5398, %v5392
    %v5406 = vld [vmem:[#allocation2 + $0x870] sm:$0xff]
    %v5407 = vld [vmem:[#allocation2 + $0x878] sm:$0xff]
    %v5408 = vld [vmem:[#allocation2 + $0x880] sm:$0xff]
    %v5409 = vld [vmem:[#allocation2 + $0x888] sm:$0xff]
    %v5410 = vld [vmem:[#allocation2 + $0x890] sm:$0xff]
    %v5411 = vld [vmem:[#allocation2 + $0x898] sm:$0xff]
    %v5412 = vld [vmem:[#allocation2 + $0x8a0] sm:$0xff]
    %v5413 = vld [vmem:[#allocation2 + $0x8a8] sm:$0xff]
    %v5415 = vsel %vm1982, %v5405, 0
    %v5418 = vsel %vm1982, %v5404, 0
    %v5421 = vsel %vm1982, %v5403, 0
    %v5424 = vsel %vm1982, %v5402, 0
    %v5427 = vsel %vm1982, %v5401, 0
    %v5430 = vsel %vm1982, %v5400, 0
    %v5433 = vsel %vm1982, %v5399, 0
    %5435 = vmatpush.msra.mxu0 0.0
    %5436 = vmatpush.msra.mxu0 0.0
    %5437 = vmatpush.msra.mxu0 0.0
    %5438 = vmatpush.msra.mxu0 0.0
    %5439 = vmatpush.msra.mxu0 0.0
    %5440 = vmatpush.msra.mxu0 0.0
    %5441 = vmatpush.msra.mxu0 0.0
    %5442 = vmatpush.msra.mxu0 0.0
    %5443 = vmatpush.msra.mxu0 %v5413
    %5444 = vmatpush.msra.mxu0 %v5412
    %5445 = vmatpush.msra.mxu0 %v5411
    %5446 = vmatpush.msra.mxu0 %v5410
    %5447 = vmatpush.msra.mxu0 %v5409
    %5448 = vmatpush.msra.mxu0 %v5408
    %5449 = vmatpush.msra.mxu0 %v5407
    %5450 = vmatpush.msra.mxu0 %v5406
    %5451 = vmatmul.f32.gmra.mxu0 %v5415
    %v5452 = vpop.f32.mrf.mxu0
    %v5453 = vadd.f32 0.0, %v5452
    %5454 = vmatmul.f32.gmra.mxu0 %v5418
    %v5455 = vpop.f32.mrf.mxu0
    %v5456 = vadd.f32 0.0, %v5455
    %5457 = vmatmul.f32.gmra.mxu0 %v5421
    %v5458 = vpop.f32.mrf.mxu0
    %v5459 = vadd.f32 0.0, %v5458
    %5460 = vmatmul.f32.gmra.mxu0 %v5424
    %v5461 = vpop.f32.mrf.mxu0
    %v5462 = vadd.f32 0.0, %v5461
    %5463 = vmatmul.f32.gmra.mxu0 %v5427
    %v5464 = vpop.f32.mrf.mxu0
    %v5465 = vadd.f32 0.0, %v5464
    %5466 = vmatmul.f32.gmra.mxu0 %v5430
    %v5467 = vpop.f32.mrf.mxu0
    %v5468 = vadd.f32 0.0, %v5467
    %5469 = vmatmul.f32.gmra.mxu0 %v5433
    %v5470 = vpop.f32.mrf.mxu0
    %v5471 = vadd.f32 0.0, %v5470
    %5472 = vdwg.mxu0
    %v5474 = vsel %vm1982, %v5383, 0
    %v5477 = vsel %vm1982, %v5382, 0
    %v5480 = vsel %vm1982, %v5381, 0
    %v5483 = vsel %vm1982, %v5380, 0
    %v5486 = vsel %vm1982, %v5379, 0
    %v5489 = vsel %vm1982, %v5378, 0
    %v5492 = vsel %vm1982, %v5377, 0
    %5494 = vmatpush.msra.mxu0 0.0
    %5495 = vmatpush.msra.mxu0 0.0
    %5496 = vmatpush.msra.mxu0 0.0
    %5497 = vmatpush.msra.mxu0 0.0
    %5498 = vmatpush.msra.mxu0 0.0
    %5499 = vmatpush.msra.mxu0 0.0
    %5500 = vmatpush.msra.mxu0 0.0
    %5501 = vmatpush.msra.mxu0 0.0
    %5502 = vmatpush.msra.mxu0 %v5391
    %5503 = vmatpush.msra.mxu0 %v5390
    %5504 = vmatpush.msra.mxu0 %v5389
    %5505 = vmatpush.msra.mxu0 %v5388
    %5506 = vmatpush.msra.mxu0 %v5387
    %5507 = vmatpush.msra.mxu0 %v5386
    %5508 = vmatpush.msra.mxu0 %v5385
    %5509 = vmatpush.msra.mxu0 %v5384
    %5510 = vmatmul.f32.gmra.mxu0 %v5474
    %v5511 = vpop.f32.mrf.mxu0
    %v5512 = vadd.f32 %v5453, %v5511
    %5513 = vmatmul.f32.gmra.mxu0 %v5477
    %v5514 = vpop.f32.mrf.mxu0
    %v5515 = vadd.f32 %v5456, %v5514
    %5516 = vmatmul.f32.gmra.mxu0 %v5480
    %v5517 = vpop.f32.mrf.mxu0
    %v5518 = vadd.f32 %v5459, %v5517
    %5519 = vmatmul.f32.gmra.mxu0 %v5483
    %v5520 = vpop.f32.mrf.mxu0
    %v5521 = vadd.f32 %v5462, %v5520
    %5522 = vmatmul.f32.gmra.mxu0 %v5486
    %v5523 = vpop.f32.mrf.mxu0
    %v5524 = vadd.f32 %v5465, %v5523
    %5525 = vmatmul.f32.gmra.mxu0 %v5489
    %v5526 = vpop.f32.mrf.mxu0
    %v5527 = vadd.f32 %v5468, %v5526
    %5528 = vmatmul.f32.gmra.mxu0 %v5492
    %v5529 = vpop.f32.mrf.mxu0
    %v5530 = vadd.f32 %v5471, %v5529
    %5531 = vdwg.mxu0
    %v5532 = vld [vmem:[#allocation2 + $0x8b0] sm:$0xff]
    %v5533 = vld [vmem:[#allocation2 + $0x8b8] sm:$0xff]
    %v5534 = vld [vmem:[#allocation2 + $0x8c0] sm:$0xff]
    %v5535 = vld [vmem:[#allocation2 + $0x8c8] sm:$0xff]
    %v5536 = vld [vmem:[#allocation2 + $0x8d0] sm:$0xff]
    %v5537 = vld [vmem:[#allocation2 + $0x8d8] sm:$0xff]
    %v5538 = vld [vmem:[#allocation2 + $0x8e0] sm:$0xff]
    %v5539 = vld [vmem:[#allocation2 + $0x8e8] sm:$0xff]
    %v5541 = vsel %vm1982, %v5363, 0
    %v5544 = vsel %vm1982, %v5364, 0
    %v5547 = vsel %vm1982, %v5365, 0
    %v5550 = vsel %vm1982, %v5366, 0
    %v5553 = vsel %vm1982, %v5367, 0
    %v5556 = vsel %vm1982, %v5368, 0
    %v5559 = vsel %vm1982, %v5369, 0
    %5561 = vmatpush.msra.mxu0 0.0
    %5562 = vmatpush.msra.mxu0 0.0
    %5563 = vmatpush.msra.mxu0 0.0
    %5564 = vmatpush.msra.mxu0 0.0
    %5565 = vmatpush.msra.mxu0 0.0
    %5566 = vmatpush.msra.mxu0 0.0
    %5567 = vmatpush.msra.mxu0 0.0
    %5568 = vmatpush.msra.mxu0 0.0
    %5569 = vmatpush.msra.mxu0 %v5539
    %5570 = vmatpush.msra.mxu0 %v5538
    %5571 = vmatpush.msra.mxu0 %v5537
    %5572 = vmatpush.msra.mxu0 %v5536
    %5573 = vmatpush.msra.mxu0 %v5535
    %5574 = vmatpush.msra.mxu0 %v5534
    %5575 = vmatpush.msra.mxu0 %v5533
    %5576 = vmatpush.msra.mxu0 %v5532
    %5577 = vmatmul.f32.gmra.mxu0 %v5541
    %v5578 = vpop.f32.mrf.mxu0
    %v5579 = vadd.f32 0.0, %v5578
    %5580 = vmatmul.f32.gmra.mxu0 %v5544
    %v5581 = vpop.f32.mrf.mxu0
    %v5582 = vadd.f32 0.0, %v5581
    %5583 = vmatmul.f32.gmra.mxu0 %v5547
    %v5584 = vpop.f32.mrf.mxu0
    %v5585 = vadd.f32 0.0, %v5584
    %5586 = vmatmul.f32.gmra.mxu0 %v5550
    %v5587 = vpop.f32.mrf.mxu0
    %v5588 = vadd.f32 0.0, %v5587
    %5589 = vmatmul.f32.gmra.mxu0 %v5553
    %v5590 = vpop.f32.mrf.mxu0
    %v5591 = vadd.f32 0.0, %v5590
    %5592 = vmatmul.f32.gmra.mxu0 %v5556
    %v5593 = vpop.f32.mrf.mxu0
    %v5594 = vadd.f32 0.0, %v5593
    %5595 = vmatmul.f32.gmra.mxu0 %v5559
    %v5596 = vpop.f32.mrf.mxu0
    %v5597 = vadd.f32 0.0, %v5596
    %5598 = vdwg.mxu0
    %v5599 = vadd.f32 %v5512, %v5579
    %v5600 = vadd.f32 %v5515, %v5582
    %v5601 = vadd.f32 %v5518, %v5585
    %v5602 = vadd.f32 %v5521, %v5588
    %v5603 = vadd.f32 %v5524, %v5591
    %v5604 = vadd.f32 %v5527, %v5594
    %v5605 = vadd.f32 %v5530, %v5597
    %v5606 = vrot.slane %v5363, 1
    %v5607 = vrot.slane %v5364, 1
    %v5608 = vrot.slane %v5365, 1
    %v5609 = vrot.slane %v5366, 1
    %v5610 = vrot.slane %v5367, 1
    %v5611 = vrot.slane %v5368, 1
    %v5612 = vrot.slane %v5369, 1
    %v5613 = vsel %vm455, %v5611, %v5612
    %v5614 = vsel %vm455, %v5610, %v5611
    %v5615 = vsel %vm455, %v5609, %v5610
    %v5616 = vsel %vm455, %v5608, %v5609
    %v5617 = vsel %vm455, %v5607, %v5608
    %v5618 = vsel %vm455, %v5606, %v5607
    %v5619 = vsel %vm455, %v5612, %v5606
    %v5620 = vld [vmem:[#allocation2 + $0x8f0] sm:$0xff]
    %v5621 = vld [vmem:[#allocation2 + $0x8f8] sm:$0xff]
    %v5622 = vld [vmem:[#allocation2 + $0x900] sm:$0xff]
    %v5623 = vld [vmem:[#allocation2 + $0x908] sm:$0xff]
    %v5624 = vld [vmem:[#allocation2 + $0x910] sm:$0xff]
    %v5625 = vld [vmem:[#allocation2 + $0x918] sm:$0xff]
    %v5626 = vld [vmem:[#allocation2 + $0x920] sm:$0xff]
    %v5627 = vld [vmem:[#allocation2 + $0x928] sm:$0xff]
    %v5629 = vsel %vm1982, %v5618, 0
    %v5632 = vsel %vm1982, %v5617, 0
    %v5635 = vsel %vm1982, %v5616, 0
    %v5638 = vsel %vm1982, %v5615, 0
    %v5641 = vsel %vm1982, %v5614, 0
    %v5644 = vsel %vm1982, %v5613, 0
    %v5647 = vsel %vm1982, %v5619, 0
    %5649 = vmatpush.msra.mxu0 0.0
    %5650 = vmatpush.msra.mxu0 0.0
    %5651 = vmatpush.msra.mxu0 0.0
    %5652 = vmatpush.msra.mxu0 0.0
    %5653 = vmatpush.msra.mxu0 0.0
    %5654 = vmatpush.msra.mxu0 0.0
    %5655 = vmatpush.msra.mxu0 0.0
    %5656 = vmatpush.msra.mxu0 0.0
    %5657 = vmatpush.msra.mxu0 %v5627
    %5658 = vmatpush.msra.mxu0 %v5626
    %5659 = vmatpush.msra.mxu0 %v5625
    %5660 = vmatpush.msra.mxu0 %v5624
    %5661 = vmatpush.msra.mxu0 %v5623
    %5662 = vmatpush.msra.mxu0 %v5622
    %5663 = vmatpush.msra.mxu0 %v5621
    %5664 = vmatpush.msra.mxu0 %v5620
    %5665 = vmatmul.f32.gmra.mxu0 %v5629
    %v5666 = vpop.f32.mrf.mxu0
    %v5667 = vadd.f32 0.0, %v5666
    %5668 = vmatmul.f32.gmra.mxu0 %v5632
    %v5669 = vpop.f32.mrf.mxu0
    %v5670 = vadd.f32 0.0, %v5669
    %5671 = vmatmul.f32.gmra.mxu0 %v5635
    %v5672 = vpop.f32.mrf.mxu0
    %v5673 = vadd.f32 0.0, %v5672
    %5674 = vmatmul.f32.gmra.mxu0 %v5638
    %v5675 = vpop.f32.mrf.mxu0
    %v5676 = vadd.f32 0.0, %v5675
    %5677 = vmatmul.f32.gmra.mxu0 %v5641
    %v5678 = vpop.f32.mrf.mxu0
    %v5679 = vadd.f32 0.0, %v5678
    %5680 = vmatmul.f32.gmra.mxu0 %v5644
    %v5681 = vpop.f32.mrf.mxu0
    %v5682 = vadd.f32 0.0, %v5681
    %5683 = vmatmul.f32.gmra.mxu0 %v5647
    %v5684 = vpop.f32.mrf.mxu0
    %v5685 = vadd.f32 0.0, %v5684
    %5686 = vdwg.mxu0
    %v5687 = vadd.f32 %v5599, %v5667
    %v5688 = vadd.f32 %v5600, %v5670
    %v5689 = vadd.f32 %v5601, %v5673
    %v5690 = vadd.f32 %v5602, %v5676
    %v5691 = vadd.f32 %v5603, %v5679
    %v5692 = vadd.f32 %v5604, %v5682
    %v5693 = vadd.f32 %v5605, %v5685
    %v5694 = vrot.slane %v5363, 2
    %v5695 = vrot.slane %v5364, 2
    %v5696 = vrot.slane %v5365, 2
    %v5697 = vrot.slane %v5366, 2
    %v5698 = vrot.slane %v5367, 2
    %v5699 = vrot.slane %v5368, 2
    %v5700 = vrot.slane %v5369, 2
    %v5701 = vsel %vm517, %v5699, %v5700
    %v5702 = vsel %vm517, %v5698, %v5699
    %v5703 = vsel %vm517, %v5697, %v5698
    %v5704 = vsel %vm517, %v5696, %v5697
    %v5705 = vsel %vm517, %v5695, %v5696
    %v5706 = vsel %vm517, %v5694, %v5695
    %v5707 = vsel %vm517, %v5700, %v5694
    %v5708 = vld [vmem:[#allocation2 + $0x930] sm:$0xff]
    %v5709 = vld [vmem:[#allocation2 + $0x938] sm:$0xff]
    %v5710 = vld [vmem:[#allocation2 + $0x940] sm:$0xff]
    %v5711 = vld [vmem:[#allocation2 + $0x948] sm:$0xff]
    %v5712 = vld [vmem:[#allocation2 + $0x950] sm:$0xff]
    %v5713 = vld [vmem:[#allocation2 + $0x958] sm:$0xff]
    %v5714 = vld [vmem:[#allocation2 + $0x960] sm:$0xff]
    %v5715 = vld [vmem:[#allocation2 + $0x968] sm:$0xff]
    %v5717 = vsel %vm1982, %v5706, 0
    %v5720 = vsel %vm1982, %v5705, 0
    %v5723 = vsel %vm1982, %v5704, 0
    %v5726 = vsel %vm1982, %v5703, 0
    %v5729 = vsel %vm1982, %v5702, 0
    %v5732 = vsel %vm1982, %v5701, 0
    %v5735 = vsel %vm1982, %v5707, 0
    %5737 = vmatpush.msra.mxu0 0.0
    %5738 = vmatpush.msra.mxu0 0.0
    %5739 = vmatpush.msra.mxu0 0.0
    %5740 = vmatpush.msra.mxu0 0.0
    %5741 = vmatpush.msra.mxu0 0.0
    %5742 = vmatpush.msra.mxu0 0.0
    %5743 = vmatpush.msra.mxu0 0.0
    %5744 = vmatpush.msra.mxu0 0.0
    %5745 = vmatpush.msra.mxu0 %v5715
    %5746 = vmatpush.msra.mxu0 %v5714
    %5747 = vmatpush.msra.mxu0 %v5713
    %5748 = vmatpush.msra.mxu0 %v5712
    %5749 = vmatpush.msra.mxu0 %v5711
    %5750 = vmatpush.msra.mxu0 %v5710
    %5751 = vmatpush.msra.mxu0 %v5709
    %5752 = vmatpush.msra.mxu0 %v5708
    %5753 = vmatmul.f32.gmra.mxu0 %v5717
    %v5754 = vpop.f32.mrf.mxu0
    %v5755 = vadd.f32 0.0, %v5754
    %5756 = vmatmul.f32.gmra.mxu0 %v5720
    %v5757 = vpop.f32.mrf.mxu0
    %v5758 = vadd.f32 0.0, %v5757
    %5759 = vmatmul.f32.gmra.mxu0 %v5723
    %v5760 = vpop.f32.mrf.mxu0
    %v5761 = vadd.f32 0.0, %v5760
    %5762 = vmatmul.f32.gmra.mxu0 %v5726
    %v5763 = vpop.f32.mrf.mxu0
    %v5764 = vadd.f32 0.0, %v5763
    %5765 = vmatmul.f32.gmra.mxu0 %v5729
    %v5766 = vpop.f32.mrf.mxu0
    %v5767 = vadd.f32 0.0, %v5766
    %5768 = vmatmul.f32.gmra.mxu0 %v5732
    %v5769 = vpop.f32.mrf.mxu0
    %v5770 = vadd.f32 0.0, %v5769
    %5771 = vmatmul.f32.gmra.mxu0 %v5735
    %v5772 = vpop.f32.mrf.mxu0
    %v5773 = vadd.f32 0.0, %v5772
    %5774 = vdwg.mxu0
    %v5775 = vadd.f32 %v5687, %v5755
    %v5776 = vadd.f32 %v5688, %v5758
    %v5777 = vadd.f32 %v5689, %v5761
    %v5778 = vadd.f32 %v5690, %v5764
    %v5779 = vadd.f32 %v5691, %v5767
    %v5780 = vadd.f32 %v5692, %v5770
    %v5781 = vadd.f32 %v5693, %v5773
    %v5782 = vld [vmem:[#allocation4 + $0x16] sm:$0x1]
    %v5783 = vld [vmem:[#allocation4 + $0x17] sm:$0x1]
    %v5784 = vmul.f32 %v5775, %v3925
    %v5785 = vmul.f32 %v5776, %v3926
    %v5786 = vmul.f32 %v5777, %v3927
    %v5787 = vmul.f32 %v5778, %v3928
    %v5788 = vmul.f32 %v5779, %v3929
    %v5789 = vmul.f32 %v5780, %v3930
    %v5790 = vmul.f32 %v5781, %v3931
    %v5791 = vsel %vm1982, %v5784, 0.0
    %v5792 = vsel %vm1982, %v5785, 0.0
    %v5793 = vadd.f32 %v5791, %v5792
    %v5794 = vsel %vm1982, %v5786, 0.0
    %v5795 = vadd.f32 %v5793, %v5794
    %v5796 = vsel %vm1982, %v5787, 0.0
    %v5797 = vadd.f32 %v5795, %v5796
    %v5798 = vsel %vm1982, %v5788, 0.0
    %v5799 = vadd.f32 %v5797, %v5798
    %v5800 = vsel %vm1982, %v5789, 0.0
    %v5801 = vadd.f32 %v5799, %v5800
    %v5802 = vsel %vm1982, %v5790, 0.0
    %v5803 = vadd.f32 %v5801, %v5802
    %v5804 = vrot.slane %v5803, 4
    %v5805 = vadd.f32 %v5803, %v5804
    %v5806 = vrot.slane %v5805, 2
    %v5807 = vadd.f32 %v5805, %v5806
    %v5808 = vrot.slane %v5807, 1
    %v5809 = vadd.f32 %v5807, %v5808
    %v5810 = vmul.f32 %v5809, 0.035714287
    %v5811 = vsub.f32 %v5775, %v5810
    %v5812 = vsub.f32 %v5776, %v5810
    %v5813 = vsub.f32 %v5777, %v5810
    %v5814 = vsub.f32 %v5778, %v5810
    %v5815 = vsub.f32 %v5779, %v5810
    %v5816 = vsub.f32 %v5780, %v5810
    %v5817 = vsub.f32 %v5781, %v5810
    %v5818 = vmul.f32 %v5811, %v3925
    %v5819 = vmul.f32 %v5812, %v3926
    %v5820 = vmul.f32 %v5813, %v3927
    %v5821 = vmul.f32 %v5814, %v3928
    %v5822 = vmul.f32 %v5815, %v3929
    %v5823 = vmul.f32 %v5816, %v3930
    %v5824 = vmul.f32 %v5817, %v3931
    %v5825 = vmul.f32 %v5818, %v5818
    %v5826 = vmul.f32 %v5819, %v5819
    %v5827 = vmul.f32 %v5820, %v5820
    %v5828 = vmul.f32 %v5821, %v5821
    %v5829 = vmul.f32 %v5822, %v5822
    %v5830 = vmul.f32 %v5823, %v5823
    %v5831 = vmul.f32 %v5824, %v5824
    %v5832 = vsel %vm1982, %v5825, 0.0
    %v5833 = vsel %vm1982, %v5826, 0.0
    %v5834 = vadd.f32 %v5832, %v5833
    %v5835 = vsel %vm1982, %v5827, 0.0
    %v5836 = vadd.f32 %v5834, %v5835
    %v5837 = vsel %vm1982, %v5828, 0.0
    %v5838 = vadd.f32 %v5836, %v5837
    %v5839 = vsel %vm1982, %v5829, 0.0
    %v5840 = vadd.f32 %v5838, %v5839
    %v5841 = vsel %vm1982, %v5830, 0.0
    %v5842 = vadd.f32 %v5840, %v5841
    %v5843 = vsel %vm1982, %v5831, 0.0
    %v5844 = vadd.f32 %v5842, %v5843
    %v5845 = vrot.slane %v5844, 4
    %v5846 = vadd.f32 %v5844, %v5845
    %v5847 = vrot.slane %v5846, 2
    %v5848 = vadd.f32 %v5846, %v5847
    %v5849 = vrot.slane %v5848, 1
    %v5850 = vadd.f32 %v5848, %v5849
    %v5851 = vmul.f32 %v5850, 0.035714287
    %v5852 = vadd.f32 %v5851, 1e-05
    %v5853 = vrsqrt.pop %v5852
    %v5854 = vmul.f32 %v5853, %v5852
    %v5855 = vmul.f32 %v5854, %v5853
    %v5856 = vmul.f32 0.5, %v5855
    %v5857 = vsub.f32 1.5, %v5856
    %v5858 = vmul.f32 %v5853, %v5857
    %vm5859 = vweird.f32 %v5852
    %vm5860 = vweird.f32 %v5853
    %vm5861 = vmor %vm5859, %vm5860
    %v5862 = vsel %vm5861, %v5853, %v5858
    %v5863 = vmul.f32 %v5862, %v5782
    %v5864 = vperm.slane %v5863, 0
    %v5865 = vmul.f32 %v5818, %v5864
    %v5866 = vmul.f32 %v5819, %v5864
    %v5867 = vmul.f32 %v5820, %v5864
    %v5868 = vmul.f32 %v5821, %v5864
    %v5869 = vmul.f32 %v5822, %v5864
    %v5870 = vmul.f32 %v5823, %v5864
    %v5871 = vmul.f32 %v5824, %v5864
    %v5872 = vperm.slane %v5783, 0
    %v5873 = vadd.f32 %v5865, %v5872
    %v5874 = vadd.f32 %v5866, %v5872
    %v5875 = vadd.f32 %v5867, %v5872
    %v5876 = vadd.f32 %v5868, %v5872
    %v5877 = vadd.f32 %v5869, %v5872
    %v5878 = vadd.f32 %v5870, %v5872
    %v5879 = vadd.f32 %v5871, %v5872
    %v5880 = vmul.f32 %v5873, %v3925
    %v5881 = vmul.f32 %v5874, %v3926
    %v5882 = vmul.f32 %v5875, %v3927
    %v5883 = vmul.f32 %v5876, %v3928
    %v5884 = vmul.f32 %v5877, %v3929
    %v5885 = vmul.f32 %v5878, %v3930
    %v5886 = vmul.f32 %v5879, %v3931
    %v5887 = vadd.f32 %v5880, %v4051
    %v5888 = vadd.f32 %v5881, %v4052
    %v5889 = vadd.f32 %v5882, %v4053
    %v5890 = vadd.f32 %v5883, %v4054
    %v5891 = vadd.f32 %v5884, %v4055
    %v5892 = vadd.f32 %v5885, %v4056
    %v5893 = vadd.f32 %v5886, %v4057
    %v5894 = vmax.f32 %v5887, 0.0
    %v5895 = vmax.f32 %v5888, 0.0
    %v5896 = vmax.f32 %v5889, 0.0
    %v5897 = vmax.f32 %v5890, 0.0
    %v5898 = vmax.f32 %v5891, 0.0
    %v5899 = vmax.f32 %v5892, 0.0
    %v5900 = vmax.f32 %v5893, 0.0
    %v5901 = vrot.slane %v5894, 1
    %v5902 = vrot.slane %v5895, 1
    %v5903 = vrot.slane %v5896, 1
    %v5904 = vrot.slane %v5897, 1
    %v5905 = vrot.slane %v5898, 1
    %v5906 = vrot.slane %v5899, 1
    %v5907 = vrot.slane %v5900, 1
    %v5908 = vsel %vm455, %v5906, %v5907
    %v5909 = vsel %vm455, %v5905, %v5906
    %v5910 = vsel %vm455, %v5904, %v5905
    %v5911 = vsel %vm455, %v5903, %v5904
    %v5912 = vsel %vm455, %v5902, %v5903
    %v5913 = vsel %vm455, %v5901, %v5902
    %v5914 = vsel %vm455, %v5907, %v5901
    %vm5915 = vcmp.lt.s32.totalorder %v52, 21
    %vm5916 = vcmp.lt.s32.totalorder %v53, 21
    %vm5917 = vcmp.lt.s32.totalorder %v54, 21
    %vm5918 = vcmp.lt.s32.totalorder %v55, 21
    %vm5919 = vcmp.lt.s32.totalorder %v56, 21
    %vm5920 = vcmp.lt.s32.totalorder %v57, 21
    %vm5921 = vcmp.lt.s32.totalorder %v58, 21
    %vm5922 = vmand %vm59, %vm5915
    %vm5923 = vmand %vm60, %vm5916
    %vm5924 = vmand %vm61, %vm5917
    %vm5925 = vmand %vm62, %vm5918
    %vm5926 = vmand %vm63, %vm5919
    %vm5927 = vmand %vm64, %vm5920
    %vm5928 = vmand %vm65, %vm5921
    %vm5929 = vcmp.lt.s32.totalorder %v52, 45
    %vm5930 = vcmp.lt.s32.totalorder %v53, 45
    %vm5931 = vcmp.lt.s32.totalorder %v54, 45
    %vm5932 = vcmp.lt.s32.totalorder %v55, 45
    %vm5933 = vcmp.lt.s32.totalorder %v56, 45
    %vm5934 = vcmp.lt.s32.totalorder %v57, 45
    %vm5935 = vcmp.lt.s32.totalorder %v58, 45
    %vm5936 = vmand %vm80, %vm5929
    %vm5937 = vmand %vm81, %vm5930
    %vm5938 = vmand %vm82, %vm5931
    %vm5939 = vmand %vm83, %vm5932
    %vm5940 = vmand %vm84, %vm5933
    %vm5941 = vmand %vm85, %vm5934
    %vm5942 = vmand %vm86, %vm5935
    %vm5943 = vmor %vm5922, %vm5936
    %vm5944 = vmor %vm5923, %vm5937
    %vm5945 = vmor %vm5924, %vm5938
    %vm5946 = vmor %vm5925, %vm5939
    %vm5947 = vmor %vm5926, %vm5940
    %vm5948 = vmor %vm5927, %vm5941
    %vm5949 = vmor %vm5928, %vm5942
    %v5950 = vsel %vm5943, 1, 0
    %v5951 = vsel %vm5944, 1, 0
    %v5952 = vsel %vm5945, 1, 0
    %v5953 = vsel %vm5946, 1, 0
    %v5954 = vsel %vm5947, 1, 0
    %v5955 = vsel %vm5948, 1, 0
    %v5956 = vsel %vm5949, 1, 0
    %v5957 = vcvt.s32.f32 %v5950
    %v5958 = vcvt.s32.f32 %v5951
    %v5959 = vcvt.s32.f32 %v5952
    %v5960 = vcvt.s32.f32 %v5953
    %v5961 = vcvt.s32.f32 %v5954
    %v5962 = vcvt.s32.f32 %v5955
    %v5963 = vcvt.s32.f32 %v5956
    %v5964 = vadd.f32 %v5894, %v5913
    %v5965 = vadd.f32 %v5895, %v5912
    %v5966 = vadd.f32 %v5896, %v5911
    %v5967 = vadd.f32 %v5897, %v5910
    %v5968 = vadd.f32 %v5898, %v5909
    %v5969 = vadd.f32 %v5899, %v5908
    %v5970 = vadd.f32 %v5900, %v5914
    %v5971 = vmul.f32 %v5964, 0.5
    %v5972 = vmul.f32 %v5965, 0.5
    %v5973 = vmul.f32 %v5966, 0.5
    %v5974 = vmul.f32 %v5967, 0.5
    %v5975 = vmul.f32 %v5968, 0.5
    %v5976 = vmul.f32 %v5969, 0.5
    %v5977 = vmul.f32 %v5970, 0.5
    %v5978 = vmul.f32 %v5971, %v5957
    %v5979 = vmul.f32 %v5972, %v5958
    %v5980 = vmul.f32 %v5973, %v5959
    %v5981 = vmul.f32 %v5974, %v5960
    %v5982 = vmul.f32 %v5975, %v5961
    %v5983 = vmul.f32 %v5976, %v5962
    %v5984 = vmul.f32 %v5977, %v5963
    %v5985 = vld [vmem:[#allocation4 + $0x18] sm:$0x1]
    %v5986 = vld [vmem:[#allocation4 + $0x19] sm:$0x1]
    %v5987 = vmul.f32 %v5978, %v5957
    %v5988 = vmul.f32 %v5979, %v5958
    %v5989 = vmul.f32 %v5980, %v5959
    %v5990 = vmul.f32 %v5981, %v5960
    %v5991 = vmul.f32 %v5982, %v5961
    %v5992 = vmul.f32 %v5983, %v5962
    %v5993 = vmul.f32 %v5984, %v5963
    %v5994 = vsel %vm1982, %v5987, 0.0
    %v5995 = vsel %vm1982, %v5988, 0.0
    %v5996 = vadd.f32 %v5994, %v5995
    %v5997 = vsel %vm1982, %v5989, 0.0
    %v5998 = vadd.f32 %v5996, %v5997
    %v5999 = vsel %vm1982, %v5990, 0.0
    %v6000 = vadd.f32 %v5998, %v5999
    %v6001 = vsel %vm1982, %v5991, 0.0
    %v6002 = vadd.f32 %v6000, %v6001
    %v6003 = vsel %vm1982, %v5992, 0.0
    %v6004 = vadd.f32 %v6002, %v6003
    %v6005 = vsel %vm1982, %v5993, 0.0
    %v6006 = vadd.f32 %v6004, %v6005
    %v6007 = vrot.slane %v6006, 4
    %v6008 = vadd.f32 %v6006, %v6007
    %v6009 = vrot.slane %v6008, 2
    %v6010 = vadd.f32 %v6008, %v6009
    %v6011 = vrot.slane %v6010, 1
    %v6012 = vadd.f32 %v6010, %v6011
    %v6013 = vmul.f32 %v6012, 0.03846154
    %v6014 = vsub.f32 %v5978, %v6013
    %v6015 = vsub.f32 %v5979, %v6013
    %v6016 = vsub.f32 %v5980, %v6013
    %v6017 = vsub.f32 %v5981, %v6013
    %v6018 = vsub.f32 %v5982, %v6013
    %v6019 = vsub.f32 %v5983, %v6013
    %v6020 = vsub.f32 %v5984, %v6013
    %v6021 = vmul.f32 %v6014, %v5957
    %v6022 = vmul.f32 %v6015, %v5958
    %v6023 = vmul.f32 %v6016, %v5959
    %v6024 = vmul.f32 %v6017, %v5960
    %v6025 = vmul.f32 %v6018, %v5961
    %v6026 = vmul.f32 %v6019, %v5962
    %v6027 = vmul.f32 %v6020, %v5963
    %v6028 = vmul.f32 %v6021, %v6021
    %v6029 = vmul.f32 %v6022, %v6022
    %v6030 = vmul.f32 %v6023, %v6023
    %v6031 = vmul.f32 %v6024, %v6024
    %v6032 = vmul.f32 %v6025, %v6025
    %v6033 = vmul.f32 %v6026, %v6026
    %v6034 = vmul.f32 %v6027, %v6027
    %v6035 = vsel %vm1982, %v6028, 0.0
    %v6036 = vsel %vm1982, %v6029, 0.0
    %v6037 = vadd.f32 %v6035, %v6036
    %v6038 = vsel %vm1982, %v6030, 0.0
    %v6039 = vadd.f32 %v6037, %v6038
    %v6040 = vsel %vm1982, %v6031, 0.0
    %v6041 = vadd.f32 %v6039, %v6040
    %v6042 = vsel %vm1982, %v6032, 0.0
    %v6043 = vadd.f32 %v6041, %v6042
    %v6044 = vsel %vm1982, %v6033, 0.0
    %v6045 = vadd.f32 %v6043, %v6044
    %v6046 = vsel %vm1982, %v6034, 0.0
    %v6047 = vadd.f32 %v6045, %v6046
    %v6048 = vrot.slane %v6047, 4
    %v6049 = vadd.f32 %v6047, %v6048
    %v6050 = vrot.slane %v6049, 2
    %v6051 = vadd.f32 %v6049, %v6050
    %v6052 = vrot.slane %v6051, 1
    %v6053 = vadd.f32 %v6051, %v6052
    %v6054 = vmul.f32 %v6053, 0.03846154
    %v6055 = vadd.f32 %v6054, 1e-05
    %v6056 = vrsqrt.pop %v6055
    %v6057 = vmul.f32 %v6056, %v6055
    %v6058 = vmul.f32 %v6057, %v6056
    %v6059 = vmul.f32 0.5, %v6058
    %v6060 = vsub.f32 1.5, %v6059
    %v6061 = vmul.f32 %v6056, %v6060
    %vm6062 = vweird.f32 %v6055
    %vm6063 = vweird.f32 %v6056
    %vm6064 = vmor %vm6062, %vm6063
    %v6065 = vsel %vm6064, %v6056, %v6061
    %v6066 = vmul.f32 %v6065, %v5985
    %v6067 = vperm.slane %v6066, 0
    %v6068 = vmul.f32 %v6022, %v6067
    %v6069 = vmul.f32 %v6023, %v6067
    %v6070 = vmul.f32 %v6024, %v6067
    %v6071 = vmul.f32 %v6025, %v6067
    %v6072 = vmul.f32 %v6026, %v6067
    %v6073 = vmul.f32 %v6027, %v6067
    %v6074 = vperm.slane %v5986, 0
    %v6075 = vadd.f32 %v6068, %v6074
    %v6076 = vadd.f32 %v6069, %v6074
    %v6077 = vadd.f32 %v6070, %v6074
    %v6078 = vadd.f32 %v6071, %v6074
    %v6079 = vadd.f32 %v6072, %v6074
    %v6080 = vadd.f32 %v6073, %v6074
    %v6081 = vmul.f32 %v6075, %v5958
    %v6082 = vmul.f32 %v6076, %v5959
    %v6083 = vmul.f32 %v6077, %v5960
    %v6084 = vmul.f32 %v6078, %v5961
    %v6085 = vmul.f32 %v6079, %v5962
    %v6086 = vmul.f32 %v6080, %v5963
    %v6087 = vrot.slane %v5978, 5
    %v6088 = vrot.slane %v5979, 5
    %v6089 = vrot.slane %v5980, 5
    %v6090 = vrot.slane %v5981, 5
    %v6091 = vrot.slane %v5982, 5
    %v6092 = vrot.slane %v5983, 5
    %v6093 = vrot.slane %v5984, 5
    %v6094 = vsel %vm262, %v6092, %v6093
    %v6095 = vsel %vm262, %v6091, %v6092
    %v6096 = vsel %vm262, %v6090, %v6091
    %v6097 = vsel %vm262, %v6089, %v6090
    %v6098 = vsel %vm262, %v6088, %v6089
    %v6099 = vsel %vm262, %v6087, %v6088
    %v6100 = vsel %vm262, %v6093, %v6087
    %v6101 = vld [vmem:[#allocation2 + $0x970] sm:$0xff]
    %v6102 = vld [vmem:[#allocation2 + $0x978] sm:$0xff]
    %v6103 = vld [vmem:[#allocation2 + $0x980] sm:$0xff]
    %v6104 = vld [vmem:[#allocation2 + $0x988] sm:$0xff]
    %v6105 = vld [vmem:[#allocation2 + $0x990] sm:$0xff]
    %v6106 = vld [vmem:[#allocation2 + $0x998] sm:$0xff]
    %v6107 = vld [vmem:[#allocation2 + $0x9a0] sm:$0xff]
    %v6108 = vld [vmem:[#allocation2 + $0x9a8] sm:$0xff]
    %v6109 = vrot.slane %v5978, 6
    %v6110 = vrot.slane %v5979, 6
    %v6111 = vrot.slane %v5980, 6
    %v6112 = vrot.slane %v5981, 6
    %v6113 = vrot.slane %v5982, 6
    %v6114 = vrot.slane %v5983, 6
    %v6115 = vrot.slane %v5984, 6
    %v6116 = vsel %vm317, %v6114, %v6115
    %v6117 = vsel %vm317, %v6113, %v6114
    %v6118 = vsel %vm317, %v6112, %v6113
    %v6119 = vsel %vm317, %v6111, %v6112
    %v6120 = vsel %vm317, %v6110, %v6111
    %v6121 = vsel %vm317, %v6109, %v6110
    %v6122 = vsel %vm317, %v6115, %v6109
    %v6123 = vld [vmem:[#allocation2 + $0x9b0] sm:$0xff]
    %v6124 = vld [vmem:[#allocation2 + $0x9b8] sm:$0xff]
    %v6125 = vld [vmem:[#allocation2 + $0x9c0] sm:$0xff]
    %v6126 = vld [vmem:[#allocation2 + $0x9c8] sm:$0xff]
    %v6127 = vld [vmem:[#allocation2 + $0x9d0] sm:$0xff]
    %v6128 = vld [vmem:[#allocation2 + $0x9d8] sm:$0xff]
    %v6129 = vld [vmem:[#allocation2 + $0x9e0] sm:$0xff]
    %v6130 = vld [vmem:[#allocation2 + $0x9e8] sm:$0xff]
    %v6132 = vsel %vm1982, %v6122, 0
    %v6135 = vsel %vm1982, %v6121, 0
    %v6138 = vsel %vm1982, %v6120, 0
    %v6141 = vsel %vm1982, %v6119, 0
    %v6144 = vsel %vm1982, %v6118, 0
    %v6147 = vsel %vm1982, %v6117, 0
    %v6150 = vsel %vm1982, %v6116, 0
    %6152 = vmatpush.msra.mxu0 0.0
    %6153 = vmatpush.msra.mxu0 0.0
    %6154 = vmatpush.msra.mxu0 0.0
    %6155 = vmatpush.msra.mxu0 0.0
    %6156 = vmatpush.msra.mxu0 0.0
    %6157 = vmatpush.msra.mxu0 0.0
    %6158 = vmatpush.msra.mxu0 0.0
    %6159 = vmatpush.msra.mxu0 0.0
    %6160 = vmatpush.msra.mxu0 %v6130
    %6161 = vmatpush.msra.mxu0 %v6129
    %6162 = vmatpush.msra.mxu0 %v6128
    %6163 = vmatpush.msra.mxu0 %v6127
    %6164 = vmatpush.msra.mxu0 %v6126
    %6165 = vmatpush.msra.mxu0 %v6125
    %6166 = vmatpush.msra.mxu0 %v6124
    %6167 = vmatpush.msra.mxu0 %v6123
    %6168 = vmatmul.f32.gmra.mxu0 %v6132
    %v6169 = vpop.f32.mrf.mxu0
    %v6170 = vadd.f32 0.0, %v6169
    %6171 = vmatmul.f32.gmra.mxu0 %v6135
    %v6172 = vpop.f32.mrf.mxu0
    %v6173 = vadd.f32 0.0, %v6172
    %6174 = vmatmul.f32.gmra.mxu0 %v6138
    %v6175 = vpop.f32.mrf.mxu0
    %v6176 = vadd.f32 0.0, %v6175
    %6177 = vmatmul.f32.gmra.mxu0 %v6141
    %v6178 = vpop.f32.mrf.mxu0
    %v6179 = vadd.f32 0.0, %v6178
    %6180 = vmatmul.f32.gmra.mxu0 %v6144
    %v6181 = vpop.f32.mrf.mxu0
    %v6182 = vadd.f32 0.0, %v6181
    %6183 = vmatmul.f32.gmra.mxu0 %v6147
    %v6184 = vpop.f32.mrf.mxu0
    %v6185 = vadd.f32 0.0, %v6184
    %6186 = vmatmul.f32.gmra.mxu0 %v6150
    %v6187 = vpop.f32.mrf.mxu0
    %v6188 = vadd.f32 0.0, %v6187
    %6189 = vdwg.mxu0
    %v6191 = vsel %vm1982, %v6100, 0
    %v6194 = vsel %vm1982, %v6099, 0
    %v6197 = vsel %vm1982, %v6098, 0
    %v6200 = vsel %vm1982, %v6097, 0
    %v6203 = vsel %vm1982, %v6096, 0
    %v6206 = vsel %vm1982, %v6095, 0
    %v6209 = vsel %vm1982, %v6094, 0
    %6211 = vmatpush.msra.mxu0 0.0
    %6212 = vmatpush.msra.mxu0 0.0
    %6213 = vmatpush.msra.mxu0 0.0
    %6214 = vmatpush.msra.mxu0 0.0
    %6215 = vmatpush.msra.mxu0 0.0
    %6216 = vmatpush.msra.mxu0 0.0
    %6217 = vmatpush.msra.mxu0 0.0
    %6218 = vmatpush.msra.mxu0 0.0
    %6219 = vmatpush.msra.mxu0 %v6108
    %6220 = vmatpush.msra.mxu0 %v6107
    %6221 = vmatpush.msra.mxu0 %v6106
    %6222 = vmatpush.msra.mxu0 %v6105
    %6223 = vmatpush.msra.mxu0 %v6104
    %6224 = vmatpush.msra.mxu0 %v6103
    %6225 = vmatpush.msra.mxu0 %v6102
    %6226 = vmatpush.msra.mxu0 %v6101
    %6227 = vmatmul.f32.gmra.mxu0 %v6191
    %v6228 = vpop.f32.mrf.mxu0
    %v6229 = vadd.f32 %v6170, %v6228
    %6230 = vmatmul.f32.gmra.mxu0 %v6194
    %v6231 = vpop.f32.mrf.mxu0
    %v6232 = vadd.f32 %v6173, %v6231
    %6233 = vmatmul.f32.gmra.mxu0 %v6197
    %v6234 = vpop.f32.mrf.mxu0
    %v6235 = vadd.f32 %v6176, %v6234
    %6236 = vmatmul.f32.gmra.mxu0 %v6200
    %v6237 = vpop.f32.mrf.mxu0
    %v6238 = vadd.f32 %v6179, %v6237
    %6239 = vmatmul.f32.gmra.mxu0 %v6203
    %v6240 = vpop.f32.mrf.mxu0
    %v6241 = vadd.f32 %v6182, %v6240
    %6242 = vmatmul.f32.gmra.mxu0 %v6206
    %v6243 = vpop.f32.mrf.mxu0
    %v6244 = vadd.f32 %v6185, %v6243
    %6245 = vmatmul.f32.gmra.mxu0 %v6209
    %v6246 = vpop.f32.mrf.mxu0
    %v6247 = vadd.f32 %v6188, %v6246
    %6248 = vdwg.mxu0
    %v6249 = vrot.slane %v5978, 7
    %v6250 = vrot.slane %v5979, 7
    %v6251 = vrot.slane %v5980, 7
    %v6252 = vrot.slane %v5981, 7
    %v6253 = vrot.slane %v5982, 7
    %v6254 = vrot.slane %v5983, 7
    %v6255 = vrot.slane %v5984, 7
    %v6256 = vsel %vm379, %v6254, %v6255
    %v6257 = vsel %vm379, %v6253, %v6254
    %v6258 = vsel %vm379, %v6252, %v6253
    %v6259 = vsel %vm379, %v6251, %v6252
    %v6260 = vsel %vm379, %v6250, %v6251
    %v6261 = vsel %vm379, %v6249, %v6250
    %v6262 = vsel %vm379, %v6255, %v6249
    %v6263 = vld [vmem:[#allocation2 + $0x9f0] sm:$0xff]
    %v6264 = vld [vmem:[#allocation2 + $0x9f8] sm:$0xff]
    %v6265 = vld [vmem:[#allocation2 + $0xa00] sm:$0xff]
    %v6266 = vld [vmem:[#allocation2 + $0xa08] sm:$0xff]
    %v6267 = vld [vmem:[#allocation2 + $0xa10] sm:$0xff]
    %v6268 = vld [vmem:[#allocation2 + $0xa18] sm:$0xff]
    %v6269 = vld [vmem:[#allocation2 + $0xa20] sm:$0xff]
    %v6270 = vld [vmem:[#allocation2 + $0xa28] sm:$0xff]
    %v6272 = vsel %vm1982, %v6262, 0
    %v6275 = vsel %vm1982, %v6261, 0
    %v6278 = vsel %vm1982, %v6260, 0
    %v6281 = vsel %vm1982, %v6259, 0
    %v6284 = vsel %vm1982, %v6258, 0
    %v6287 = vsel %vm1982, %v6257, 0
    %v6290 = vsel %vm1982, %v6256, 0
    %6292 = vmatpush.msra.mxu0 0.0
    %6293 = vmatpush.msra.mxu0 0.0
    %6294 = vmatpush.msra.mxu0 0.0
    %6295 = vmatpush.msra.mxu0 0.0
    %6296 = vmatpush.msra.mxu0 0.0
    %6297 = vmatpush.msra.mxu0 0.0
    %6298 = vmatpush.msra.mxu0 0.0
    %6299 = vmatpush.msra.mxu0 0.0
    %6300 = vmatpush.msra.mxu0 %v6270
    %6301 = vmatpush.msra.mxu0 %v6269
    %6302 = vmatpush.msra.mxu0 %v6268
    %6303 = vmatpush.msra.mxu0 %v6267
    %6304 = vmatpush.msra.mxu0 %v6266
    %6305 = vmatpush.msra.mxu0 %v6265
    %6306 = vmatpush.msra.mxu0 %v6264
    %6307 = vmatpush.msra.mxu0 %v6263
    %6308 = vmatmul.f32.gmra.mxu0 %v6272
    %v6309 = vpop.f32.mrf.mxu0
    %v6310 = vadd.f32 0.0, %v6309
    %6311 = vmatmul.f32.gmra.mxu0 %v6275
    %v6312 = vpop.f32.mrf.mxu0
    %v6313 = vadd.f32 0.0, %v6312
    %6314 = vmatmul.f32.gmra.mxu0 %v6278
    %v6315 = vpop.f32.mrf.mxu0
    %v6316 = vadd.f32 0.0, %v6315
    %6317 = vmatmul.f32.gmra.mxu0 %v6281
    %v6318 = vpop.f32.mrf.mxu0
    %v6319 = vadd.f32 0.0, %v6318
    %6320 = vmatmul.f32.gmra.mxu0 %v6284
    %v6321 = vpop.f32.mrf.mxu0
    %v6322 = vadd.f32 0.0, %v6321
    %6323 = vmatmul.f32.gmra.mxu0 %v6287
    %v6324 = vpop.f32.mrf.mxu0
    %v6325 = vadd.f32 0.0, %v6324
    %6326 = vmatmul.f32.gmra.mxu0 %v6290
    %v6327 = vpop.f32.mrf.mxu0
    %v6328 = vadd.f32 0.0, %v6327
    %6329 = vdwg.mxu0
    %v6330 = vadd.f32 %v6229, %v6310
    %v6331 = vadd.f32 %v6232, %v6313
    %v6332 = vadd.f32 %v6235, %v6316
    %v6333 = vadd.f32 %v6238, %v6319
    %v6334 = vadd.f32 %v6241, %v6322
    %v6335 = vadd.f32 %v6244, %v6325
    %v6336 = vadd.f32 %v6247, %v6328
    %v6337 = vld [vmem:[#allocation2 + $0xa30] sm:$0xff]
    %v6338 = vld [vmem:[#allocation2 + $0xa38] sm:$0xff]
    %v6339 = vld [vmem:[#allocation2 + $0xa40] sm:$0xff]
    %v6340 = vld [vmem:[#allocation2 + $0xa48] sm:$0xff]
    %v6341 = vld [vmem:[#allocation2 + $0xa50] sm:$0xff]
    %v6342 = vld [vmem:[#allocation2 + $0xa58] sm:$0xff]
    %v6343 = vld [vmem:[#allocation2 + $0xa60] sm:$0xff]
    %v6344 = vld [vmem:[#allocation2 + $0xa68] sm:$0xff]
    %v6346 = vsel %vm1982, %v5978, 0
    %v6349 = vsel %vm1982, %v5979, 0
    %v6352 = vsel %vm1982, %v5980, 0
    %v6355 = vsel %vm1982, %v5981, 0
    %v6358 = vsel %vm1982, %v5982, 0
    %v6361 = vsel %vm1982, %v5983, 0
    %v6364 = vsel %vm1982, %v5984, 0
    %6366 = vmatpush.msra.mxu0 0.0
    %6367 = vmatpush.msra.mxu0 0.0
    %6368 = vmatpush.msra.mxu0 0.0
    %6369 = vmatpush.msra.mxu0 0.0
    %6370 = vmatpush.msra.mxu0 0.0
    %6371 = vmatpush.msra.mxu0 0.0
    %6372 = vmatpush.msra.mxu0 0.0
    %6373 = vmatpush.msra.mxu0 0.0
    %6374 = vmatpush.msra.mxu0 %v6344
    %6375 = vmatpush.msra.mxu0 %v6343
    %6376 = vmatpush.msra.mxu0 %v6342
    %6377 = vmatpush.msra.mxu0 %v6341
    %6378 = vmatpush.msra.mxu0 %v6340
    %6379 = vmatpush.msra.mxu0 %v6339
    %6380 = vmatpush.msra.mxu0 %v6338
    %6381 = vmatpush.msra.mxu0 %v6337
    %6382 = vmatmul.f32.gmra.mxu0 %v6346
    %v6383 = vpop.f32.mrf.mxu0
    %v6384 = vadd.f32 0.0, %v6383
    %6385 = vmatmul.f32.gmra.mxu0 %v6349
    %v6386 = vpop.f32.mrf.mxu0
    %v6387 = vadd.f32 0.0, %v6386
    %6388 = vmatmul.f32.gmra.mxu0 %v6352
    %v6389 = vpop.f32.mrf.mxu0
    %v6390 = vadd.f32 0.0, %v6389
    %6391 = vmatmul.f32.gmra.mxu0 %v6355
    %v6392 = vpop.f32.mrf.mxu0
    %v6393 = vadd.f32 0.0, %v6392
    %6394 = vmatmul.f32.gmra.mxu0 %v6358
    %v6395 = vpop.f32.mrf.mxu0
    %v6396 = vadd.f32 0.0, %v6395
    %6397 = vmatmul.f32.gmra.mxu0 %v6361
    %v6398 = vpop.f32.mrf.mxu0
    %v6399 = vadd.f32 0.0, %v6398
    %6400 = vmatmul.f32.gmra.mxu0 %v6364
    %v6401 = vpop.f32.mrf.mxu0
    %v6402 = vadd.f32 0.0, %v6401
    %6403 = vdwg.mxu0
    %v6404 = vadd.f32 %v6330, %v6384
    %v6405 = vadd.f32 %v6331, %v6387
    %v6406 = vadd.f32 %v6332, %v6390
    %v6407 = vadd.f32 %v6333, %v6393
    %v6408 = vadd.f32 %v6334, %v6396
    %v6409 = vadd.f32 %v6335, %v6399
    %v6410 = vadd.f32 %v6336, %v6402
    %v6411 = vrot.slane %v5978, 1
    %v6412 = vrot.slane %v5979, 1
    %v6413 = vrot.slane %v5980, 1
    %v6414 = vrot.slane %v5981, 1
    %v6415 = vrot.slane %v5982, 1
    %v6416 = vrot.slane %v5983, 1
    %v6417 = vrot.slane %v5984, 1
    %v6418 = vsel %vm455, %v6416, %v6417
    %v6419 = vsel %vm455, %v6415, %v6416
    %v6420 = vsel %vm455, %v6414, %v6415
    %v6421 = vsel %vm455, %v6413, %v6414
    %v6422 = vsel %vm455, %v6412, %v6413
    %v6423 = vsel %vm455, %v6411, %v6412
    %v6424 = vsel %vm455, %v6417, %v6411
    %v6425 = vld [vmem:[#allocation2 + $0xa70] sm:$0xff]
    %v6426 = vld [vmem:[#allocation2 + $0xa78] sm:$0xff]
    %v6427 = vld [vmem:[#allocation2 + $0xa80] sm:$0xff]
    %v6428 = vld [vmem:[#allocation2 + $0xa88] sm:$0xff]
    %v6429 = vld [vmem:[#allocation2 + $0xa90] sm:$0xff]
    %v6430 = vld [vmem:[#allocation2 + $0xa98] sm:$0xff]
    %v6431 = vld [vmem:[#allocation2 + $0xaa0] sm:$0xff]
    %v6432 = vld [vmem:[#allocation2 + $0xaa8] sm:$0xff]
    %v6434 = vsel %vm1982, %v6423, 0
    %v6437 = vsel %vm1982, %v6422, 0
    %v6440 = vsel %vm1982, %v6421, 0
    %v6443 = vsel %vm1982, %v6420, 0
    %v6446 = vsel %vm1982, %v6419, 0
    %v6449 = vsel %vm1982, %v6418, 0
    %v6452 = vsel %vm1982, %v6424, 0
    %6454 = vmatpush.msra.mxu0 0.0
    %6455 = vmatpush.msra.mxu0 0.0
    %6456 = vmatpush.msra.mxu0 0.0
    %6457 = vmatpush.msra.mxu0 0.0
    %6458 = vmatpush.msra.mxu0 0.0
    %6459 = vmatpush.msra.mxu0 0.0
    %6460 = vmatpush.msra.mxu0 0.0
    %6461 = vmatpush.msra.mxu0 0.0
    %6462 = vmatpush.msra.mxu0 %v6432
    %6463 = vmatpush.msra.mxu0 %v6431
    %6464 = vmatpush.msra.mxu0 %v6430
    %6465 = vmatpush.msra.mxu0 %v6429
    %6466 = vmatpush.msra.mxu0 %v6428
    %6467 = vmatpush.msra.mxu0 %v6427
    %6468 = vmatpush.msra.mxu0 %v6426
    %6469 = vmatpush.msra.mxu0 %v6425
    %6470 = vmatmul.f32.gmra.mxu0 %v6434
    %v6471 = vpop.f32.mrf.mxu0
    %v6472 = vadd.f32 0.0, %v6471
    %6473 = vmatmul.f32.gmra.mxu0 %v6437
    %v6474 = vpop.f32.mrf.mxu0
    %v6475 = vadd.f32 0.0, %v6474
    %6476 = vmatmul.f32.gmra.mxu0 %v6440
    %v6477 = vpop.f32.mrf.mxu0
    %v6478 = vadd.f32 0.0, %v6477
    %6479 = vmatmul.f32.gmra.mxu0 %v6443
    %v6480 = vpop.f32.mrf.mxu0
    %v6481 = vadd.f32 0.0, %v6480
    %6482 = vmatmul.f32.gmra.mxu0 %v6446
    %v6483 = vpop.f32.mrf.mxu0
    %v6484 = vadd.f32 0.0, %v6483
    %6485 = vmatmul.f32.gmra.mxu0 %v6449
    %v6486 = vpop.f32.mrf.mxu0
    %v6487 = vadd.f32 0.0, %v6486
    %6488 = vmatmul.f32.gmra.mxu0 %v6452
    %v6489 = vpop.f32.mrf.mxu0
    %v6490 = vadd.f32 0.0, %v6489
    %6491 = vdwg.mxu0
    %v6492 = vadd.f32 %v6404, %v6472
    %v6493 = vadd.f32 %v6405, %v6475
    %v6494 = vadd.f32 %v6406, %v6478
    %v6495 = vadd.f32 %v6407, %v6481
    %v6496 = vadd.f32 %v6408, %v6484
    %v6497 = vadd.f32 %v6409, %v6487
    %v6498 = vadd.f32 %v6410, %v6490
    %v6499 = vrot.slane %v5978, 2
    %v6500 = vrot.slane %v5979, 2
    %v6501 = vrot.slane %v5980, 2
    %v6502 = vrot.slane %v5981, 2
    %v6503 = vrot.slane %v5982, 2
    %v6504 = vrot.slane %v5983, 2
    %v6505 = vrot.slane %v5984, 2
    %v6506 = vsel %vm517, %v6504, %v6505
    %v6507 = vsel %vm517, %v6503, %v6504
    %v6508 = vsel %vm517, %v6502, %v6503
    %v6509 = vsel %vm517, %v6501, %v6502
    %v6510 = vsel %vm517, %v6500, %v6501
    %v6511 = vsel %vm517, %v6499, %v6500
    %v6512 = vsel %vm517, %v6505, %v6499
    %v6513 = vld [vmem:[#allocation2 + $0xab0] sm:$0xff]
    %v6514 = vld [vmem:[#allocation2 + $0xab8] sm:$0xff]
    %v6515 = vld [vmem:[#allocation2 + $0xac0] sm:$0xff]
    %v6516 = vld [vmem:[#allocation2 + $0xac8] sm:$0xff]
    %v6517 = vld [vmem:[#allocation2 + $0xad0] sm:$0xff]
    %v6518 = vld [vmem:[#allocation2 + $0xad8] sm:$0xff]
    %v6519 = vld [vmem:[#allocation2 + $0xae0] sm:$0xff]
    %v6520 = vld [vmem:[#allocation2 + $0xae8] sm:$0xff]
    %v6522 = vsel %vm1982, %v6511, 0
    %v6525 = vsel %vm1982, %v6510, 0
    %v6528 = vsel %vm1982, %v6509, 0
    %v6531 = vsel %vm1982, %v6508, 0
    %v6534 = vsel %vm1982, %v6507, 0
    %v6537 = vsel %vm1982, %v6506, 0
    %v6540 = vsel %vm1982, %v6512, 0
    %6542 = vmatpush.msra.mxu0 0.0
    %6543 = vmatpush.msra.mxu0 0.0
    %6544 = vmatpush.msra.mxu0 0.0
    %6545 = vmatpush.msra.mxu0 0.0
    %6546 = vmatpush.msra.mxu0 0.0
    %6547 = vmatpush.msra.mxu0 0.0
    %6548 = vmatpush.msra.mxu0 0.0
    %6549 = vmatpush.msra.mxu0 0.0
    %6550 = vmatpush.msra.mxu0 %v6520
    %6551 = vmatpush.msra.mxu0 %v6519
    %6552 = vmatpush.msra.mxu0 %v6518
    %6553 = vmatpush.msra.mxu0 %v6517
    %6554 = vmatpush.msra.mxu0 %v6516
    %6555 = vmatpush.msra.mxu0 %v6515
    %6556 = vmatpush.msra.mxu0 %v6514
    %6557 = vmatpush.msra.mxu0 %v6513
    %6558 = vmatmul.f32.gmra.mxu0 %v6522
    %v6559 = vpop.f32.mrf.mxu0
    %v6560 = vadd.f32 0.0, %v6559
    %6561 = vmatmul.f32.gmra.mxu0 %v6525
    %v6562 = vpop.f32.mrf.mxu0
    %v6563 = vadd.f32 0.0, %v6562
    %6564 = vmatmul.f32.gmra.mxu0 %v6528
    %v6565 = vpop.f32.mrf.mxu0
    %v6566 = vadd.f32 0.0, %v6565
    %6567 = vmatmul.f32.gmra.mxu0 %v6531
    %v6568 = vpop.f32.mrf.mxu0
    %v6569 = vadd.f32 0.0, %v6568
    %6570 = vmatmul.f32.gmra.mxu0 %v6534
    %v6571 = vpop.f32.mrf.mxu0
    %v6572 = vadd.f32 0.0, %v6571
    %6573 = vmatmul.f32.gmra.mxu0 %v6537
    %v6574 = vpop.f32.mrf.mxu0
    %v6575 = vadd.f32 0.0, %v6574
    %6576 = vmatmul.f32.gmra.mxu0 %v6540
    %v6577 = vpop.f32.mrf.mxu0
    %v6578 = vadd.f32 0.0, %v6577
    %6579 = vdwg.mxu0
    %v6580 = vadd.f32 %v6492, %v6560
    %v6581 = vadd.f32 %v6493, %v6563
    %v6582 = vadd.f32 %v6494, %v6566
    %v6583 = vadd.f32 %v6495, %v6569
    %v6584 = vadd.f32 %v6496, %v6572
    %v6585 = vadd.f32 %v6497, %v6575
    %v6586 = vadd.f32 %v6498, %v6578
    %v6587 = vrot.slane %v5978, 3
    %v6588 = vrot.slane %v5979, 3
    %v6589 = vrot.slane %v5980, 3
    %v6590 = vrot.slane %v5981, 3
    %v6591 = vrot.slane %v5982, 3
    %v6592 = vrot.slane %v5983, 3
    %v6593 = vrot.slane %v5984, 3
    %v6594 = vsel %vm579, %v6592, %v6593
    %v6595 = vsel %vm579, %v6591, %v6592
    %v6596 = vsel %vm579, %v6590, %v6591
    %v6597 = vsel %vm579, %v6589, %v6590
    %v6598 = vsel %vm579, %v6588, %v6589
    %v6599 = vsel %vm579, %v6587, %v6588
    %v6600 = vsel %vm579, %v6593, %v6587
    %v6601 = vld [vmem:[#allocation2 + $0xaf0] sm:$0xff]
    %v6602 = vld [vmem:[#allocation2 + $0xaf8] sm:$0xff]
    %v6603 = vld [vmem:[#allocation2 + $0xb00] sm:$0xff]
    %v6604 = vld [vmem:[#allocation2 + $0xb08] sm:$0xff]
    %v6605 = vld [vmem:[#allocation2 + $0xb10] sm:$0xff]
    %v6606 = vld [vmem:[#allocation2 + $0xb18] sm:$0xff]
    %v6607 = vld [vmem:[#allocation2 + $0xb20] sm:$0xff]
    %v6608 = vld [vmem:[#allocation2 + $0xb28] sm:$0xff]
    %v6610 = vsel %vm1982, %v6599, 0
    %v6613 = vsel %vm1982, %v6598, 0
    %v6616 = vsel %vm1982, %v6597, 0
    %v6619 = vsel %vm1982, %v6596, 0
    %v6622 = vsel %vm1982, %v6595, 0
    %v6625 = vsel %vm1982, %v6594, 0
    %v6628 = vsel %vm1982, %v6600, 0
    %6630 = vmatpush.msra.mxu0 0.0
    %6631 = vmatpush.msra.mxu0 0.0
    %6632 = vmatpush.msra.mxu0 0.0
    %6633 = vmatpush.msra.mxu0 0.0
    %6634 = vmatpush.msra.mxu0 0.0
    %6635 = vmatpush.msra.mxu0 0.0
    %6636 = vmatpush.msra.mxu0 0.0
    %6637 = vmatpush.msra.mxu0 0.0
    %6638 = vmatpush.msra.mxu0 %v6608
    %6639 = vmatpush.msra.mxu0 %v6607
    %6640 = vmatpush.msra.mxu0 %v6606
    %6641 = vmatpush.msra.mxu0 %v6605
    %6642 = vmatpush.msra.mxu0 %v6604
    %6643 = vmatpush.msra.mxu0 %v6603
    %6644 = vmatpush.msra.mxu0 %v6602
    %6645 = vmatpush.msra.mxu0 %v6601
    %6646 = vmatmul.f32.gmra.mxu0 %v6610
    %v6647 = vpop.f32.mrf.mxu0
    %v6648 = vadd.f32 0.0, %v6647
    %6649 = vmatmul.f32.gmra.mxu0 %v6613
    %v6650 = vpop.f32.mrf.mxu0
    %v6651 = vadd.f32 0.0, %v6650
    %6652 = vmatmul.f32.gmra.mxu0 %v6616
    %v6653 = vpop.f32.mrf.mxu0
    %v6654 = vadd.f32 0.0, %v6653
    %6655 = vmatmul.f32.gmra.mxu0 %v6619
    %v6656 = vpop.f32.mrf.mxu0
    %v6657 = vadd.f32 0.0, %v6656
    %6658 = vmatmul.f32.gmra.mxu0 %v6622
    %v6659 = vpop.f32.mrf.mxu0
    %v6660 = vadd.f32 0.0, %v6659
    %6661 = vmatmul.f32.gmra.mxu0 %v6625
    %v6662 = vpop.f32.mrf.mxu0
    %v6663 = vadd.f32 0.0, %v6662
    %6664 = vmatmul.f32.gmra.mxu0 %v6628
    %v6665 = vpop.f32.mrf.mxu0
    %v6666 = vadd.f32 0.0, %v6665
    %6667 = vdwg.mxu0
    %v6668 = vadd.f32 %v6580, %v6648
    %v6669 = vadd.f32 %v6581, %v6651
    %v6670 = vadd.f32 %v6582, %v6654
    %v6671 = vadd.f32 %v6583, %v6657
    %v6672 = vadd.f32 %v6584, %v6660
    %v6673 = vadd.f32 %v6585, %v6663
    %v6674 = vadd.f32 %v6586, %v6666
    %v6675 = vrot.slane %v5978, 4
    %v6676 = vrot.slane %v5979, 4
    %v6677 = vrot.slane %v5980, 4
    %v6678 = vrot.slane %v5981, 4
    %v6679 = vrot.slane %v5982, 4
    %v6680 = vrot.slane %v5983, 4
    %v6681 = vrot.slane %v5984, 4
    %v6682 = vsel %vm641, %v6680, %v6681
    %v6683 = vsel %vm641, %v6679, %v6680
    %v6684 = vsel %vm641, %v6678, %v6679
    %v6685 = vsel %vm641, %v6677, %v6678
    %v6686 = vsel %vm641, %v6676, %v6677
    %v6687 = vsel %vm641, %v6675, %v6676
    %v6688 = vsel %vm641, %v6681, %v6675
    %v6689 = vld [vmem:[#allocation2 + $0xb30] sm:$0xff]
    %v6690 = vld [vmem:[#allocation2 + $0xb38] sm:$0xff]
    %v6691 = vld [vmem:[#allocation2 + $0xb40] sm:$0xff]
    %v6692 = vld [vmem:[#allocation2 + $0xb48] sm:$0xff]
    %v6693 = vld [vmem:[#allocation2 + $0xb50] sm:$0xff]
    %v6694 = vld [vmem:[#allocation2 + $0xb58] sm:$0xff]
    %v6695 = vld [vmem:[#allocation2 + $0xb60] sm:$0xff]
    %v6696 = vld [vmem:[#allocation2 + $0xb68] sm:$0xff]
    %v6698 = vsel %vm1982, %v6687, 0
    %v6701 = vsel %vm1982, %v6686, 0
    %v6704 = vsel %vm1982, %v6685, 0
    %v6707 = vsel %vm1982, %v6684, 0
    %v6710 = vsel %vm1982, %v6683, 0
    %v6713 = vsel %vm1982, %v6682, 0
    %v6716 = vsel %vm1982, %v6688, 0
    %6718 = vmatpush.msra.mxu0 0.0
    %6719 = vmatpush.msra.mxu0 0.0
    %6720 = vmatpush.msra.mxu0 0.0
    %6721 = vmatpush.msra.mxu0 0.0
    %6722 = vmatpush.msra.mxu0 0.0
    %6723 = vmatpush.msra.mxu0 0.0
    %6724 = vmatpush.msra.mxu0 0.0
    %6725 = vmatpush.msra.mxu0 0.0
    %6726 = vmatpush.msra.mxu0 %v6696
    %6727 = vmatpush.msra.mxu0 %v6695
    %6728 = vmatpush.msra.mxu0 %v6694
    %6729 = vmatpush.msra.mxu0 %v6693
    %6730 = vmatpush.msra.mxu0 %v6692
    %6731 = vmatpush.msra.mxu0 %v6691
    %6732 = vmatpush.msra.mxu0 %v6690
    %6733 = vmatpush.msra.mxu0 %v6689
    %6734 = vmatmul.f32.gmra.mxu0 %v6698
    %v6735 = vpop.f32.mrf.mxu0
    %v6736 = vadd.f32 0.0, %v6735
    %6737 = vmatmul.f32.gmra.mxu0 %v6701
    %v6738 = vpop.f32.mrf.mxu0
    %v6739 = vadd.f32 0.0, %v6738
    %6740 = vmatmul.f32.gmra.mxu0 %v6704
    %v6741 = vpop.f32.mrf.mxu0
    %v6742 = vadd.f32 0.0, %v6741
    %6743 = vmatmul.f32.gmra.mxu0 %v6707
    %v6744 = vpop.f32.mrf.mxu0
    %v6745 = vadd.f32 0.0, %v6744
    %6746 = vmatmul.f32.gmra.mxu0 %v6710
    %v6747 = vpop.f32.mrf.mxu0
    %v6748 = vadd.f32 0.0, %v6747
    %6749 = vmatmul.f32.gmra.mxu0 %v6713
    %v6750 = vpop.f32.mrf.mxu0
    %v6751 = vadd.f32 0.0, %v6750
    %6752 = vmatmul.f32.gmra.mxu0 %v6716
    %v6753 = vpop.f32.mrf.mxu0
    %v6754 = vadd.f32 0.0, %v6753
    %6755 = vdwg.mxu0
    %v6756 = vadd.f32 %v6668, %v6736
    %v6757 = vadd.f32 %v6669, %v6739
    %v6758 = vadd.f32 %v6670, %v6742
    %v6759 = vadd.f32 %v6671, %v6745
    %v6760 = vadd.f32 %v6672, %v6748
    %v6761 = vadd.f32 %v6673, %v6751
    %v6762 = vadd.f32 %v6674, %v6754
    %v6763 = vld [vmem:[#allocation4 + $0x1a] sm:$0x1]
    %v6764 = vld [vmem:[#allocation4 + $0x1b] sm:$0x1]
    %v6765 = vmul.f32 %v6756, %v5957
    %v6766 = vmul.f32 %v6757, %v5958
    %v6767 = vmul.f32 %v6758, %v5959
    %v6768 = vmul.f32 %v6759, %v5960
    %v6769 = vmul.f32 %v6760, %v5961
    %v6770 = vmul.f32 %v6761, %v5962
    %v6771 = vmul.f32 %v6762, %v5963
    %v6772 = vsel %vm1982, %v6765, 0.0
    %v6773 = vsel %vm1982, %v6766, 0.0
    %v6774 = vadd.f32 %v6772, %v6773
    %v6775 = vsel %vm1982, %v6767, 0.0
    %v6776 = vadd.f32 %v6774, %v6775
    %v6777 = vsel %vm1982, %v6768, 0.0
    %v6778 = vadd.f32 %v6776, %v6777
    %v6779 = vsel %vm1982, %v6769, 0.0
    %v6780 = vadd.f32 %v6778, %v6779
    %v6781 = vsel %vm1982, %v6770, 0.0
    %v6782 = vadd.f32 %v6780, %v6781
    %v6783 = vsel %vm1982, %v6771, 0.0
    %v6784 = vadd.f32 %v6782, %v6783
    %v6785 = vrot.slane %v6784, 4
    %v6786 = vadd.f32 %v6784, %v6785
    %v6787 = vrot.slane %v6786, 2
    %v6788 = vadd.f32 %v6786, %v6787
    %v6789 = vrot.slane %v6788, 1
    %v6790 = vadd.f32 %v6788, %v6789
    %v6791 = vmul.f32 %v6790, 0.03846154
    %v6792 = vsub.f32 %v6756, %v6791
    %v6793 = vsub.f32 %v6757, %v6791
    %v6794 = vsub.f32 %v6758, %v6791
    %v6795 = vsub.f32 %v6759, %v6791
    %v6796 = vsub.f32 %v6760, %v6791
    %v6797 = vsub.f32 %v6761, %v6791
    %v6798 = vsub.f32 %v6762, %v6791
    %v6799 = vmul.f32 %v6792, %v5957
    %v6800 = vmul.f32 %v6793, %v5958
    %v6801 = vmul.f32 %v6794, %v5959
    %v6802 = vmul.f32 %v6795, %v5960
    %v6803 = vmul.f32 %v6796, %v5961
    %v6804 = vmul.f32 %v6797, %v5962
    %v6805 = vmul.f32 %v6798, %v5963
    %v6806 = vmul.f32 %v6799, %v6799
    %v6807 = vmul.f32 %v6800, %v6800
    %v6808 = vmul.f32 %v6801, %v6801
    %v6809 = vmul.f32 %v6802, %v6802
    %v6810 = vmul.f32 %v6803, %v6803
    %v6811 = vmul.f32 %v6804, %v6804
    %v6812 = vmul.f32 %v6805, %v6805
    %v6813 = vsel %vm1982, %v6806, 0.0
    %v6814 = vsel %vm1982, %v6807, 0.0
    %v6815 = vadd.f32 %v6813, %v6814
    %v6816 = vsel %vm1982, %v6808, 0.0
    %v6817 = vadd.f32 %v6815, %v6816
    %v6818 = vsel %vm1982, %v6809, 0.0
    %v6819 = vadd.f32 %v6817, %v6818
    %v6820 = vsel %vm1982, %v6810, 0.0
    %v6821 = vadd.f32 %v6819, %v6820
    %v6822 = vsel %vm1982, %v6811, 0.0
    %v6823 = vadd.f32 %v6821, %v6822
    %v6824 = vsel %vm1982, %v6812, 0.0
    %v6825 = vadd.f32 %v6823, %v6824
    %v6826 = vrot.slane %v6825, 4
    %v6827 = vadd.f32 %v6825, %v6826
    %v6828 = vrot.slane %v6827, 2
    %v6829 = vadd.f32 %v6827, %v6828
    %v6830 = vrot.slane %v6829, 1
    %v6831 = vadd.f32 %v6829, %v6830
    %v6832 = vmul.f32 %v6831, 0.03846154
    %v6833 = vadd.f32 %v6832, 1e-05
    %v6834 = vrsqrt.pop %v6833
    %v6835 = vmul.f32 %v6834, %v6833
    %v6836 = vmul.f32 %v6835, %v6834
    %v6837 = vmul.f32 0.5, %v6836
    %v6838 = vsub.f32 1.5, %v6837
    %v6839 = vmul.f32 %v6834, %v6838
    %vm6840 = vweird.f32 %v6833
    %vm6841 = vweird.f32 %v6834
    %vm6842 = vmor %vm6840, %vm6841
    %v6843 = vsel %vm6842, %v6834, %v6839
    %v6844 = vmul.f32 %v6843, %v6763
    %v6845 = vperm.slane %v6844, 0
    %v6846 = vmul.f32 %v6799, %v6845
    %v6847 = vmul.f32 %v6800, %v6845
    %v6848 = vmul.f32 %v6801, %v6845
    %v6849 = vmul.f32 %v6802, %v6845
    %v6850 = vmul.f32 %v6803, %v6845
    %v6851 = vmul.f32 %v6804, %v6845
    %v6852 = vmul.f32 %v6805, %v6845
    %v6853 = vperm.slane %v6764, 0
    %v6854 = vadd.f32 %v6846, %v6853
    %v6855 = vadd.f32 %v6847, %v6853
    %v6856 = vadd.f32 %v6848, %v6853
    %v6857 = vadd.f32 %v6849, %v6853
    %v6858 = vadd.f32 %v6850, %v6853
    %v6859 = vadd.f32 %v6851, %v6853
    %v6860 = vadd.f32 %v6852, %v6853
    %v6861 = vmax.f32 %v6854, 0.0
    %v6862 = vmax.f32 %v6855, 0.0
    %v6863 = vmax.f32 %v6856, 0.0
    %v6864 = vmax.f32 %v6857, 0.0
    %v6865 = vmax.f32 %v6858, 0.0
    %v6866 = vmax.f32 %v6859, 0.0
    %v6867 = vmax.f32 %v6860, 0.0
    %v6868 = vmul.f32 %v6861, %v5957
    %v6869 = vmul.f32 %v6862, %v5958
    %v6870 = vmul.f32 %v6863, %v5959
    %v6871 = vmul.f32 %v6864, %v5960
    %v6872 = vmul.f32 %v6865, %v5961
    %v6873 = vmul.f32 %v6866, %v5962
    %v6874 = vmul.f32 %v6867, %v5963
    %v6875 = vrot.slane %v6868, 6
    %v6876 = vrot.slane %v6869, 6
    %v6877 = vrot.slane %v6870, 6
    %v6878 = vrot.slane %v6871, 6
    %v6879 = vrot.slane %v6872, 6
    %v6880 = vrot.slane %v6873, 6
    %v6881 = vrot.slane %v6874, 6
    %v6882 = vsel %vm317, %v6880, %v6881
    %v6883 = vsel %vm317, %v6879, %v6880
    %v6884 = vsel %vm317, %v6878, %v6879
    %v6885 = vsel %vm317, %v6877, %v6878
    %v6886 = vsel %vm317, %v6876, %v6877
    %v6887 = vsel %vm317, %v6875, %v6876
    %v6888 = vsel %vm317, %v6881, %v6875
    %v6889 = vld [vmem:[#allocation2 + $0xb70] sm:$0xff]
    %v6890 = vld [vmem:[#allocation2 + $0xb78] sm:$0xff]
    %v6891 = vld [vmem:[#allocation2 + $0xb80] sm:$0xff]
    %v6892 = vld [vmem:[#allocation2 + $0xb88] sm:$0xff]
    %v6893 = vld [vmem:[#allocation2 + $0xb90] sm:$0xff]
    %v6894 = vld [vmem:[#allocation2 + $0xb98] sm:$0xff]
    %v6895 = vld [vmem:[#allocation2 + $0xba0] sm:$0xff]
    %v6896 = vld [vmem:[#allocation2 + $0xba8] sm:$0xff]
    %v6897 = vrot.slane %v6868, 7
    %v6898 = vrot.slane %v6869, 7
    %v6899 = vrot.slane %v6870, 7
    %v6900 = vrot.slane %v6871, 7
    %v6901 = vrot.slane %v6872, 7
    %v6902 = vrot.slane %v6873, 7
    %v6903 = vrot.slane %v6874, 7
    %v6904 = vsel %vm379, %v6902, %v6903
    %v6905 = vsel %vm379, %v6901, %v6902
    %v6906 = vsel %vm379, %v6900, %v6901
    %v6907 = vsel %vm379, %v6899, %v6900
    %v6908 = vsel %vm379, %v6898, %v6899
    %v6909 = vsel %vm379, %v6897, %v6898
    %v6910 = vsel %vm379, %v6903, %v6897
    %v6911 = vld [vmem:[#allocation2 + $0xbb0] sm:$0xff]
    %v6912 = vld [vmem:[#allocation2 + $0xbb8] sm:$0xff]
    %v6913 = vld [vmem:[#allocation2 + $0xbc0] sm:$0xff]
    %v6914 = vld [vmem:[#allocation2 + $0xbc8] sm:$0xff]
    %v6915 = vld [vmem:[#allocation2 + $0xbd0] sm:$0xff]
    %v6916 = vld [vmem:[#allocation2 + $0xbd8] sm:$0xff]
    %v6917 = vld [vmem:[#allocation2 + $0xbe0] sm:$0xff]
    %v6918 = vld [vmem:[#allocation2 + $0xbe8] sm:$0xff]
    %v6920 = vsel %vm1982, %v6910, 0
    %v6923 = vsel %vm1982, %v6909, 0
    %v6926 = vsel %vm1982, %v6908, 0
    %v6929 = vsel %vm1982, %v6907, 0
    %v6932 = vsel %vm1982, %v6906, 0
    %v6935 = vsel %vm1982, %v6905, 0
    %v6938 = vsel %vm1982, %v6904, 0
    %6940 = vmatpush.msra.mxu0 0.0
    %6941 = vmatpush.msra.mxu0 0.0
    %6942 = vmatpush.msra.mxu0 0.0
    %6943 = vmatpush.msra.mxu0 0.0
    %6944 = vmatpush.msra.mxu0 0.0
    %6945 = vmatpush.msra.mxu0 0.0
    %6946 = vmatpush.msra.mxu0 0.0
    %6947 = vmatpush.msra.mxu0 0.0
    %6948 = vmatpush.msra.mxu0 %v6918
    %6949 = vmatpush.msra.mxu0 %v6917
    %6950 = vmatpush.msra.mxu0 %v6916
    %6951 = vmatpush.msra.mxu0 %v6915
    %6952 = vmatpush.msra.mxu0 %v6914
    %6953 = vmatpush.msra.mxu0 %v6913
    %6954 = vmatpush.msra.mxu0 %v6912
    %6955 = vmatpush.msra.mxu0 %v6911
    %6956 = vmatmul.f32.gmra.mxu0 %v6920
    %v6957 = vpop.f32.mrf.mxu0
    %v6958 = vadd.f32 0.0, %v6957
    %6959 = vmatmul.f32.gmra.mxu0 %v6923
    %v6960 = vpop.f32.mrf.mxu0
    %v6961 = vadd.f32 0.0, %v6960
    %6962 = vmatmul.f32.gmra.mxu0 %v6926
    %v6963 = vpop.f32.mrf.mxu0
    %v6964 = vadd.f32 0.0, %v6963
    %6965 = vmatmul.f32.gmra.mxu0 %v6929
    %v6966 = vpop.f32.mrf.mxu0
    %v6967 = vadd.f32 0.0, %v6966
    %6968 = vmatmul.f32.gmra.mxu0 %v6932
    %v6969 = vpop.f32.mrf.mxu0
    %v6970 = vadd.f32 0.0, %v6969
    %6971 = vmatmul.f32.gmra.mxu0 %v6935
    %v6972 = vpop.f32.mrf.mxu0
    %v6973 = vadd.f32 0.0, %v6972
    %6974 = vmatmul.f32.gmra.mxu0 %v6938
    %v6975 = vpop.f32.mrf.mxu0
    %v6976 = vadd.f32 0.0, %v6975
    %6977 = vdwg.mxu0
    %v6979 = vsel %vm1982, %v6888, 0
    %v6982 = vsel %vm1982, %v6887, 0
    %v6985 = vsel %vm1982, %v6886, 0
    %v6988 = vsel %vm1982, %v6885, 0
    %v6991 = vsel %vm1982, %v6884, 0
    %v6994 = vsel %vm1982, %v6883, 0
    %v6997 = vsel %vm1982, %v6882, 0
    %6999 = vmatpush.msra.mxu0 0.0
    %7000 = vmatpush.msra.mxu0 0.0
    %7001 = vmatpush.msra.mxu0 0.0
    %7002 = vmatpush.msra.mxu0 0.0
    %7003 = vmatpush.msra.mxu0 0.0
    %7004 = vmatpush.msra.mxu0 0.0
    %7005 = vmatpush.msra.mxu0 0.0
    %7006 = vmatpush.msra.mxu0 0.0
    %7007 = vmatpush.msra.mxu0 %v6896
    %7008 = vmatpush.msra.mxu0 %v6895
    %7009 = vmatpush.msra.mxu0 %v6894
    %7010 = vmatpush.msra.mxu0 %v6893
    %7011 = vmatpush.msra.mxu0 %v6892
    %7012 = vmatpush.msra.mxu0 %v6891
    %7013 = vmatpush.msra.mxu0 %v6890
    %7014 = vmatpush.msra.mxu0 %v6889
    %7015 = vmatmul.f32.gmra.mxu0 %v6979
    %v7016 = vpop.f32.mrf.mxu0
    %v7017 = vadd.f32 %v6958, %v7016
    %7018 = vmatmul.f32.gmra.mxu0 %v6982
    %v7019 = vpop.f32.mrf.mxu0
    %v7020 = vadd.f32 %v6961, %v7019
    %7021 = vmatmul.f32.gmra.mxu0 %v6985
    %v7022 = vpop.f32.mrf.mxu0
    %v7023 = vadd.f32 %v6964, %v7022
    %7024 = vmatmul.f32.gmra.mxu0 %v6988
    %v7025 = vpop.f32.mrf.mxu0
    %v7026 = vadd.f32 %v6967, %v7025
    %7027 = vmatmul.f32.gmra.mxu0 %v6991
    %v7028 = vpop.f32.mrf.mxu0
    %v7029 = vadd.f32 %v6970, %v7028
    %7030 = vmatmul.f32.gmra.mxu0 %v6994
    %v7031 = vpop.f32.mrf.mxu0
    %v7032 = vadd.f32 %v6973, %v7031
    %7033 = vmatmul.f32.gmra.mxu0 %v6997
    %v7034 = vpop.f32.mrf.mxu0
    %v7035 = vadd.f32 %v6976, %v7034
    %7036 = vdwg.mxu0
    %v7037 = vld [vmem:[#allocation2 + $0xbf0] sm:$0xff]
    %v7038 = vld [vmem:[#allocation2 + $0xbf8] sm:$0xff]
    %v7039 = vld [vmem:[#allocation2 + $0xc00] sm:$0xff]
    %v7040 = vld [vmem:[#allocation2 + $0xc08] sm:$0xff]
    %v7041 = vld [vmem:[#allocation2 + $0xc10] sm:$0xff]
    %v7042 = vld [vmem:[#allocation2 + $0xc18] sm:$0xff]
    %v7043 = vld [vmem:[#allocation2 + $0xc20] sm:$0xff]
    %v7044 = vld [vmem:[#allocation2 + $0xc28] sm:$0xff]
    %v7046 = vsel %vm1982, %v6868, 0
    %v7049 = vsel %vm1982, %v6869, 0
    %v7052 = vsel %vm1982, %v6870, 0
    %v7055 = vsel %vm1982, %v6871, 0
    %v7058 = vsel %vm1982, %v6872, 0
    %v7061 = vsel %vm1982, %v6873, 0
    %v7064 = vsel %vm1982, %v6874, 0
    %7066 = vmatpush.msra.mxu0 0.0
    %7067 = vmatpush.msra.mxu0 0.0
    %7068 = vmatpush.msra.mxu0 0.0
    %7069 = vmatpush.msra.mxu0 0.0
    %7070 = vmatpush.msra.mxu0 0.0
    %7071 = vmatpush.msra.mxu0 0.0
    %7072 = vmatpush.msra.mxu0 0.0
    %7073 = vmatpush.msra.mxu0 0.0
    %7074 = vmatpush.msra.mxu0 %v7044
    %7075 = vmatpush.msra.mxu0 %v7043
    %7076 = vmatpush.msra.mxu0 %v7042
    %7077 = vmatpush.msra.mxu0 %v7041
    %7078 = vmatpush.msra.mxu0 %v7040
    %7079 = vmatpush.msra.mxu0 %v7039
    %7080 = vmatpush.msra.mxu0 %v7038
    %7081 = vmatpush.msra.mxu0 %v7037
    %7082 = vmatmul.f32.gmra.mxu0 %v7046
    %v7083 = vpop.f32.mrf.mxu0
    %v7084 = vadd.f32 0.0, %v7083
    %7085 = vmatmul.f32.gmra.mxu0 %v7049
    %v7086 = vpop.f32.mrf.mxu0
    %v7087 = vadd.f32 0.0, %v7086
    %7088 = vmatmul.f32.gmra.mxu0 %v7052
    %v7089 = vpop.f32.mrf.mxu0
    %v7090 = vadd.f32 0.0, %v7089
    %7091 = vmatmul.f32.gmra.mxu0 %v7055
    %v7092 = vpop.f32.mrf.mxu0
    %v7093 = vadd.f32 0.0, %v7092
    %7094 = vmatmul.f32.gmra.mxu0 %v7058
    %v7095 = vpop.f32.mrf.mxu0
    %v7096 = vadd.f32 0.0, %v7095
    %7097 = vmatmul.f32.gmra.mxu0 %v7061
    %v7098 = vpop.f32.mrf.mxu0
    %v7099 = vadd.f32 0.0, %v7098
    %7100 = vmatmul.f32.gmra.mxu0 %v7064
    %v7101 = vpop.f32.mrf.mxu0
    %v7102 = vadd.f32 0.0, %v7101
    %7103 = vdwg.mxu0
    %v7104 = vadd.f32 %v7017, %v7084
    %v7105 = vadd.f32 %v7020, %v7087
    %v7106 = vadd.f32 %v7023, %v7090
    %v7107 = vadd.f32 %v7026, %v7093
    %v7108 = vadd.f32 %v7029, %v7096
    %v7109 = vadd.f32 %v7032, %v7099
    %v7110 = vadd.f32 %v7035, %v7102
    %v7111 = vrot.slane %v6868, 1
    %v7112 = vrot.slane %v6869, 1
    %v7113 = vrot.slane %v6870, 1
    %v7114 = vrot.slane %v6871, 1
    %v7115 = vrot.slane %v6872, 1
    %v7116 = vrot.slane %v6873, 1
    %v7117 = vrot.slane %v6874, 1
    %v7118 = vsel %vm455, %v7116, %v7117
    %v7119 = vsel %vm455, %v7115, %v7116
    %v7120 = vsel %vm455, %v7114, %v7115
    %v7121 = vsel %vm455, %v7113, %v7114
    %v7122 = vsel %vm455, %v7112, %v7113
    %v7123 = vsel %vm455, %v7111, %v7112
    %v7124 = vsel %vm455, %v7117, %v7111
    %v7125 = vld [vmem:[#allocation2 + $0xc30] sm:$0xff]
    %v7126 = vld [vmem:[#allocation2 + $0xc38] sm:$0xff]
    %v7127 = vld [vmem:[#allocation2 + $0xc40] sm:$0xff]
    %v7128 = vld [vmem:[#allocation2 + $0xc48] sm:$0xff]
    %v7129 = vld [vmem:[#allocation2 + $0xc50] sm:$0xff]
    %v7130 = vld [vmem:[#allocation2 + $0xc58] sm:$0xff]
    %v7131 = vld [vmem:[#allocation2 + $0xc60] sm:$0xff]
    %v7132 = vld [vmem:[#allocation2 + $0xc68] sm:$0xff]
    %v7134 = vsel %vm1982, %v7123, 0
    %v7137 = vsel %vm1982, %v7122, 0
    %v7140 = vsel %vm1982, %v7121, 0
    %v7143 = vsel %vm1982, %v7120, 0
    %v7146 = vsel %vm1982, %v7119, 0
    %v7149 = vsel %vm1982, %v7118, 0
    %v7152 = vsel %vm1982, %v7124, 0
    %7154 = vmatpush.msra.mxu0 0.0
    %7155 = vmatpush.msra.mxu0 0.0
    %7156 = vmatpush.msra.mxu0 0.0
    %7157 = vmatpush.msra.mxu0 0.0
    %7158 = vmatpush.msra.mxu0 0.0
    %7159 = vmatpush.msra.mxu0 0.0
    %7160 = vmatpush.msra.mxu0 0.0
    %7161 = vmatpush.msra.mxu0 0.0
    %7162 = vmatpush.msra.mxu0 %v7132
    %7163 = vmatpush.msra.mxu0 %v7131
    %7164 = vmatpush.msra.mxu0 %v7130
    %7165 = vmatpush.msra.mxu0 %v7129
    %7166 = vmatpush.msra.mxu0 %v7128
    %7167 = vmatpush.msra.mxu0 %v7127
    %7168 = vmatpush.msra.mxu0 %v7126
    %7169 = vmatpush.msra.mxu0 %v7125
    %7170 = vmatmul.f32.gmra.mxu0 %v7134
    %v7171 = vpop.f32.mrf.mxu0
    %v7172 = vadd.f32 0.0, %v7171
    %7173 = vmatmul.f32.gmra.mxu0 %v7137
    %v7174 = vpop.f32.mrf.mxu0
    %v7175 = vadd.f32 0.0, %v7174
    %7176 = vmatmul.f32.gmra.mxu0 %v7140
    %v7177 = vpop.f32.mrf.mxu0
    %v7178 = vadd.f32 0.0, %v7177
    %7179 = vmatmul.f32.gmra.mxu0 %v7143
    %v7180 = vpop.f32.mrf.mxu0
    %v7181 = vadd.f32 0.0, %v7180
    %7182 = vmatmul.f32.gmra.mxu0 %v7146
    %v7183 = vpop.f32.mrf.mxu0
    %v7184 = vadd.f32 0.0, %v7183
    %7185 = vmatmul.f32.gmra.mxu0 %v7149
    %v7186 = vpop.f32.mrf.mxu0
    %v7187 = vadd.f32 0.0, %v7186
    %7188 = vmatmul.f32.gmra.mxu0 %v7152
    %v7189 = vpop.f32.mrf.mxu0
    %v7190 = vadd.f32 0.0, %v7189
    %7191 = vdwg.mxu0
    %v7192 = vadd.f32 %v7104, %v7172
    %v7193 = vadd.f32 %v7105, %v7175
    %v7194 = vadd.f32 %v7106, %v7178
    %v7195 = vadd.f32 %v7107, %v7181
    %v7196 = vadd.f32 %v7108, %v7184
    %v7197 = vadd.f32 %v7109, %v7187
    %v7198 = vadd.f32 %v7110, %v7190
    %v7199 = vrot.slane %v6868, 2
    %v7200 = vrot.slane %v6869, 2
    %v7201 = vrot.slane %v6870, 2
    %v7202 = vrot.slane %v6871, 2
    %v7203 = vrot.slane %v6872, 2
    %v7204 = vrot.slane %v6873, 2
    %v7205 = vrot.slane %v6874, 2
    %v7206 = vsel %vm517, %v7204, %v7205
    %v7207 = vsel %vm517, %v7203, %v7204
    %v7208 = vsel %vm517, %v7202, %v7203
    %v7209 = vsel %vm517, %v7201, %v7202
    %v7210 = vsel %vm517, %v7200, %v7201
    %v7211 = vsel %vm517, %v7199, %v7200
    %v7212 = vsel %vm517, %v7205, %v7199
    %v7213 = vld [vmem:[#allocation2 + $0xc70] sm:$0xff]
    %v7214 = vld [vmem:[#allocation2 + $0xc78] sm:$0xff]
    %v7215 = vld [vmem:[#allocation2 + $0xc80] sm:$0xff]
    %v7216 = vld [vmem:[#allocation2 + $0xc88] sm:$0xff]
    %v7217 = vld [vmem:[#allocation2 + $0xc90] sm:$0xff]
    %v7218 = vld [vmem:[#allocation2 + $0xc98] sm:$0xff]
    %v7219 = vld [vmem:[#allocation2 + $0xca0] sm:$0xff]
    %v7220 = vld [vmem:[#allocation2 + $0xca8] sm:$0xff]
    %v7222 = vsel %vm1982, %v7211, 0
    %v7225 = vsel %vm1982, %v7210, 0
    %v7228 = vsel %vm1982, %v7209, 0
    %v7231 = vsel %vm1982, %v7208, 0
    %v7234 = vsel %vm1982, %v7207, 0
    %v7237 = vsel %vm1982, %v7206, 0
    %v7240 = vsel %vm1982, %v7212, 0
    %7242 = vmatpush.msra.mxu0 0.0
    %7243 = vmatpush.msra.mxu0 0.0
    %7244 = vmatpush.msra.mxu0 0.0
    %7245 = vmatpush.msra.mxu0 0.0
    %7246 = vmatpush.msra.mxu0 0.0
    %7247 = vmatpush.msra.mxu0 0.0
    %7248 = vmatpush.msra.mxu0 0.0
    %7249 = vmatpush.msra.mxu0 0.0
    %7250 = vmatpush.msra.mxu0 %v7220
    %7251 = vmatpush.msra.mxu0 %v7219
    %7252 = vmatpush.msra.mxu0 %v7218
    %7253 = vmatpush.msra.mxu0 %v7217
    %7254 = vmatpush.msra.mxu0 %v7216
    %7255 = vmatpush.msra.mxu0 %v7215
    %7256 = vmatpush.msra.mxu0 %v7214
    %7257 = vmatpush.msra.mxu0 %v7213
    %7258 = vmatmul.f32.gmra.mxu0 %v7222
    %v7259 = vpop.f32.mrf.mxu0
    %v7260 = vadd.f32 0.0, %v7259
    %7261 = vmatmul.f32.gmra.mxu0 %v7225
    %v7262 = vpop.f32.mrf.mxu0
    %v7263 = vadd.f32 0.0, %v7262
    %7264 = vmatmul.f32.gmra.mxu0 %v7228
    %v7265 = vpop.f32.mrf.mxu0
    %v7266 = vadd.f32 0.0, %v7265
    %7267 = vmatmul.f32.gmra.mxu0 %v7231
    %v7268 = vpop.f32.mrf.mxu0
    %v7269 = vadd.f32 0.0, %v7268
    %7270 = vmatmul.f32.gmra.mxu0 %v7234
    %v7271 = vpop.f32.mrf.mxu0
    %v7272 = vadd.f32 0.0, %v7271
    %7273 = vmatmul.f32.gmra.mxu0 %v7237
    %v7274 = vpop.f32.mrf.mxu0
    %v7275 = vadd.f32 0.0, %v7274
    %7276 = vmatmul.f32.gmra.mxu0 %v7240
    %v7277 = vpop.f32.mrf.mxu0
    %v7278 = vadd.f32 0.0, %v7277
    %7279 = vdwg.mxu0
    %v7280 = vadd.f32 %v7192, %v7260
    %v7281 = vadd.f32 %v7193, %v7263
    %v7282 = vadd.f32 %v7194, %v7266
    %v7283 = vadd.f32 %v7195, %v7269
    %v7284 = vadd.f32 %v7196, %v7272
    %v7285 = vadd.f32 %v7197, %v7275
    %v7286 = vadd.f32 %v7198, %v7278
    %v7287 = vld [vmem:[#allocation4 + $0x1c] sm:$0x1]
    %v7288 = vld [vmem:[#allocation4 + $0x1d] sm:$0x1]
    %v7289 = vmul.f32 %v7280, %v5957
    %v7290 = vmul.f32 %v7281, %v5958
    %v7291 = vmul.f32 %v7282, %v5959
    %v7292 = vmul.f32 %v7283, %v5960
    %v7293 = vmul.f32 %v7284, %v5961
    %v7294 = vmul.f32 %v7285, %v5962
    %v7295 = vmul.f32 %v7286, %v5963
    %v7296 = vsel %vm1982, %v7289, 0.0
    %v7297 = vsel %vm1982, %v7290, 0.0
    %v7298 = vadd.f32 %v7296, %v7297
    %v7299 = vsel %vm1982, %v7291, 0.0
    %v7300 = vadd.f32 %v7298, %v7299
    %v7301 = vsel %vm1982, %v7292, 0.0
    %v7302 = vadd.f32 %v7300, %v7301
    %v7303 = vsel %vm1982, %v7293, 0.0
    %v7304 = vadd.f32 %v7302, %v7303
    %v7305 = vsel %vm1982, %v7294, 0.0
    %v7306 = vadd.f32 %v7304, %v7305
    %v7307 = vsel %vm1982, %v7295, 0.0
    %v7308 = vadd.f32 %v7306, %v7307
    %v7309 = vrot.slane %v7308, 4
    %v7310 = vadd.f32 %v7308, %v7309
    %v7311 = vrot.slane %v7310, 2
    %v7312 = vadd.f32 %v7310, %v7311
    %v7313 = vrot.slane %v7312, 1
    %v7314 = vadd.f32 %v7312, %v7313
    %v7315 = vmul.f32 %v7314, 0.03846154
    %v7316 = vsub.f32 %v7280, %v7315
    %v7317 = vsub.f32 %v7281, %v7315
    %v7318 = vsub.f32 %v7282, %v7315
    %v7319 = vsub.f32 %v7283, %v7315
    %v7320 = vsub.f32 %v7284, %v7315
    %v7321 = vsub.f32 %v7285, %v7315
    %v7322 = vsub.f32 %v7286, %v7315
    %v7323 = vmul.f32 %v7316, %v5957
    %v7324 = vmul.f32 %v7317, %v5958
    %v7325 = vmul.f32 %v7318, %v5959
    %v7326 = vmul.f32 %v7319, %v5960
    %v7327 = vmul.f32 %v7320, %v5961
    %v7328 = vmul.f32 %v7321, %v5962
    %v7329 = vmul.f32 %v7322, %v5963
    %v7330 = vmul.f32 %v7323, %v7323
    %v7331 = vmul.f32 %v7324, %v7324
    %v7332 = vmul.f32 %v7325, %v7325
    %v7333 = vmul.f32 %v7326, %v7326
    %v7334 = vmul.f32 %v7327, %v7327
    %v7335 = vmul.f32 %v7328, %v7328
    %v7336 = vmul.f32 %v7329, %v7329
    %v7337 = vsel %vm1982, %v7330, 0.0
    %v7338 = vsel %vm1982, %v7331, 0.0
    %v7339 = vadd.f32 %v7337, %v7338
    %v7340 = vsel %vm1982, %v7332, 0.0
    %v7341 = vadd.f32 %v7339, %v7340
    %v7342 = vsel %vm1982, %v7333, 0.0
    %v7343 = vadd.f32 %v7341, %v7342
    %v7344 = vsel %vm1982, %v7334, 0.0
    %v7345 = vadd.f32 %v7343, %v7344
    %v7346 = vsel %vm1982, %v7335, 0.0
    %v7347 = vadd.f32 %v7345, %v7346
    %v7348 = vsel %vm1982, %v7336, 0.0
    %v7349 = vadd.f32 %v7347, %v7348
    %v7350 = vrot.slane %v7349, 4
    %v7351 = vadd.f32 %v7349, %v7350
    %v7352 = vrot.slane %v7351, 2
    %v7353 = vadd.f32 %v7351, %v7352
    %v7354 = vrot.slane %v7353, 1
    %v7355 = vadd.f32 %v7353, %v7354
    %v7356 = vmul.f32 %v7355, 0.03846154
    %v7357 = vadd.f32 %v7356, 1e-05
    %v7358 = vrsqrt.pop %v7357
    %v7359 = vmul.f32 %v7358, %v7357
    %v7360 = vmul.f32 %v7359, %v7358
    %v7361 = vmul.f32 0.5, %v7360
    %v7362 = vsub.f32 1.5, %v7361
    %v7363 = vmul.f32 %v7358, %v7362
    %vm7364 = vweird.f32 %v7357
    %vm7365 = vweird.f32 %v7358
    %vm7366 = vmor %vm7364, %vm7365
    %v7367 = vsel %vm7366, %v7358, %v7363
    %v7368 = vmul.f32 %v7367, %v7287
    %v7369 = vperm.slane %v7368, 0
    %v7370 = vmul.f32 %v7323, %v7369
    %v7371 = vmul.f32 %v7324, %v7369
    %v7372 = vmul.f32 %v7325, %v7369
    %v7373 = vmul.f32 %v7326, %v7369
    %v7374 = vmul.f32 %v7327, %v7369
    %v7375 = vmul.f32 %v7328, %v7369
    %v7376 = vmul.f32 %v7329, %v7369
    %v7377 = vperm.slane %v7288, 0
    %v7378 = vadd.f32 %v7370, %v7377
    %v7379 = vadd.f32 %v7371, %v7377
    %v7380 = vadd.f32 %v7372, %v7377
    %v7381 = vadd.f32 %v7373, %v7377
    %v7382 = vadd.f32 %v7374, %v7377
    %v7383 = vadd.f32 %v7375, %v7377
    %v7384 = vadd.f32 %v7376, %v7377
    %v7385 = vmax.f32 %v7378, 0.0
    %v7386 = vmax.f32 %v7379, 0.0
    %v7387 = vmax.f32 %v7380, 0.0
    %v7388 = vmax.f32 %v7381, 0.0
    %v7389 = vmax.f32 %v7382, 0.0
    %v7390 = vmax.f32 %v7383, 0.0
    %v7391 = vmax.f32 %v7384, 0.0
    %v7392 = vmul.f32 %v7385, %v5957
    %v7393 = vmul.f32 %v7386, %v5958
    %v7394 = vmul.f32 %v7387, %v5959
    %v7395 = vmul.f32 %v7388, %v5960
    %v7396 = vmul.f32 %v7389, %v5961
    %v7397 = vmul.f32 %v7390, %v5962
    %v7398 = vmul.f32 %v7391, %v5963
    %v7399 = vrot.slane %v7392, 6
    %v7400 = vrot.slane %v7393, 6
    %v7401 = vrot.slane %v7394, 6
    %v7402 = vrot.slane %v7395, 6
    %v7403 = vrot.slane %v7396, 6
    %v7404 = vrot.slane %v7397, 6
    %v7405 = vrot.slane %v7398, 6
    %v7406 = vsel %vm317, %v7404, %v7405
    %v7407 = vsel %vm317, %v7403, %v7404
    %v7408 = vsel %vm317, %v7402, %v7403
    %v7409 = vsel %vm317, %v7401, %v7402
    %v7410 = vsel %vm317, %v7400, %v7401
    %v7411 = vsel %vm317, %v7399, %v7400
    %v7412 = vsel %vm317, %v7405, %v7399
    %v7413 = vld [vmem:[#allocation2 + $0xcb0] sm:$0xff]
    %v7414 = vld [vmem:[#allocation2 + $0xcb8] sm:$0xff]
    %v7415 = vld [vmem:[#allocation2 + $0xcc0] sm:$0xff]
    %v7416 = vld [vmem:[#allocation2 + $0xcc8] sm:$0xff]
    %v7417 = vld [vmem:[#allocation2 + $0xcd0] sm:$0xff]
    %v7418 = vld [vmem:[#allocation2 + $0xcd8] sm:$0xff]
    %v7419 = vld [vmem:[#allocation2 + $0xce0] sm:$0xff]
    %v7420 = vld [vmem:[#allocation2 + $0xce8] sm:$0xff]
    %v7421 = vrot.slane %v7392, 7
    %v7422 = vrot.slane %v7393, 7
    %v7423 = vrot.slane %v7394, 7
    %v7424 = vrot.slane %v7395, 7
    %v7425 = vrot.slane %v7396, 7
    %v7426 = vrot.slane %v7397, 7
    %v7427 = vrot.slane %v7398, 7
    %v7428 = vsel %vm379, %v7426, %v7427
    %v7429 = vsel %vm379, %v7425, %v7426
    %v7430 = vsel %vm379, %v7424, %v7425
    %v7431 = vsel %vm379, %v7423, %v7424
    %v7432 = vsel %vm379, %v7422, %v7423
    %v7433 = vsel %vm379, %v7421, %v7422
    %v7434 = vsel %vm379, %v7427, %v7421
    %v7435 = vld [vmem:[#allocation2 + $0xcf0] sm:$0xff]
    %v7436 = vld [vmem:[#allocation2 + $0xcf8] sm:$0xff]
    %v7437 = vld [vmem:[#allocation2 + $0xd00] sm:$0xff]
    %v7438 = vld [vmem:[#allocation2 + $0xd08] sm:$0xff]
    %v7439 = vld [vmem:[#allocation2 + $0xd10] sm:$0xff]
    %v7440 = vld [vmem:[#allocation2 + $0xd18] sm:$0xff]
    %v7441 = vld [vmem:[#allocation2 + $0xd20] sm:$0xff]
    %v7442 = vld [vmem:[#allocation2 + $0xd28] sm:$0xff]
    %v7444 = vsel %vm1982, %v7434, 0
    %v7447 = vsel %vm1982, %v7433, 0
    %v7450 = vsel %vm1982, %v7432, 0
    %v7453 = vsel %vm1982, %v7431, 0
    %v7456 = vsel %vm1982, %v7430, 0
    %v7459 = vsel %vm1982, %v7429, 0
    %v7462 = vsel %vm1982, %v7428, 0
    %7464 = vmatpush.msra.mxu0 0.0
    %7465 = vmatpush.msra.mxu0 0.0
    %7466 = vmatpush.msra.mxu0 0.0
    %7467 = vmatpush.msra.mxu0 0.0
    %7468 = vmatpush.msra.mxu0 0.0
    %7469 = vmatpush.msra.mxu0 0.0
    %7470 = vmatpush.msra.mxu0 0.0
    %7471 = vmatpush.msra.mxu0 0.0
    %7472 = vmatpush.msra.mxu0 %v7442
    %7473 = vmatpush.msra.mxu0 %v7441
    %7474 = vmatpush.msra.mxu0 %v7440
    %7475 = vmatpush.msra.mxu0 %v7439
    %7476 = vmatpush.msra.mxu0 %v7438
    %7477 = vmatpush.msra.mxu0 %v7437
    %7478 = vmatpush.msra.mxu0 %v7436
    %7479 = vmatpush.msra.mxu0 %v7435
    %7480 = vmatmul.f32.gmra.mxu0 %v7444
    %v7481 = vpop.f32.mrf.mxu0
    %v7482 = vadd.f32 0.0, %v7481
    %7483 = vmatmul.f32.gmra.mxu0 %v7447
    %v7484 = vpop.f32.mrf.mxu0
    %v7485 = vadd.f32 0.0, %v7484
    %7486 = vmatmul.f32.gmra.mxu0 %v7450
    %v7487 = vpop.f32.mrf.mxu0
    %v7488 = vadd.f32 0.0, %v7487
    %7489 = vmatmul.f32.gmra.mxu0 %v7453
    %v7490 = vpop.f32.mrf.mxu0
    %v7491 = vadd.f32 0.0, %v7490
    %7492 = vmatmul.f32.gmra.mxu0 %v7456
    %v7493 = vpop.f32.mrf.mxu0
    %v7494 = vadd.f32 0.0, %v7493
    %7495 = vmatmul.f32.gmra.mxu0 %v7459
    %v7496 = vpop.f32.mrf.mxu0
    %v7497 = vadd.f32 0.0, %v7496
    %7498 = vmatmul.f32.gmra.mxu0 %v7462
    %v7499 = vpop.f32.mrf.mxu0
    %v7500 = vadd.f32 0.0, %v7499
    %7501 = vdwg.mxu0
    %v7503 = vsel %vm1982, %v7412, 0
    %v7506 = vsel %vm1982, %v7411, 0
    %v7509 = vsel %vm1982, %v7410, 0
    %v7512 = vsel %vm1982, %v7409, 0
    %v7515 = vsel %vm1982, %v7408, 0
    %v7518 = vsel %vm1982, %v7407, 0
    %v7521 = vsel %vm1982, %v7406, 0
    %7523 = vmatpush.msra.mxu0 0.0
    %7524 = vmatpush.msra.mxu0 0.0
    %7525 = vmatpush.msra.mxu0 0.0
    %7526 = vmatpush.msra.mxu0 0.0
    %7527 = vmatpush.msra.mxu0 0.0
    %7528 = vmatpush.msra.mxu0 0.0
    %7529 = vmatpush.msra.mxu0 0.0
    %7530 = vmatpush.msra.mxu0 0.0
    %7531 = vmatpush.msra.mxu0 %v7420
    %7532 = vmatpush.msra.mxu0 %v7419
    %7533 = vmatpush.msra.mxu0 %v7418
    %7534 = vmatpush.msra.mxu0 %v7417
    %7535 = vmatpush.msra.mxu0 %v7416
    %7536 = vmatpush.msra.mxu0 %v7415
    %7537 = vmatpush.msra.mxu0 %v7414
    %7538 = vmatpush.msra.mxu0 %v7413
    %7539 = vmatmul.f32.gmra.mxu0 %v7503
    %v7540 = vpop.f32.mrf.mxu0
    %v7541 = vadd.f32 %v7482, %v7540
    %7542 = vmatmul.f32.gmra.mxu0 %v7506
    %v7543 = vpop.f32.mrf.mxu0
    %v7544 = vadd.f32 %v7485, %v7543
    %7545 = vmatmul.f32.gmra.mxu0 %v7509
    %v7546 = vpop.f32.mrf.mxu0
    %v7547 = vadd.f32 %v7488, %v7546
    %7548 = vmatmul.f32.gmra.mxu0 %v7512
    %v7549 = vpop.f32.mrf.mxu0
    %v7550 = vadd.f32 %v7491, %v7549
    %7551 = vmatmul.f32.gmra.mxu0 %v7515
    %v7552 = vpop.f32.mrf.mxu0
    %v7553 = vadd.f32 %v7494, %v7552
    %7554 = vmatmul.f32.gmra.mxu0 %v7518
    %v7555 = vpop.f32.mrf.mxu0
    %v7556 = vadd.f32 %v7497, %v7555
    %7557 = vmatmul.f32.gmra.mxu0 %v7521
    %v7558 = vpop.f32.mrf.mxu0
    %v7559 = vadd.f32 %v7500, %v7558
    %7560 = vdwg.mxu0
    %v7561 = vld [vmem:[#allocation2 + $0xd30] sm:$0xff]
    %v7562 = vld [vmem:[#allocation2 + $0xd38] sm:$0xff]
    %v7563 = vld [vmem:[#allocation2 + $0xd40] sm:$0xff]
    %v7564 = vld [vmem:[#allocation2 + $0xd48] sm:$0xff]
    %v7565 = vld [vmem:[#allocation2 + $0xd50] sm:$0xff]
    %v7566 = vld [vmem:[#allocation2 + $0xd58] sm:$0xff]
    %v7567 = vld [vmem:[#allocation2 + $0xd60] sm:$0xff]
    %v7568 = vld [vmem:[#allocation2 + $0xd68] sm:$0xff]
    %v7570 = vsel %vm1982, %v7392, 0
    %v7573 = vsel %vm1982, %v7393, 0
    %v7576 = vsel %vm1982, %v7394, 0
    %v7579 = vsel %vm1982, %v7395, 0
    %v7582 = vsel %vm1982, %v7396, 0
    %v7585 = vsel %vm1982, %v7397, 0
    %v7588 = vsel %vm1982, %v7398, 0
    %7590 = vmatpush.msra.mxu0 0.0
    %7591 = vmatpush.msra.mxu0 0.0
    %7592 = vmatpush.msra.mxu0 0.0
    %7593 = vmatpush.msra.mxu0 0.0
    %7594 = vmatpush.msra.mxu0 0.0
    %7595 = vmatpush.msra.mxu0 0.0
    %7596 = vmatpush.msra.mxu0 0.0
    %7597 = vmatpush.msra.mxu0 0.0
    %7598 = vmatpush.msra.mxu0 %v7568
    %7599 = vmatpush.msra.mxu0 %v7567
    %7600 = vmatpush.msra.mxu0 %v7566
    %7601 = vmatpush.msra.mxu0 %v7565
    %7602 = vmatpush.msra.mxu0 %v7564
    %7603 = vmatpush.msra.mxu0 %v7563
    %7604 = vmatpush.msra.mxu0 %v7562
    %7605 = vmatpush.msra.mxu0 %v7561
    %7606 = vmatmul.f32.gmra.mxu0 %v7570
    %v7607 = vpop.f32.mrf.mxu0
    %v7608 = vadd.f32 0.0, %v7607
    %7609 = vmatmul.f32.gmra.mxu0 %v7573
    %v7610 = vpop.f32.mrf.mxu0
    %v7611 = vadd.f32 0.0, %v7610
    %7612 = vmatmul.f32.gmra.mxu0 %v7576
    %v7613 = vpop.f32.mrf.mxu0
    %v7614 = vadd.f32 0.0, %v7613
    %7615 = vmatmul.f32.gmra.mxu0 %v7579
    %v7616 = vpop.f32.mrf.mxu0
    %v7617 = vadd.f32 0.0, %v7616
    %7618 = vmatmul.f32.gmra.mxu0 %v7582
    %v7619 = vpop.f32.mrf.mxu0
    %v7620 = vadd.f32 0.0, %v7619
    %7621 = vmatmul.f32.gmra.mxu0 %v7585
    %v7622 = vpop.f32.mrf.mxu0
    %v7623 = vadd.f32 0.0, %v7622
    %7624 = vmatmul.f32.gmra.mxu0 %v7588
    %v7625 = vpop.f32.mrf.mxu0
    %v7626 = vadd.f32 0.0, %v7625
    %7627 = vdwg.mxu0
    %v7628 = vadd.f32 %v7541, %v7608
    %v7629 = vadd.f32 %v7544, %v7611
    %v7630 = vadd.f32 %v7547, %v7614
    %v7631 = vadd.f32 %v7550, %v7617
    %v7632 = vadd.f32 %v7553, %v7620
    %v7633 = vadd.f32 %v7556, %v7623
    %v7634 = vadd.f32 %v7559, %v7626
    %v7635 = vrot.slane %v7392, 1
    %v7636 = vrot.slane %v7393, 1
    %v7637 = vrot.slane %v7394, 1
    %v7638 = vrot.slane %v7395, 1
    %v7639 = vrot.slane %v7396, 1
    %v7640 = vrot.slane %v7397, 1
    %v7641 = vrot.slane %v7398, 1
    %v7642 = vsel %vm455, %v7640, %v7641
    %v7643 = vsel %vm455, %v7639, %v7640
    %v7644 = vsel %vm455, %v7638, %v7639
    %v7645 = vsel %vm455, %v7637, %v7638
    %v7646 = vsel %vm455, %v7636, %v7637
    %v7647 = vsel %vm455, %v7635, %v7636
    %v7648 = vsel %vm455, %v7641, %v7635
    %v7649 = vld [vmem:[#allocation2 + $0xd70] sm:$0xff]
    %v7650 = vld [vmem:[#allocation2 + $0xd78] sm:$0xff]
    %v7651 = vld [vmem:[#allocation2 + $0xd80] sm:$0xff]
    %v7652 = vld [vmem:[#allocation2 + $0xd88] sm:$0xff]
    %v7653 = vld [vmem:[#allocation2 + $0xd90] sm:$0xff]
    %v7654 = vld [vmem:[#allocation2 + $0xd98] sm:$0xff]
    %v7655 = vld [vmem:[#allocation2 + $0xda0] sm:$0xff]
    %v7656 = vld [vmem:[#allocation2 + $0xda8] sm:$0xff]
    %v7658 = vsel %vm1982, %v7647, 0
    %v7661 = vsel %vm1982, %v7646, 0
    %v7664 = vsel %vm1982, %v7645, 0
    %v7667 = vsel %vm1982, %v7644, 0
    %v7670 = vsel %vm1982, %v7643, 0
    %v7673 = vsel %vm1982, %v7642, 0
    %v7676 = vsel %vm1982, %v7648, 0
    %7678 = vmatpush.msra.mxu0 0.0
    %7679 = vmatpush.msra.mxu0 0.0
    %7680 = vmatpush.msra.mxu0 0.0
    %7681 = vmatpush.msra.mxu0 0.0
    %7682 = vmatpush.msra.mxu0 0.0
    %7683 = vmatpush.msra.mxu0 0.0
    %7684 = vmatpush.msra.mxu0 0.0
    %7685 = vmatpush.msra.mxu0 0.0
    %7686 = vmatpush.msra.mxu0 %v7656
    %7687 = vmatpush.msra.mxu0 %v7655
    %7688 = vmatpush.msra.mxu0 %v7654
    %7689 = vmatpush.msra.mxu0 %v7653
    %7690 = vmatpush.msra.mxu0 %v7652
    %7691 = vmatpush.msra.mxu0 %v7651
    %7692 = vmatpush.msra.mxu0 %v7650
    %7693 = vmatpush.msra.mxu0 %v7649
    %7694 = vmatmul.f32.gmra.mxu0 %v7658
    %v7695 = vpop.f32.mrf.mxu0
    %v7696 = vadd.f32 0.0, %v7695
    %7697 = vmatmul.f32.gmra.mxu0 %v7661
    %v7698 = vpop.f32.mrf.mxu0
    %v7699 = vadd.f32 0.0, %v7698
    %7700 = vmatmul.f32.gmra.mxu0 %v7664
    %v7701 = vpop.f32.mrf.mxu0
    %v7702 = vadd.f32 0.0, %v7701
    %7703 = vmatmul.f32.gmra.mxu0 %v7667
    %v7704 = vpop.f32.mrf.mxu0
    %v7705 = vadd.f32 0.0, %v7704
    %7706 = vmatmul.f32.gmra.mxu0 %v7670
    %v7707 = vpop.f32.mrf.mxu0
    %v7708 = vadd.f32 0.0, %v7707
    %7709 = vmatmul.f32.gmra.mxu0 %v7673
    %v7710 = vpop.f32.mrf.mxu0
    %v7711 = vadd.f32 0.0, %v7710
    %7712 = vmatmul.f32.gmra.mxu0 %v7676
    %v7713 = vpop.f32.mrf.mxu0
    %v7714 = vadd.f32 0.0, %v7713
    %7715 = vdwg.mxu0
    %v7716 = vadd.f32 %v7628, %v7696
    %v7717 = vadd.f32 %v7629, %v7699
    %v7718 = vadd.f32 %v7630, %v7702
    %v7719 = vadd.f32 %v7631, %v7705
    %v7720 = vadd.f32 %v7632, %v7708
    %v7721 = vadd.f32 %v7633, %v7711
    %v7722 = vadd.f32 %v7634, %v7714
    %v7723 = vrot.slane %v7392, 2
    %v7724 = vrot.slane %v7393, 2
    %v7725 = vrot.slane %v7394, 2
    %v7726 = vrot.slane %v7395, 2
    %v7727 = vrot.slane %v7396, 2
    %v7728 = vrot.slane %v7397, 2
    %v7729 = vrot.slane %v7398, 2
    %v7730 = vsel %vm517, %v7728, %v7729
    %v7731 = vsel %vm517, %v7727, %v7728
    %v7732 = vsel %vm517, %v7726, %v7727
    %v7733 = vsel %vm517, %v7725, %v7726
    %v7734 = vsel %vm517, %v7724, %v7725
    %v7735 = vsel %vm517, %v7723, %v7724
    %v7736 = vsel %vm517, %v7729, %v7723
    %v7737 = vld [vmem:[#allocation2 + $0xdb0] sm:$0xff]
    %v7738 = vld [vmem:[#allocation2 + $0xdb8] sm:$0xff]
    %v7739 = vld [vmem:[#allocation2 + $0xdc0] sm:$0xff]
    %v7740 = vld [vmem:[#allocation2 + $0xdc8] sm:$0xff]
    %v7741 = vld [vmem:[#allocation2 + $0xdd0] sm:$0xff]
    %v7742 = vld [vmem:[#allocation2 + $0xdd8] sm:$0xff]
    %v7743 = vld [vmem:[#allocation2 + $0xde0] sm:$0xff]
    %v7744 = vld [vmem:[#allocation2 + $0xde8] sm:$0xff]
    %v7746 = vsel %vm1982, %v7735, 0
    %v7749 = vsel %vm1982, %v7734, 0
    %v7752 = vsel %vm1982, %v7733, 0
    %v7755 = vsel %vm1982, %v7732, 0
    %v7758 = vsel %vm1982, %v7731, 0
    %v7761 = vsel %vm1982, %v7730, 0
    %v7764 = vsel %vm1982, %v7736, 0
    %7766 = vmatpush.msra.mxu0 0.0
    %7767 = vmatpush.msra.mxu0 0.0
    %7768 = vmatpush.msra.mxu0 0.0
    %7769 = vmatpush.msra.mxu0 0.0
    %7770 = vmatpush.msra.mxu0 0.0
    %7771 = vmatpush.msra.mxu0 0.0
    %7772 = vmatpush.msra.mxu0 0.0
    %7773 = vmatpush.msra.mxu0 0.0
    %7774 = vmatpush.msra.mxu0 %v7744
    %7775 = vmatpush.msra.mxu0 %v7743
    %7776 = vmatpush.msra.mxu0 %v7742
    %7777 = vmatpush.msra.mxu0 %v7741
    %7778 = vmatpush.msra.mxu0 %v7740
    %7779 = vmatpush.msra.mxu0 %v7739
    %7780 = vmatpush.msra.mxu0 %v7738
    %7781 = vmatpush.msra.mxu0 %v7737
    %7782 = vmatmul.f32.gmra.mxu0 %v7746
    %v7783 = vpop.f32.mrf.mxu0
    %v7784 = vadd.f32 0.0, %v7783
    %7785 = vmatmul.f32.gmra.mxu0 %v7749
    %v7786 = vpop.f32.mrf.mxu0
    %v7787 = vadd.f32 0.0, %v7786
    %7788 = vmatmul.f32.gmra.mxu0 %v7752
    %v7789 = vpop.f32.mrf.mxu0
    %v7790 = vadd.f32 0.0, %v7789
    %7791 = vmatmul.f32.gmra.mxu0 %v7755
    %v7792 = vpop.f32.mrf.mxu0
    %v7793 = vadd.f32 0.0, %v7792
    %7794 = vmatmul.f32.gmra.mxu0 %v7758
    %v7795 = vpop.f32.mrf.mxu0
    %v7796 = vadd.f32 0.0, %v7795
    %7797 = vmatmul.f32.gmra.mxu0 %v7761
    %v7798 = vpop.f32.mrf.mxu0
    %v7799 = vadd.f32 0.0, %v7798
    %7800 = vmatmul.f32.gmra.mxu0 %v7764
    %v7801 = vpop.f32.mrf.mxu0
    %v7802 = vadd.f32 0.0, %v7801
    %7803 = vdwg.mxu0
    %v7804 = vadd.f32 %v7716, %v7784
    %v7805 = vadd.f32 %v7717, %v7787
    %v7806 = vadd.f32 %v7718, %v7790
    %v7807 = vadd.f32 %v7719, %v7793
    %v7808 = vadd.f32 %v7720, %v7796
    %v7809 = vadd.f32 %v7721, %v7799
    %v7810 = vadd.f32 %v7722, %v7802
    %v7811 = vld [vmem:[#allocation4 + $0x1e] sm:$0x1]
    %v7812 = vld [vmem:[#allocation4 + $0x1f] sm:$0x1]
    %v7813 = vmul.f32 %v7804, %v5957
    %v7814 = vmul.f32 %v7805, %v5958
    %v7815 = vmul.f32 %v7806, %v5959
    %v7816 = vmul.f32 %v7807, %v5960
    %v7817 = vmul.f32 %v7808, %v5961
    %v7818 = vmul.f32 %v7809, %v5962
    %v7819 = vmul.f32 %v7810, %v5963
    %v7820 = vsel %vm1982, %v7813, 0.0
    %v7821 = vsel %vm1982, %v7814, 0.0
    %v7822 = vadd.f32 %v7820, %v7821
    %v7823 = vsel %vm1982, %v7815, 0.0
    %v7824 = vadd.f32 %v7822, %v7823
    %v7825 = vsel %vm1982, %v7816, 0.0
    %v7826 = vadd.f32 %v7824, %v7825
    %v7827 = vsel %vm1982, %v7817, 0.0
    %v7828 = vadd.f32 %v7826, %v7827
    %v7829 = vsel %vm1982, %v7818, 0.0
    %v7830 = vadd.f32 %v7828, %v7829
    %v7831 = vsel %vm1982, %v7819, 0.0
    %v7832 = vadd.f32 %v7830, %v7831
    %v7833 = vrot.slane %v7832, 4
    %v7834 = vadd.f32 %v7832, %v7833
    %v7835 = vrot.slane %v7834, 2
    %v7836 = vadd.f32 %v7834, %v7835
    %v7837 = vrot.slane %v7836, 1
    %v7838 = vadd.f32 %v7836, %v7837
    %v7839 = vmul.f32 %v7838, 0.03846154
    %v7840 = vsub.f32 %v7804, %v7839
    %v7841 = vsub.f32 %v7805, %v7839
    %v7842 = vsub.f32 %v7806, %v7839
    %v7843 = vsub.f32 %v7807, %v7839
    %v7844 = vsub.f32 %v7808, %v7839
    %v7845 = vsub.f32 %v7809, %v7839
    %v7846 = vsub.f32 %v7810, %v7839
    %v7847 = vmul.f32 %v7840, %v5957
    %v7848 = vmul.f32 %v7841, %v5958
    %v7849 = vmul.f32 %v7842, %v5959
    %v7850 = vmul.f32 %v7843, %v5960
    %v7851 = vmul.f32 %v7844, %v5961
    %v7852 = vmul.f32 %v7845, %v5962
    %v7853 = vmul.f32 %v7846, %v5963
    %v7854 = vmul.f32 %v7847, %v7847
    %v7855 = vmul.f32 %v7848, %v7848
    %v7856 = vmul.f32 %v7849, %v7849
    %v7857 = vmul.f32 %v7850, %v7850
    %v7858 = vmul.f32 %v7851, %v7851
    %v7859 = vmul.f32 %v7852, %v7852
    %v7860 = vmul.f32 %v7853, %v7853
    %v7861 = vsel %vm1982, %v7854, 0.0
    %v7862 = vsel %vm1982, %v7855, 0.0
    %v7863 = vadd.f32 %v7861, %v7862
    %v7864 = vsel %vm1982, %v7856, 0.0
    %v7865 = vadd.f32 %v7863, %v7864
    %v7866 = vsel %vm1982, %v7857, 0.0
    %v7867 = vadd.f32 %v7865, %v7866
    %v7868 = vsel %vm1982, %v7858, 0.0
    %v7869 = vadd.f32 %v7867, %v7868
    %v7870 = vsel %vm1982, %v7859, 0.0
    %v7871 = vadd.f32 %v7869, %v7870
    %v7872 = vsel %vm1982, %v7860, 0.0
    %v7873 = vadd.f32 %v7871, %v7872
    %v7874 = vrot.slane %v7873, 4
    %v7875 = vadd.f32 %v7873, %v7874
    %v7876 = vrot.slane %v7875, 2
    %v7877 = vadd.f32 %v7875, %v7876
    %v7878 = vrot.slane %v7877, 1
    %v7879 = vadd.f32 %v7877, %v7878
    %v7880 = vmul.f32 %v7879, 0.03846154
    %v7881 = vadd.f32 %v7880, 1e-05
    %v7882 = vrsqrt.pop %v7881
    %v7883 = vmul.f32 %v7882, %v7881
    %v7884 = vmul.f32 %v7883, %v7882
    %v7885 = vmul.f32 0.5, %v7884
    %v7886 = vsub.f32 1.5, %v7885
    %v7887 = vmul.f32 %v7882, %v7886
    %vm7888 = vweird.f32 %v7881
    %vm7889 = vweird.f32 %v7882
    %vm7890 = vmor %vm7888, %vm7889
    %v7891 = vsel %vm7890, %v7882, %v7887
    %v7892 = vmul.f32 %v7891, %v7811
    %v7893 = vperm.slane %v7892, 0
    %v7894 = vmul.f32 %v7848, %v7893
    %v7895 = vmul.f32 %v7849, %v7893
    %v7896 = vmul.f32 %v7850, %v7893
    %v7897 = vmul.f32 %v7851, %v7893
    %v7898 = vmul.f32 %v7852, %v7893
    %v7899 = vmul.f32 %v7853, %v7893
    %v7900 = vperm.slane %v7812, 0
    %v7901 = vadd.f32 %v7894, %v7900
    %v7902 = vadd.f32 %v7895, %v7900
    %v7903 = vadd.f32 %v7896, %v7900
    %v7904 = vadd.f32 %v7897, %v7900
    %v7905 = vadd.f32 %v7898, %v7900
    %v7906 = vadd.f32 %v7899, %v7900
    %v7907 = vmul.f32 %v7901, %v5958
    %v7908 = vmul.f32 %v7902, %v5959
    %v7909 = vmul.f32 %v7903, %v5960
    %v7910 = vmul.f32 %v7904, %v5961
    %v7911 = vmul.f32 %v7905, %v5962
    %v7912 = vmul.f32 %v7906, %v5963
    %v7913 = vadd.f32 %v7907, %v6081
    %v7914 = vadd.f32 %v7908, %v6082
    %v7915 = vadd.f32 %v7909, %v6083
    %v7916 = vadd.f32 %v7910, %v6084
    %v7917 = vadd.f32 %v7911, %v6085
    %v7918 = vadd.f32 %v7912, %v6086
    %v7919 = vmax.f32 %v7913, 0.0
    %v7920 = vmax.f32 %v7914, 0.0
    %v7921 = vmax.f32 %v7915, 0.0
    %v7922 = vmax.f32 %v7916, 0.0
    %v7923 = vmax.f32 %v7917, 0.0
    %v7924 = vmax.f32 %v7918, 0.0
    %v7925 = vrot.slane %v7919, 1
    %v7926 = vrot.slane %v7920, 1
    %v7927 = vrot.slane %v7921, 1
    %v7928 = vrot.slane %v7922, 1
    %v7929 = vrot.slane %v7923, 1
    %v7930 = vrot.slane %v7924, 1
    %v7931 = vsel %vm455, %v7929, %v7930
    %v7932 = vsel %vm455, %v7928, %v7929
    %v7933 = vsel %vm455, %v7926, %v7927
    %v7934 = vsel %vm455, %v7925, %v7926
    %vm7935 = vcmp.lt.s32.totalorder %v53, 20
    %vm7936 = vcmp.lt.s32.totalorder %v54, 20
    %vm7937 = vcmp.lt.s32.totalorder %v56, 20
    %vm7938 = vcmp.lt.s32.totalorder %v57, 20
    %vm7939 = vmand %vm60, %vm7935
    %vm7940 = vmand %vm61, %vm7936
    %vm7941 = vmand %vm63, %vm7937
    %vm7942 = vmand %vm64, %vm7938
    %vm7943 = vcmp.lt.s32.totalorder %v53, 44
    %vm7944 = vcmp.lt.s32.totalorder %v54, 44
    %vm7945 = vcmp.lt.s32.totalorder %v56, 44
    %vm7946 = vcmp.lt.s32.totalorder %v57, 44
    %vm7947 = vmand %vm81, %vm7943
    %vm7948 = vmand %vm82, %vm7944
    %vm7949 = vmand %vm84, %vm7945
    %vm7950 = vmand %vm85, %vm7946
    %vm7951 = vmor %vm7939, %vm7947
    %vm7952 = vmor %vm7940, %vm7948
    %vm7953 = vmor %vm7941, %vm7949
    %vm7954 = vmor %vm7942, %vm7950
    %v7955 = vsel %vm7951, 1, 0
    %v7956 = vsel %vm7952, 1, 0
    %v7957 = vsel %vm7953, 1, 0
    %v7958 = vsel %vm7954, 1, 0
    %v7959 = vcvt.s32.f32 %v7955
    %v7960 = vcvt.s32.f32 %v7956
    %v7961 = vcvt.s32.f32 %v7957
    %v7962 = vcvt.s32.f32 %v7958
    %v7963 = vadd.f32 %v7919, %v7934
    %v7964 = vadd.f32 %v7920, %v7933
    %v7965 = vadd.f32 %v7922, %v7932
    %v7966 = vadd.f32 %v7923, %v7931
    %v7967 = vmul.f32 %v7963, 0.5
    %v7968 = vmul.f32 %v7964, 0.5
    %v7969 = vmul.f32 %v7965, 0.5
    %v7970 = vmul.f32 %v7966, 0.5
    %v7971 = vmul.f32 %v7967, %v7959
    %v7972 = vmul.f32 %v7968, %v7960
    %v7973 = vmul.f32 %v7969, %v7961
    %v7974 = vmul.f32 %v7970, %v7962
    %7975 = vst.msk [vmem:[%s3] sm:$0xff] %vm1982, %v7971
    %vm7976 = vcmask 519168
    %7977 = vst.msk [vmem:[%s3 + $0x8] sm:$0xf] %vm7976, %v7972
    %s7978 = scalar_lea.vmem %s3, 16
    %7979 = vst.msk [vmem:[%s7978] sm:$0xff] %vm1982, %v7973
    %7980 = vst.msk [vmem:[%s7978 + $0x8] sm:$0xf] %vm7976, %v7974
    // Predicated region
    $region22: #{tpu_custom_call.1} parent=1 // pred_check
      _
    $region23: #{tpu_custom_call.1} parent=1 // pred_check_branch
      %7982 = sbr.rel (0) target = $region25
    $region24: #{tpu_custom_call.1} parent=1 // pred_region
      _
    $region25: #{tpu_custom_call.1} parent=1 // pred_fallthru
      _
    // Predicated region
    $region26: #{tpu_custom_call.1} parent=1 // pred_check
      _
    $region27: #{tpu_custom_call.1} parent=1 // pred_check_branch
      %7984 = sbr.rel (0) target = $region29
    $region28: #{tpu_custom_call.1} parent=1 // pred_region
      _
    $region29: #{tpu_custom_call.1} parent=1 // pred_fallthru
      _
    %7985 = vsyncpa [#allocation3], 1
    %7986 = vsyncpa [#allocation5], 1

</llo_original>
